<compile_context>
chip_gen: v7x
topology: tpu7x:2x2x1
jax: 0.10.0
libtpu: 0.0.40
codegen_flags: <defaults>
</compile_context>

<pallas_src>
import functools

import jax
import jax.numpy as jnp
from jax.experimental import pallas as pl
from jax.experimental.pallas import tpu as pltpu


_PAD = 16  # start offset of the activation inside the padded conv scratch


def _relu_bn_pool(y, bias, scale, shift):
    # y: (M, C) f32 conv pre-activation, rows ordered b*L + l (L even).
    # conv-bias -> ReLU -> BatchNorm1d(eval, folded) -> MaxPool1d(2).
    M, C = y.shape
    y = jnp.maximum(y + bias, 0.0) * scale + shift
    return jnp.max(y.reshape(M // 2, 2, C), axis=1)          # (M//2, C)


def fused_forward_kernel(B, L,
                         cols1_ref,
                         w1_ref, b1_ref, s1_ref, t1_ref,
                         w2_ref, b2_ref, s2_ref, t2_ref,
                         w3_ref, b3_ref, s3_ref, t3_ref,
                         fw0_hbm, fw1_hbm, fw2_hbm,
                         fb0_ref, fb1_ref, fb2_ref,
                         o_ref,
                         pad2_ref, pad3_ref,
                         fw0_vmem, fw1_vmem, fw2_vmem, dma_sem):
    f32, bf16 = jnp.float32, jnp.bfloat16

    # ---- Start streaming the classifier weights NOW; they are only consumed
    # after the three conv blocks, so this DMA overlaps with conv compute.
    cp_fw0 = pltpu.make_async_copy(fw0_hbm, fw0_vmem, dma_sem.at[0])
    cp_fw1 = pltpu.make_async_copy(fw1_hbm, fw1_vmem, dma_sem.at[1])
    cp_fw2 = pltpu.make_async_copy(fw2_hbm, fw2_vmem, dma_sem.at[2])
    cp_fw0.start()
    cp_fw1.start()
    cp_fw2.start()

    # ---- Block 1: Conv1d(1,128,k=3,p=1) + ReLU + BN + MaxPool(2) -------------
    # cols1 is the (B*L, 3) im2col of the scalar input; the K=3 contraction is
    # three f32 VPU broadcast FMAs (cheaper than a degenerate MXU op).
    c1 = cols1_ref[...]                                      # (B*L, 3) f32
    w1 = w1_ref[...]                                         # (3, 128) f32
    y = (c1[:, 0:1] * w1[0:1, :]
         + c1[:, 1:2] * w1[1:2, :]
         + c1[:, 2:3] * w1[2:3, :])                          # (B*L, 128) f32
    y = _relu_bn_pool(y, b1_ref[...], s1_ref[...], t1_ref[...])
    x = y.reshape(B, L // 2, 128)

    # ---- Blocks 2 & 3: conv as three accumulated matmuls over shifted taps --
    def conv_block(x, w_ref, b_ref, s_ref, t_ref, pad_ref):
        Bb, Ll, Cin = x.shape
        # padding=1 handled in a bf16 VMEM scratch: the activation sits at
        # sublane offset _PAD; only the two boundary rows the shifted taps can
        # read are zeroed (no full-buffer zero fill).
        pad_ref[:, _PAD - 1:_PAD, :] = jnp.zeros((Bb, 1, Cin), bf16)
        pad_ref[:, _PAD + Ll:_PAD + Ll + 1, :] = jnp.zeros((Bb, 1, Cin), bf16)
        pad_ref[:, _PAD:_PAD + Ll, :] = x.astype(bf16)

        def tap(k):                                          # (B*Ll, Cin) bf16
            return pad_ref[:, _PAD - 1 + k:_PAD - 1 + k + Ll, :].reshape(
                Bb * Ll, Cin)

        y = jnp.dot(tap(0), w_ref[0:Cin, :], preferred_element_type=f32)
        y = y + jnp.dot(tap(1), w_ref[Cin:2 * Cin, :], preferred_element_type=f32)
        y = y + jnp.dot(tap(2), w_ref[2 * Cin:3 * Cin, :], preferred_element_type=f32)
        y = _relu_bn_pool(y, b_ref[...], s_ref[...], t_ref[...])
        return y.reshape(Bb, Ll // 2, y.shape[-1])

    x = conv_block(x, w2_ref, b2_ref, s2_ref, t2_ref, pad2_ref)  # (B, L//4, 256)
    x = conv_block(x, w3_ref, b3_ref, s3_ref, t3_ref, pad3_ref)  # (B, L//8, 512)

    # ---- Classifier: Linear->ReLU->Linear->ReLU->Linear (Dropout = identity) -
    # fc0 weight row index is l*512 + c, so the channels-last activation
    # flattens directly into one K = Lf*512 matmul.
    Lf = x.shape[1]
    xf = x.reshape(B, Lf * 512).astype(bf16)

    cp_fw0.wait()
    h = jnp.dot(xf, fw0_vmem[...], preferred_element_type=f32)
    h = jnp.maximum(h + fb0_ref[...], 0.0)

    cp_fw1.wait()
    h = jnp.dot(h.astype(bf16), fw1_vmem[...], preferred_element_type=f32)
    h = jnp.maximum(h + fb1_ref[...], 0.0)

    cp_fw2.wait()
    out = jnp.dot(h.astype(bf16), fw2_vmem[...], preferred_element_type=f32)
    o_ref[...] = (out + fb2_ref[...]).astype(o_ref.dtype)


# ---------------------------------------------------------------------------
# Parameter construction (PyTorch-default-style init, BN eval-mode folding)
# ---------------------------------------------------------------------------
def init_params(key, input_size, num_classes, eps=1e-5):
    ks = jax.random.split(key, 12)

    def uniform(k, shape, fan_in):
        bound = 1.0 / float(fan_in) ** 0.5
        return jax.random.uniform(k, shape, jnp.float32, -bound, bound)

    p = {}
    conv_dims = [(1, 128), (128, 256), (256, 512)]
    for i, (cin, cout) in enumerate(conv_dims):
        w = uniform(ks[2 * i], (cout, cin, 3), cin * 3)       # PyTorch (Cout,Cin,K)
        b = uniform(ks[2 * i + 1], (1, cout), cin * 3)
        # im2col layout: row index = k*Cin + ci  ->  (3*Cin, Cout)
        w_flat = jnp.transpose(w, (2, 1, 0)).reshape(3 * cin, cout)
        p[f"conv{i}_w"] = w_flat if cin == 1 else w_flat.astype(jnp.bfloat16)
        p[f"conv{i}_b"] = b
        gamma = jnp.ones((1, cout), jnp.float32)
        beta = jnp.zeros((1, cout), jnp.float32)
        mean = jnp.zeros((1, cout), jnp.float32)
        var = jnp.ones((1, cout), jnp.float32)
        scale = gamma / jnp.sqrt(var + eps)                   # eval-mode BN folding
        p[f"bn{i}_scale"] = scale
        p[f"bn{i}_shift"] = beta - mean * scale

    lf = input_size // 8                                      # length after 3 pools
    flat = 512 * lf                                           # PyTorch flatten size
    w0 = uniform(ks[6], (1024, flat), flat)                   # PyTorch (out, in)
    b0 = uniform(ks[7], (1, 1024), flat)
    # PyTorch flatten index = c*lf + l; store rows as l*512 + c so the kernel's
    # channels-last activation contracts in one matmul.
    w0p = jnp.transpose(w0.T.reshape(512, lf, 1024), (1, 0, 2)).reshape(flat, 1024)
    p["fc0_w"] = w0p.astype(jnp.bfloat16)
    p["fc0_b"] = b0
    w1 = uniform(ks[8], (512, 1024), 1024)
    b1 = uniform(ks[9], (1, 512), 1024)
    p["fc1_w"] = jnp.transpose(w1).astype(jnp.bfloat16)
    p["fc1_b"] = b1
    w2 = uniform(ks[10], (num_classes, 512), 512)
    b2 = uniform(ks[11], (1, num_classes), 512)
    # Lane-pad the last layer to a multiple of 128 output columns (lane-dense
    # final matmul + store); the wrapper slices back to num_classes.
    ncp = max(128, ((num_classes + 127) // 128) * 128)
    w2p = jnp.zeros((512, ncp), jnp.float32).at[:, :num_classes].set(jnp.transpose(w2))
    p["fc2_w"] = w2p.astype(jnp.bfloat16)
    p["fc2_b"] = b2                                           # unpadded (true classes)
    return p


# ---------------------------------------------------------------------------
# Full forward pass: one fused pallas_call
# ---------------------------------------------------------------------------
@jax.jit
def combined_cyber_threat_cnn_forward(x, params):
    # x: (B, input_size) float32; input_size divisible by 8 (three MaxPool1d(2)).
    B, L = x.shape
    assert L % 8 == 0 and L >= 8, "input_size must be divisible by 8"
    Lf = L // 8
    ncp = params["fc2_w"].shape[1]                  # lane-padded class count
    num_classes = params["fc2_b"].shape[1]          # true class count
    fb2 = jnp.pad(params["fc2_b"], ((0, 0), (0, ncp - num_classes)))

    # Layer-1 im2col (B*L, 3) built host-side (3*B*L floats, negligible);
    # keeps the 1-channel first conv lane-dense inside the kernel.
    xp = jnp.pad(x, ((0, 0), (1, 1)))
    cols1 = jnp.stack([xp[:, 0:L], xp[:, 1:L + 1], xp[:, 2:L + 2]],
                      axis=2).reshape(B * L, 3)

    flops = 2 * (B * L * 3 * 128
                 + (B * L // 2) * 384 * 256
                 + (B * L // 4) * 768 * 512
                 + B * (512 * Lf) * 1024
                 + B * 1024 * 512
                 + B * 512 * ncp)
    weight_args = [params[k] for k in (
        "conv0_w", "conv0_b", "bn0_scale", "bn0_shift",
        "conv1_w", "conv1_b", "bn1_scale", "bn1_shift",
        "conv2_w", "conv2_b", "bn2_scale", "bn2_shift",
        "fc0_w", "fc1_w", "fc2_w", "fc0_b", "fc1_b")] + [fb2]
    bytes_accessed = int(cols1.size * 4 + B * ncp * 4
                         + sum(int(a.size) * a.dtype.itemsize for a in weight_args))

    vmem_spec = lambda: pl.BlockSpec(memory_space=pltpu.MemorySpace.VMEM)
    hbm_spec = lambda: pl.BlockSpec(memory_space=pl.ANY)

    kernel = functools.partial(fused_forward_kernel, B, L)
    out = pl.pallas_call(
        kernel,
        out_shape=jax.ShapeDtypeStruct((B, ncp), jnp.float32),
        in_specs=[vmem_spec()] * 13 + [hbm_spec()] * 3 + [vmem_spec()] * 3,
        out_specs=vmem_spec(),
        scratch_shapes=[
            pltpu.VMEM((B, L // 2 + 2 * _PAD, 128), jnp.bfloat16),  # block-2 pad
            pltpu.VMEM((B, L // 4 + 2 * _PAD, 256), jnp.bfloat16),  # block-3 pad
            pltpu.VMEM(params["fc0_w"].shape, jnp.bfloat16),        # fc0 weight
            pltpu.VMEM(params["fc1_w"].shape, jnp.bfloat16),        # fc1 weight
            pltpu.VMEM(params["fc2_w"].shape, jnp.bfloat16),        # fc2 weight
            pltpu.SemaphoreType.DMA((3,)),
        ],
        cost_estimate=pl.CostEstimate(flops=int(flops), transcendentals=0,
                                      bytes_accessed=bytes_accessed),
        compiler_params=pltpu.CompilerParams(
            vmem_limit_bytes=32 * 1024 * 1024),
    )(cols1,
      params["conv0_w"], params["conv0_b"], params["bn0_scale"], params["bn0_shift"],
      params["conv1_w"], params["conv1_b"], params["bn1_scale"], params["bn1_shift"],
      params["conv2_w"], params["conv2_b"], params["bn2_scale"], params["bn2_shift"],
      params["fc0_w"], params["fc1_w"], params["fc2_w"],
      params["fc0_b"], params["fc1_b"], fb2)
    return out[:, :num_classes]


if __name__ == "__main__":
    batch = 2
    input_size = 32          # divisible by 8 so the three MaxPool1d(2) are exact
    num_classes = 8

    key = jax.random.PRNGKey(0)
    k_x, k_p = jax.random.split(key)
    x = jax.random.normal(k_x, (batch, input_size), jnp.float32)
    params = init_params(k_p, input_size, num_classes)

    out = combined_cyber_threat_cnn_forward(x, params)
    out = jax.block_until_ready(out)
    assert out.shape == (batch, num_classes)
    assert bool(jnp.all(jnp.isfinite(out)))
    print("KERNEL_OK")
</pallas_src>

<mosaic_0001>
module attributes {stable_mosaic.version = 11 : i64} {
  func.func @fused_forward_kernel(%arg0: memref<64x3xf32, #tpu.memory_space<vmem>>, %arg1: memref<3x128xf32, #tpu.memory_space<vmem>>, %arg2: memref<1x128xf32, #tpu.memory_space<vmem>>, %arg3: memref<1x128xf32, #tpu.memory_space<vmem>>, %arg4: memref<1x128xf32, #tpu.memory_space<vmem>>, %arg5: memref<384x256xbf16, #tpu.memory_space<vmem>>, %arg6: memref<1x256xf32, #tpu.memory_space<vmem>>, %arg7: memref<1x256xf32, #tpu.memory_space<vmem>>, %arg8: memref<1x256xf32, #tpu.memory_space<vmem>>, %arg9: memref<768x512xbf16, #tpu.memory_space<vmem>>, %arg10: memref<1x512xf32, #tpu.memory_space<vmem>>, %arg11: memref<1x512xf32, #tpu.memory_space<vmem>>, %arg12: memref<1x512xf32, #tpu.memory_space<vmem>>, %arg13: memref<2048x1024xbf16, #tpu.memory_space<any>>, %arg14: memref<1024x512xbf16, #tpu.memory_space<any>>, %arg15: memref<512x128xbf16, #tpu.memory_space<any>>, %arg16: memref<1x1024xf32, #tpu.memory_space<vmem>>, %arg17: memref<1x512xf32, #tpu.memory_space<vmem>>, %arg18: memref<1x128xf32, #tpu.memory_space<vmem>>, %arg19: memref<2x128xf32, #tpu.memory_space<vmem>>, %arg20: memref<2x48x128xbf16, #tpu.memory_space<vmem>>, %arg21: memref<2x40x256xbf16, #tpu.memory_space<vmem>>, %arg22: memref<2048x1024xbf16, #tpu.memory_space<vmem>>, %arg23: memref<1024x512xbf16, #tpu.memory_space<vmem>>, %arg24: memref<512x128xbf16, #tpu.memory_space<vmem>>, %arg25: memref<3x!tpu.dma_semaphore, #tpu.memory_space<semaphore_mem>>) attributes {dimension_semantics = [], scalar_prefetch = 0 : i64, scratch_operands = 6 : i64, tpu.core_type = #tpu.core_type<tc>} {
    %c0_i32 = arith.constant 0 : i32
    %0 = tpu.memref_slice %arg25[%c0_i32] : memref<3x!tpu.dma_semaphore, #tpu.memory_space<semaphore_mem>> -> memref<1x!tpu.dma_semaphore, #tpu.memory_space<semaphore_mem>>
    %1 = tpu.memref_squeeze %0 : memref<1x!tpu.dma_semaphore, #tpu.memory_space<semaphore_mem>> -> memref<!tpu.dma_semaphore, #tpu.memory_space<semaphore_mem>>
    tpu.enqueue_dma source(%arg13 : memref<2048x1024xbf16, #tpu.memory_space<any>>) target(%arg22 : memref<2048x1024xbf16, #tpu.memory_space<vmem>>) target_semaphore(%1 : memref<!tpu.dma_semaphore, #tpu.memory_space<semaphore_mem>>)
    %c1_i32 = arith.constant 1 : i32
    %2 = tpu.memref_slice %arg25[%c1_i32] : memref<3x!tpu.dma_semaphore, #tpu.memory_space<semaphore_mem>> -> memref<1x!tpu.dma_semaphore, #tpu.memory_space<semaphore_mem>>
    %3 = tpu.memref_squeeze %2 : memref<1x!tpu.dma_semaphore, #tpu.memory_space<semaphore_mem>> -> memref<!tpu.dma_semaphore, #tpu.memory_space<semaphore_mem>>
    tpu.enqueue_dma source(%arg14 : memref<1024x512xbf16, #tpu.memory_space<any>>) target(%arg23 : memref<1024x512xbf16, #tpu.memory_space<vmem>>) target_semaphore(%3 : memref<!tpu.dma_semaphore, #tpu.memory_space<semaphore_mem>>)
    %c2_i32 = arith.constant 2 : i32
    %4 = tpu.memref_slice %arg25[%c2_i32] : memref<3x!tpu.dma_semaphore, #tpu.memory_space<semaphore_mem>> -> memref<1x!tpu.dma_semaphore, #tpu.memory_space<semaphore_mem>>
    %5 = tpu.memref_squeeze %4 : memref<1x!tpu.dma_semaphore, #tpu.memory_space<semaphore_mem>> -> memref<!tpu.dma_semaphore, #tpu.memory_space<semaphore_mem>>
    tpu.enqueue_dma source(%arg15 : memref<512x128xbf16, #tpu.memory_space<any>>) target(%arg24 : memref<512x128xbf16, #tpu.memory_space<vmem>>) target_semaphore(%5 : memref<!tpu.dma_semaphore, #tpu.memory_space<semaphore_mem>>)
    %c0 = arith.constant 0 : index
    %c0_0 = arith.constant 0 : index
    %6 = vector.load %arg0[%c0, %c0_0] : memref<64x3xf32, #tpu.memory_space<vmem>>, vector<64x3xf32>
    %c0_1 = arith.constant 0 : index
    %c0_2 = arith.constant 0 : index
    %7 = vector.load %arg1[%c0_1, %c0_2] : memref<3x128xf32, #tpu.memory_space<vmem>>, vector<3x128xf32>
    %8 = vector.extract_strided_slice %6 {offsets = [0, 0], sizes = [64, 1], strides = [1, 1]} : vector<64x3xf32> to vector<64x1xf32>
    %9 = vector.extract_strided_slice %7 {offsets = [0, 0], sizes = [1, 128], strides = [1, 1]} : vector<3x128xf32> to vector<1x128xf32>
    %10 = vector.broadcast %8 : vector<64x1xf32> to vector<64x128xf32>
    %11 = vector.broadcast %9 : vector<1x128xf32> to vector<64x128xf32>
    %12 = arith.mulf %10, %11 : vector<64x128xf32>
    %13 = vector.extract_strided_slice %6 {offsets = [0, 1], sizes = [64, 1], strides = [1, 1]} : vector<64x3xf32> to vector<64x1xf32>
    %14 = vector.extract_strided_slice %7 {offsets = [1, 0], sizes = [1, 128], strides = [1, 1]} : vector<3x128xf32> to vector<1x128xf32>
    %15 = vector.broadcast %13 : vector<64x1xf32> to vector<64x128xf32>
    %16 = vector.broadcast %14 : vector<1x128xf32> to vector<64x128xf32>
    %17 = arith.mulf %15, %16 : vector<64x128xf32>
    %18 = arith.addf %12, %17 : vector<64x128xf32>
    %19 = vector.extract_strided_slice %6 {offsets = [0, 2], sizes = [64, 1], strides = [1, 1]} : vector<64x3xf32> to vector<64x1xf32>
    %20 = vector.extract_strided_slice %7 {offsets = [2, 0], sizes = [1, 128], strides = [1, 1]} : vector<3x128xf32> to vector<1x128xf32>
    %21 = vector.broadcast %19 : vector<64x1xf32> to vector<64x128xf32>
    %22 = vector.broadcast %20 : vector<1x128xf32> to vector<64x128xf32>
    %23 = arith.mulf %21, %22 : vector<64x128xf32>
    %24 = arith.addf %18, %23 : vector<64x128xf32>
    %c0_3 = arith.constant 0 : index
    %c0_4 = arith.constant 0 : index
    %25 = vector.load %arg2[%c0_3, %c0_4] : memref<1x128xf32, #tpu.memory_space<vmem>>, vector<1x128xf32>
    %c0_5 = arith.constant 0 : index
    %c0_6 = arith.constant 0 : index
    %26 = vector.load %arg3[%c0_5, %c0_6] : memref<1x128xf32, #tpu.memory_space<vmem>>, vector<1x128xf32>
    %c0_7 = arith.constant 0 : index
    %c0_8 = arith.constant 0 : index
    %27 = vector.load %arg4[%c0_7, %c0_8] : memref<1x128xf32, #tpu.memory_space<vmem>>, vector<1x128xf32>
    %28 = vector.broadcast %25 : vector<1x128xf32> to vector<64x128xf32>
    %29 = arith.addf %24, %28 : vector<64x128xf32>
    %cst = arith.constant 0.000000e+00 : f32
    %30 = vector.broadcast %cst : f32 to vector<64x128xf32>
    %31 = arith.maximumf %29, %30 : vector<64x128xf32>
    %32 = vector.broadcast %26 : vector<1x128xf32> to vector<64x128xf32>
    %33 = arith.mulf %31, %32 : vector<64x128xf32>
    %34 = vector.broadcast %27 : vector<1x128xf32> to vector<64x128xf32>
    %35 = arith.addf %33, %34 : vector<64x128xf32>
    %36 = vector.shape_cast %35 : vector<64x128xf32> to vector<32x2x128xf32>
    %cst_9 = arith.constant dense<0xFF800000> : vector<32x128xf32>
    %37 = vector.multi_reduction <maximumf>, %36, %cst_9 [1] : vector<32x2x128xf32> to vector<32x128xf32>
    %38 = vector.shape_cast %37 : vector<32x128xf32> to vector<2x16x128xf32>
    %cst_10 = arith.constant 0.000000e+00 : bf16
    %39 = vector.broadcast %cst_10 : bf16 to vector<2x1x128xbf16>
    %c0_11 = arith.constant 0 : index
    %c15 = arith.constant 15 : index
    %c0_12 = arith.constant 0 : index
    %40 = vector.load %arg20[%c0_11, %c15, %c0_12] : memref<2x48x128xbf16, #tpu.memory_space<vmem>>, vector<2x1x128xbf16>
    tpu.vector_store %arg20[%c0_11, %c15, %c0_12], %39 {strides = array<i32>} : memref<2x48x128xbf16, #tpu.memory_space<vmem>>, vector<2x1x128xbf16>,
    %cst_13 = arith.constant 0.000000e+00 : bf16
    %41 = vector.broadcast %cst_13 : bf16 to vector<2x1x128xbf16>
    %c0_14 = arith.constant 0 : index
    %c32 = arith.constant 32 : index
    %c0_15 = arith.constant 0 : index
    %42 = vector.load %arg20[%c0_14, %c32, %c0_15] : memref<2x48x128xbf16, #tpu.memory_space<vmem>>, vector<2x1x128xbf16>
    tpu.vector_store %arg20[%c0_14, %c32, %c0_15], %41 {strides = array<i32>} : memref<2x48x128xbf16, #tpu.memory_space<vmem>>, vector<2x1x128xbf16>,
    %43 = arith.truncf %38 : vector<2x16x128xf32> to vector<2x16x128xbf16>
    %c0_16 = arith.constant 0 : index
    %c16 = arith.constant 16 : index
    %c0_17 = arith.constant 0 : index
    %44 = vector.load %arg20[%c0_16, %c16, %c0_17] : memref<2x48x128xbf16, #tpu.memory_space<vmem>>, vector<2x16x128xbf16>
    tpu.vector_store %arg20[%c0_16, %c16, %c0_17], %43 {strides = array<i32>} : memref<2x48x128xbf16, #tpu.memory_space<vmem>>, vector<2x16x128xbf16>,
    %c0_18 = arith.constant 0 : index
    %c15_19 = arith.constant 15 : index
    %c0_20 = arith.constant 0 : index
    %45 = vector.load %arg20[%c0_18, %c15_19, %c0_20] : memref<2x48x128xbf16, #tpu.memory_space<vmem>>, vector<2x16x128xbf16>
    %46 = vector.shape_cast %45 : vector<2x16x128xbf16> to vector<32x128xbf16>
    %c0_21 = arith.constant 0 : index
    %c0_22 = arith.constant 0 : index
    %47 = vector.load %arg5[%c0_21, %c0_22] : memref<384x256xbf16, #tpu.memory_space<vmem>>, vector<128x256xbf16>
    %cst_23 = arith.constant dense<0.000000e+00> : vector<32x256xf32>
    %48 = tpu.matmul %46, %47, %cst_23 {dimension_numbers = #tpu.dot_dimension_numbers<[1], [0], [0], [1], [0, 0, 1, 1], [], []>} : vector<32x128xbf16>, vector<128x256xbf16>, vector<32x256xf32> -> vector<32x256xf32>
    %c0_24 = arith.constant 0 : index
    %c16_25 = arith.constant 16 : index
    %c0_26 = arith.constant 0 : index
    %49 = vector.load %arg20[%c0_24, %c16_25, %c0_26] : memref<2x48x128xbf16, #tpu.memory_space<vmem>>, vector<2x16x128xbf16>
    %50 = vector.shape_cast %49 : vector<2x16x128xbf16> to vector<32x128xbf16>
    %c128 = arith.constant 128 : index
    %c0_27 = arith.constant 0 : index
    %51 = vector.load %arg5[%c128, %c0_27] : memref<384x256xbf16, #tpu.memory_space<vmem>>, vector<128x256xbf16>
    %cst_28 = arith.constant dense<0.000000e+00> : vector<32x256xf32>
    %52 = tpu.matmul %50, %51, %cst_28 {dimension_numbers = #tpu.dot_dimension_numbers<[1], [0], [0], [1], [0, 0, 1, 1], [], []>} : vector<32x128xbf16>, vector<128x256xbf16>, vector<32x256xf32> -> vector<32x256xf32>
    %53 = arith.addf %48, %52 : vector<32x256xf32>
    %c0_29 = arith.constant 0 : index
    %c17 = arith.constant 17 : index
    %c0_30 = arith.constant 0 : index
    %54 = vector.load %arg20[%c0_29, %c17, %c0_30] : memref<2x48x128xbf16, #tpu.memory_space<vmem>>, vector<2x16x128xbf16>
    %55 = vector.shape_cast %54 : vector<2x16x128xbf16> to vector<32x128xbf16>
    %c256 = arith.constant 256 : index
    %c0_31 = arith.constant 0 : index
    %56 = vector.load %arg5[%c256, %c0_31] : memref<384x256xbf16, #tpu.memory_space<vmem>>, vector<128x256xbf16>
    %cst_32 = arith.constant dense<0.000000e+00> : vector<32x256xf32>
    %57 = tpu.matmul %55, %56, %cst_32 {dimension_numbers = #tpu.dot_dimension_numbers<[1], [0], [0], [1], [0, 0, 1, 1], [], []>} : vector<32x128xbf16>, vector<128x256xbf16>, vector<32x256xf32> -> vector<32x256xf32>
    %58 = arith.addf %53, %57 : vector<32x256xf32>
    %c0_33 = arith.constant 0 : index
    %c0_34 = arith.constant 0 : index
    %59 = vector.load %arg6[%c0_33, %c0_34] : memref<1x256xf32, #tpu.memory_space<vmem>>, vector<1x256xf32>
    %c0_35 = arith.constant 0 : index
    %c0_36 = arith.constant 0 : index
    %60 = vector.load %arg7[%c0_35, %c0_36] : memref<1x256xf32, #tpu.memory_space<vmem>>, vector<1x256xf32>
    %c0_37 = arith.constant 0 : index
    %c0_38 = arith.constant 0 : index
    %61 = vector.load %arg8[%c0_37, %c0_38] : memref<1x256xf32, #tpu.memory_space<vmem>>, vector<1x256xf32>
    %62 = vector.broadcast %59 : vector<1x256xf32> to vector<32x256xf32>
    %63 = arith.addf %58, %62 : vector<32x256xf32>
    %cst_39 = arith.constant 0.000000e+00 : f32
    %64 = vector.broadcast %cst_39 : f32 to vector<32x256xf32>
    %65 = arith.maximumf %63, %64 : vector<32x256xf32>
    %66 = vector.broadcast %60 : vector<1x256xf32> to vector<32x256xf32>
    %67 = arith.mulf %65, %66 : vector<32x256xf32>
    %68 = vector.broadcast %61 : vector<1x256xf32> to vector<32x256xf32>
    %69 = arith.addf %67, %68 : vector<32x256xf32>
    %70 = vector.shape_cast %69 : vector<32x256xf32> to vector<16x2x256xf32>
    %cst_40 = arith.constant dense<0xFF800000> : vector<16x256xf32>
    %71 = vector.multi_reduction <maximumf>, %70, %cst_40 [1] : vector<16x2x256xf32> to vector<16x256xf32>
    %72 = vector.shape_cast %71 : vector<16x256xf32> to vector<2x8x256xf32>
    %cst_41 = arith.constant 0.000000e+00 : bf16
    %73 = vector.broadcast %cst_41 : bf16 to vector<2x1x256xbf16>
    %c0_42 = arith.constant 0 : index
    %c15_43 = arith.constant 15 : index
    %c0_44 = arith.constant 0 : index
    %74 = vector.load %arg21[%c0_42, %c15_43, %c0_44] : memref<2x40x256xbf16, #tpu.memory_space<vmem>>, vector<2x1x256xbf16>
    tpu.vector_store %arg21[%c0_42, %c15_43, %c0_44], %73 {strides = array<i32>} : memref<2x40x256xbf16, #tpu.memory_space<vmem>>, vector<2x1x256xbf16>,
    %cst_45 = arith.constant 0.000000e+00 : bf16
    %75 = vector.broadcast %cst_45 : bf16 to vector<2x1x256xbf16>
    %c0_46 = arith.constant 0 : index
    %c24 = arith.constant 24 : index
    %c0_47 = arith.constant 0 : index
    %76 = vector.load %arg21[%c0_46, %c24, %c0_47] : memref<2x40x256xbf16, #tpu.memory_space<vmem>>, vector<2x1x256xbf16>
    tpu.vector_store %arg21[%c0_46, %c24, %c0_47], %75 {strides = array<i32>} : memref<2x40x256xbf16, #tpu.memory_space<vmem>>, vector<2x1x256xbf16>,
    %77 = arith.truncf %72 : vector<2x8x256xf32> to vector<2x8x256xbf16>
    %c0_48 = arith.constant 0 : index
    %c16_49 = arith.constant 16 : index
    %c0_50 = arith.constant 0 : index
    %78 = vector.load %arg21[%c0_48, %c16_49, %c0_50] : memref<2x40x256xbf16, #tpu.memory_space<vmem>>, vector<2x8x256xbf16>
    tpu.vector_store %arg21[%c0_48, %c16_49, %c0_50], %77 {strides = array<i32>} : memref<2x40x256xbf16, #tpu.memory_space<vmem>>, vector<2x8x256xbf16>,
    %c0_51 = arith.constant 0 : index
    %c15_52 = arith.constant 15 : index
    %c0_53 = arith.constant 0 : index
    %79 = vector.load %arg21[%c0_51, %c15_52, %c0_53] : memref<2x40x256xbf16, #tpu.memory_space<vmem>>, vector<2x8x256xbf16>
    %80 = vector.shape_cast %79 : vector<2x8x256xbf16> to vector<16x256xbf16>
    %c0_54 = arith.constant 0 : index
    %c0_55 = arith.constant 0 : index
    %81 = vector.load %arg9[%c0_54, %c0_55] : memref<768x512xbf16, #tpu.memory_space<vmem>>, vector<256x512xbf16>
    %cst_56 = arith.constant dense<0.000000e+00> : vector<16x512xf32>
    %82 = tpu.matmul %80, %81, %cst_56 {dimension_numbers = #tpu.dot_dimension_numbers<[1], [0], [0], [1], [0, 0, 1, 1], [], []>} : vector<16x256xbf16>, vector<256x512xbf16>, vector<16x512xf32> -> vector<16x512xf32>
    %c0_57 = arith.constant 0 : index
    %c16_58 = arith.constant 16 : index
    %c0_59 = arith.constant 0 : index
    %83 = vector.load %arg21[%c0_57, %c16_58, %c0_59] : memref<2x40x256xbf16, #tpu.memory_space<vmem>>, vector<2x8x256xbf16>
    %84 = vector.shape_cast %83 : vector<2x8x256xbf16> to vector<16x256xbf16>
    %c256_60 = arith.constant 256 : index
    %c0_61 = arith.constant 0 : index
    %85 = vector.load %arg9[%c256_60, %c0_61] : memref<768x512xbf16, #tpu.memory_space<vmem>>, vector<256x512xbf16>
    %cst_62 = arith.constant dense<0.000000e+00> : vector<16x512xf32>
    %86 = tpu.matmul %84, %85, %cst_62 {dimension_numbers = #tpu.dot_dimension_numbers<[1], [0], [0], [1], [0, 0, 1, 1], [], []>} : vector<16x256xbf16>, vector<256x512xbf16>, vector<16x512xf32> -> vector<16x512xf32>
    %87 = arith.addf %82, %86 : vector<16x512xf32>
    %c0_63 = arith.constant 0 : index
    %c17_64 = arith.constant 17 : index
    %c0_65 = arith.constant 0 : index
    %88 = vector.load %arg21[%c0_63, %c17_64, %c0_65] : memref<2x40x256xbf16, #tpu.memory_space<vmem>>, vector<2x8x256xbf16>
    %89 = vector.shape_cast %88 : vector<2x8x256xbf16> to vector<16x256xbf16>
    %c512 = arith.constant 512 : index
    %c0_66 = arith.constant 0 : index
    %90 = vector.load %arg9[%c512, %c0_66] : memref<768x512xbf16, #tpu.memory_space<vmem>>, vector<256x512xbf16>
    %cst_67 = arith.constant dense<0.000000e+00> : vector<16x512xf32>
    %91 = tpu.matmul %89, %90, %cst_67 {dimension_numbers = #tpu.dot_dimension_numbers<[1], [0], [0], [1], [0, 0, 1, 1], [], []>} : vector<16x256xbf16>, vector<256x512xbf16>, vector<16x512xf32> -> vector<16x512xf32>
    %92 = arith.addf %87, %91 : vector<16x512xf32>
    %c0_68 = arith.constant 0 : index
    %c0_69 = arith.constant 0 : index
    %93 = vector.load %arg10[%c0_68, %c0_69] : memref<1x512xf32, #tpu.memory_space<vmem>>, vector<1x512xf32>
    %c0_70 = arith.constant 0 : index
    %c0_71 = arith.constant 0 : index
    %94 = vector.load %arg11[%c0_70, %c0_71] : memref<1x512xf32, #tpu.memory_space<vmem>>, vector<1x512xf32>
    %c0_72 = arith.constant 0 : index
    %c0_73 = arith.constant 0 : index
    %95 = vector.load %arg12[%c0_72, %c0_73] : memref<1x512xf32, #tpu.memory_space<vmem>>, vector<1x512xf32>
    %96 = vector.broadcast %93 : vector<1x512xf32> to vector<16x512xf32>
    %97 = arith.addf %92, %96 : vector<16x512xf32>
    %cst_74 = arith.constant 0.000000e+00 : f32
    %98 = vector.broadcast %cst_74 : f32 to vector<16x512xf32>
    %99 = arith.maximumf %97, %98 : vector<16x512xf32>
    %100 = vector.broadcast %94 : vector<1x512xf32> to vector<16x512xf32>
    %101 = arith.mulf %99, %100 : vector<16x512xf32>
    %102 = vector.broadcast %95 : vector<1x512xf32> to vector<16x512xf32>
    %103 = arith.addf %101, %102 : vector<16x512xf32>
    %104 = vector.shape_cast %103 : vector<16x512xf32> to vector<8x2x512xf32>
    %cst_75 = arith.constant dense<0xFF800000> : vector<8x512xf32>
    %105 = vector.multi_reduction <maximumf>, %104, %cst_75 [1] : vector<8x2x512xf32> to vector<8x512xf32>
    %106 = vector.shape_cast %105 : vector<8x512xf32> to vector<2x4x512xf32>
    %107 = vector.shape_cast %106 : vector<2x4x512xf32> to vector<2x2048xf32>
    %108 = arith.truncf %107 : vector<2x2048xf32> to vector<2x2048xbf16>
    %c0_i32_76 = arith.constant 0 : i32
    %109 = tpu.memref_slice %arg25[%c0_i32_76] : memref<3x!tpu.dma_semaphore, #tpu.memory_space<semaphore_mem>> -> memref<1x!tpu.dma_semaphore, #tpu.memory_space<semaphore_mem>>
    %110 = tpu.memref_squeeze %109 : memref<1x!tpu.dma_semaphore, #tpu.memory_space<semaphore_mem>> -> memref<!tpu.dma_semaphore, #tpu.memory_space<semaphore_mem>>
    tpu.wait_dma2 semaphore(%110 : memref<!tpu.dma_semaphore, #tpu.memory_space<semaphore_mem>>) src(%arg13 : memref<2048x1024xbf16, #tpu.memory_space<any>>) dst(%arg22 : memref<2048x1024xbf16, #tpu.memory_space<vmem>>)
    %c0_77 = arith.constant 0 : index
    %c0_78 = arith.constant 0 : index
    %111 = vector.load %arg22[%c0_77, %c0_78] : memref<2048x1024xbf16, #tpu.memory_space<vmem>>, vector<2048x1024xbf16>
    %cst_79 = arith.constant dense<0.000000e+00> : vector<2x1024xf32>
    %112 = tpu.matmul %108, %111, %cst_79 {dimension_numbers = #tpu.dot_dimension_numbers<[1], [0], [0], [1], [0, 0, 1, 1], [], []>} : vector<2x2048xbf16>, vector<2048x1024xbf16>, vector<2x1024xf32> -> vector<2x1024xf32>
    %c0_80 = arith.constant 0 : index
    %c0_81 = arith.constant 0 : index
    %113 = vector.load %arg16[%c0_80, %c0_81] : memref<1x1024xf32, #tpu.memory_space<vmem>>, vector<1x1024xf32>
    %114 = vector.broadcast %113 : vector<1x1024xf32> to vector<2x1024xf32>
    %115 = arith.addf %112, %114 : vector<2x1024xf32>
    %cst_82 = arith.constant 0.000000e+00 : f32
    %116 = vector.broadcast %cst_82 : f32 to vector<2x1024xf32>
    %117 = arith.maximumf %115, %116 : vector<2x1024xf32>
    %c1_i32_83 = arith.constant 1 : i32
    %118 = tpu.memref_slice %arg25[%c1_i32_83] : memref<3x!tpu.dma_semaphore, #tpu.memory_space<semaphore_mem>> -> memref<1x!tpu.dma_semaphore, #tpu.memory_space<semaphore_mem>>
    %119 = tpu.memref_squeeze %118 : memref<1x!tpu.dma_semaphore, #tpu.memory_space<semaphore_mem>> -> memref<!tpu.dma_semaphore, #tpu.memory_space<semaphore_mem>>
    tpu.wait_dma2 semaphore(%119 : memref<!tpu.dma_semaphore, #tpu.memory_space<semaphore_mem>>) src(%arg14 : memref<1024x512xbf16, #tpu.memory_space<any>>) dst(%arg23 : memref<1024x512xbf16, #tpu.memory_space<vmem>>)
    %120 = arith.truncf %117 : vector<2x1024xf32> to vector<2x1024xbf16>
    %c0_84 = arith.constant 0 : index
    %c0_85 = arith.constant 0 : index
    %121 = vector.load %arg23[%c0_84, %c0_85] : memref<1024x512xbf16, #tpu.memory_space<vmem>>, vector<1024x512xbf16>
    %cst_86 = arith.constant dense<0.000000e+00> : vector<2x512xf32>
    %122 = tpu.matmul %120, %121, %cst_86 {dimension_numbers = #tpu.dot_dimension_numbers<[1], [0], [0], [1], [0, 0, 1, 1], [], []>} : vector<2x1024xbf16>, vector<1024x512xbf16>, vector<2x512xf32> -> vector<2x512xf32>
    %c0_87 = arith.constant 0 : index
    %c0_88 = arith.constant 0 : index
    %123 = vector.load %arg17[%c0_87, %c0_88] : memref<1x512xf32, #tpu.memory_space<vmem>>, vector<1x512xf32>
    %124 = vector.broadcast %123 : vector<1x512xf32> to vector<2x512xf32>
    %125 = arith.addf %122, %124 : vector<2x512xf32>
    %cst_89 = arith.constant 0.000000e+00 : f32
    %126 = vector.broadcast %cst_89 : f32 to vector<2x512xf32>
    %127 = arith.maximumf %125, %126 : vector<2x512xf32>
    %c2_i32_90 = arith.constant 2 : i32
    %128 = tpu.memref_slice %arg25[%c2_i32_90] : memref<3x!tpu.dma_semaphore, #tpu.memory_space<semaphore_mem>> -> memref<1x!tpu.dma_semaphore, #tpu.memory_space<semaphore_mem>>
    %129 = tpu.memref_squeeze %128 : memref<1x!tpu.dma_semaphore, #tpu.memory_space<semaphore_mem>> -> memref<!tpu.dma_semaphore, #tpu.memory_space<semaphore_mem>>
    tpu.wait_dma2 semaphore(%129 : memref<!tpu.dma_semaphore, #tpu.memory_space<semaphore_mem>>) src(%arg15 : memref<512x128xbf16, #tpu.memory_space<any>>) dst(%arg24 : memref<512x128xbf16, #tpu.memory_space<vmem>>)
    %130 = arith.truncf %127 : vector<2x512xf32> to vector<2x512xbf16>
    %c0_91 = arith.constant 0 : index
    %c0_92 = arith.constant 0 : index
    %131 = vector.load %arg24[%c0_91, %c0_92] : memref<512x128xbf16, #tpu.memory_space<vmem>>, vector<512x128xbf16>
    %cst_93 = arith.constant dense<0.000000e+00> : vector<2x128xf32>
    %132 = tpu.matmul %130, %131, %cst_93 {dimension_numbers = #tpu.dot_dimension_numbers<[1], [0], [0], [1], [0, 0, 1, 1], [], []>} : vector<2x512xbf16>, vector<512x128xbf16>, vector<2x128xf32> -> vector<2x128xf32>
    %c0_94 = arith.constant 0 : index
    %c0_95 = arith.constant 0 : index
    %133 = vector.load %arg18[%c0_94, %c0_95] : memref<1x128xf32, #tpu.memory_space<vmem>>, vector<1x128xf32>
    %134 = vector.broadcast %133 : vector<1x128xf32> to vector<2x128xf32>
    %135 = arith.addf %132, %134 : vector<2x128xf32>
    %c0_96 = arith.constant 0 : index
    %c0_97 = arith.constant 0 : index
    %136 = vector.load %arg19[%c0_96, %c0_97] : memref<2x128xf32, #tpu.memory_space<vmem>>, vector<2x128xf32>
    tpu.vector_store %arg19[%c0_96, %c0_97], %135 {strides = array<i32>} : memref<2x128xf32, #tpu.memory_space<vmem>>, vector<2x128xf32>,
    return
  }
}

</mosaic_0001>

<llo_original>
// kernel: combined_cyber_threat_cnn_forward.1
$region0: #{combined_cyber_threat_cnn_forward.1}
  #allocation0 [shape = 'u32[]', space=smem, size = 0x4, offset = 0x4, fixed_abs, tag = 'smem constant byte address 0x4 - core index']
  #allocation1 [shape = 'u32[144,128]{1,0:T(1,128)}', space=vmem, size = 0x12000, scoped, tag = 'internal scratch']
  #allocation2 [shape = 'bf16[2,48,128]{2,1,0:T(16,128)(2,1)}', space=vmem, size = 0x6000, scoped, tag = 'scratch operand']
  #allocation3 [shape = 'bf16[2,40,256]{2,1,0:T(8,128)(2,1)}', space=vmem, size = 0xa000, scoped, tag = 'scratch operand']
  #allocation4 [shape = 'bf16[2048,1024]{1,0:T(16,128)(2,1)}', space=vmem, size = 0x400000, scoped, tag = 'scratch operand']
  #allocation5 [shape = 'bf16[1024,512]{1,0:T(16,128)(2,1)}', space=vmem, size = 0x100000, scoped, tag = 'scratch operand']
  #allocation6 [shape = 'bf16[512,128]{1,0:T(16,128)(2,1)}', space=vmem, size = 0x20000, scoped, tag = 'scratch operand']
  #allocation7 [shape = 's32[3]{0}', space=sflag, size = 0xc, scoped, tag = 'scratch operand']
  #allocation32 [shape = 's32[]', space=sflag, size = 0x4, offset = 0, fixed_abs, tag = 'sflag constant byte address 0x0 - dummy sync flag']
  #allocation34 [shape = 's32[]', space=sflag, size = 0x4, offset = 0, fixed_abs, tag = 'sflag constant byte address 0x0 - dummy sync flag']
  #allocation36 [shape = 's32[]', space=sflag, size = 0x4, offset = 0, fixed_abs, tag = 'sflag constant byte address 0x0 - dummy sync flag']
  #allocation37 [shape = 's32[]', space=sflag, size = 0x4, offset = 0, fixed_abs, tag = 'sflag constant byte address 0x0 - dummy sync flag']
  #allocation38 [shape = 'u32[]', space=smem, size = 0x4, offset = 0x44, fixed_abs, tag = 'smem constant byte address 0x44 - assertion arg 0']
  #allocation39 [shape = 'u32[]', space=smem, size = 0x4, offset = 0x48, fixed_abs, tag = 'smem constant byte address 0x48 - assertion arg 1']
  %s0 = inlined_call_operand.vmem [shape: f32[64,3], index: 0, kind: input, shape index: {}]
  %s1 = inlined_call_operand.hbm [shape: f32[3,128], index: 1, kind: input, shape index: {}]
  %s2 = inlined_call_operand.hbm [shape: f32[1,128], index: 2, kind: input, shape index: {}]
  %s3 = inlined_call_operand.hbm [shape: f32[1,128], index: 3, kind: input, shape index: {}]
  %s4 = inlined_call_operand.hbm [shape: f32[1,128], index: 4, kind: input, shape index: {}]
  %s5 = inlined_call_operand.hbm [shape: bf16[384,256], index: 5, kind: input, shape index: {}]
  %s6 = inlined_call_operand.hbm [shape: f32[1,256], index: 6, kind: input, shape index: {}]
  %s7 = inlined_call_operand.hbm [shape: f32[1,256], index: 7, kind: input, shape index: {}]
  %s8 = inlined_call_operand.hbm [shape: f32[1,256], index: 8, kind: input, shape index: {}]
  %s9 = inlined_call_operand.hbm [shape: bf16[768,512], index: 9, kind: input, shape index: {}]
  %s10 = inlined_call_operand.hbm [shape: f32[1,512], index: 10, kind: input, shape index: {}]
  %s11 = inlined_call_operand.hbm [shape: f32[1,512], index: 11, kind: input, shape index: {}]
  %s12 = inlined_call_operand.hbm [shape: f32[1,512], index: 12, kind: input, shape index: {}]
  %s13 = inlined_call_operand.hbm [shape: bf16[2048,1024], index: 13, kind: input, shape index: {}]
  %s14 = inlined_call_operand.hbm [shape: bf16[1024,512], index: 14, kind: input, shape index: {}]
  %s15 = inlined_call_operand.hbm [shape: bf16[512,128], index: 15, kind: input, shape index: {}]
  %s16 = inlined_call_operand.hbm [shape: f32[1,1024], index: 16, kind: input, shape index: {}]
  %s17 = inlined_call_operand.hbm [shape: f32[1,512], index: 17, kind: input, shape index: {}]
  %s18 = inlined_call_operand.vmem [shape: f32[1,128], index: 18, kind: input, shape index: {}]
  %s19 = inlined_call_operand.hbm [shape: f32[2,128], index: 19, kind: output, shape index: {}]
  %s20 = sld [smem:[#allocation0]]
  $region134: #{combined_cyber_threat_cnn_forward.1} parent=0
    _
  %s22 = ssub.s32 1, %s20
  %s23 = scalar_select 0, %s22, %s20
  $region1: #{combined_cyber_threat_cnn_forward.1} parent=0
    #allocation8 [shape = 'u8[2048]{0}', space=vmem, size = 0x800, scoped, tag = 'input window, operand 1, single buffered']
    #allocation9 [shape = 's32[1]{0}', space=sflag, size = 0x4, scoped, tag = 'scoped memory for combined_cyber_threat_cnn_forward.1']
    #allocation10 [shape = 's32[1]{0}', space=sflag, size = 0x4, scoped, tag = 'scoped memory for combined_cyber_threat_cnn_forward.1']
    #allocation11 [shape = 'u8[512]{0}', space=vmem, size = 0x400, scoped, tag = 'input window, operand 2, single buffered']
    #allocation12 [shape = 's32[1]{0}', space=sflag, size = 0x4, scoped, tag = 'scoped memory for combined_cyber_threat_cnn_forward.1']
    #allocation13 [shape = 'u8[512]{0}', space=vmem, size = 0x400, scoped, tag = 'input window, operand 3, single buffered']
    #allocation14 [shape = 'u8[512]{0}', space=vmem, size = 0x400, scoped, tag = 'input window, operand 4, single buffered']
    #allocation15 [shape = 's32[1]{0}', space=sflag, size = 0x4, scoped, tag = 'scoped memory for combined_cyber_threat_cnn_forward.1']
    #allocation16 [shape = 'u8[196608]{0}', space=vmem, size = 0x30000, scoped, tag = 'input window, operand 5, single buffered']
    #allocation17 [shape = 'u8[1024]{0}', space=vmem, size = 0x400, scoped, tag = 'input window, operand 6, single buffered']
    #allocation18 [shape = 's32[1]{0}', space=sflag, size = 0x4, scoped, tag = 'scoped memory for combined_cyber_threat_cnn_forward.1']
    #allocation19 [shape = 'u8[1024]{0}', space=vmem, size = 0x400, scoped, tag = 'input window, operand 7, single buffered']
    #allocation20 [shape = 'u8[1024]{0}', space=vmem, size = 0x400, scoped, tag = 'input window, operand 8, single buffered']
    #allocation21 [shape = 's32[1]{0}', space=sflag, size = 0x4, scoped, tag = 'scoped memory for combined_cyber_threat_cnn_forward.1']
    #allocation22 [shape = 'u8[786432]{0}', space=vmem, size = 0xc0000, scoped, tag = 'input window, operand 9, single buffered']
    #allocation23 [shape = 'u8[2048]{0}', space=vmem, size = 0x800, scoped, tag = 'input window, operand 10, single buffered']
    #allocation24 [shape = 's32[1]{0}', space=sflag, size = 0x4, scoped, tag = 'scoped memory for combined_cyber_threat_cnn_forward.1']
    #allocation25 [shape = 'u8[2048]{0}', space=vmem, size = 0x800, scoped, tag = 'input window, operand 11, single buffered']
    #allocation26 [shape = 'u8[2048]{0}', space=vmem, size = 0x800, scoped, tag = 'input window, operand 12, single buffered']
    #allocation27 [shape = 's32[1]{0}', space=sflag, size = 0x4, scoped, tag = 'scoped memory for combined_cyber_threat_cnn_forward.1']
    #allocation28 [shape = 'u8[4096]{0}', space=vmem, size = 0x1000, scoped, tag = 'input window, operand 16, single buffered']
    #allocation29 [shape = 'u8[2048]{0}', space=vmem, size = 0x800, scoped, tag = 'input window, operand 17, single buffered']
    #allocation30 [shape = 's32[1]{0}', space=sflag, size = 0x4, scoped, tag = 'scoped memory for combined_cyber_threat_cnn_forward.1']
    #allocation31 [shape = 'u8[1024]{0}', space=vmem, size = 0x400, scoped, tag = 'output window, operand 0, single buffered']
    #allocation33 [shape = 'u32[9]{0}', space=smem, size = 0x24, scoped, tag = 'DMA stride descriptor']
    #allocation35 [shape = 'u32[9]{0}', space=smem, size = 0x24, scoped, tag = 'DMA stride descriptor']
    %24 = vsyncpa [#allocation9], 0
    %25 = vsyncpa [#allocation12], 0
    %26 = vsyncpa [#allocation15], 0
    %27 = vsyncpa [#allocation18], 0
    %28 = vsyncpa [#allocation21], 0
    %29 = vsyncpa [#allocation24], 0
    %30 = vsyncpa [#allocation27], 0
    %31 = vsyncpa [#allocation30], 0
    %32 = vsyncpa [#allocation10], 0
    // Predicated region
    $region2: #{combined_cyber_threat_cnn_forward.1} parent=1 // pred_check
      _
    $region3: #{combined_cyber_threat_cnn_forward.1} parent=1 // pred_check_branch
      %34 = sbr.rel (0) target = $region5
    $region4: #{combined_cyber_threat_cnn_forward.1} parent=1 // pred_region
      _
    $region5: #{combined_cyber_threat_cnn_forward.1} parent=1 // pred_fallthru
      _
    // Predicated region
    $region6: #{combined_cyber_threat_cnn_forward.1} parent=1 // pred_check
      _
    $region7: #{combined_cyber_threat_cnn_forward.1} parent=1 // pred_check_branch
      %36 = sbr.rel (0) target = $region9
    $region8: #{combined_cyber_threat_cnn_forward.1} parent=1 // pred_region
      %s38 = ssub.s32 64, 64
      %39 = vsyncadd [#allocation9], %s38
      %s41 = sshll.u32 [#allocation8], 4
      %s42 = int_to_ptr.vmem [resolvable:$true] %s41
      %44 = dma.hbm_to_vmem [thread:$0]  %s1, 64, %s42, [#allocation9]
    $region9: #{combined_cyber_threat_cnn_forward.1} parent=1 // pred_fallthru
      _
    // Predicated region
    $region10: #{combined_cyber_threat_cnn_forward.1} parent=1 // pred_check
      _
    $region11: #{combined_cyber_threat_cnn_forward.1} parent=1 // pred_check_branch
      %46 = sbr.rel (0) target = $region13
    $region12: #{combined_cyber_threat_cnn_forward.1} parent=1 // pred_region
      %s48 = ssub.s32 16, 16
      %49 = vsyncadd [#allocation12], %s48
      %s51 = sshll.u32 [#allocation11], 4
      %s52 = int_to_ptr.vmem [resolvable:$true] %s51
      %54 = dma.hbm_to_vmem [thread:$0]  %s2, 16, %s52, [#allocation12]
    $region13: #{combined_cyber_threat_cnn_forward.1} parent=1 // pred_fallthru
      _
    // Predicated region
    $region14: #{combined_cyber_threat_cnn_forward.1} parent=1 // pred_check
      _
    $region15: #{combined_cyber_threat_cnn_forward.1} parent=1 // pred_check_branch
      %56 = sbr.rel (0) target = $region17
    $region16: #{combined_cyber_threat_cnn_forward.1} parent=1 // pred_region
      %s58 = ssub.s32 16, 16
      %59 = vsyncadd [#allocation12], %s58
      %s61 = sshll.u32 [#allocation13], 4
      %s62 = int_to_ptr.vmem [resolvable:$true] %s61
      %64 = dma.hbm_to_vmem [thread:$0]  %s3, 16, %s62, [#allocation12]
    $region17: #{combined_cyber_threat_cnn_forward.1} parent=1 // pred_fallthru
      _
    // Predicated region
    $region18: #{combined_cyber_threat_cnn_forward.1} parent=1 // pred_check
      _
    $region19: #{combined_cyber_threat_cnn_forward.1} parent=1 // pred_check_branch
      %66 = sbr.rel (0) target = $region21
    $region20: #{combined_cyber_threat_cnn_forward.1} parent=1 // pred_region
      %s68 = ssub.s32 16, 16
      %69 = vsyncadd [#allocation15], %s68
      %s71 = sshll.u32 [#allocation14], 4
      %s72 = int_to_ptr.vmem [resolvable:$true] %s71
      %74 = dma.hbm_to_vmem [thread:$0]  %s4, 16, %s72, [#allocation15]
    $region21: #{combined_cyber_threat_cnn_forward.1} parent=1 // pred_fallthru
      _
    // Predicated region
    $region22: #{combined_cyber_threat_cnn_forward.1} parent=1 // pred_check
      _
    $region23: #{combined_cyber_threat_cnn_forward.1} parent=1 // pred_check_branch
      %76 = sbr.rel (0) target = $region25
    $region24: #{combined_cyber_threat_cnn_forward.1} parent=1 // pred_region
      %s78 = ssub.s32 6144, 6144
      %79 = vsyncadd [#allocation15], %s78
      %s80 = sshll.u32 [#allocation16], 4
      %s81 = int_to_ptr.vmem [resolvable:$true] %s80
      %86 = dma.hbm_to_vmem [thread:$0]  %s5, 6144, %s81, [#allocation15], 128, 128, 8
    $region25: #{combined_cyber_threat_cnn_forward.1} parent=1 // pred_fallthru
      _
    // Predicated region
    $region26: #{combined_cyber_threat_cnn_forward.1} parent=1 // pred_check
      _
    $region27: #{combined_cyber_threat_cnn_forward.1} parent=1 // pred_check_branch
      %88 = sbr.rel (0) target = $region29
    $region28: #{combined_cyber_threat_cnn_forward.1} parent=1 // pred_region
      %s90 = ssub.s32 32, 32
      %91 = vsyncadd [#allocation18], %s90
      %s93 = sshll.u32 [#allocation17], 4
      %s94 = int_to_ptr.vmem [resolvable:$true] %s93
      %96 = dma.hbm_to_vmem [thread:$0]  %s6, 32, %s94, [#allocation18]
    $region29: #{combined_cyber_threat_cnn_forward.1} parent=1 // pred_fallthru
      _
    // Predicated region
    $region30: #{combined_cyber_threat_cnn_forward.1} parent=1 // pred_check
      _
    $region31: #{combined_cyber_threat_cnn_forward.1} parent=1 // pred_check_branch
      %98 = sbr.rel (0) target = $region33
    $region32: #{combined_cyber_threat_cnn_forward.1} parent=1 // pred_region
      %s100 = ssub.s32 32, 32
      %101 = vsyncadd [#allocation18], %s100
      %s103 = sshll.u32 [#allocation19], 4
      %s104 = int_to_ptr.vmem [resolvable:$true] %s103
      %106 = dma.hbm_to_vmem [thread:$0]  %s7, 32, %s104, [#allocation18]
    $region33: #{combined_cyber_threat_cnn_forward.1} parent=1 // pred_fallthru
      _
    // Predicated region
    $region34: #{combined_cyber_threat_cnn_forward.1} parent=1 // pred_check
      _
    $region35: #{combined_cyber_threat_cnn_forward.1} parent=1 // pred_check_branch
      %108 = sbr.rel (0) target = $region37
    $region36: #{combined_cyber_threat_cnn_forward.1} parent=1 // pred_region
      %s110 = ssub.s32 32, 32
      %111 = vsyncadd [#allocation21], %s110
      %s113 = sshll.u32 [#allocation20], 4
      %s114 = int_to_ptr.vmem [resolvable:$true] %s113
      %116 = dma.hbm_to_vmem [thread:$0]  %s8, 32, %s114, [#allocation21]
    $region37: #{combined_cyber_threat_cnn_forward.1} parent=1 // pred_fallthru
      _
    // Predicated region
    $region38: #{combined_cyber_threat_cnn_forward.1} parent=1 // pred_check
      _
    $region39: #{combined_cyber_threat_cnn_forward.1} parent=1 // pred_check_branch
      %118 = sbr.rel (0) target = $region41
    $region40: #{combined_cyber_threat_cnn_forward.1} parent=1 // pred_region
      %s120 = ssub.s32 24576, 24576
      %121 = vsyncadd [#allocation21], %s120
      %s122 = sshll.u32 [#allocation22], 4
      %s123 = int_to_ptr.vmem [resolvable:$true] %s122
      %128 = dma.hbm_to_vmem [thread:$0]  %s9, 24576, %s123, [#allocation21], 256, 256, 16
    $region41: #{combined_cyber_threat_cnn_forward.1} parent=1 // pred_fallthru
      _
    // Predicated region
    $region42: #{combined_cyber_threat_cnn_forward.1} parent=1 // pred_check
      _
    $region43: #{combined_cyber_threat_cnn_forward.1} parent=1 // pred_check_branch
      %130 = sbr.rel (0) target = $region45
    $region44: #{combined_cyber_threat_cnn_forward.1} parent=1 // pred_region
      %s132 = ssub.s32 64, 64
      %133 = vsyncadd [#allocation24], %s132
      %s135 = sshll.u32 [#allocation23], 4
      %s136 = int_to_ptr.vmem [resolvable:$true] %s135
      %138 = dma.hbm_to_vmem [thread:$0]  %s10, 64, %s136, [#allocation24]
    $region45: #{combined_cyber_threat_cnn_forward.1} parent=1 // pred_fallthru
      _
    // Predicated region
    $region46: #{combined_cyber_threat_cnn_forward.1} parent=1 // pred_check
      _
    $region47: #{combined_cyber_threat_cnn_forward.1} parent=1 // pred_check_branch
      %140 = sbr.rel (0) target = $region49
    $region48: #{combined_cyber_threat_cnn_forward.1} parent=1 // pred_region
      %s142 = ssub.s32 64, 64
      %143 = vsyncadd [#allocation24], %s142
      %s145 = sshll.u32 [#allocation25], 4
      %s146 = int_to_ptr.vmem [resolvable:$true] %s145
      %148 = dma.hbm_to_vmem [thread:$0]  %s11, 64, %s146, [#allocation24]
    $region49: #{combined_cyber_threat_cnn_forward.1} parent=1 // pred_fallthru
      _
    // Predicated region
    $region50: #{combined_cyber_threat_cnn_forward.1} parent=1 // pred_check
      _
    $region51: #{combined_cyber_threat_cnn_forward.1} parent=1 // pred_check_branch
      %150 = sbr.rel (0) target = $region53
    $region52: #{combined_cyber_threat_cnn_forward.1} parent=1 // pred_region
      %s152 = ssub.s32 64, 64
      %153 = vsyncadd [#allocation27], %s152
      %s155 = sshll.u32 [#allocation26], 4
      %s156 = int_to_ptr.vmem [resolvable:$true] %s155
      %158 = dma.hbm_to_vmem [thread:$0]  %s12, 64, %s156, [#allocation27]
    $region53: #{combined_cyber_threat_cnn_forward.1} parent=1 // pred_fallthru
      _
    // Predicated region
    $region54: #{combined_cyber_threat_cnn_forward.1} parent=1 // pred_check
      _
    $region55: #{combined_cyber_threat_cnn_forward.1} parent=1 // pred_check_branch
      %160 = sbr.rel (0) target = $region57
    $region56: #{combined_cyber_threat_cnn_forward.1} parent=1 // pred_region
      %s162 = ssub.s32 128, 128
      %163 = vsyncadd [#allocation27], %s162
      %s165 = sshll.u32 [#allocation28], 4
      %s166 = int_to_ptr.vmem [resolvable:$true] %s165
      %168 = dma.hbm_to_vmem [thread:$0]  %s16, 128, %s166, [#allocation27]
    $region57: #{combined_cyber_threat_cnn_forward.1} parent=1 // pred_fallthru
      _
    // Predicated region
    $region58: #{combined_cyber_threat_cnn_forward.1} parent=1 // pred_check
      _
    $region59: #{combined_cyber_threat_cnn_forward.1} parent=1 // pred_check_branch
      %170 = sbr.rel (0) target = $region61
    $region60: #{combined_cyber_threat_cnn_forward.1} parent=1 // pred_region
      %s172 = ssub.s32 64, 64
      %173 = vsyncadd [#allocation30], %s172
      %s175 = sshll.u32 [#allocation29], 4
      %s176 = int_to_ptr.vmem [resolvable:$true] %s175
      %178 = dma.hbm_to_vmem [thread:$0]  %s17, 64, %s176, [#allocation30]
    $region61: #{combined_cyber_threat_cnn_forward.1} parent=1 // pred_fallthru
      _
    // Predicated region
    $region62: #{combined_cyber_threat_cnn_forward.1} parent=1 // pred_check
      _
    $region63: #{combined_cyber_threat_cnn_forward.1} parent=1 // pred_check_branch
      %180 = sbr.rel (0) target = $region65
    $region64: #{combined_cyber_threat_cnn_forward.1} parent=1 // pred_region
      _
    $region65: #{combined_cyber_threat_cnn_forward.1} parent=1 // pred_fallthru
      _
    // Predicated region
    $region66: #{combined_cyber_threat_cnn_forward.1} parent=1 // pred_check
      _
    $region67: #{combined_cyber_threat_cnn_forward.1} parent=1 // pred_check_branch
      %182 = sbr.rel (0) target = $region69
    $region68: #{combined_cyber_threat_cnn_forward.1} parent=1 // pred_region
      %183 = dma.done [#allocation9], 64
    $region69: #{combined_cyber_threat_cnn_forward.1} parent=1 // pred_fallthru
      _
    // Predicated region
    $region70: #{combined_cyber_threat_cnn_forward.1} parent=1 // pred_check
      _
    $region71: #{combined_cyber_threat_cnn_forward.1} parent=1 // pred_check_branch
      %185 = sbr.rel (0) target = $region73
    $region72: #{combined_cyber_threat_cnn_forward.1} parent=1 // pred_region
      %186 = dma.done [#allocation12], 16
    $region73: #{combined_cyber_threat_cnn_forward.1} parent=1 // pred_fallthru
      _
    // Predicated region
    $region74: #{combined_cyber_threat_cnn_forward.1} parent=1 // pred_check
      _
    $region75: #{combined_cyber_threat_cnn_forward.1} parent=1 // pred_check_branch
      %188 = sbr.rel (0) target = $region77
    $region76: #{combined_cyber_threat_cnn_forward.1} parent=1 // pred_region
      %189 = dma.done [#allocation12], 16
    $region77: #{combined_cyber_threat_cnn_forward.1} parent=1 // pred_fallthru
      _
    // Predicated region
    $region78: #{combined_cyber_threat_cnn_forward.1} parent=1 // pred_check
      _
    $region79: #{combined_cyber_threat_cnn_forward.1} parent=1 // pred_check_branch
      %191 = sbr.rel (0) target = $region81
    $region80: #{combined_cyber_threat_cnn_forward.1} parent=1 // pred_region
      %192 = dma.done [#allocation15], 16
    $region81: #{combined_cyber_threat_cnn_forward.1} parent=1 // pred_fallthru
      _
    // Predicated region
    $region82: #{combined_cyber_threat_cnn_forward.1} parent=1 // pred_check
      _
    $region83: #{combined_cyber_threat_cnn_forward.1} parent=1 // pred_check_branch
      %194 = sbr.rel (0) target = $region85
    $region84: #{combined_cyber_threat_cnn_forward.1} parent=1 // pred_region
      %195 = dma.done [#allocation15], 6144
    $region85: #{combined_cyber_threat_cnn_forward.1} parent=1 // pred_fallthru
      _
    // Predicated region
    $region86: #{combined_cyber_threat_cnn_forward.1} parent=1 // pred_check
      _
    $region87: #{combined_cyber_threat_cnn_forward.1} parent=1 // pred_check_branch
      %197 = sbr.rel (0) target = $region89
    $region88: #{combined_cyber_threat_cnn_forward.1} parent=1 // pred_region
      %198 = dma.done [#allocation18], 32
    $region89: #{combined_cyber_threat_cnn_forward.1} parent=1 // pred_fallthru
      _
    // Predicated region
    $region90: #{combined_cyber_threat_cnn_forward.1} parent=1 // pred_check
      _
    $region91: #{combined_cyber_threat_cnn_forward.1} parent=1 // pred_check_branch
      %200 = sbr.rel (0) target = $region93
    $region92: #{combined_cyber_threat_cnn_forward.1} parent=1 // pred_region
      %201 = dma.done [#allocation18], 32
    $region93: #{combined_cyber_threat_cnn_forward.1} parent=1 // pred_fallthru
      _
    // Predicated region
    $region94: #{combined_cyber_threat_cnn_forward.1} parent=1 // pred_check
      _
    $region95: #{combined_cyber_threat_cnn_forward.1} parent=1 // pred_check_branch
      %203 = sbr.rel (0) target = $region97
    $region96: #{combined_cyber_threat_cnn_forward.1} parent=1 // pred_region
      %204 = dma.done [#allocation21], 32
    $region97: #{combined_cyber_threat_cnn_forward.1} parent=1 // pred_fallthru
      _
    // Predicated region
    $region98: #{combined_cyber_threat_cnn_forward.1} parent=1 // pred_check
      _
    $region99: #{combined_cyber_threat_cnn_forward.1} parent=1 // pred_check_branch
      %206 = sbr.rel (0) target = $region101
    $region100: #{combined_cyber_threat_cnn_forward.1} parent=1 // pred_region
      %207 = dma.done [#allocation21], 24576
    $region101: #{combined_cyber_threat_cnn_forward.1} parent=1 // pred_fallthru
      _
    // Predicated region
    $region102: #{combined_cyber_threat_cnn_forward.1} parent=1 // pred_check
      _
    $region103: #{combined_cyber_threat_cnn_forward.1} parent=1 // pred_check_branch
      %209 = sbr.rel (0) target = $region105
    $region104: #{combined_cyber_threat_cnn_forward.1} parent=1 // pred_region
      %210 = dma.done [#allocation24], 64
    $region105: #{combined_cyber_threat_cnn_forward.1} parent=1 // pred_fallthru
      _
    // Predicated region
    $region106: #{combined_cyber_threat_cnn_forward.1} parent=1 // pred_check
      _
    $region107: #{combined_cyber_threat_cnn_forward.1} parent=1 // pred_check_branch
      %212 = sbr.rel (0) target = $region109
    $region108: #{combined_cyber_threat_cnn_forward.1} parent=1 // pred_region
      %213 = dma.done [#allocation24], 64
    $region109: #{combined_cyber_threat_cnn_forward.1} parent=1 // pred_fallthru
      _
    // Predicated region
    $region110: #{combined_cyber_threat_cnn_forward.1} parent=1 // pred_check
      _
    $region111: #{combined_cyber_threat_cnn_forward.1} parent=1 // pred_check_branch
      %215 = sbr.rel (0) target = $region113
    $region112: #{combined_cyber_threat_cnn_forward.1} parent=1 // pred_region
      %216 = dma.done [#allocation27], 64
    $region113: #{combined_cyber_threat_cnn_forward.1} parent=1 // pred_fallthru
      _
    // Predicated region
    $region114: #{combined_cyber_threat_cnn_forward.1} parent=1 // pred_check
      _
    $region115: #{combined_cyber_threat_cnn_forward.1} parent=1 // pred_check_branch
      %218 = sbr.rel (0) target = $region117
    $region116: #{combined_cyber_threat_cnn_forward.1} parent=1 // pred_region
      %219 = dma.done [#allocation27], 128
    $region117: #{combined_cyber_threat_cnn_forward.1} parent=1 // pred_fallthru
      _
    // Predicated region
    $region118: #{combined_cyber_threat_cnn_forward.1} parent=1 // pred_check
      _
    $region119: #{combined_cyber_threat_cnn_forward.1} parent=1 // pred_check_branch
      %221 = sbr.rel (0) target = $region121
    $region120: #{combined_cyber_threat_cnn_forward.1} parent=1 // pred_region
      %222 = dma.done [#allocation30], 64
    $region121: #{combined_cyber_threat_cnn_forward.1} parent=1 // pred_fallthru
      _
    %s225 = sshll.u32 1, 14
    %s226 = sxor.u32 4294967295, %s225
    %s228 = sld [smem:[#allocation0]]
    %s229 = sadd.s32 2, %s228
    %s231 = sshll.u32 7, 26
    %s232 = sxor.u32 4294967295, %s231
    %s233 = sand.u32 0, %s232
    %s234 = sshll.u32 %s229, 26
    %s235 = sor.u32 %s233, %s234
    %s236 = sshll.u32 [#allocation4], 4
    %s237 = int_to_ptr.vmem [resolvable:$true] %s236
    %240 = sst [smem:[#allocation33]] 1024
    %s241 = scalar_lea.smem [#allocation33], 1
    %242 = sst [smem:[%s241]] 1024
    %s243 = scalar_lea.smem [#allocation33], 2
    %244 = sst [smem:[%s243]] 8
    %s245 = scalar_lea.smem [#allocation33], 3
    %246 = sst [smem:[%s245]] 64
    %s247 = scalar_lea.smem [#allocation33], 4
    %248 = sst [smem:[%s247]] 128
    %s249 = scalar_lea.smem [#allocation33], 5
    %250 = sst [smem:[%s249]] 2
    %s251 = scalar_lea.smem [#allocation33], 6
    %252 = sst [smem:[%s251]] 512
    %s253 = scalar_lea.smem [#allocation33], 7
    %254 = sst [smem:[%s253]] 64
    %s255 = scalar_lea.smem [#allocation33], 8
    %256 = sst [smem:[%s255]] 4
    %258 = dma.general %s13, 131072, %s237, [#allocation7], [#allocation32], [#allocation33], %s235, 0
    %s259 = scalar_lea.sflag [#allocation7], 1
    %s261 = sshll.u32 1, 14
    %s262 = sxor.u32 4294967295, %s261
    %s264 = sadd.s32 2, %s228
    %s266 = sshll.u32 7, 26
    %s267 = sxor.u32 4294967295, %s266
    %s268 = sand.u32 0, %s267
    %s269 = sshll.u32 %s264, 26
    %s270 = sor.u32 %s268, %s269
    %s271 = sshll.u32 [#allocation5], 4
    %s272 = int_to_ptr.vmem [resolvable:$true] %s271
    %275 = sst [smem:[#allocation35]] 512
    %s276 = scalar_lea.smem [#allocation35], 1
    %277 = sst [smem:[%s276]] 512
    %s278 = scalar_lea.smem [#allocation35], 2
    %279 = sst [smem:[%s278]] 4
    %s280 = scalar_lea.smem [#allocation35], 3
    %281 = sst [smem:[%s280]] 64
    %s282 = scalar_lea.smem [#allocation35], 4
    %283 = sst [smem:[%s282]] 128
    %s284 = scalar_lea.smem [#allocation35], 5
    %285 = sst [smem:[%s284]] 2
    %s286 = scalar_lea.smem [#allocation35], 6
    %287 = sst [smem:[%s286]] 256
    %s288 = scalar_lea.smem [#allocation35], 7
    %289 = sst [smem:[%s288]] 64
    %s290 = scalar_lea.smem [#allocation35], 8
    %291 = sst [smem:[%s290]] 4
    %293 = dma.general %s14, 32768, %s272, %s259, [#allocation34], [#allocation35], %s270, 0
    %s294 = scalar_lea.sflag [#allocation7], 2
    // Predicated region
    $region122: #{combined_cyber_threat_cnn_forward.1} parent=1 // pred_check
      _
    $region123: #{combined_cyber_threat_cnn_forward.1} parent=1 // pred_check_branch
      %296 = sbr.rel target = $region125
    $region124: #{combined_cyber_threat_cnn_forward.1} parent=1 // pred_region
      %297 = sst [smem:[#allocation38]] [#allocation37]
      %298 = sst [smem:[#allocation39]] [#allocation36]
    $region125: #{combined_cyber_threat_cnn_forward.1} parent=1 // pred_fallthru
      _
    %300 = shalt.err (0)
    %s302 = sshll.u32 [#allocation6], 4
    %s303 = int_to_ptr.vmem [resolvable:$true] %s302
    %305 = dma.hbm_to_vmem [thread:$0]  %s15, 4096, %s303, %s294
    %v306 = vld [vmem:[%s0] sm:$0xff]
    %v307 = vld [vmem:[%s0 + $0x8] sm:$0xff]
    %v308 = vld [vmem:[%s0 + $0x10] sm:$0xff]
    %v309 = vld [vmem:[%s0 + $0x18] sm:$0xff]
    %v310 = vld [vmem:[%s0 + $0x20] sm:$0xff]
    %v311 = vld [vmem:[%s0 + $0x28] sm:$0xff]
    %v312 = vld [vmem:[%s0 + $0x30] sm:$0xff]
    %v313 = vld [vmem:[%s0 + $0x38] sm:$0xff]
    %v314 = vld [vmem:[#allocation8] sm:$0x7]
    %316 = vset.pattern.permute.xlu0 0
    %317 = vperm.xlu0 %316, %v306
    %v318 = vpop.permute.xlu0 %317
    %321 = vset.pattern.permute.xlu0 0
    %322 = vperm.xlu0 %321, %v307
    %v323 = vpop.permute.xlu0 %322
    %326 = vset.pattern.permute.xlu0 0
    %327 = vperm.xlu0 %326, %v308
    %v328 = vpop.permute.xlu0 %327
    %331 = vset.pattern.permute.xlu0 0
    %332 = vperm.xlu0 %331, %v309
    %v333 = vpop.permute.xlu0 %332
    %336 = vset.pattern.permute.xlu0 0
    %337 = vperm.xlu0 %336, %v310
    %v338 = vpop.permute.xlu0 %337
    %341 = vset.pattern.permute.xlu0 0
    %342 = vperm.xlu0 %341, %v311
    %v343 = vpop.permute.xlu0 %342
    %346 = vset.pattern.permute.xlu0 0
    %347 = vperm.xlu0 %346, %v312
    %v348 = vpop.permute.xlu0 %347
    %351 = vset.pattern.permute.xlu0 0
    %352 = vperm.xlu0 %351, %v313
    %v353 = vpop.permute.xlu0 %352
    %v355 = vlaneseq
    %v356 = vshrl.u32 %v355, 7
    %v357 = vsub.s32 0, %v356
    %v358 = vrot.slane %v314, %v357
    %v359 = vmul.f32 %v318, %v358
    %v360 = vmul.f32 %v323, %v358
    %v361 = vmul.f32 %v328, %v358
    %v362 = vmul.f32 %v333, %v358
    %v363 = vmul.f32 %v338, %v358
    %v364 = vmul.f32 %v343, %v358
    %v365 = vmul.f32 %v348, %v358
    %v366 = vmul.f32 %v353, %v358
    %367 = vset.pattern.permute.xlu0 1
    %368 = vperm.xlu0 %367, %v306
    %v369 = vpop.permute.xlu0 %368
    %371 = vset.pattern.permute.xlu0 1
    %372 = vperm.xlu0 %371, %v307
    %v373 = vpop.permute.xlu0 %372
    %375 = vset.pattern.permute.xlu0 1
    %376 = vperm.xlu0 %375, %v308
    %v377 = vpop.permute.xlu0 %376
    %379 = vset.pattern.permute.xlu0 1
    %380 = vperm.xlu0 %379, %v309
    %v381 = vpop.permute.xlu0 %380
    %383 = vset.pattern.permute.xlu0 1
    %384 = vperm.xlu0 %383, %v310
    %v385 = vpop.permute.xlu0 %384
    %387 = vset.pattern.permute.xlu0 1
    %388 = vperm.xlu0 %387, %v311
    %v389 = vpop.permute.xlu0 %388
    %391 = vset.pattern.permute.xlu0 1
    %392 = vperm.xlu0 %391, %v312
    %v393 = vpop.permute.xlu0 %392
    %395 = vset.pattern.permute.xlu0 1
    %396 = vperm.xlu0 %395, %v313
    %v397 = vpop.permute.xlu0 %396
    %v399 = vlaneseq
    %v400 = vshrl.u32 %v399, 7
    %v401 = vsub.s32 1, %v400
    %v402 = vrot.slane %v314, %v401
    %v403 = vmul.f32 %v369, %v402
    %v404 = vmul.f32 %v373, %v402
    %v405 = vmul.f32 %v377, %v402
    %v406 = vmul.f32 %v381, %v402
    %v407 = vmul.f32 %v385, %v402
    %v408 = vmul.f32 %v389, %v402
    %v409 = vmul.f32 %v393, %v402
    %v410 = vmul.f32 %v397, %v402
    %v411 = vadd.f32 %v359, %v403
    %v412 = vadd.f32 %v360, %v404
    %v413 = vadd.f32 %v361, %v405
    %v414 = vadd.f32 %v362, %v406
    %v415 = vadd.f32 %v363, %v407
    %v416 = vadd.f32 %v364, %v408
    %v417 = vadd.f32 %v365, %v409
    %v418 = vadd.f32 %v366, %v410
    %419 = vset.pattern.permute.xlu0 2
    %420 = vperm.xlu0 %419, %v306
    %v421 = vpop.permute.xlu0 %420
    %423 = vset.pattern.permute.xlu0 2
    %424 = vperm.xlu0 %423, %v307
    %v425 = vpop.permute.xlu0 %424
    %427 = vset.pattern.permute.xlu0 2
    %428 = vperm.xlu0 %427, %v308
    %v429 = vpop.permute.xlu0 %428
    %431 = vset.pattern.permute.xlu0 2
    %432 = vperm.xlu0 %431, %v309
    %v433 = vpop.permute.xlu0 %432
    %435 = vset.pattern.permute.xlu0 2
    %436 = vperm.xlu0 %435, %v310
    %v437 = vpop.permute.xlu0 %436
    %439 = vset.pattern.permute.xlu0 2
    %440 = vperm.xlu0 %439, %v311
    %v441 = vpop.permute.xlu0 %440
    %443 = vset.pattern.permute.xlu0 2
    %444 = vperm.xlu0 %443, %v312
    %v445 = vpop.permute.xlu0 %444
    %447 = vset.pattern.permute.xlu0 2
    %448 = vperm.xlu0 %447, %v313
    %v449 = vpop.permute.xlu0 %448
    %v451 = vlaneseq
    %v452 = vshrl.u32 %v451, 7
    %v453 = vsub.s32 2, %v452
    %v454 = vrot.slane %v314, %v453
    %v455 = vmul.f32 %v421, %v454
    %v456 = vmul.f32 %v425, %v454
    %v457 = vmul.f32 %v429, %v454
    %v458 = vmul.f32 %v433, %v454
    %v459 = vmul.f32 %v437, %v454
    %v460 = vmul.f32 %v441, %v454
    %v461 = vmul.f32 %v445, %v454
    %v462 = vmul.f32 %v449, %v454
    %v463 = vadd.f32 %v411, %v455
    %v464 = vadd.f32 %v412, %v456
    %v465 = vadd.f32 %v413, %v457
    %v466 = vadd.f32 %v414, %v458
    %v467 = vadd.f32 %v415, %v459
    %v468 = vadd.f32 %v416, %v460
    %v469 = vadd.f32 %v417, %v461
    %v470 = vadd.f32 %v418, %v462
    %v471 = vld [vmem:[#allocation11] sm:$0x1]
    %v472 = vld [vmem:[#allocation13] sm:$0x1]
    %v473 = vld [vmem:[#allocation14] sm:$0x1]
    %v475 = vlaneseq
    %v476 = vshrl.u32 %v475, 7
    %v477 = vsub.s32 0, %v476
    %v478 = vrot.slane %v471, %v477
    %v480 = vadd.f32 %v463, %v478
    %v481 = vadd.f32 %v464, %v478
    %v482 = vadd.f32 %v465, %v478
    %v483 = vadd.f32 %v466, %v478
    %v484 = vadd.f32 %v467, %v478
    %v485 = vadd.f32 %v468, %v478
    %v486 = vadd.f32 %v469, %v478
    %v487 = vadd.f32 %v470, %v478
    %v488 = vmax.f32 %v480, 0.0
    %v489 = vmax.f32 %v481, 0.0
    %v490 = vmax.f32 %v482, 0.0
    %v491 = vmax.f32 %v483, 0.0
    %v492 = vmax.f32 %v484, 0.0
    %v493 = vmax.f32 %v485, 0.0
    %v494 = vmax.f32 %v486, 0.0
    %v495 = vmax.f32 %v487, 0.0
    %v497 = vlaneseq
    %v498 = vshrl.u32 %v497, 7
    %v499 = vsub.s32 0, %v498
    %v500 = vrot.slane %v472, %v499
    %v502 = vmul.f32 %v488, %v500
    %v503 = vmul.f32 %v489, %v500
    %v504 = vmul.f32 %v490, %v500
    %v505 = vmul.f32 %v491, %v500
    %v506 = vmul.f32 %v492, %v500
    %v507 = vmul.f32 %v493, %v500
    %v508 = vmul.f32 %v494, %v500
    %v509 = vmul.f32 %v495, %v500
    %v511 = vlaneseq
    %v512 = vshrl.u32 %v511, 7
    %v513 = vsub.s32 0, %v512
    %v514 = vrot.slane %v473, %v513
    %v516 = vadd.f32 %v502, %v514
    %v517 = vadd.f32 %v503, %v514
    %v518 = vadd.f32 %v504, %v514
    %v519 = vadd.f32 %v505, %v514
    %v520 = vadd.f32 %v506, %v514
    %v521 = vadd.f32 %v507, %v514
    %v522 = vadd.f32 %v508, %v514
    %v523 = vadd.f32 %v509, %v514
    %v532 = vcombine.high %v516, %v516
    %v534 = vunpack.c.l.s4 1983009808
    %v535 = vunpack.c.0.s8 %v534
    %v536 = vlaneseq
    %v537 = vshrl.u32 %v536, 7
    %v538 = vsub.s32 %v535, %v537
    %v539 = vrot.slane %v516, %v538
    %v541 = vunpack.c.l.s4 1983009808
    %v542 = vunpack.c.0.s8 %v541
    %v543 = vlaneseq
    %v544 = vshrl.u32 %v543, 7
    %v545 = vsub.s32 %v542, %v544
    %v546 = vrot.slane %v532, %v545
    %v547 = vcombine.high %v539, %v539
    %v548 = vcombine.high %v546, %v546
    %v549 = vcombine.high %v517, %v517
    %v551 = vunpack.c.l.s4 1983009808
    %v552 = vunpack.c.0.s8 %v551
    %v553 = vlaneseq
    %v554 = vshrl.u32 %v553, 7
    %v555 = vsub.s32 %v552, %v554
    %v556 = vrot.slane %v517, %v555
    %v558 = vunpack.c.l.s4 1983009808
    %v559 = vunpack.c.0.s8 %v558
    %v560 = vlaneseq
    %v561 = vshrl.u32 %v560, 7
    %v562 = vsub.s32 %v559, %v561
    %v563 = vrot.slane %v549, %v562
    %v564 = vcombine.high %v556, %v556
    %v565 = vcombine.high %v563, %v563
    %v566 = vcombine.high %v518, %v518
    %v568 = vunpack.c.l.s4 1983009808
    %v569 = vunpack.c.0.s8 %v568
    %v570 = vlaneseq
    %v571 = vshrl.u32 %v570, 7
    %v572 = vsub.s32 %v569, %v571
    %v573 = vrot.slane %v518, %v572
    %v575 = vunpack.c.l.s4 1983009808
    %v576 = vunpack.c.0.s8 %v575
    %v577 = vlaneseq
    %v578 = vshrl.u32 %v577, 7
    %v579 = vsub.s32 %v576, %v578
    %v580 = vrot.slane %v566, %v579
    %v581 = vcombine.high %v573, %v573
    %v582 = vcombine.high %v580, %v580
    %v583 = vcombine.high %v519, %v519
    %v585 = vunpack.c.l.s4 1983009808
    %v586 = vunpack.c.0.s8 %v585
    %v587 = vlaneseq
    %v588 = vshrl.u32 %v587, 7
    %v589 = vsub.s32 %v586, %v588
    %v590 = vrot.slane %v519, %v589
    %v592 = vunpack.c.l.s4 1983009808
    %v593 = vunpack.c.0.s8 %v592
    %v594 = vlaneseq
    %v595 = vshrl.u32 %v594, 7
    %v596 = vsub.s32 %v593, %v595
    %v597 = vrot.slane %v583, %v596
    %v598 = vcombine.high %v590, %v590
    %v599 = vcombine.high %v597, %v597
    %v600 = vcombine.high %v520, %v520
    %v602 = vunpack.c.l.s4 1983009808
    %v603 = vunpack.c.0.s8 %v602
    %v604 = vlaneseq
    %v605 = vshrl.u32 %v604, 7
    %v606 = vsub.s32 %v603, %v605
    %v607 = vrot.slane %v520, %v606
    %v609 = vunpack.c.l.s4 1983009808
    %v610 = vunpack.c.0.s8 %v609
    %v611 = vlaneseq
    %v612 = vshrl.u32 %v611, 7
    %v613 = vsub.s32 %v610, %v612
    %v614 = vrot.slane %v600, %v613
    %v615 = vcombine.high %v607, %v607
    %v616 = vcombine.high %v614, %v614
    %v617 = vcombine.high %v521, %v521
    %v619 = vunpack.c.l.s4 1983009808
    %v620 = vunpack.c.0.s8 %v619
    %v621 = vlaneseq
    %v622 = vshrl.u32 %v621, 7
    %v623 = vsub.s32 %v620, %v622
    %v624 = vrot.slane %v521, %v623
    %v626 = vunpack.c.l.s4 1983009808
    %v627 = vunpack.c.0.s8 %v626
    %v628 = vlaneseq
    %v629 = vshrl.u32 %v628, 7
    %v630 = vsub.s32 %v627, %v629
    %v631 = vrot.slane %v617, %v630
    %v632 = vcombine.high %v624, %v624
    %v633 = vcombine.high %v631, %v631
    %v634 = vcombine.high %v522, %v522
    %v636 = vunpack.c.l.s4 1983009808
    %v637 = vunpack.c.0.s8 %v636
    %v638 = vlaneseq
    %v639 = vshrl.u32 %v638, 7
    %v640 = vsub.s32 %v637, %v639
    %v641 = vrot.slane %v522, %v640
    %v643 = vunpack.c.l.s4 1983009808
    %v644 = vunpack.c.0.s8 %v643
    %v645 = vlaneseq
    %v646 = vshrl.u32 %v645, 7
    %v647 = vsub.s32 %v644, %v646
    %v648 = vrot.slane %v634, %v647
    %v649 = vcombine.high %v641, %v641
    %v650 = vcombine.high %v648, %v648
    %v651 = vcombine.high %v523, %v523
    %v653 = vunpack.c.l.s4 1983009808
    %v654 = vunpack.c.0.s8 %v653
    %v655 = vlaneseq
    %v656 = vshrl.u32 %v655, 7
    %v657 = vsub.s32 %v654, %v656
    %v658 = vrot.slane %v523, %v657
    %v660 = vunpack.c.l.s4 1983009808
    %v661 = vunpack.c.0.s8 %v660
    %v662 = vlaneseq
    %v663 = vshrl.u32 %v662, 7
    %v664 = vsub.s32 %v661, %v663
    %v665 = vrot.slane %v651, %v664
    %v666 = vcombine.high %v658, %v658
    %v667 = vcombine.high %v665, %v665
    %vm700 = vcmask 1041408
    %v701 = vsel %vm700, %v539, -inf
    %v702 = vrot.slane %v701, 4
    %v703 = vmax.f32 %v701, %v702
    %v704 = vrot.slane %v703, 2
    %v705 = vmax.f32 %v703, %v704
    %v706 = vrot.slane %v705, 1
    %v707 = vmax.f32 %v705, %v706
    %v708 = vsel %vm700, %v547, -inf
    %v709 = vrot.slane %v708, 4
    %v710 = vmax.f32 %v708, %v709
    %v711 = vrot.slane %v710, 2
    %v712 = vmax.f32 %v710, %v711
    %v713 = vrot.slane %v712, 1
    %v714 = vmax.f32 %v712, %v713
    %v715 = vsel %vm700, %v546, -inf
    %v716 = vrot.slane %v715, 4
    %v717 = vmax.f32 %v715, %v716
    %v718 = vrot.slane %v717, 2
    %v719 = vmax.f32 %v717, %v718
    %v720 = vrot.slane %v719, 1
    %v721 = vmax.f32 %v719, %v720
    %v722 = vsel %vm700, %v548, -inf
    %v723 = vrot.slane %v722, 4
    %v724 = vmax.f32 %v722, %v723
    %v725 = vrot.slane %v724, 2
    %v726 = vmax.f32 %v724, %v725
    %v727 = vrot.slane %v726, 1
    %v728 = vmax.f32 %v726, %v727
    %v729 = vsel %vm700, %v556, -inf
    %v730 = vrot.slane %v729, 4
    %v731 = vmax.f32 %v729, %v730
    %v732 = vrot.slane %v731, 2
    %v733 = vmax.f32 %v731, %v732
    %v734 = vrot.slane %v733, 1
    %v735 = vmax.f32 %v733, %v734
    %v736 = vsel %vm700, %v564, -inf
    %v737 = vrot.slane %v736, 4
    %v738 = vmax.f32 %v736, %v737
    %v739 = vrot.slane %v738, 2
    %v740 = vmax.f32 %v738, %v739
    %v741 = vrot.slane %v740, 1
    %v742 = vmax.f32 %v740, %v741
    %v743 = vsel %vm700, %v563, -inf
    %v744 = vrot.slane %v743, 4
    %v745 = vmax.f32 %v743, %v744
    %v746 = vrot.slane %v745, 2
    %v747 = vmax.f32 %v745, %v746
    %v748 = vrot.slane %v747, 1
    %v749 = vmax.f32 %v747, %v748
    %v750 = vsel %vm700, %v565, -inf
    %v751 = vrot.slane %v750, 4
    %v752 = vmax.f32 %v750, %v751
    %v753 = vrot.slane %v752, 2
    %v754 = vmax.f32 %v752, %v753
    %v755 = vrot.slane %v754, 1
    %v756 = vmax.f32 %v754, %v755
    %v757 = vsel %vm700, %v573, -inf
    %v758 = vrot.slane %v757, 4
    %v759 = vmax.f32 %v757, %v758
    %v760 = vrot.slane %v759, 2
    %v761 = vmax.f32 %v759, %v760
    %v762 = vrot.slane %v761, 1
    %v763 = vmax.f32 %v761, %v762
    %v764 = vsel %vm700, %v581, -inf
    %v765 = vrot.slane %v764, 4
    %v766 = vmax.f32 %v764, %v765
    %v767 = vrot.slane %v766, 2
    %v768 = vmax.f32 %v766, %v767
    %v769 = vrot.slane %v768, 1
    %v770 = vmax.f32 %v768, %v769
    %v771 = vsel %vm700, %v580, -inf
    %v772 = vrot.slane %v771, 4
    %v773 = vmax.f32 %v771, %v772
    %v774 = vrot.slane %v773, 2
    %v775 = vmax.f32 %v773, %v774
    %v776 = vrot.slane %v775, 1
    %v777 = vmax.f32 %v775, %v776
    %v778 = vsel %vm700, %v582, -inf
    %v779 = vrot.slane %v778, 4
    %v780 = vmax.f32 %v778, %v779
    %v781 = vrot.slane %v780, 2
    %v782 = vmax.f32 %v780, %v781
    %v783 = vrot.slane %v782, 1
    %v784 = vmax.f32 %v782, %v783
    %v785 = vsel %vm700, %v590, -inf
    %v786 = vrot.slane %v785, 4
    %v787 = vmax.f32 %v785, %v786
    %v788 = vrot.slane %v787, 2
    %v789 = vmax.f32 %v787, %v788
    %v790 = vrot.slane %v789, 1
    %v791 = vmax.f32 %v789, %v790
    %v792 = vsel %vm700, %v598, -inf
    %v793 = vrot.slane %v792, 4
    %v794 = vmax.f32 %v792, %v793
    %v795 = vrot.slane %v794, 2
    %v796 = vmax.f32 %v794, %v795
    %v797 = vrot.slane %v796, 1
    %v798 = vmax.f32 %v796, %v797
    %v799 = vsel %vm700, %v597, -inf
    %v800 = vrot.slane %v799, 4
    %v801 = vmax.f32 %v799, %v800
    %v802 = vrot.slane %v801, 2
    %v803 = vmax.f32 %v801, %v802
    %v804 = vrot.slane %v803, 1
    %v805 = vmax.f32 %v803, %v804
    %v806 = vsel %vm700, %v599, -inf
    %v807 = vrot.slane %v806, 4
    %v808 = vmax.f32 %v806, %v807
    %v809 = vrot.slane %v808, 2
    %v810 = vmax.f32 %v808, %v809
    %v811 = vrot.slane %v810, 1
    %v812 = vmax.f32 %v810, %v811
    %v813 = vsel %vm700, %v607, -inf
    %v814 = vrot.slane %v813, 4
    %v815 = vmax.f32 %v813, %v814
    %v816 = vrot.slane %v815, 2
    %v817 = vmax.f32 %v815, %v816
    %v818 = vrot.slane %v817, 1
    %v819 = vmax.f32 %v817, %v818
    %v820 = vsel %vm700, %v615, -inf
    %v821 = vrot.slane %v820, 4
    %v822 = vmax.f32 %v820, %v821
    %v823 = vrot.slane %v822, 2
    %v824 = vmax.f32 %v822, %v823
    %v825 = vrot.slane %v824, 1
    %v826 = vmax.f32 %v824, %v825
    %v827 = vsel %vm700, %v614, -inf
    %v828 = vrot.slane %v827, 4
    %v829 = vmax.f32 %v827, %v828
    %v830 = vrot.slane %v829, 2
    %v831 = vmax.f32 %v829, %v830
    %v832 = vrot.slane %v831, 1
    %v833 = vmax.f32 %v831, %v832
    %v834 = vsel %vm700, %v616, -inf
    %v835 = vrot.slane %v834, 4
    %v836 = vmax.f32 %v834, %v835
    %v837 = vrot.slane %v836, 2
    %v838 = vmax.f32 %v836, %v837
    %v839 = vrot.slane %v838, 1
    %v840 = vmax.f32 %v838, %v839
    %v841 = vsel %vm700, %v624, -inf
    %v842 = vrot.slane %v841, 4
    %v843 = vmax.f32 %v841, %v842
    %v844 = vrot.slane %v843, 2
    %v845 = vmax.f32 %v843, %v844
    %v846 = vrot.slane %v845, 1
    %v847 = vmax.f32 %v845, %v846
    %v848 = vsel %vm700, %v632, -inf
    %v849 = vrot.slane %v848, 4
    %v850 = vmax.f32 %v848, %v849
    %v851 = vrot.slane %v850, 2
    %v852 = vmax.f32 %v850, %v851
    %v853 = vrot.slane %v852, 1
    %v854 = vmax.f32 %v852, %v853
    %v855 = vsel %vm700, %v631, -inf
    %v856 = vrot.slane %v855, 4
    %v857 = vmax.f32 %v855, %v856
    %v858 = vrot.slane %v857, 2
    %v859 = vmax.f32 %v857, %v858
    %v860 = vrot.slane %v859, 1
    %v861 = vmax.f32 %v859, %v860
    %v862 = vsel %vm700, %v633, -inf
    %v863 = vrot.slane %v862, 4
    %v864 = vmax.f32 %v862, %v863
    %v865 = vrot.slane %v864, 2
    %v866 = vmax.f32 %v864, %v865
    %v867 = vrot.slane %v866, 1
    %v868 = vmax.f32 %v866, %v867
    %v869 = vsel %vm700, %v641, -inf
    %v870 = vrot.slane %v869, 4
    %v871 = vmax.f32 %v869, %v870
    %v872 = vrot.slane %v871, 2
    %v873 = vmax.f32 %v871, %v872
    %v874 = vrot.slane %v873, 1
    %v875 = vmax.f32 %v873, %v874
    %v876 = vsel %vm700, %v649, -inf
    %v877 = vrot.slane %v876, 4
    %v878 = vmax.f32 %v876, %v877
    %v879 = vrot.slane %v878, 2
    %v880 = vmax.f32 %v878, %v879
    %v881 = vrot.slane %v880, 1
    %v882 = vmax.f32 %v880, %v881
    %v883 = vsel %vm700, %v648, -inf
    %v884 = vrot.slane %v883, 4
    %v885 = vmax.f32 %v883, %v884
    %v886 = vrot.slane %v885, 2
    %v887 = vmax.f32 %v885, %v886
    %v888 = vrot.slane %v887, 1
    %v889 = vmax.f32 %v887, %v888
    %v890 = vsel %vm700, %v650, -inf
    %v891 = vrot.slane %v890, 4
    %v892 = vmax.f32 %v890, %v891
    %v893 = vrot.slane %v892, 2
    %v894 = vmax.f32 %v892, %v893
    %v895 = vrot.slane %v894, 1
    %v896 = vmax.f32 %v894, %v895
    %v897 = vsel %vm700, %v658, -inf
    %v898 = vrot.slane %v897, 4
    %v899 = vmax.f32 %v897, %v898
    %v900 = vrot.slane %v899, 2
    %v901 = vmax.f32 %v899, %v900
    %v902 = vrot.slane %v901, 1
    %v903 = vmax.f32 %v901, %v902
    %v904 = vsel %vm700, %v666, -inf
    %v905 = vrot.slane %v904, 4
    %v906 = vmax.f32 %v904, %v905
    %v907 = vrot.slane %v906, 2
    %v908 = vmax.f32 %v906, %v907
    %v909 = vrot.slane %v908, 1
    %v910 = vmax.f32 %v908, %v909
    %v911 = vsel %vm700, %v665, -inf
    %v912 = vrot.slane %v911, 4
    %v913 = vmax.f32 %v911, %v912
    %v914 = vrot.slane %v913, 2
    %v915 = vmax.f32 %v913, %v914
    %v916 = vrot.slane %v915, 1
    %v917 = vmax.f32 %v915, %v916
    %v918 = vsel %vm700, %v667, -inf
    %v919 = vrot.slane %v918, 4
    %v920 = vmax.f32 %v918, %v919
    %v921 = vrot.slane %v920, 2
    %v922 = vmax.f32 %v920, %v921
    %v923 = vrot.slane %v922, 1
    %v924 = vmax.f32 %v922, %v923
    %vm925 = vcmask 1047559
    %vm926 = vsmask.f32 7966
    %vm927 = vmand %vm925, %vm926
    %v928 = vld [vmem:[#allocation2] sm:$0x80]
    %v929 = vsel %vm927, 0, %v928
    %930 = vst [vmem:[#allocation2] sm:$0x80] %v929
    %v931 = vld [vmem:[#allocation2 + $0x18] sm:$0x80]
    %v932 = vsel %vm927, 0, %v931
    %933 = vst [vmem:[#allocation2 + $0x18] sm:$0x80] %v932
    %vm934 = vcmask 1040384
    %vm935 = vsmask.f32 256
    %vm936 = vmand %vm934, %vm935
    %v937 = vld [vmem:[#allocation2 + $0x10] sm:$0x1]
    %v938 = vsel %vm936, 0, %v937
    %939 = vst [vmem:[#allocation2 + $0x10] sm:$0x1] %v938
    %v940 = vld [vmem:[#allocation2 + $0x28] sm:$0x1]
    %v941 = vsel %vm936, 0, %v940
    %942 = vst [vmem:[#allocation2 + $0x28] sm:$0x1] %v941
    %v943 = vpack.c.bf16 %v707, %v707
    %v944 = vpack.c.bf16 %v714, %v714
    %v945 = vpack.c.bf16 %v721, %v721
    %v946 = vpack.c.bf16 %v728, %v728
    %v947 = vpack.c.bf16 %v735, %v735
    %v948 = vpack.c.bf16 %v742, %v742
    %v949 = vpack.c.bf16 %v749, %v749
    %v950 = vpack.c.bf16 %v756, %v756
    %v951 = vpack.c.bf16 %v763, %v763
    %v952 = vpack.c.bf16 %v770, %v770
    %v953 = vpack.c.bf16 %v777, %v777
    %v954 = vpack.c.bf16 %v784, %v784
    %v955 = vpack.c.bf16 %v791, %v791
    %v956 = vpack.c.bf16 %v798, %v798
    %v957 = vpack.c.bf16 %v805, %v805
    %v958 = vpack.c.bf16 %v812, %v812
    %v959 = vpack.c.bf16 %v819, %v819
    %v960 = vpack.c.bf16 %v826, %v826
    %v961 = vpack.c.bf16 %v833, %v833
    %v962 = vpack.c.bf16 %v840, %v840
    %v963 = vpack.c.bf16 %v847, %v847
    %v964 = vpack.c.bf16 %v854, %v854
    %v965 = vpack.c.bf16 %v861, %v861
    %v966 = vpack.c.bf16 %v868, %v868
    %v967 = vpack.c.bf16 %v875, %v875
    %v968 = vpack.c.bf16 %v882, %v882
    %v969 = vpack.c.bf16 %v889, %v889
    %v970 = vpack.c.bf16 %v896, %v896
    %v971 = vpack.c.bf16 %v903, %v903
    %v972 = vpack.c.bf16 %v910, %v910
    %v973 = vpack.c.bf16 %v917, %v917
    %v974 = vpack.c.bf16 %v924, %v924
    %v1007 = vunpack.c.l.b16 %v943
    %v1008 = vunpack.c.l.b16 %v944
    %v1009 = vunpack.c.l.b16 %v945
    %v1010 = vunpack.c.l.b16 %v946
    %v1011 = vunpack.c.l.b16 %v947
    %v1012 = vunpack.c.l.b16 %v948
    %v1013 = vunpack.c.l.b16 %v949
    %v1014 = vunpack.c.l.b16 %v950
    %v1015 = vunpack.c.l.b16 %v951
    %v1016 = vunpack.c.l.b16 %v952
    %v1017 = vunpack.c.l.b16 %v953
    %v1018 = vunpack.c.l.b16 %v954
    %v1019 = vunpack.c.l.b16 %v955
    %v1020 = vunpack.c.l.b16 %v956
    %v1021 = vunpack.c.l.b16 %v957
    %v1022 = vunpack.c.l.b16 %v958
    %v1023 = vunpack.c.l.b16 %v959
    %v1024 = vunpack.c.l.b16 %v960
    %v1025 = vunpack.c.l.b16 %v961
    %v1026 = vunpack.c.l.b16 %v962
    %v1027 = vunpack.c.l.b16 %v963
    %v1028 = vunpack.c.l.b16 %v964
    %v1029 = vunpack.c.l.b16 %v965
    %v1030 = vunpack.c.l.b16 %v966
    %v1031 = vunpack.c.l.b16 %v967
    %v1032 = vunpack.c.l.b16 %v968
    %v1033 = vunpack.c.l.b16 %v969
    %v1034 = vunpack.c.l.b16 %v970
    %v1035 = vunpack.c.l.b16 %v971
    %v1036 = vunpack.c.l.b16 %v972
    %v1037 = vunpack.c.l.b16 %v973
    %v1038 = vunpack.c.l.b16 %v974
    %vm1039 = vcmask 1041409
    %v1040 = vsel %vm1039, %v1008, %v1007
    %vm1041 = vcmask 1042434
    %v1042 = vsel %vm1041, %v1009, %v1040
    %vm1043 = vcmask 1043459
    %v1044 = vsel %vm1043, %v1010, %v1042
    %vm1045 = vcmask 1044484
    %v1046 = vsel %vm1045, %v1011, %v1044
    %vm1047 = vcmask 1045509
    %v1048 = vsel %vm1047, %v1012, %v1046
    %vm1049 = vcmask 1046534
    %v1050 = vsel %vm1049, %v1013, %v1048
    %vm1051 = vcmask 1047559
    %v1052 = vsel %vm1051, %v1014, %v1050
    %v1053 = vsel %vm1039, %v1016, %v1015
    %v1054 = vsel %vm1041, %v1017, %v1053
    %v1055 = vsel %vm1043, %v1018, %v1054
    %v1056 = vsel %vm1045, %v1019, %v1055
    %v1057 = vsel %vm1047, %v1020, %v1056
    %v1058 = vsel %vm1049, %v1021, %v1057
    %v1059 = vsel %vm1051, %v1022, %v1058
    %v1060 = vsel %vm1039, %v1024, %v1023
    %v1061 = vsel %vm1041, %v1025, %v1060
    %v1062 = vsel %vm1043, %v1026, %v1061
    %v1063 = vsel %vm1045, %v1027, %v1062
    %v1064 = vsel %vm1047, %v1028, %v1063
    %v1065 = vsel %vm1049, %v1029, %v1064
    %v1066 = vsel %vm1051, %v1030, %v1065
    %v1067 = vsel %vm1039, %v1032, %v1031
    %v1068 = vsel %vm1041, %v1033, %v1067
    %v1069 = vsel %vm1043, %v1034, %v1068
    %v1070 = vsel %vm1045, %v1035, %v1069
    %v1071 = vsel %vm1047, %v1036, %v1070
    %v1072 = vsel %vm1049, %v1037, %v1071
    %v1073 = vsel %vm1051, %v1038, %v1072
    %v1074 = vpack.c.b16 %v1059, %v1052
    %v1075 = vpack.c.b16 %v1073, %v1066
    %1078 = vst [vmem:[#allocation2 + $0x8] sm:$0xff] %v1074
    %1079 = vst [vmem:[#allocation2 + $0x20] sm:$0xff] %v1075
    %v1080 = vld [vmem:[#allocation2] sm:$0x80]
    %v1081 = vld [vmem:[#allocation2 + $0x8] sm:$0xff]
    %v1082 = vld [vmem:[#allocation2 + $0x18] sm:$0x80]
    %v1083 = vld [vmem:[#allocation2 + $0x20] sm:$0xff]
    %v1085 = vshrl.u32 %v1080, 16
    %v1087 = vrot.slane %v1085, 7
    %v1089 = vshrl.u32 %v1081, 16
    %v1091 = vrot.slane %v1089, 7
    %v1092 = vshll.u32 %v1081, 16
    %v1094 = vor.u32 %v1091, %v1092
    %v1095 = vsel %vm935, %v1087, %v1094
    %v1097 = vshrl.u32 %v1082, 16
    %v1099 = vrot.slane %v1097, 7
    %v1101 = vshrl.u32 %v1083, 16
    %v1103 = vrot.slane %v1101, 7
    %v1104 = vshll.u32 %v1083, 16
    %v1106 = vor.u32 %v1103, %v1104
    %v1107 = vsel %vm935, %v1099, %v1106
    %v1110 = vld [vmem:[#allocation16] sm:$0xff]
    %v1111 = vld [vmem:[#allocation16 + $0x8] sm:$0xff]
    %v1112 = vld [vmem:[#allocation16 + $0x10] sm:$0xff]
    %v1113 = vld [vmem:[#allocation16 + $0x18] sm:$0xff]
    %v1114 = vld [vmem:[#allocation16 + $0x20] sm:$0xff]
    %v1115 = vld [vmem:[#allocation16 + $0x28] sm:$0xff]
    %v1116 = vld [vmem:[#allocation16 + $0x30] sm:$0xff]
    %v1117 = vld [vmem:[#allocation16 + $0x38] sm:$0xff]
    %v1118 = vld [vmem:[#allocation16 + $0x40] sm:$0xff]
    %v1119 = vld [vmem:[#allocation16 + $0x48] sm:$0xff]
    %v1120 = vld [vmem:[#allocation16 + $0x50] sm:$0xff]
    %v1121 = vld [vmem:[#allocation16 + $0x58] sm:$0xff]
    %v1122 = vld [vmem:[#allocation16 + $0x60] sm:$0xff]
    %v1123 = vld [vmem:[#allocation16 + $0x68] sm:$0xff]
    %v1124 = vld [vmem:[#allocation16 + $0x70] sm:$0xff]
    %v1125 = vld [vmem:[#allocation16 + $0x78] sm:$0xff]
    %v1126 = vld [vmem:[#allocation16 + $0x80] sm:$0xff]
    %v1127 = vld [vmem:[#allocation16 + $0x88] sm:$0xff]
    %v1128 = vld [vmem:[#allocation16 + $0x90] sm:$0xff]
    %v1129 = vld [vmem:[#allocation16 + $0x98] sm:$0xff]
    %v1130 = vld [vmem:[#allocation16 + $0xa0] sm:$0xff]
    %v1131 = vld [vmem:[#allocation16 + $0xa8] sm:$0xff]
    %v1132 = vld [vmem:[#allocation16 + $0xb0] sm:$0xff]
    %v1133 = vld [vmem:[#allocation16 + $0xb8] sm:$0xff]
    %v1134 = vld [vmem:[#allocation16 + $0xc0] sm:$0xff]
    %v1135 = vld [vmem:[#allocation16 + $0xc8] sm:$0xff]
    %v1136 = vld [vmem:[#allocation16 + $0xd0] sm:$0xff]
    %v1137 = vld [vmem:[#allocation16 + $0xd8] sm:$0xff]
    %v1138 = vld [vmem:[#allocation16 + $0xe0] sm:$0xff]
    %v1139 = vld [vmem:[#allocation16 + $0xe8] sm:$0xff]
    %v1140 = vld [vmem:[#allocation16 + $0xf0] sm:$0xff]
    %v1141 = vld [vmem:[#allocation16 + $0xf8] sm:$0xff]
    %v1158 = vunpack.c.l.b16 %v1126
    %v1159 = vunpack.c.h.b16 %v1126
    %v1160 = vunpack.c.l.b16 %v1127
    %v1161 = vunpack.c.h.b16 %v1127
    %v1162 = vunpack.c.l.b16 %v1128
    %v1163 = vunpack.c.h.b16 %v1128
    %v1164 = vunpack.c.l.b16 %v1129
    %v1165 = vunpack.c.h.b16 %v1129
    %v1166 = vunpack.c.l.b16 %v1130
    %v1167 = vunpack.c.h.b16 %v1130
    %v1168 = vunpack.c.l.b16 %v1131
    %v1169 = vunpack.c.h.b16 %v1131
    %v1170 = vunpack.c.l.b16 %v1132
    %v1171 = vunpack.c.h.b16 %v1132
    %v1172 = vunpack.c.l.b16 %v1133
    %v1173 = vunpack.c.h.b16 %v1133
    %v1174 = vunpack.c.l.b16 %v1134
    %v1175 = vunpack.c.h.b16 %v1134
    %v1176 = vunpack.c.l.b16 %v1135
    %v1177 = vunpack.c.h.b16 %v1135
    %v1178 = vunpack.c.l.b16 %v1136
    %v1179 = vunpack.c.h.b16 %v1136
    %v1180 = vunpack.c.l.b16 %v1137
    %v1181 = vunpack.c.h.b16 %v1137
    %v1182 = vunpack.c.l.b16 %v1138
    %v1183 = vunpack.c.h.b16 %v1138
    %v1184 = vunpack.c.l.b16 %v1139
    %v1185 = vunpack.c.h.b16 %v1139
    %v1186 = vunpack.c.l.b16 %v1140
    %v1187 = vunpack.c.h.b16 %v1140
    %v1188 = vunpack.c.l.b16 %v1141
    %v1189 = vunpack.c.h.b16 %v1141
    %v1190 = vpack.c.b16 %v1160, %v1158
    %v1191 = vpack.c.b16 %v1161, %v1159
    %v1192 = vpack.c.b16 %v1164, %v1162
    %v1193 = vpack.c.b16 %v1165, %v1163
    %v1194 = vpack.c.b16 %v1168, %v1166
    %v1195 = vpack.c.b16 %v1169, %v1167
    %v1196 = vpack.c.b16 %v1172, %v1170
    %v1197 = vpack.c.b16 %v1173, %v1171
    %v1198 = vpack.c.b16 %v1176, %v1174
    %v1199 = vpack.c.b16 %v1177, %v1175
    %v1200 = vpack.c.b16 %v1180, %v1178
    %v1201 = vpack.c.b16 %v1181, %v1179
    %v1202 = vpack.c.b16 %v1184, %v1182
    %v1203 = vpack.c.b16 %v1185, %v1183
    %v1204 = vpack.c.b16 %v1188, %v1186
    %v1205 = vpack.c.b16 %v1189, %v1187
    %1222 = vmatprep.subr.bf16.mxu0 %v1191
    %1223 = vmatpush1.bf16.msra.mxu0 %v1190
    %1224 = vmatprep.subr.bf16.mxu0 %v1193
    %1225 = vmatpush1.bf16.msra.mxu0 %v1192
    %1226 = vmatprep.subr.bf16.mxu0 %v1195
    %1227 = vmatpush1.bf16.msra.mxu0 %v1194
    %1228 = vmatprep.subr.bf16.mxu0 %v1197
    %1229 = vmatpush1.bf16.msra.mxu0 %v1196
    %1230 = vmatprep.subr.bf16.mxu0 %v1199
    %1231 = vmatpush1.bf16.msra.mxu0 %v1198
    %1232 = vmatprep.subr.bf16.mxu0 %v1201
    %1233 = vmatpush1.bf16.msra.mxu0 %v1200
    %1234 = vmatprep.subr.bf16.mxu0 %v1203
    %1235 = vmatpush1.bf16.msra.mxu0 %v1202
    %1236 = vmatprep.subr.bf16.mxu0 %v1205
    %1237 = vmatpush1.bf16.msra.mxu0 %v1204
    %1238 = vmatprep.subr.bf16.mxu0 0
    %1239 = vmatpush1.bf16.msra.mxu0 0
    %1240 = vmatprep.subr.bf16.mxu0 0
    %1241 = vmatpush1.bf16.msra.mxu0 0
    %1242 = vmatprep.subr.bf16.mxu0 0
    %1243 = vmatpush1.bf16.msra.mxu0 0
    %1244 = vmatprep.subr.bf16.mxu0 0
    %1245 = vmatpush1.bf16.msra.mxu0 0
    %1246 = vmatprep.subr.bf16.mxu0 0
    %1247 = vmatpush1.bf16.msra.mxu0 0
    %1248 = vmatprep.subr.bf16.mxu0 0
    %1249 = vmatpush1.bf16.msra.mxu0 0
    %1250 = vmatprep.subr.bf16.mxu0 0
    %1251 = vmatpush1.bf16.msra.mxu0 0
    %1252 = vmatprep.subr.bf16.mxu0 0
    %1253 = vmatpush1.bf16.msra.mxu0 0
    %1254 = vmatprep.mubr.bf16.mxu0 0
    %1255 = vmatmul.mubr.bf16.gmra.mrb[0].mxu0 %v1081
    %v1256 = vpop.f32.mrb[0].mxu0
    %v1257 = vadd.f32 0.0, %v1256
    %v1258 = vpop.f32.mrb[0].mxu0
    %v1259 = vadd.f32 0.0, %v1258
    %v1260 = vpop.f32.mrb[0].mxu0
    %v1261 = vadd.f32 0.0, %v1260
    %v1262 = vpop.f32.mrb[0].mxu0
    %v1263 = vadd.f32 0.0, %v1262
    %1264 = vmatprep.mubr.bf16.mxu0 0
    %1265 = vmatmul.mubr.bf16.gmra.mrb[0].mxu0 %v1083
    %v1266 = vpop.f32.mrb[0].mxu0
    %v1267 = vadd.f32 0.0, %v1266
    %v1268 = vpop.f32.mrb[0].mxu0
    %v1269 = vadd.f32 0.0, %v1268
    %v1270 = vpop.f32.mrb[0].mxu0
    %v1271 = vadd.f32 0.0, %v1270
    %v1272 = vpop.f32.mrb[0].mxu0
    %v1273 = vadd.f32 0.0, %v1272
    %1274 = vdwg.mxu0
    %v1291 = vunpack.c.l.b16 %v1110
    %v1292 = vunpack.c.h.b16 %v1110
    %v1293 = vunpack.c.l.b16 %v1111
    %v1294 = vunpack.c.h.b16 %v1111
    %v1295 = vunpack.c.l.b16 %v1112
    %v1296 = vunpack.c.h.b16 %v1112
    %v1297 = vunpack.c.l.b16 %v1113
    %v1298 = vunpack.c.h.b16 %v1113
    %v1299 = vunpack.c.l.b16 %v1114
    %v1300 = vunpack.c.h.b16 %v1114
    %v1301 = vunpack.c.l.b16 %v1115
    %v1302 = vunpack.c.h.b16 %v1115
    %v1303 = vunpack.c.l.b16 %v1116
    %v1304 = vunpack.c.h.b16 %v1116
    %v1305 = vunpack.c.l.b16 %v1117
    %v1306 = vunpack.c.h.b16 %v1117
    %v1307 = vunpack.c.l.b16 %v1118
    %v1308 = vunpack.c.h.b16 %v1118
    %v1309 = vunpack.c.l.b16 %v1119
    %v1310 = vunpack.c.h.b16 %v1119
    %v1311 = vunpack.c.l.b16 %v1120
    %v1312 = vunpack.c.h.b16 %v1120
    %v1313 = vunpack.c.l.b16 %v1121
    %v1314 = vunpack.c.h.b16 %v1121
    %v1315 = vunpack.c.l.b16 %v1122
    %v1316 = vunpack.c.h.b16 %v1122
    %v1317 = vunpack.c.l.b16 %v1123
    %v1318 = vunpack.c.h.b16 %v1123
    %v1319 = vunpack.c.l.b16 %v1124
    %v1320 = vunpack.c.h.b16 %v1124
    %v1321 = vunpack.c.l.b16 %v1125
    %v1322 = vunpack.c.h.b16 %v1125
    %v1323 = vpack.c.b16 %v1293, %v1291
    %v1324 = vpack.c.b16 %v1294, %v1292
    %v1325 = vpack.c.b16 %v1297, %v1295
    %v1326 = vpack.c.b16 %v1298, %v1296
    %v1327 = vpack.c.b16 %v1301, %v1299
    %v1328 = vpack.c.b16 %v1302, %v1300
    %v1329 = vpack.c.b16 %v1305, %v1303
    %v1330 = vpack.c.b16 %v1306, %v1304
    %v1331 = vpack.c.b16 %v1309, %v1307
    %v1332 = vpack.c.b16 %v1310, %v1308
    %v1333 = vpack.c.b16 %v1313, %v1311
    %v1334 = vpack.c.b16 %v1314, %v1312
    %v1335 = vpack.c.b16 %v1317, %v1315
    %v1336 = vpack.c.b16 %v1318, %v1316
    %v1337 = vpack.c.b16 %v1321, %v1319
    %v1338 = vpack.c.b16 %v1322, %v1320
    %1355 = vmatprep.subr.bf16.mxu0 %v1324
    %1356 = vmatpush1.bf16.msra.mxu0 %v1323
    %1357 = vmatprep.subr.bf16.mxu0 %v1326
    %1358 = vmatpush1.bf16.msra.mxu0 %v1325
    %1359 = vmatprep.subr.bf16.mxu0 %v1328
    %1360 = vmatpush1.bf16.msra.mxu0 %v1327
    %1361 = vmatprep.subr.bf16.mxu0 %v1330
    %1362 = vmatpush1.bf16.msra.mxu0 %v1329
    %1363 = vmatprep.subr.bf16.mxu0 %v1332
    %1364 = vmatpush1.bf16.msra.mxu0 %v1331
    %1365 = vmatprep.subr.bf16.mxu0 %v1334
    %1366 = vmatpush1.bf16.msra.mxu0 %v1333
    %1367 = vmatprep.subr.bf16.mxu0 %v1336
    %1368 = vmatpush1.bf16.msra.mxu0 %v1335
    %1369 = vmatprep.subr.bf16.mxu0 %v1338
    %1370 = vmatpush1.bf16.msra.mxu0 %v1337
    %1371 = vmatprep.subr.bf16.mxu0 0
    %1372 = vmatpush1.bf16.msra.mxu0 0
    %1373 = vmatprep.subr.bf16.mxu0 0
    %1374 = vmatpush1.bf16.msra.mxu0 0
    %1375 = vmatprep.subr.bf16.mxu0 0
    %1376 = vmatpush1.bf16.msra.mxu0 0
    %1377 = vmatprep.subr.bf16.mxu0 0
    %1378 = vmatpush1.bf16.msra.mxu0 0
    %1379 = vmatprep.subr.bf16.mxu0 0
    %1380 = vmatpush1.bf16.msra.mxu0 0
    %1381 = vmatprep.subr.bf16.mxu0 0
    %1382 = vmatpush1.bf16.msra.mxu0 0
    %1383 = vmatprep.subr.bf16.mxu0 0
    %1384 = vmatpush1.bf16.msra.mxu0 0
    %1385 = vmatprep.subr.bf16.mxu0 0
    %1386 = vmatpush1.bf16.msra.mxu0 0
    %1387 = vmatprep.mubr.bf16.mxu0 0
    %1388 = vmatmul.mubr.bf16.gmra.mrb[0].mxu0 %v1095
    %v1389 = vpop.f32.mrb[0].mxu0
    %v1390 = vadd.f32 %v1257, %v1389
    %v1391 = vpop.f32.mrb[0].mxu0
    %v1392 = vadd.f32 %v1259, %v1391
    %v1393 = vpop.f32.mrb[0].mxu0
    %v1394 = vadd.f32 %v1261, %v1393
    %v1395 = vpop.f32.mrb[0].mxu0
    %v1396 = vadd.f32 %v1263, %v1395
    %1397 = vmatprep.mubr.bf16.mxu0 0
    %1398 = vmatmul.mubr.bf16.gmra.mrb[0].mxu0 %v1107
    %v1399 = vpop.f32.mrb[0].mxu0
    %v1400 = vadd.f32 %v1267, %v1399
    %v1401 = vpop.f32.mrb[0].mxu0
    %v1402 = vadd.f32 %v1269, %v1401
    %v1403 = vpop.f32.mrb[0].mxu0
    %v1404 = vadd.f32 %v1271, %v1403
    %v1405 = vpop.f32.mrb[0].mxu0
    %v1406 = vadd.f32 %v1273, %v1405
    %1407 = vdwg.mxu0
    %v1408 = vld [vmem:[#allocation2 + $0x8] sm:$0xff]
    %v1409 = vld [vmem:[#allocation2 + $0x10] sm:$0x1]
    %v1410 = vld [vmem:[#allocation2 + $0x20] sm:$0xff]
    %v1411 = vld [vmem:[#allocation2 + $0x28] sm:$0x1]
    %vm1412 = vsmask.f32 7424
    %v1414 = vshrl.u32 %v1408, 16
    %v1416 = vshll.u32 %v1408, 16
    %v1418 = vrot.slane %v1416, 1
    %v1419 = vor.u32 %v1414, %v1418
    %v1421 = vshll.u32 %v1409, 16
    %v1423 = vrot.slane %v1421, 1
    %v1424 = vsel %vm1412, %v1419, %v1423
    %v1426 = vshrl.u32 %v1410, 16
    %v1428 = vshll.u32 %v1410, 16
    %v1430 = vrot.slane %v1428, 1
    %v1431 = vor.u32 %v1426, %v1430
    %v1433 = vshll.u32 %v1411, 16
    %v1435 = vrot.slane %v1433, 1
    %v1436 = vsel %vm1412, %v1431, %v1435
    %v1439 = vld [vmem:[#allocation16 + $0x100] sm:$0xff]
    %v1440 = vld [vmem:[#allocation16 + $0x108] sm:$0xff]
    %v1441 = vld [vmem:[#allocation16 + $0x110] sm:$0xff]
    %v1442 = vld [vmem:[#allocation16 + $0x118] sm:$0xff]
    %v1443 = vld [vmem:[#allocation16 + $0x120] sm:$0xff]
    %v1444 = vld [vmem:[#allocation16 + $0x128] sm:$0xff]
    %v1445 = vld [vmem:[#allocation16 + $0x130] sm:$0xff]
    %v1446 = vld [vmem:[#allocation16 + $0x138] sm:$0xff]
    %v1447 = vld [vmem:[#allocation16 + $0x140] sm:$0xff]
    %v1448 = vld [vmem:[#allocation16 + $0x148] sm:$0xff]
    %v1449 = vld [vmem:[#allocation16 + $0x150] sm:$0xff]
    %v1450 = vld [vmem:[#allocation16 + $0x158] sm:$0xff]
    %v1451 = vld [vmem:[#allocation16 + $0x160] sm:$0xff]
    %v1452 = vld [vmem:[#allocation16 + $0x168] sm:$0xff]
    %v1453 = vld [vmem:[#allocation16 + $0x170] sm:$0xff]
    %v1454 = vld [vmem:[#allocation16 + $0x178] sm:$0xff]
    %v1471 = vunpack.c.l.b16 %v1439
    %v1472 = vunpack.c.h.b16 %v1439
    %v1473 = vunpack.c.l.b16 %v1440
    %v1474 = vunpack.c.h.b16 %v1440
    %v1475 = vunpack.c.l.b16 %v1441
    %v1476 = vunpack.c.h.b16 %v1441
    %v1477 = vunpack.c.l.b16 %v1442
    %v1478 = vunpack.c.h.b16 %v1442
    %v1479 = vunpack.c.l.b16 %v1443
    %v1480 = vunpack.c.h.b16 %v1443
    %v1481 = vunpack.c.l.b16 %v1444
    %v1482 = vunpack.c.h.b16 %v1444
    %v1483 = vunpack.c.l.b16 %v1445
    %v1484 = vunpack.c.h.b16 %v1445
    %v1485 = vunpack.c.l.b16 %v1446
    %v1486 = vunpack.c.h.b16 %v1446
    %v1487 = vunpack.c.l.b16 %v1447
    %v1488 = vunpack.c.h.b16 %v1447
    %v1489 = vunpack.c.l.b16 %v1448
    %v1490 = vunpack.c.h.b16 %v1448
    %v1491 = vunpack.c.l.b16 %v1449
    %v1492 = vunpack.c.h.b16 %v1449
    %v1493 = vunpack.c.l.b16 %v1450
    %v1494 = vunpack.c.h.b16 %v1450
    %v1495 = vunpack.c.l.b16 %v1451
    %v1496 = vunpack.c.h.b16 %v1451
    %v1497 = vunpack.c.l.b16 %v1452
    %v1498 = vunpack.c.h.b16 %v1452
    %v1499 = vunpack.c.l.b16 %v1453
    %v1500 = vunpack.c.h.b16 %v1453
    %v1501 = vunpack.c.l.b16 %v1454
    %v1502 = vunpack.c.h.b16 %v1454
    %v1503 = vpack.c.b16 %v1473, %v1471
    %v1504 = vpack.c.b16 %v1474, %v1472
    %v1505 = vpack.c.b16 %v1477, %v1475
    %v1506 = vpack.c.b16 %v1478, %v1476
    %v1507 = vpack.c.b16 %v1481, %v1479
    %v1508 = vpack.c.b16 %v1482, %v1480
    %v1509 = vpack.c.b16 %v1485, %v1483
    %v1510 = vpack.c.b16 %v1486, %v1484
    %v1511 = vpack.c.b16 %v1489, %v1487
    %v1512 = vpack.c.b16 %v1490, %v1488
    %v1513 = vpack.c.b16 %v1493, %v1491
    %v1514 = vpack.c.b16 %v1494, %v1492
    %v1515 = vpack.c.b16 %v1497, %v1495
    %v1516 = vpack.c.b16 %v1498, %v1496
    %v1517 = vpack.c.b16 %v1501, %v1499
    %v1518 = vpack.c.b16 %v1502, %v1500
    %1535 = vmatprep.subr.bf16.mxu0 %v1504
    %1536 = vmatpush1.bf16.msra.mxu0 %v1503
    %1537 = vmatprep.subr.bf16.mxu0 %v1506
    %1538 = vmatpush1.bf16.msra.mxu0 %v1505
    %1539 = vmatprep.subr.bf16.mxu0 %v1508
    %1540 = vmatpush1.bf16.msra.mxu0 %v1507
    %1541 = vmatprep.subr.bf16.mxu0 %v1510
    %1542 = vmatpush1.bf16.msra.mxu0 %v1509
    %1543 = vmatprep.subr.bf16.mxu0 %v1512
    %1544 = vmatpush1.bf16.msra.mxu0 %v1511
    %1545 = vmatprep.subr.bf16.mxu0 %v1514
    %1546 = vmatpush1.bf16.msra.mxu0 %v1513
    %1547 = vmatprep.subr.bf16.mxu0 %v1516
    %1548 = vmatpush1.bf16.msra.mxu0 %v1515
    %1549 = vmatprep.subr.bf16.mxu0 %v1518
    %1550 = vmatpush1.bf16.msra.mxu0 %v1517
    %1551 = vmatprep.subr.bf16.mxu0 0
    %1552 = vmatpush1.bf16.msra.mxu0 0
    %1553 = vmatprep.subr.bf16.mxu0 0
    %1554 = vmatpush1.bf16.msra.mxu0 0
    %1555 = vmatprep.subr.bf16.mxu0 0
    %1556 = vmatpush1.bf16.msra.mxu0 0
    %1557 = vmatprep.subr.bf16.mxu0 0
    %1558 = vmatpush1.bf16.msra.mxu0 0
    %1559 = vmatprep.subr.bf16.mxu0 0
    %1560 = vmatpush1.bf16.msra.mxu0 0
    %1561 = vmatprep.subr.bf16.mxu0 0
    %1562 = vmatpush1.bf16.msra.mxu0 0
    %1563 = vmatprep.subr.bf16.mxu0 0
    %1564 = vmatpush1.bf16.msra.mxu0 0
    %1565 = vmatprep.subr.bf16.mxu0 0
    %1566 = vmatpush1.bf16.msra.mxu0 0
    %1567 = vmatprep.mubr.bf16.mxu0 0
    %1568 = vmatmul.mubr.bf16.gmra.mrb[0].mxu0 %v1424
    %v1569 = vpop.f32.mrb[0].mxu0
    %v1570 = vadd.f32 0.0, %v1569
    %v1571 = vpop.f32.mrb[0].mxu0
    %v1572 = vadd.f32 0.0, %v1571
    %v1573 = vpop.f32.mrb[0].mxu0
    %v1574 = vadd.f32 0.0, %v1573
    %v1575 = vpop.f32.mrb[0].mxu0
    %v1576 = vadd.f32 0.0, %v1575
    %1577 = vmatprep.mubr.bf16.mxu0 0
    %1578 = vmatmul.mubr.bf16.gmra.mrb[0].mxu0 %v1436
    %v1579 = vpop.f32.mrb[0].mxu0
    %v1580 = vadd.f32 0.0, %v1579
    %v1581 = vpop.f32.mrb[0].mxu0
    %v1582 = vadd.f32 0.0, %v1581
    %v1583 = vpop.f32.mrb[0].mxu0
    %v1584 = vadd.f32 0.0, %v1583
    %v1585 = vpop.f32.mrb[0].mxu0
    %v1586 = vadd.f32 0.0, %v1585
    %1587 = vdwg.mxu0
    %v1588 = vadd.f32 %v1390, %v1570
    %v1589 = vadd.f32 %v1392, %v1572
    %v1590 = vadd.f32 %v1394, %v1574
    %v1591 = vadd.f32 %v1396, %v1576
    %v1592 = vadd.f32 %v1400, %v1580
    %v1593 = vadd.f32 %v1402, %v1582
    %v1594 = vadd.f32 %v1404, %v1584
    %v1595 = vadd.f32 %v1406, %v1586
    %v1596 = vld [vmem:[#allocation17] sm:$0x3]
    %v1597 = vld [vmem:[#allocation19] sm:$0x3]
    %v1598 = vld [vmem:[#allocation20] sm:$0x3]
    %v1600 = vlaneseq
    %v1601 = vshrl.u32 %v1600, 7
    %v1602 = vsub.s32 0, %v1601
    %v1603 = vrot.slane %v1596, %v1602
    %v1604 = vlaneseq
    %v1605 = vshrl.u32 %v1604, 7
    %v1606 = vsub.s32 1, %v1605
    %v1607 = vrot.slane %v1596, %v1606
    %v1610 = vadd.f32 %v1588, %v1603
    %v1611 = vadd.f32 %v1589, %v1607
    %v1612 = vadd.f32 %v1590, %v1603
    %v1613 = vadd.f32 %v1591, %v1607
    %v1614 = vadd.f32 %v1592, %v1603
    %v1615 = vadd.f32 %v1593, %v1607
    %v1616 = vadd.f32 %v1594, %v1603
    %v1617 = vadd.f32 %v1595, %v1607
    %v1618 = vmax.f32 %v1610, 0.0
    %v1619 = vmax.f32 %v1611, 0.0
    %v1620 = vmax.f32 %v1612, 0.0
    %v1621 = vmax.f32 %v1613, 0.0
    %v1622 = vmax.f32 %v1614, 0.0
    %v1623 = vmax.f32 %v1615, 0.0
    %v1624 = vmax.f32 %v1616, 0.0
    %v1625 = vmax.f32 %v1617, 0.0
    %v1627 = vlaneseq
    %v1628 = vshrl.u32 %v1627, 7
    %v1629 = vsub.s32 0, %v1628
    %v1630 = vrot.slane %v1597, %v1629
    %v1631 = vlaneseq
    %v1632 = vshrl.u32 %v1631, 7
    %v1633 = vsub.s32 1, %v1632
    %v1634 = vrot.slane %v1597, %v1633
    %v1637 = vmul.f32 %v1618, %v1630
    %v1638 = vmul.f32 %v1619, %v1634
    %v1639 = vmul.f32 %v1620, %v1630
    %v1640 = vmul.f32 %v1621, %v1634
    %v1641 = vmul.f32 %v1622, %v1630
    %v1642 = vmul.f32 %v1623, %v1634
    %v1643 = vmul.f32 %v1624, %v1630
    %v1644 = vmul.f32 %v1625, %v1634
    %v1646 = vlaneseq
    %v1647 = vshrl.u32 %v1646, 7
    %v1648 = vsub.s32 0, %v1647
    %v1649 = vrot.slane %v1598, %v1648
    %v1650 = vlaneseq
    %v1651 = vshrl.u32 %v1650, 7
    %v1652 = vsub.s32 1, %v1651
    %v1653 = vrot.slane %v1598, %v1652
    %v1656 = vadd.f32 %v1637, %v1649
    %v1657 = vadd.f32 %v1638, %v1653
    %v1658 = vadd.f32 %v1639, %v1649
    %v1659 = vadd.f32 %v1640, %v1653
    %v1660 = vadd.f32 %v1641, %v1649
    %v1661 = vadd.f32 %v1642, %v1653
    %v1662 = vadd.f32 %v1643, %v1649
    %v1663 = vadd.f32 %v1644, %v1653
    %v1672 = vcombine.low %v1656, %v1657
    %v1673 = vcombine.high %v1656, %v1657
    %v1675 = vunpack.c.l.s4 1983009808
    %v1676 = vunpack.c.0.s8 %v1675
    %v1677 = vlaneseq
    %v1678 = vshrl.u32 %v1677, 7
    %v1679 = vsub.s32 %v1676, %v1678
    %v1680 = vrot.slane %v1672, %v1679
    %v1682 = vunpack.c.l.s4 1983009808
    %v1683 = vunpack.c.0.s8 %v1682
    %v1684 = vlaneseq
    %v1685 = vshrl.u32 %v1684, 7
    %v1686 = vsub.s32 %v1683, %v1685
    %v1687 = vrot.slane %v1673, %v1686
    %v1688 = vcombine.high %v1680, %v1680
    %v1689 = vcombine.high %v1687, %v1687
    %v1690 = vcombine.low %v1658, %v1659
    %v1691 = vcombine.high %v1658, %v1659
    %v1693 = vunpack.c.l.s4 1983009808
    %v1694 = vunpack.c.0.s8 %v1693
    %v1695 = vlaneseq
    %v1696 = vshrl.u32 %v1695, 7
    %v1697 = vsub.s32 %v1694, %v1696
    %v1698 = vrot.slane %v1690, %v1697
    %v1700 = vunpack.c.l.s4 1983009808
    %v1701 = vunpack.c.0.s8 %v1700
    %v1702 = vlaneseq
    %v1703 = vshrl.u32 %v1702, 7
    %v1704 = vsub.s32 %v1701, %v1703
    %v1705 = vrot.slane %v1691, %v1704
    %v1706 = vcombine.high %v1698, %v1698
    %v1707 = vcombine.high %v1705, %v1705
    %v1708 = vcombine.low %v1660, %v1661
    %v1709 = vcombine.high %v1660, %v1661
    %v1711 = vunpack.c.l.s4 1983009808
    %v1712 = vunpack.c.0.s8 %v1711
    %v1713 = vlaneseq
    %v1714 = vshrl.u32 %v1713, 7
    %v1715 = vsub.s32 %v1712, %v1714
    %v1716 = vrot.slane %v1708, %v1715
    %v1718 = vunpack.c.l.s4 1983009808
    %v1719 = vunpack.c.0.s8 %v1718
    %v1720 = vlaneseq
    %v1721 = vshrl.u32 %v1720, 7
    %v1722 = vsub.s32 %v1719, %v1721
    %v1723 = vrot.slane %v1709, %v1722
    %v1724 = vcombine.high %v1716, %v1716
    %v1725 = vcombine.high %v1723, %v1723
    %v1726 = vcombine.low %v1662, %v1663
    %v1727 = vcombine.high %v1662, %v1663
    %v1729 = vunpack.c.l.s4 1983009808
    %v1730 = vunpack.c.0.s8 %v1729
    %v1731 = vlaneseq
    %v1732 = vshrl.u32 %v1731, 7
    %v1733 = vsub.s32 %v1730, %v1732
    %v1734 = vrot.slane %v1726, %v1733
    %v1736 = vunpack.c.l.s4 1983009808
    %v1737 = vunpack.c.0.s8 %v1736
    %v1738 = vlaneseq
    %v1739 = vshrl.u32 %v1738, 7
    %v1740 = vsub.s32 %v1737, %v1739
    %v1741 = vrot.slane %v1727, %v1740
    %v1742 = vcombine.high %v1734, %v1734
    %v1743 = vcombine.high %v1741, %v1741
    %v1745 = vunpack.c.l.s4 1983009808
    %v1746 = vunpack.c.0.s8 %v1745
    %v1747 = vlaneseq
    %v1748 = vshrl.u32 %v1747, 7
    %v1749 = vsub.s32 %v1746, %v1748
    %v1750 = vrot.slane %v1680, %v1749
    %v1751 = vcombine.high %v1750, %v1750
    %v1753 = vunpack.c.l.s4 1983009808
    %v1754 = vunpack.c.0.s8 %v1753
    %v1755 = vlaneseq
    %v1756 = vshrl.u32 %v1755, 7
    %v1757 = vsub.s32 %v1754, %v1756
    %v1758 = vrot.slane %v1688, %v1757
    %v1759 = vcombine.high %v1758, %v1758
    %v1761 = vunpack.c.l.s4 1983009808
    %v1762 = vunpack.c.0.s8 %v1761
    %v1763 = vlaneseq
    %v1764 = vshrl.u32 %v1763, 7
    %v1765 = vsub.s32 %v1762, %v1764
    %v1766 = vrot.slane %v1687, %v1765
    %v1767 = vcombine.high %v1766, %v1766
    %v1769 = vunpack.c.l.s4 1983009808
    %v1770 = vunpack.c.0.s8 %v1769
    %v1771 = vlaneseq
    %v1772 = vshrl.u32 %v1771, 7
    %v1773 = vsub.s32 %v1770, %v1772
    %v1774 = vrot.slane %v1689, %v1773
    %v1775 = vcombine.high %v1774, %v1774
    %v1777 = vunpack.c.l.s4 1983009808
    %v1778 = vunpack.c.0.s8 %v1777
    %v1779 = vlaneseq
    %v1780 = vshrl.u32 %v1779, 7
    %v1781 = vsub.s32 %v1778, %v1780
    %v1782 = vrot.slane %v1698, %v1781
    %v1783 = vcombine.high %v1782, %v1782
    %v1785 = vunpack.c.l.s4 1983009808
    %v1786 = vunpack.c.0.s8 %v1785
    %v1787 = vlaneseq
    %v1788 = vshrl.u32 %v1787, 7
    %v1789 = vsub.s32 %v1786, %v1788
    %v1790 = vrot.slane %v1706, %v1789
    %v1791 = vcombine.high %v1790, %v1790
    %v1793 = vunpack.c.l.s4 1983009808
    %v1794 = vunpack.c.0.s8 %v1793
    %v1795 = vlaneseq
    %v1796 = vshrl.u32 %v1795, 7
    %v1797 = vsub.s32 %v1794, %v1796
    %v1798 = vrot.slane %v1705, %v1797
    %v1799 = vcombine.high %v1798, %v1798
    %v1801 = vunpack.c.l.s4 1983009808
    %v1802 = vunpack.c.0.s8 %v1801
    %v1803 = vlaneseq
    %v1804 = vshrl.u32 %v1803, 7
    %v1805 = vsub.s32 %v1802, %v1804
    %v1806 = vrot.slane %v1707, %v1805
    %v1807 = vcombine.high %v1806, %v1806
    %v1809 = vunpack.c.l.s4 1983009808
    %v1810 = vunpack.c.0.s8 %v1809
    %v1811 = vlaneseq
    %v1812 = vshrl.u32 %v1811, 7
    %v1813 = vsub.s32 %v1810, %v1812
    %v1814 = vrot.slane %v1716, %v1813
    %v1815 = vcombine.high %v1814, %v1814
    %v1817 = vunpack.c.l.s4 1983009808
    %v1818 = vunpack.c.0.s8 %v1817
    %v1819 = vlaneseq
    %v1820 = vshrl.u32 %v1819, 7
    %v1821 = vsub.s32 %v1818, %v1820
    %v1822 = vrot.slane %v1724, %v1821
    %v1823 = vcombine.high %v1822, %v1822
    %v1825 = vunpack.c.l.s4 1983009808
    %v1826 = vunpack.c.0.s8 %v1825
    %v1827 = vlaneseq
    %v1828 = vshrl.u32 %v1827, 7
    %v1829 = vsub.s32 %v1826, %v1828
    %v1830 = vrot.slane %v1723, %v1829
    %v1831 = vcombine.high %v1830, %v1830
    %v1833 = vunpack.c.l.s4 1983009808
    %v1834 = vunpack.c.0.s8 %v1833
    %v1835 = vlaneseq
    %v1836 = vshrl.u32 %v1835, 7
    %v1837 = vsub.s32 %v1834, %v1836
    %v1838 = vrot.slane %v1725, %v1837
    %v1839 = vcombine.high %v1838, %v1838
    %v1841 = vunpack.c.l.s4 1983009808
    %v1842 = vunpack.c.0.s8 %v1841
    %v1843 = vlaneseq
    %v1844 = vshrl.u32 %v1843, 7
    %v1845 = vsub.s32 %v1842, %v1844
    %v1846 = vrot.slane %v1734, %v1845
    %v1847 = vcombine.high %v1846, %v1846
    %v1849 = vunpack.c.l.s4 1983009808
    %v1850 = vunpack.c.0.s8 %v1849
    %v1851 = vlaneseq
    %v1852 = vshrl.u32 %v1851, 7
    %v1853 = vsub.s32 %v1850, %v1852
    %v1854 = vrot.slane %v1742, %v1853
    %v1855 = vcombine.high %v1854, %v1854
    %v1857 = vunpack.c.l.s4 1983009808
    %v1858 = vunpack.c.0.s8 %v1857
    %v1859 = vlaneseq
    %v1860 = vshrl.u32 %v1859, 7
    %v1861 = vsub.s32 %v1858, %v1860
    %v1862 = vrot.slane %v1741, %v1861
    %v1863 = vcombine.high %v1862, %v1862
    %v1865 = vunpack.c.l.s4 1983009808
    %v1866 = vunpack.c.0.s8 %v1865
    %v1867 = vlaneseq
    %v1868 = vshrl.u32 %v1867, 7
    %v1869 = vsub.s32 %v1866, %v1868
    %v1870 = vrot.slane %v1743, %v1869
    %v1871 = vcombine.high %v1870, %v1870
    %v1904 = vsel %vm700, %v1750, -inf
    %v1905 = vrot.slane %v1904, 4
    %v1906 = vmax.f32 %v1904, %v1905
    %v1907 = vrot.slane %v1906, 2
    %v1908 = vmax.f32 %v1906, %v1907
    %v1909 = vrot.slane %v1908, 1
    %v1910 = vmax.f32 %v1908, %v1909
    %v1911 = vsel %vm700, %v1751, -inf
    %v1912 = vrot.slane %v1911, 4
    %v1913 = vmax.f32 %v1911, %v1912
    %v1914 = vrot.slane %v1913, 2
    %v1915 = vmax.f32 %v1913, %v1914
    %v1916 = vrot.slane %v1915, 1
    %v1917 = vmax.f32 %v1915, %v1916
    %v1918 = vsel %vm700, %v1758, -inf
    %v1919 = vrot.slane %v1918, 4
    %v1920 = vmax.f32 %v1918, %v1919
    %v1921 = vrot.slane %v1920, 2
    %v1922 = vmax.f32 %v1920, %v1921
    %v1923 = vrot.slane %v1922, 1
    %v1924 = vmax.f32 %v1922, %v1923
    %v1925 = vsel %vm700, %v1759, -inf
    %v1926 = vrot.slane %v1925, 4
    %v1927 = vmax.f32 %v1925, %v1926
    %v1928 = vrot.slane %v1927, 2
    %v1929 = vmax.f32 %v1927, %v1928
    %v1930 = vrot.slane %v1929, 1
    %v1931 = vmax.f32 %v1929, %v1930
    %v1932 = vsel %vm700, %v1766, -inf
    %v1933 = vrot.slane %v1932, 4
    %v1934 = vmax.f32 %v1932, %v1933
    %v1935 = vrot.slane %v1934, 2
    %v1936 = vmax.f32 %v1934, %v1935
    %v1937 = vrot.slane %v1936, 1
    %v1938 = vmax.f32 %v1936, %v1937
    %v1939 = vsel %vm700, %v1767, -inf
    %v1940 = vrot.slane %v1939, 4
    %v1941 = vmax.f32 %v1939, %v1940
    %v1942 = vrot.slane %v1941, 2
    %v1943 = vmax.f32 %v1941, %v1942
    %v1944 = vrot.slane %v1943, 1
    %v1945 = vmax.f32 %v1943, %v1944
    %v1946 = vsel %vm700, %v1774, -inf
    %v1947 = vrot.slane %v1946, 4
    %v1948 = vmax.f32 %v1946, %v1947
    %v1949 = vrot.slane %v1948, 2
    %v1950 = vmax.f32 %v1948, %v1949
    %v1951 = vrot.slane %v1950, 1
    %v1952 = vmax.f32 %v1950, %v1951
    %v1953 = vsel %vm700, %v1775, -inf
    %v1954 = vrot.slane %v1953, 4
    %v1955 = vmax.f32 %v1953, %v1954
    %v1956 = vrot.slane %v1955, 2
    %v1957 = vmax.f32 %v1955, %v1956
    %v1958 = vrot.slane %v1957, 1
    %v1959 = vmax.f32 %v1957, %v1958
    %v1960 = vsel %vm700, %v1782, -inf
    %v1961 = vrot.slane %v1960, 4
    %v1962 = vmax.f32 %v1960, %v1961
    %v1963 = vrot.slane %v1962, 2
    %v1964 = vmax.f32 %v1962, %v1963
    %v1965 = vrot.slane %v1964, 1
    %v1966 = vmax.f32 %v1964, %v1965
    %v1967 = vsel %vm700, %v1783, -inf
    %v1968 = vrot.slane %v1967, 4
    %v1969 = vmax.f32 %v1967, %v1968
    %v1970 = vrot.slane %v1969, 2
    %v1971 = vmax.f32 %v1969, %v1970
    %v1972 = vrot.slane %v1971, 1
    %v1973 = vmax.f32 %v1971, %v1972
    %v1974 = vsel %vm700, %v1790, -inf
    %v1975 = vrot.slane %v1974, 4
    %v1976 = vmax.f32 %v1974, %v1975
    %v1977 = vrot.slane %v1976, 2
    %v1978 = vmax.f32 %v1976, %v1977
    %v1979 = vrot.slane %v1978, 1
    %v1980 = vmax.f32 %v1978, %v1979
    %v1981 = vsel %vm700, %v1791, -inf
    %v1982 = vrot.slane %v1981, 4
    %v1983 = vmax.f32 %v1981, %v1982
    %v1984 = vrot.slane %v1983, 2
    %v1985 = vmax.f32 %v1983, %v1984
    %v1986 = vrot.slane %v1985, 1
    %v1987 = vmax.f32 %v1985, %v1986
    %v1988 = vsel %vm700, %v1798, -inf
    %v1989 = vrot.slane %v1988, 4
    %v1990 = vmax.f32 %v1988, %v1989
    %v1991 = vrot.slane %v1990, 2
    %v1992 = vmax.f32 %v1990, %v1991
    %v1993 = vrot.slane %v1992, 1
    %v1994 = vmax.f32 %v1992, %v1993
    %v1995 = vsel %vm700, %v1799, -inf
    %v1996 = vrot.slane %v1995, 4
    %v1997 = vmax.f32 %v1995, %v1996
    %v1998 = vrot.slane %v1997, 2
    %v1999 = vmax.f32 %v1997, %v1998
    %v2000 = vrot.slane %v1999, 1
    %v2001 = vmax.f32 %v1999, %v2000
    %v2002 = vsel %vm700, %v1806, -inf
    %v2003 = vrot.slane %v2002, 4
    %v2004 = vmax.f32 %v2002, %v2003
    %v2005 = vrot.slane %v2004, 2
    %v2006 = vmax.f32 %v2004, %v2005
    %v2007 = vrot.slane %v2006, 1
    %v2008 = vmax.f32 %v2006, %v2007
    %v2009 = vsel %vm700, %v1807, -inf
    %v2010 = vrot.slane %v2009, 4
    %v2011 = vmax.f32 %v2009, %v2010
    %v2012 = vrot.slane %v2011, 2
    %v2013 = vmax.f32 %v2011, %v2012
    %v2014 = vrot.slane %v2013, 1
    %v2015 = vmax.f32 %v2013, %v2014
    %v2016 = vsel %vm700, %v1814, -inf
    %v2017 = vrot.slane %v2016, 4
    %v2018 = vmax.f32 %v2016, %v2017
    %v2019 = vrot.slane %v2018, 2
    %v2020 = vmax.f32 %v2018, %v2019
    %v2021 = vrot.slane %v2020, 1
    %v2022 = vmax.f32 %v2020, %v2021
    %v2023 = vsel %vm700, %v1815, -inf
    %v2024 = vrot.slane %v2023, 4
    %v2025 = vmax.f32 %v2023, %v2024
    %v2026 = vrot.slane %v2025, 2
    %v2027 = vmax.f32 %v2025, %v2026
    %v2028 = vrot.slane %v2027, 1
    %v2029 = vmax.f32 %v2027, %v2028
    %v2030 = vsel %vm700, %v1822, -inf
    %v2031 = vrot.slane %v2030, 4
    %v2032 = vmax.f32 %v2030, %v2031
    %v2033 = vrot.slane %v2032, 2
    %v2034 = vmax.f32 %v2032, %v2033
    %v2035 = vrot.slane %v2034, 1
    %v2036 = vmax.f32 %v2034, %v2035
    %v2037 = vsel %vm700, %v1823, -inf
    %v2038 = vrot.slane %v2037, 4
    %v2039 = vmax.f32 %v2037, %v2038
    %v2040 = vrot.slane %v2039, 2
    %v2041 = vmax.f32 %v2039, %v2040
    %v2042 = vrot.slane %v2041, 1
    %v2043 = vmax.f32 %v2041, %v2042
    %v2044 = vsel %vm700, %v1830, -inf
    %v2045 = vrot.slane %v2044, 4
    %v2046 = vmax.f32 %v2044, %v2045
    %v2047 = vrot.slane %v2046, 2
    %v2048 = vmax.f32 %v2046, %v2047
    %v2049 = vrot.slane %v2048, 1
    %v2050 = vmax.f32 %v2048, %v2049
    %v2051 = vsel %vm700, %v1831, -inf
    %v2052 = vrot.slane %v2051, 4
    %v2053 = vmax.f32 %v2051, %v2052
    %v2054 = vrot.slane %v2053, 2
    %v2055 = vmax.f32 %v2053, %v2054
    %v2056 = vrot.slane %v2055, 1
    %v2057 = vmax.f32 %v2055, %v2056
    %v2058 = vsel %vm700, %v1838, -inf
    %v2059 = vrot.slane %v2058, 4
    %v2060 = vmax.f32 %v2058, %v2059
    %v2061 = vrot.slane %v2060, 2
    %v2062 = vmax.f32 %v2060, %v2061
    %v2063 = vrot.slane %v2062, 1
    %v2064 = vmax.f32 %v2062, %v2063
    %v2065 = vsel %vm700, %v1839, -inf
    %v2066 = vrot.slane %v2065, 4
    %v2067 = vmax.f32 %v2065, %v2066
    %v2068 = vrot.slane %v2067, 2
    %v2069 = vmax.f32 %v2067, %v2068
    %v2070 = vrot.slane %v2069, 1
    %v2071 = vmax.f32 %v2069, %v2070
    %v2072 = vsel %vm700, %v1846, -inf
    %v2073 = vrot.slane %v2072, 4
    %v2074 = vmax.f32 %v2072, %v2073
    %v2075 = vrot.slane %v2074, 2
    %v2076 = vmax.f32 %v2074, %v2075
    %v2077 = vrot.slane %v2076, 1
    %v2078 = vmax.f32 %v2076, %v2077
    %v2079 = vsel %vm700, %v1847, -inf
    %v2080 = vrot.slane %v2079, 4
    %v2081 = vmax.f32 %v2079, %v2080
    %v2082 = vrot.slane %v2081, 2
    %v2083 = vmax.f32 %v2081, %v2082
    %v2084 = vrot.slane %v2083, 1
    %v2085 = vmax.f32 %v2083, %v2084
    %v2086 = vsel %vm700, %v1854, -inf
    %v2087 = vrot.slane %v2086, 4
    %v2088 = vmax.f32 %v2086, %v2087
    %v2089 = vrot.slane %v2088, 2
    %v2090 = vmax.f32 %v2088, %v2089
    %v2091 = vrot.slane %v2090, 1
    %v2092 = vmax.f32 %v2090, %v2091
    %v2093 = vsel %vm700, %v1855, -inf
    %v2094 = vrot.slane %v2093, 4
    %v2095 = vmax.f32 %v2093, %v2094
    %v2096 = vrot.slane %v2095, 2
    %v2097 = vmax.f32 %v2095, %v2096
    %v2098 = vrot.slane %v2097, 1
    %v2099 = vmax.f32 %v2097, %v2098
    %v2100 = vsel %vm700, %v1862, -inf
    %v2101 = vrot.slane %v2100, 4
    %v2102 = vmax.f32 %v2100, %v2101
    %v2103 = vrot.slane %v2102, 2
    %v2104 = vmax.f32 %v2102, %v2103
    %v2105 = vrot.slane %v2104, 1
    %v2106 = vmax.f32 %v2104, %v2105
    %v2107 = vsel %vm700, %v1863, -inf
    %v2108 = vrot.slane %v2107, 4
    %v2109 = vmax.f32 %v2107, %v2108
    %v2110 = vrot.slane %v2109, 2
    %v2111 = vmax.f32 %v2109, %v2110
    %v2112 = vrot.slane %v2111, 1
    %v2113 = vmax.f32 %v2111, %v2112
    %v2114 = vsel %vm700, %v1870, -inf
    %v2115 = vrot.slane %v2114, 4
    %v2116 = vmax.f32 %v2114, %v2115
    %v2117 = vrot.slane %v2116, 2
    %v2118 = vmax.f32 %v2116, %v2117
    %v2119 = vrot.slane %v2118, 1
    %v2120 = vmax.f32 %v2118, %v2119
    %v2121 = vsel %vm700, %v1871, -inf
    %v2122 = vrot.slane %v2121, 4
    %v2123 = vmax.f32 %v2121, %v2122
    %v2124 = vrot.slane %v2123, 2
    %v2125 = vmax.f32 %v2123, %v2124
    %v2126 = vrot.slane %v2125, 1
    %v2127 = vmax.f32 %v2125, %v2126
    %vm2128 = vcmask 1043459
    %vm2129 = vsmask.f32 7950
    %vm2130 = vmand %vm2128, %vm2129
    %vm2131 = vmor %vm927, %vm2130
    %v2132 = vld [vmem:[#allocation3 + $0x8] sm:$0x88]
    %v2133 = vsel %vm2131, 0, %v2132
    %2134 = vst [vmem:[#allocation3 + $0x8] sm:$0x88] %v2133
    %v2135 = vld [vmem:[#allocation3 + $0x30] sm:$0x88]
    %v2136 = vsel %vm2131, 0, %v2135
    %2137 = vst [vmem:[#allocation3 + $0x30] sm:$0x88] %v2136
    %vm2138 = vcmask 1044484
    %vm2139 = vsmask.f32 4352
    %vm2140 = vmand %vm2138, %vm2139
    %vm2141 = vmor %vm2140, %vm936
    %v2142 = vld [vmem:[#allocation3 + $0x18] sm:$0x11]
    %v2143 = vsel %vm2141, 0, %v2142
    %2144 = vst [vmem:[#allocation3 + $0x18] sm:$0x11] %v2143
    %v2145 = vld [vmem:[#allocation3 + $0x40] sm:$0x11]
    %v2146 = vsel %vm2141, 0, %v2145
    %2147 = vst [vmem:[#allocation3 + $0x40] sm:$0x11] %v2146
    %v2148 = vpack.c.bf16 %v1910, %v1910
    %v2149 = vpack.c.bf16 %v1917, %v1917
    %v2150 = vpack.c.bf16 %v1924, %v1924
    %v2151 = vpack.c.bf16 %v1931, %v1931
    %v2152 = vpack.c.bf16 %v1938, %v1938
    %v2153 = vpack.c.bf16 %v1945, %v1945
    %v2154 = vpack.c.bf16 %v1952, %v1952
    %v2155 = vpack.c.bf16 %v1959, %v1959
    %v2156 = vpack.c.bf16 %v1966, %v1966
    %v2157 = vpack.c.bf16 %v1973, %v1973
    %v2158 = vpack.c.bf16 %v1980, %v1980
    %v2159 = vpack.c.bf16 %v1987, %v1987
    %v2160 = vpack.c.bf16 %v1994, %v1994
    %v2161 = vpack.c.bf16 %v2001, %v2001
    %v2162 = vpack.c.bf16 %v2008, %v2008
    %v2163 = vpack.c.bf16 %v2015, %v2015
    %v2164 = vpack.c.bf16 %v2022, %v2022
    %v2165 = vpack.c.bf16 %v2029, %v2029
    %v2166 = vpack.c.bf16 %v2036, %v2036
    %v2167 = vpack.c.bf16 %v2043, %v2043
    %v2168 = vpack.c.bf16 %v2050, %v2050
    %v2169 = vpack.c.bf16 %v2057, %v2057
    %v2170 = vpack.c.bf16 %v2064, %v2064
    %v2171 = vpack.c.bf16 %v2071, %v2071
    %v2172 = vpack.c.bf16 %v2078, %v2078
    %v2173 = vpack.c.bf16 %v2085, %v2085
    %v2174 = vpack.c.bf16 %v2092, %v2092
    %v2175 = vpack.c.bf16 %v2099, %v2099
    %v2176 = vpack.c.bf16 %v2106, %v2106
    %v2177 = vpack.c.bf16 %v2113, %v2113
    %v2178 = vpack.c.bf16 %v2120, %v2120
    %v2179 = vpack.c.bf16 %v2127, %v2127
    %v2212 = vunpack.c.l.b16 %v2148
    %v2213 = vunpack.c.l.b16 %v2149
    %v2214 = vunpack.c.l.b16 %v2150
    %v2215 = vunpack.c.l.b16 %v2151
    %v2216 = vunpack.c.l.b16 %v2152
    %v2217 = vunpack.c.l.b16 %v2153
    %v2218 = vunpack.c.l.b16 %v2154
    %v2219 = vunpack.c.l.b16 %v2155
    %v2220 = vunpack.c.l.b16 %v2156
    %v2221 = vunpack.c.l.b16 %v2157
    %v2222 = vunpack.c.l.b16 %v2158
    %v2223 = vunpack.c.l.b16 %v2159
    %v2224 = vunpack.c.l.b16 %v2160
    %v2225 = vunpack.c.l.b16 %v2161
    %v2226 = vunpack.c.l.b16 %v2162
    %v2227 = vunpack.c.l.b16 %v2163
    %v2228 = vunpack.c.l.b16 %v2164
    %v2229 = vunpack.c.l.b16 %v2165
    %v2230 = vunpack.c.l.b16 %v2166
    %v2231 = vunpack.c.l.b16 %v2167
    %v2232 = vunpack.c.l.b16 %v2168
    %v2233 = vunpack.c.l.b16 %v2169
    %v2234 = vunpack.c.l.b16 %v2170
    %v2235 = vunpack.c.l.b16 %v2171
    %v2236 = vunpack.c.l.b16 %v2172
    %v2237 = vunpack.c.l.b16 %v2173
    %v2238 = vunpack.c.l.b16 %v2174
    %v2239 = vunpack.c.l.b16 %v2175
    %v2240 = vunpack.c.l.b16 %v2176
    %v2241 = vunpack.c.l.b16 %v2177
    %v2242 = vunpack.c.l.b16 %v2178
    %v2243 = vunpack.c.l.b16 %v2179
    %v2244 = vpack.c.b16 %v2213, %v2212
    %v2245 = vpack.c.b16 %v2215, %v2214
    %v2246 = vpack.c.b16 %v2217, %v2216
    %v2247 = vpack.c.b16 %v2219, %v2218
    %v2248 = vpack.c.b16 %v2221, %v2220
    %v2249 = vpack.c.b16 %v2223, %v2222
    %v2250 = vpack.c.b16 %v2225, %v2224
    %v2251 = vpack.c.b16 %v2227, %v2226
    %v2252 = vpack.c.b16 %v2229, %v2228
    %v2253 = vpack.c.b16 %v2231, %v2230
    %v2254 = vpack.c.b16 %v2233, %v2232
    %v2255 = vpack.c.b16 %v2235, %v2234
    %v2256 = vpack.c.b16 %v2237, %v2236
    %v2257 = vpack.c.b16 %v2239, %v2238
    %v2258 = vpack.c.b16 %v2241, %v2240
    %v2259 = vpack.c.b16 %v2243, %v2242
    %v2260 = vunpack.c.l.b16 %v2244
    %v2261 = vunpack.c.h.b16 %v2244
    %v2262 = vunpack.c.l.b16 %v2245
    %v2263 = vunpack.c.h.b16 %v2245
    %v2264 = vunpack.c.l.b16 %v2246
    %v2265 = vunpack.c.h.b16 %v2246
    %v2266 = vunpack.c.l.b16 %v2247
    %v2267 = vunpack.c.h.b16 %v2247
    %v2268 = vunpack.c.l.b16 %v2248
    %v2269 = vunpack.c.h.b16 %v2248
    %v2270 = vunpack.c.l.b16 %v2249
    %v2271 = vunpack.c.h.b16 %v2249
    %v2272 = vunpack.c.l.b16 %v2250
    %v2273 = vunpack.c.h.b16 %v2250
    %v2274 = vunpack.c.l.b16 %v2251
    %v2275 = vunpack.c.h.b16 %v2251
    %v2276 = vunpack.c.l.b16 %v2252
    %v2277 = vunpack.c.h.b16 %v2252
    %v2278 = vunpack.c.l.b16 %v2253
    %v2279 = vunpack.c.h.b16 %v2253
    %v2280 = vunpack.c.l.b16 %v2254
    %v2281 = vunpack.c.h.b16 %v2254
    %v2282 = vunpack.c.l.b16 %v2255
    %v2283 = vunpack.c.h.b16 %v2255
    %v2284 = vunpack.c.l.b16 %v2256
    %v2285 = vunpack.c.h.b16 %v2256
    %v2286 = vunpack.c.l.b16 %v2257
    %v2287 = vunpack.c.h.b16 %v2257
    %v2288 = vunpack.c.l.b16 %v2258
    %v2289 = vunpack.c.h.b16 %v2258
    %v2290 = vunpack.c.l.b16 %v2259
    %v2291 = vunpack.c.h.b16 %v2259
    %v2292 = vsel %vm1039, %v2262, %v2260
    %v2293 = vsel %vm1041, %v2264, %v2292
    %v2294 = vsel %vm1043, %v2266, %v2293
    %v2295 = vsel %vm1045, %v2268, %v2294
    %v2296 = vsel %vm1047, %v2270, %v2295
    %v2297 = vsel %vm1049, %v2272, %v2296
    %v2298 = vsel %vm1051, %v2274, %v2297
    %v2299 = vsel %vm1039, %v2263, %v2261
    %v2300 = vsel %vm1041, %v2265, %v2299
    %v2301 = vsel %vm1043, %v2267, %v2300
    %v2302 = vsel %vm1045, %v2269, %v2301
    %v2303 = vsel %vm1047, %v2271, %v2302
    %v2304 = vsel %vm1049, %v2273, %v2303
    %v2305 = vsel %vm1051, %v2275, %v2304
    %v2306 = vsel %vm1039, %v2278, %v2276
    %v2307 = vsel %vm1041, %v2280, %v2306
    %v2308 = vsel %vm1043, %v2282, %v2307
    %v2309 = vsel %vm1045, %v2284, %v2308
    %v2310 = vsel %vm1047, %v2286, %v2309
    %v2311 = vsel %vm1049, %v2288, %v2310
    %v2312 = vsel %vm1051, %v2290, %v2311
    %v2313 = vsel %vm1039, %v2279, %v2277
    %v2314 = vsel %vm1041, %v2281, %v2313
    %v2315 = vsel %vm1043, %v2283, %v2314
    %v2316 = vsel %vm1045, %v2285, %v2315
    %v2317 = vsel %vm1047, %v2287, %v2316
    %v2318 = vsel %vm1049, %v2289, %v2317
    %v2319 = vsel %vm1051, %v2291, %v2318
    %v2320 = vpack.c.b16 %v2305, %v2298
    %v2321 = vpack.c.b16 %v2319, %v2312
    %2324 = vst [vmem:[#allocation3 + $0x10] sm:$0xff] %v2320
    %2325 = vst [vmem:[#allocation3 + $0x38] sm:$0xff] %v2321
    %v2326 = vld [vmem:[#allocation3 + $0x8] sm:$0x88]
    %v2327 = vld [vmem:[#allocation3 + $0x10] sm:$0xff]
    %v2328 = vld [vmem:[#allocation3 + $0x30] sm:$0x88]
    %v2329 = vld [vmem:[#allocation3 + $0x38] sm:$0xff]
    %vm2330 = vsmask.f32 4368
    %vm2331 = vmor %vm935, %vm2330
    %v2333 = vshrl.u32 %v2326, 16
    %v2335 = vrot.slane %v2333, 7
    %v2336 = vrot.slane %v2335, 4
    %v2338 = vshrl.u32 %v2327, 16
    %v2340 = vrot.slane %v2338, 7
    %v2341 = vshll.u32 %v2327, 16
    %v2343 = vor.u32 %v2340, %v2341
    %v2344 = vsel %vm2331, %v2336, %v2343
    %v2346 = vshrl.u32 %v2328, 16
    %v2348 = vrot.slane %v2346, 7
    %v2349 = vrot.slane %v2348, 4
    %v2351 = vshrl.u32 %v2329, 16
    %v2353 = vrot.slane %v2351, 7
    %v2354 = vshll.u32 %v2329, 16
    %v2356 = vor.u32 %v2353, %v2354
    %v2357 = vsel %vm2331, %v2349, %v2356
    %v2358 = vld [vmem:[#allocation22] sm:$0xff]
    %v2359 = vld [vmem:[#allocation22 + $0x8] sm:$0xff]
    %v2360 = vld [vmem:[#allocation22 + $0x10] sm:$0xff]
    %v2361 = vld [vmem:[#allocation22 + $0x18] sm:$0xff]
    %v2362 = vld [vmem:[#allocation22 + $0x20] sm:$0xff]
    %v2363 = vld [vmem:[#allocation22 + $0x28] sm:$0xff]
    %v2364 = vld [vmem:[#allocation22 + $0x30] sm:$0xff]
    %v2365 = vld [vmem:[#allocation22 + $0x38] sm:$0xff]
    %v2366 = vld [vmem:[#allocation22 + $0x40] sm:$0xff]
    %v2367 = vld [vmem:[#allocation22 + $0x48] sm:$0xff]
    %v2368 = vld [vmem:[#allocation22 + $0x50] sm:$0xff]
    %v2369 = vld [vmem:[#allocation22 + $0x58] sm:$0xff]
    %v2370 = vld [vmem:[#allocation22 + $0x60] sm:$0xff]
    %v2371 = vld [vmem:[#allocation22 + $0x68] sm:$0xff]
    %v2372 = vld [vmem:[#allocation22 + $0x70] sm:$0xff]
    %v2373 = vld [vmem:[#allocation22 + $0x78] sm:$0xff]
    %v2374 = vld [vmem:[#allocation22 + $0x80] sm:$0xff]
    %v2375 = vld [vmem:[#allocation22 + $0x88] sm:$0xff]
    %v2376 = vld [vmem:[#allocation22 + $0x90] sm:$0xff]
    %v2377 = vld [vmem:[#allocation22 + $0x98] sm:$0xff]
    %v2378 = vld [vmem:[#allocation22 + $0xa0] sm:$0xff]
    %v2379 = vld [vmem:[#allocation22 + $0xa8] sm:$0xff]
    %v2380 = vld [vmem:[#allocation22 + $0xb0] sm:$0xff]
    %v2381 = vld [vmem:[#allocation22 + $0xb8] sm:$0xff]
    %v2382 = vld [vmem:[#allocation22 + $0xc0] sm:$0xff]
    %v2383 = vld [vmem:[#allocation22 + $0xc8] sm:$0xff]
    %v2384 = vld [vmem:[#allocation22 + $0xd0] sm:$0xff]
    %v2385 = vld [vmem:[#allocation22 + $0xd8] sm:$0xff]
    %v2386 = vld [vmem:[#allocation22 + $0xe0] sm:$0xff]
    %v2387 = vld [vmem:[#allocation22 + $0xe8] sm:$0xff]
    %v2388 = vld [vmem:[#allocation22 + $0xf0] sm:$0xff]
    %v2389 = vld [vmem:[#allocation22 + $0xf8] sm:$0xff]
    %v2390 = vld [vmem:[#allocation22 + $0x100] sm:$0xff]
    %v2391 = vld [vmem:[#allocation22 + $0x108] sm:$0xff]
    %v2392 = vld [vmem:[#allocation22 + $0x110] sm:$0xff]
    %v2393 = vld [vmem:[#allocation22 + $0x118] sm:$0xff]
    %v2394 = vld [vmem:[#allocation22 + $0x120] sm:$0xff]
    %v2395 = vld [vmem:[#allocation22 + $0x128] sm:$0xff]
    %v2396 = vld [vmem:[#allocation22 + $0x130] sm:$0xff]
    %v2397 = vld [vmem:[#allocation22 + $0x138] sm:$0xff]
    %v2398 = vld [vmem:[#allocation22 + $0x140] sm:$0xff]
    %v2399 = vld [vmem:[#allocation22 + $0x148] sm:$0xff]
    %v2400 = vld [vmem:[#allocation22 + $0x150] sm:$0xff]
    %v2401 = vld [vmem:[#allocation22 + $0x158] sm:$0xff]
    %v2402 = vld [vmem:[#allocation22 + $0x160] sm:$0xff]
    %v2403 = vld [vmem:[#allocation22 + $0x168] sm:$0xff]
    %v2404 = vld [vmem:[#allocation22 + $0x170] sm:$0xff]
    %v2405 = vld [vmem:[#allocation22 + $0x178] sm:$0xff]
    %v2406 = vld [vmem:[#allocation22 + $0x180] sm:$0xff]
    %v2407 = vld [vmem:[#allocation22 + $0x188] sm:$0xff]
    %v2408 = vld [vmem:[#allocation22 + $0x190] sm:$0xff]
    %v2409 = vld [vmem:[#allocation22 + $0x198] sm:$0xff]
    %v2410 = vld [vmem:[#allocation22 + $0x1a0] sm:$0xff]
    %v2411 = vld [vmem:[#allocation22 + $0x1a8] sm:$0xff]
    %v2412 = vld [vmem:[#allocation22 + $0x1b0] sm:$0xff]
    %v2413 = vld [vmem:[#allocation22 + $0x1b8] sm:$0xff]
    %v2414 = vld [vmem:[#allocation22 + $0x1c0] sm:$0xff]
    %v2415 = vld [vmem:[#allocation22 + $0x1c8] sm:$0xff]
    %v2416 = vld [vmem:[#allocation22 + $0x1d0] sm:$0xff]
    %v2417 = vld [vmem:[#allocation22 + $0x1d8] sm:$0xff]
    %v2418 = vld [vmem:[#allocation22 + $0x1e0] sm:$0xff]
    %v2419 = vld [vmem:[#allocation22 + $0x1e8] sm:$0xff]
    %v2420 = vld [vmem:[#allocation22 + $0x1f0] sm:$0xff]
    %v2421 = vld [vmem:[#allocation22 + $0x1f8] sm:$0xff]
    %v2422 = vld [vmem:[#allocation22 + $0x200] sm:$0xff]
    %v2423 = vld [vmem:[#allocation22 + $0x208] sm:$0xff]
    %v2424 = vld [vmem:[#allocation22 + $0x210] sm:$0xff]
    %v2425 = vld [vmem:[#allocation22 + $0x218] sm:$0xff]
    %v2426 = vld [vmem:[#allocation22 + $0x220] sm:$0xff]
    %v2427 = vld [vmem:[#allocation22 + $0x228] sm:$0xff]
    %v2428 = vld [vmem:[#allocation22 + $0x230] sm:$0xff]
    %v2429 = vld [vmem:[#allocation22 + $0x238] sm:$0xff]
    %v2430 = vld [vmem:[#allocation22 + $0x240] sm:$0xff]
    %v2431 = vld [vmem:[#allocation22 + $0x248] sm:$0xff]
    %v2432 = vld [vmem:[#allocation22 + $0x250] sm:$0xff]
    %v2433 = vld [vmem:[#allocation22 + $0x258] sm:$0xff]
    %v2434 = vld [vmem:[#allocation22 + $0x260] sm:$0xff]
    %v2435 = vld [vmem:[#allocation22 + $0x268] sm:$0xff]
    %v2436 = vld [vmem:[#allocation22 + $0x270] sm:$0xff]
    %v2437 = vld [vmem:[#allocation22 + $0x278] sm:$0xff]
    %v2438 = vld [vmem:[#allocation22 + $0x280] sm:$0xff]
    %v2439 = vld [vmem:[#allocation22 + $0x288] sm:$0xff]
    %v2440 = vld [vmem:[#allocation22 + $0x290] sm:$0xff]
    %v2441 = vld [vmem:[#allocation22 + $0x298] sm:$0xff]
    %v2442 = vld [vmem:[#allocation22 + $0x2a0] sm:$0xff]
    %v2443 = vld [vmem:[#allocation22 + $0x2a8] sm:$0xff]
    %v2444 = vld [vmem:[#allocation22 + $0x2b0] sm:$0xff]
    %v2445 = vld [vmem:[#allocation22 + $0x2b8] sm:$0xff]
    %v2446 = vld [vmem:[#allocation22 + $0x2c0] sm:$0xff]
    %v2447 = vld [vmem:[#allocation22 + $0x2c8] sm:$0xff]
    %v2448 = vld [vmem:[#allocation22 + $0x2d0] sm:$0xff]
    %v2449 = vld [vmem:[#allocation22 + $0x2d8] sm:$0xff]
    %v2450 = vld [vmem:[#allocation22 + $0x2e0] sm:$0xff]
    %v2451 = vld [vmem:[#allocation22 + $0x2e8] sm:$0xff]
    %v2452 = vld [vmem:[#allocation22 + $0x2f0] sm:$0xff]
    %v2453 = vld [vmem:[#allocation22 + $0x2f8] sm:$0xff]
    %v2454 = vld [vmem:[#allocation22 + $0x300] sm:$0xff]
    %v2455 = vld [vmem:[#allocation22 + $0x308] sm:$0xff]
    %v2456 = vld [vmem:[#allocation22 + $0x310] sm:$0xff]
    %v2457 = vld [vmem:[#allocation22 + $0x318] sm:$0xff]
    %v2458 = vld [vmem:[#allocation22 + $0x320] sm:$0xff]
    %v2459 = vld [vmem:[#allocation22 + $0x328] sm:$0xff]
    %v2460 = vld [vmem:[#allocation22 + $0x330] sm:$0xff]
    %v2461 = vld [vmem:[#allocation22 + $0x338] sm:$0xff]
    %v2462 = vld [vmem:[#allocation22 + $0x340] sm:$0xff]
    %v2463 = vld [vmem:[#allocation22 + $0x348] sm:$0xff]
    %v2464 = vld [vmem:[#allocation22 + $0x350] sm:$0xff]
    %v2465 = vld [vmem:[#allocation22 + $0x358] sm:$0xff]
    %v2466 = vld [vmem:[#allocation22 + $0x360] sm:$0xff]
    %v2467 = vld [vmem:[#allocation22 + $0x368] sm:$0xff]
    %v2468 = vld [vmem:[#allocation22 + $0x370] sm:$0xff]
    %v2469 = vld [vmem:[#allocation22 + $0x378] sm:$0xff]
    %v2470 = vld [vmem:[#allocation22 + $0x380] sm:$0xff]
    %v2471 = vld [vmem:[#allocation22 + $0x388] sm:$0xff]
    %v2472 = vld [vmem:[#allocation22 + $0x390] sm:$0xff]
    %v2473 = vld [vmem:[#allocation22 + $0x398] sm:$0xff]
    %v2474 = vld [vmem:[#allocation22 + $0x3a0] sm:$0xff]
    %v2475 = vld [vmem:[#allocation22 + $0x3a8] sm:$0xff]
    %v2476 = vld [vmem:[#allocation22 + $0x3b0] sm:$0xff]
    %v2477 = vld [vmem:[#allocation22 + $0x3b8] sm:$0xff]
    %v2478 = vld [vmem:[#allocation22 + $0x3c0] sm:$0xff]
    %v2479 = vld [vmem:[#allocation22 + $0x3c8] sm:$0xff]
    %v2480 = vld [vmem:[#allocation22 + $0x3d0] sm:$0xff]
    %v2481 = vld [vmem:[#allocation22 + $0x3d8] sm:$0xff]
    %v2482 = vld [vmem:[#allocation22 + $0x3e0] sm:$0xff]
    %v2483 = vld [vmem:[#allocation22 + $0x3e8] sm:$0xff]
    %v2484 = vld [vmem:[#allocation22 + $0x3f0] sm:$0xff]
    %v2485 = vld [vmem:[#allocation22 + $0x3f8] sm:$0xff]
    %v2488 = vunpack.c.l.b16 %v2327
    %v2489 = vunpack.c.h.b16 %v2327
    %v2490 = vunpack.c.l.b16 %v2329
    %v2491 = vunpack.c.h.b16 %v2329
    %v2492 = vpack.c.b16 %v2490, %v2488
    %v2493 = vpack.c.b16 %v2491, %v2489
    %v2560 = vunpack.c.l.b16 %v2422
    %v2561 = vunpack.c.h.b16 %v2422
    %v2562 = vunpack.c.l.b16 %v2423
    %v2563 = vunpack.c.h.b16 %v2423
    %v2564 = vunpack.c.l.b16 %v2424
    %v2565 = vunpack.c.h.b16 %v2424
    %v2566 = vunpack.c.l.b16 %v2425
    %v2567 = vunpack.c.h.b16 %v2425
    %v2568 = vunpack.c.l.b16 %v2426
    %v2569 = vunpack.c.h.b16 %v2426
    %v2570 = vunpack.c.l.b16 %v2427
    %v2571 = vunpack.c.h.b16 %v2427
    %v2572 = vunpack.c.l.b16 %v2428
    %v2573 = vunpack.c.h.b16 %v2428
    %v2574 = vunpack.c.l.b16 %v2429
    %v2575 = vunpack.c.h.b16 %v2429
    %v2576 = vunpack.c.l.b16 %v2430
    %v2577 = vunpack.c.h.b16 %v2430
    %v2578 = vunpack.c.l.b16 %v2431
    %v2579 = vunpack.c.h.b16 %v2431
    %v2580 = vunpack.c.l.b16 %v2432
    %v2581 = vunpack.c.h.b16 %v2432
    %v2582 = vunpack.c.l.b16 %v2433
    %v2583 = vunpack.c.h.b16 %v2433
    %v2584 = vunpack.c.l.b16 %v2434
    %v2585 = vunpack.c.h.b16 %v2434
    %v2586 = vunpack.c.l.b16 %v2435
    %v2587 = vunpack.c.h.b16 %v2435
    %v2588 = vunpack.c.l.b16 %v2436
    %v2589 = vunpack.c.h.b16 %v2436
    %v2590 = vunpack.c.l.b16 %v2437
    %v2591 = vunpack.c.h.b16 %v2437
    %v2592 = vunpack.c.l.b16 %v2438
    %v2593 = vunpack.c.h.b16 %v2438
    %v2594 = vunpack.c.l.b16 %v2439
    %v2595 = vunpack.c.h.b16 %v2439
    %v2596 = vunpack.c.l.b16 %v2440
    %v2597 = vunpack.c.h.b16 %v2440
    %v2598 = vunpack.c.l.b16 %v2441
    %v2599 = vunpack.c.h.b16 %v2441
    %v2600 = vunpack.c.l.b16 %v2442
    %v2601 = vunpack.c.h.b16 %v2442
    %v2602 = vunpack.c.l.b16 %v2443
    %v2603 = vunpack.c.h.b16 %v2443
    %v2604 = vunpack.c.l.b16 %v2444
    %v2605 = vunpack.c.h.b16 %v2444
    %v2606 = vunpack.c.l.b16 %v2445
    %v2607 = vunpack.c.h.b16 %v2445
    %v2608 = vunpack.c.l.b16 %v2446
    %v2609 = vunpack.c.h.b16 %v2446
    %v2610 = vunpack.c.l.b16 %v2447
    %v2611 = vunpack.c.h.b16 %v2447
    %v2612 = vunpack.c.l.b16 %v2448
    %v2613 = vunpack.c.h.b16 %v2448
    %v2614 = vunpack.c.l.b16 %v2449
    %v2615 = vunpack.c.h.b16 %v2449
    %v2616 = vunpack.c.l.b16 %v2450
    %v2617 = vunpack.c.h.b16 %v2450
    %v2618 = vunpack.c.l.b16 %v2451
    %v2619 = vunpack.c.h.b16 %v2451
    %v2620 = vunpack.c.l.b16 %v2452
    %v2621 = vunpack.c.h.b16 %v2452
    %v2622 = vunpack.c.l.b16 %v2453
    %v2623 = vunpack.c.h.b16 %v2453
    %v2624 = vunpack.c.l.b16 %v2454
    %v2625 = vunpack.c.h.b16 %v2454
    %v2626 = vunpack.c.l.b16 %v2455
    %v2627 = vunpack.c.h.b16 %v2455
    %v2628 = vunpack.c.l.b16 %v2456
    %v2629 = vunpack.c.h.b16 %v2456
    %v2630 = vunpack.c.l.b16 %v2457
    %v2631 = vunpack.c.h.b16 %v2457
    %v2632 = vunpack.c.l.b16 %v2458
    %v2633 = vunpack.c.h.b16 %v2458
    %v2634 = vunpack.c.l.b16 %v2459
    %v2635 = vunpack.c.h.b16 %v2459
    %v2636 = vunpack.c.l.b16 %v2460
    %v2637 = vunpack.c.h.b16 %v2460
    %v2638 = vunpack.c.l.b16 %v2461
    %v2639 = vunpack.c.h.b16 %v2461
    %v2640 = vunpack.c.l.b16 %v2462
    %v2641 = vunpack.c.h.b16 %v2462
    %v2642 = vunpack.c.l.b16 %v2463
    %v2643 = vunpack.c.h.b16 %v2463
    %v2644 = vunpack.c.l.b16 %v2464
    %v2645 = vunpack.c.h.b16 %v2464
    %v2646 = vunpack.c.l.b16 %v2465
    %v2647 = vunpack.c.h.b16 %v2465
    %v2648 = vunpack.c.l.b16 %v2466
    %v2649 = vunpack.c.h.b16 %v2466
    %v2650 = vunpack.c.l.b16 %v2467
    %v2651 = vunpack.c.h.b16 %v2467
    %v2652 = vunpack.c.l.b16 %v2468
    %v2653 = vunpack.c.h.b16 %v2468
    %v2654 = vunpack.c.l.b16 %v2469
    %v2655 = vunpack.c.h.b16 %v2469
    %v2656 = vunpack.c.l.b16 %v2470
    %v2657 = vunpack.c.h.b16 %v2470
    %v2658 = vunpack.c.l.b16 %v2471
    %v2659 = vunpack.c.h.b16 %v2471
    %v2660 = vunpack.c.l.b16 %v2472
    %v2661 = vunpack.c.h.b16 %v2472
    %v2662 = vunpack.c.l.b16 %v2473
    %v2663 = vunpack.c.h.b16 %v2473
    %v2664 = vunpack.c.l.b16 %v2474
    %v2665 = vunpack.c.h.b16 %v2474
    %v2666 = vunpack.c.l.b16 %v2475
    %v2667 = vunpack.c.h.b16 %v2475
    %v2668 = vunpack.c.l.b16 %v2476
    %v2669 = vunpack.c.h.b16 %v2476
    %v2670 = vunpack.c.l.b16 %v2477
    %v2671 = vunpack.c.h.b16 %v2477
    %v2672 = vunpack.c.l.b16 %v2478
    %v2673 = vunpack.c.h.b16 %v2478
    %v2674 = vunpack.c.l.b16 %v2479
    %v2675 = vunpack.c.h.b16 %v2479
    %v2676 = vunpack.c.l.b16 %v2480
    %v2677 = vunpack.c.h.b16 %v2480
    %v2678 = vunpack.c.l.b16 %v2481
    %v2679 = vunpack.c.h.b16 %v2481
    %v2680 = vunpack.c.l.b16 %v2482
    %v2681 = vunpack.c.h.b16 %v2482
    %v2682 = vunpack.c.l.b16 %v2483
    %v2683 = vunpack.c.h.b16 %v2483
    %v2684 = vunpack.c.l.b16 %v2484
    %v2685 = vunpack.c.h.b16 %v2484
    %v2686 = vunpack.c.l.b16 %v2485
    %v2687 = vunpack.c.h.b16 %v2485
    %v2688 = vpack.c.b16 %v2564, %v2560
    %v2689 = vpack.c.b16 %v2565, %v2561
    %v2690 = vpack.c.b16 %v2566, %v2562
    %v2691 = vpack.c.b16 %v2567, %v2563
    %v2692 = vpack.c.b16 %v2572, %v2568
    %v2693 = vpack.c.b16 %v2573, %v2569
    %v2694 = vpack.c.b16 %v2574, %v2570
    %v2695 = vpack.c.b16 %v2575, %v2571
    %v2696 = vpack.c.b16 %v2580, %v2576
    %v2697 = vpack.c.b16 %v2581, %v2577
    %v2698 = vpack.c.b16 %v2582, %v2578
    %v2699 = vpack.c.b16 %v2583, %v2579
    %v2700 = vpack.c.b16 %v2588, %v2584
    %v2701 = vpack.c.b16 %v2589, %v2585
    %v2702 = vpack.c.b16 %v2590, %v2586
    %v2703 = vpack.c.b16 %v2591, %v2587
    %v2704 = vpack.c.b16 %v2596, %v2592
    %v2705 = vpack.c.b16 %v2597, %v2593
    %v2706 = vpack.c.b16 %v2598, %v2594
    %v2707 = vpack.c.b16 %v2599, %v2595
    %v2708 = vpack.c.b16 %v2604, %v2600
    %v2709 = vpack.c.b16 %v2605, %v2601
    %v2710 = vpack.c.b16 %v2606, %v2602
    %v2711 = vpack.c.b16 %v2607, %v2603
    %v2712 = vpack.c.b16 %v2612, %v2608
    %v2713 = vpack.c.b16 %v2613, %v2609
    %v2714 = vpack.c.b16 %v2614, %v2610
    %v2715 = vpack.c.b16 %v2615, %v2611
    %v2716 = vpack.c.b16 %v2620, %v2616
    %v2717 = vpack.c.b16 %v2621, %v2617
    %v2718 = vpack.c.b16 %v2622, %v2618
    %v2719 = vpack.c.b16 %v2623, %v2619
    %v2720 = vpack.c.b16 %v2628, %v2624
    %v2721 = vpack.c.b16 %v2629, %v2625
    %v2722 = vpack.c.b16 %v2630, %v2626
    %v2723 = vpack.c.b16 %v2631, %v2627
    %v2724 = vpack.c.b16 %v2636, %v2632
    %v2725 = vpack.c.b16 %v2637, %v2633
    %v2726 = vpack.c.b16 %v2638, %v2634
    %v2727 = vpack.c.b16 %v2639, %v2635
    %v2728 = vpack.c.b16 %v2644, %v2640
    %v2729 = vpack.c.b16 %v2645, %v2641
    %v2730 = vpack.c.b16 %v2646, %v2642
    %v2731 = vpack.c.b16 %v2647, %v2643
    %v2732 = vpack.c.b16 %v2652, %v2648
    %v2733 = vpack.c.b16 %v2653, %v2649
    %v2734 = vpack.c.b16 %v2654, %v2650
    %v2735 = vpack.c.b16 %v2655, %v2651
    %v2736 = vpack.c.b16 %v2660, %v2656
    %v2737 = vpack.c.b16 %v2661, %v2657
    %v2738 = vpack.c.b16 %v2662, %v2658
    %v2739 = vpack.c.b16 %v2663, %v2659
    %v2740 = vpack.c.b16 %v2668, %v2664
    %v2741 = vpack.c.b16 %v2669, %v2665
    %v2742 = vpack.c.b16 %v2670, %v2666
    %v2743 = vpack.c.b16 %v2671, %v2667
    %v2744 = vpack.c.b16 %v2676, %v2672
    %v2745 = vpack.c.b16 %v2677, %v2673
    %v2746 = vpack.c.b16 %v2678, %v2674
    %v2747 = vpack.c.b16 %v2679, %v2675
    %v2748 = vpack.c.b16 %v2684, %v2680
    %v2749 = vpack.c.b16 %v2685, %v2681
    %v2750 = vpack.c.b16 %v2686, %v2682
    %v2751 = vpack.c.b16 %v2687, %v2683
    %2816 = vmatprep.subr.bf16.mxu0 %v2689
    %2817 = vmatpush1.bf16.msra.mxu0 %v2688
    %2818 = vmatprep.subr.bf16.mxu0 %v2693
    %2819 = vmatpush1.bf16.msra.mxu0 %v2692
    %2820 = vmatprep.subr.bf16.mxu0 %v2697
    %2821 = vmatpush1.bf16.msra.mxu0 %v2696
    %2822 = vmatprep.subr.bf16.mxu0 %v2701
    %2823 = vmatpush1.bf16.msra.mxu0 %v2700
    %2824 = vmatprep.subr.bf16.mxu0 %v2705
    %2825 = vmatpush1.bf16.msra.mxu0 %v2704
    %2826 = vmatprep.subr.bf16.mxu0 %v2709
    %2827 = vmatpush1.bf16.msra.mxu0 %v2708
    %2828 = vmatprep.subr.bf16.mxu0 %v2713
    %2829 = vmatpush1.bf16.msra.mxu0 %v2712
    %2830 = vmatprep.subr.bf16.mxu0 %v2717
    %2831 = vmatpush1.bf16.msra.mxu0 %v2716
    %2832 = vmatprep.subr.bf16.mxu0 %v2721
    %2833 = vmatpush1.bf16.msra.mxu0 %v2720
    %2834 = vmatprep.subr.bf16.mxu0 %v2725
    %2835 = vmatpush1.bf16.msra.mxu0 %v2724
    %2836 = vmatprep.subr.bf16.mxu0 %v2729
    %2837 = vmatpush1.bf16.msra.mxu0 %v2728
    %2838 = vmatprep.subr.bf16.mxu0 %v2733
    %2839 = vmatpush1.bf16.msra.mxu0 %v2732
    %2840 = vmatprep.subr.bf16.mxu0 %v2737
    %2841 = vmatpush1.bf16.msra.mxu0 %v2736
    %2842 = vmatprep.subr.bf16.mxu0 %v2741
    %2843 = vmatpush1.bf16.msra.mxu0 %v2740
    %2844 = vmatprep.subr.bf16.mxu0 %v2745
    %2845 = vmatpush1.bf16.msra.mxu0 %v2744
    %2846 = vmatprep.subr.bf16.mxu0 %v2749
    %2847 = vmatpush1.bf16.msra.mxu0 %v2748
    %2848 = vmatprep.mubr.bf16.mxu0 %v2493
    %2849 = vmatmul.mubr.bf16.gmra.mrb[0].mxu0 %v2492
    %v2850 = vpop.f32.mrb[0].mxu0
    %v2851 = vadd.f32 0.0, %v2850
    %v2852 = vpop.f32.mrb[0].mxu0
    %v2853 = vadd.f32 0.0, %v2852
    %v2854 = vpop.f32.mrb[0].mxu0
    %v2855 = vadd.f32 0.0, %v2854
    %v2856 = vpop.f32.mrb[0].mxu0
    %v2857 = vadd.f32 0.0, %v2856
    %2858 = vdwg.mxu0
    %2859 = vmatprep.subr.bf16.mxu0 %v2691
    %2860 = vmatpush1.bf16.msra.mxu0 %v2690
    %2861 = vmatprep.subr.bf16.mxu0 %v2695
    %2862 = vmatpush1.bf16.msra.mxu0 %v2694
    %2863 = vmatprep.subr.bf16.mxu0 %v2699
    %2864 = vmatpush1.bf16.msra.mxu0 %v2698
    %2865 = vmatprep.subr.bf16.mxu0 %v2703
    %2866 = vmatpush1.bf16.msra.mxu0 %v2702
    %2867 = vmatprep.subr.bf16.mxu0 %v2707
    %2868 = vmatpush1.bf16.msra.mxu0 %v2706
    %2869 = vmatprep.subr.bf16.mxu0 %v2711
    %2870 = vmatpush1.bf16.msra.mxu0 %v2710
    %2871 = vmatprep.subr.bf16.mxu0 %v2715
    %2872 = vmatpush1.bf16.msra.mxu0 %v2714
    %2873 = vmatprep.subr.bf16.mxu0 %v2719
    %2874 = vmatpush1.bf16.msra.mxu0 %v2718
    %2875 = vmatprep.subr.bf16.mxu0 %v2723
    %2876 = vmatpush1.bf16.msra.mxu0 %v2722
    %2877 = vmatprep.subr.bf16.mxu0 %v2727
    %2878 = vmatpush1.bf16.msra.mxu0 %v2726
    %2879 = vmatprep.subr.bf16.mxu0 %v2731
    %2880 = vmatpush1.bf16.msra.mxu0 %v2730
    %2881 = vmatprep.subr.bf16.mxu0 %v2735
    %2882 = vmatpush1.bf16.msra.mxu0 %v2734
    %2883 = vmatprep.subr.bf16.mxu0 %v2739
    %2884 = vmatpush1.bf16.msra.mxu0 %v2738
    %2885 = vmatprep.subr.bf16.mxu0 %v2743
    %2886 = vmatpush1.bf16.msra.mxu0 %v2742
    %2887 = vmatprep.subr.bf16.mxu0 %v2747
    %2888 = vmatpush1.bf16.msra.mxu0 %v2746
    %2889 = vmatprep.subr.bf16.mxu0 %v2751
    %2890 = vmatpush1.bf16.msra.mxu0 %v2750
    %2891 = vmatprep.mubr.bf16.mxu0 %v2493
    %2892 = vmatmul.mubr.bf16.gmra.mrb[0].mxu0 %v2492
    %v2893 = vpop.f32.mrb[0].mxu0
    %v2894 = vadd.f32 0.0, %v2893
    %v2895 = vpop.f32.mrb[0].mxu0
    %v2896 = vadd.f32 0.0, %v2895
    %v2897 = vpop.f32.mrb[0].mxu0
    %v2898 = vadd.f32 0.0, %v2897
    %v2899 = vpop.f32.mrb[0].mxu0
    %v2900 = vadd.f32 0.0, %v2899
    %2901 = vdwg.mxu0
    %v2902 = vunpack.c.l.b16 %v2344
    %v2903 = vunpack.c.h.b16 %v2344
    %v2904 = vunpack.c.l.b16 %v2357
    %v2905 = vunpack.c.h.b16 %v2357
    %v2906 = vpack.c.b16 %v2904, %v2902
    %v2907 = vpack.c.b16 %v2905, %v2903
    %v2974 = vunpack.c.l.b16 %v2358
    %v2975 = vunpack.c.h.b16 %v2358
    %v2976 = vunpack.c.l.b16 %v2359
    %v2977 = vunpack.c.h.b16 %v2359
    %v2978 = vunpack.c.l.b16 %v2360
    %v2979 = vunpack.c.h.b16 %v2360
    %v2980 = vunpack.c.l.b16 %v2361
    %v2981 = vunpack.c.h.b16 %v2361
    %v2982 = vunpack.c.l.b16 %v2362
    %v2983 = vunpack.c.h.b16 %v2362
    %v2984 = vunpack.c.l.b16 %v2363
    %v2985 = vunpack.c.h.b16 %v2363
    %v2986 = vunpack.c.l.b16 %v2364
    %v2987 = vunpack.c.h.b16 %v2364
    %v2988 = vunpack.c.l.b16 %v2365
    %v2989 = vunpack.c.h.b16 %v2365
    %v2990 = vunpack.c.l.b16 %v2366
    %v2991 = vunpack.c.h.b16 %v2366
    %v2992 = vunpack.c.l.b16 %v2367
    %v2993 = vunpack.c.h.b16 %v2367
    %v2994 = vunpack.c.l.b16 %v2368
    %v2995 = vunpack.c.h.b16 %v2368
    %v2996 = vunpack.c.l.b16 %v2369
    %v2997 = vunpack.c.h.b16 %v2369
    %v2998 = vunpack.c.l.b16 %v2370
    %v2999 = vunpack.c.h.b16 %v2370
    %v3000 = vunpack.c.l.b16 %v2371
    %v3001 = vunpack.c.h.b16 %v2371
    %v3002 = vunpack.c.l.b16 %v2372
    %v3003 = vunpack.c.h.b16 %v2372
    %v3004 = vunpack.c.l.b16 %v2373
    %v3005 = vunpack.c.h.b16 %v2373
    %v3006 = vunpack.c.l.b16 %v2374
    %v3007 = vunpack.c.h.b16 %v2374
    %v3008 = vunpack.c.l.b16 %v2375
    %v3009 = vunpack.c.h.b16 %v2375
    %v3010 = vunpack.c.l.b16 %v2376
    %v3011 = vunpack.c.h.b16 %v2376
    %v3012 = vunpack.c.l.b16 %v2377
    %v3013 = vunpack.c.h.b16 %v2377
    %v3014 = vunpack.c.l.b16 %v2378
    %v3015 = vunpack.c.h.b16 %v2378
    %v3016 = vunpack.c.l.b16 %v2379
    %v3017 = vunpack.c.h.b16 %v2379
    %v3018 = vunpack.c.l.b16 %v2380
    %v3019 = vunpack.c.h.b16 %v2380
    %v3020 = vunpack.c.l.b16 %v2381
    %v3021 = vunpack.c.h.b16 %v2381
    %v3022 = vunpack.c.l.b16 %v2382
    %v3023 = vunpack.c.h.b16 %v2382
    %v3024 = vunpack.c.l.b16 %v2383
    %v3025 = vunpack.c.h.b16 %v2383
    %v3026 = vunpack.c.l.b16 %v2384
    %v3027 = vunpack.c.h.b16 %v2384
    %v3028 = vunpack.c.l.b16 %v2385
    %v3029 = vunpack.c.h.b16 %v2385
    %v3030 = vunpack.c.l.b16 %v2386
    %v3031 = vunpack.c.h.b16 %v2386
    %v3032 = vunpack.c.l.b16 %v2387
    %v3033 = vunpack.c.h.b16 %v2387
    %v3034 = vunpack.c.l.b16 %v2388
    %v3035 = vunpack.c.h.b16 %v2388
    %v3036 = vunpack.c.l.b16 %v2389
    %v3037 = vunpack.c.h.b16 %v2389
    %v3038 = vunpack.c.l.b16 %v2390
    %v3039 = vunpack.c.h.b16 %v2390
    %v3040 = vunpack.c.l.b16 %v2391
    %v3041 = vunpack.c.h.b16 %v2391
    %v3042 = vunpack.c.l.b16 %v2392
    %v3043 = vunpack.c.h.b16 %v2392
    %v3044 = vunpack.c.l.b16 %v2393
    %v3045 = vunpack.c.h.b16 %v2393
    %v3046 = vunpack.c.l.b16 %v2394
    %v3047 = vunpack.c.h.b16 %v2394
    %v3048 = vunpack.c.l.b16 %v2395
    %v3049 = vunpack.c.h.b16 %v2395
    %v3050 = vunpack.c.l.b16 %v2396
    %v3051 = vunpack.c.h.b16 %v2396
    %v3052 = vunpack.c.l.b16 %v2397
    %v3053 = vunpack.c.h.b16 %v2397
    %v3054 = vunpack.c.l.b16 %v2398
    %v3055 = vunpack.c.h.b16 %v2398
    %v3056 = vunpack.c.l.b16 %v2399
    %v3057 = vunpack.c.h.b16 %v2399
    %v3058 = vunpack.c.l.b16 %v2400
    %v3059 = vunpack.c.h.b16 %v2400
    %v3060 = vunpack.c.l.b16 %v2401
    %v3061 = vunpack.c.h.b16 %v2401
    %v3062 = vunpack.c.l.b16 %v2402
    %v3063 = vunpack.c.h.b16 %v2402
    %v3064 = vunpack.c.l.b16 %v2403
    %v3065 = vunpack.c.h.b16 %v2403
    %v3066 = vunpack.c.l.b16 %v2404
    %v3067 = vunpack.c.h.b16 %v2404
    %v3068 = vunpack.c.l.b16 %v2405
    %v3069 = vunpack.c.h.b16 %v2405
    %v3070 = vunpack.c.l.b16 %v2406
    %v3071 = vunpack.c.h.b16 %v2406
    %v3072 = vunpack.c.l.b16 %v2407
    %v3073 = vunpack.c.h.b16 %v2407
    %v3074 = vunpack.c.l.b16 %v2408
    %v3075 = vunpack.c.h.b16 %v2408
    %v3076 = vunpack.c.l.b16 %v2409
    %v3077 = vunpack.c.h.b16 %v2409
    %v3078 = vunpack.c.l.b16 %v2410
    %v3079 = vunpack.c.h.b16 %v2410
    %v3080 = vunpack.c.l.b16 %v2411
    %v3081 = vunpack.c.h.b16 %v2411
    %v3082 = vunpack.c.l.b16 %v2412
    %v3083 = vunpack.c.h.b16 %v2412
    %v3084 = vunpack.c.l.b16 %v2413
    %v3085 = vunpack.c.h.b16 %v2413
    %v3086 = vunpack.c.l.b16 %v2414
    %v3087 = vunpack.c.h.b16 %v2414
    %v3088 = vunpack.c.l.b16 %v2415
    %v3089 = vunpack.c.h.b16 %v2415
    %v3090 = vunpack.c.l.b16 %v2416
    %v3091 = vunpack.c.h.b16 %v2416
    %v3092 = vunpack.c.l.b16 %v2417
    %v3093 = vunpack.c.h.b16 %v2417
    %v3094 = vunpack.c.l.b16 %v2418
    %v3095 = vunpack.c.h.b16 %v2418
    %v3096 = vunpack.c.l.b16 %v2419
    %v3097 = vunpack.c.h.b16 %v2419
    %v3098 = vunpack.c.l.b16 %v2420
    %v3099 = vunpack.c.h.b16 %v2420
    %v3100 = vunpack.c.l.b16 %v2421
    %v3101 = vunpack.c.h.b16 %v2421
    %v3102 = vpack.c.b16 %v2978, %v2974
    %v3103 = vpack.c.b16 %v2979, %v2975
    %v3104 = vpack.c.b16 %v2980, %v2976
    %v3105 = vpack.c.b16 %v2981, %v2977
    %v3106 = vpack.c.b16 %v2986, %v2982
    %v3107 = vpack.c.b16 %v2987, %v2983
    %v3108 = vpack.c.b16 %v2988, %v2984
    %v3109 = vpack.c.b16 %v2989, %v2985
    %v3110 = vpack.c.b16 %v2994, %v2990
    %v3111 = vpack.c.b16 %v2995, %v2991
    %v3112 = vpack.c.b16 %v2996, %v2992
    %v3113 = vpack.c.b16 %v2997, %v2993
    %v3114 = vpack.c.b16 %v3002, %v2998
    %v3115 = vpack.c.b16 %v3003, %v2999
    %v3116 = vpack.c.b16 %v3004, %v3000
    %v3117 = vpack.c.b16 %v3005, %v3001
    %v3118 = vpack.c.b16 %v3010, %v3006
    %v3119 = vpack.c.b16 %v3011, %v3007
    %v3120 = vpack.c.b16 %v3012, %v3008
    %v3121 = vpack.c.b16 %v3013, %v3009
    %v3122 = vpack.c.b16 %v3018, %v3014
    %v3123 = vpack.c.b16 %v3019, %v3015
    %v3124 = vpack.c.b16 %v3020, %v3016
    %v3125 = vpack.c.b16 %v3021, %v3017
    %v3126 = vpack.c.b16 %v3026, %v3022
    %v3127 = vpack.c.b16 %v3027, %v3023
    %v3128 = vpack.c.b16 %v3028, %v3024
    %v3129 = vpack.c.b16 %v3029, %v3025
    %v3130 = vpack.c.b16 %v3034, %v3030
    %v3131 = vpack.c.b16 %v3035, %v3031
    %v3132 = vpack.c.b16 %v3036, %v3032
    %v3133 = vpack.c.b16 %v3037, %v3033
    %v3134 = vpack.c.b16 %v3042, %v3038
    %v3135 = vpack.c.b16 %v3043, %v3039
    %v3136 = vpack.c.b16 %v3044, %v3040
    %v3137 = vpack.c.b16 %v3045, %v3041
    %v3138 = vpack.c.b16 %v3050, %v3046
    %v3139 = vpack.c.b16 %v3051, %v3047
    %v3140 = vpack.c.b16 %v3052, %v3048
    %v3141 = vpack.c.b16 %v3053, %v3049
    %v3142 = vpack.c.b16 %v3058, %v3054
    %v3143 = vpack.c.b16 %v3059, %v3055
    %v3144 = vpack.c.b16 %v3060, %v3056
    %v3145 = vpack.c.b16 %v3061, %v3057
    %v3146 = vpack.c.b16 %v3066, %v3062
    %v3147 = vpack.c.b16 %v3067, %v3063
    %v3148 = vpack.c.b16 %v3068, %v3064
    %v3149 = vpack.c.b16 %v3069, %v3065
    %v3150 = vpack.c.b16 %v3074, %v3070
    %v3151 = vpack.c.b16 %v3075, %v3071
    %v3152 = vpack.c.b16 %v3076, %v3072
    %v3153 = vpack.c.b16 %v3077, %v3073
    %v3154 = vpack.c.b16 %v3082, %v3078
    %v3155 = vpack.c.b16 %v3083, %v3079
    %v3156 = vpack.c.b16 %v3084, %v3080
    %v3157 = vpack.c.b16 %v3085, %v3081
    %v3158 = vpack.c.b16 %v3090, %v3086
    %v3159 = vpack.c.b16 %v3091, %v3087
    %v3160 = vpack.c.b16 %v3092, %v3088
    %v3161 = vpack.c.b16 %v3093, %v3089
    %v3162 = vpack.c.b16 %v3098, %v3094
    %v3163 = vpack.c.b16 %v3099, %v3095
    %v3164 = vpack.c.b16 %v3100, %v3096
    %v3165 = vpack.c.b16 %v3101, %v3097
    %3230 = vmatprep.subr.bf16.mxu0 %v3103
    %3231 = vmatpush1.bf16.msra.mxu0 %v3102
    %3232 = vmatprep.subr.bf16.mxu0 %v3107
    %3233 = vmatpush1.bf16.msra.mxu0 %v3106
    %3234 = vmatprep.subr.bf16.mxu0 %v3111
    %3235 = vmatpush1.bf16.msra.mxu0 %v3110
    %3236 = vmatprep.subr.bf16.mxu0 %v3115
    %3237 = vmatpush1.bf16.msra.mxu0 %v3114
    %3238 = vmatprep.subr.bf16.mxu0 %v3119
    %3239 = vmatpush1.bf16.msra.mxu0 %v3118
    %3240 = vmatprep.subr.bf16.mxu0 %v3123
    %3241 = vmatpush1.bf16.msra.mxu0 %v3122
    %3242 = vmatprep.subr.bf16.mxu0 %v3127
    %3243 = vmatpush1.bf16.msra.mxu0 %v3126
    %3244 = vmatprep.subr.bf16.mxu0 %v3131
    %3245 = vmatpush1.bf16.msra.mxu0 %v3130
    %3246 = vmatprep.subr.bf16.mxu0 %v3135
    %3247 = vmatpush1.bf16.msra.mxu0 %v3134
    %3248 = vmatprep.subr.bf16.mxu0 %v3139
    %3249 = vmatpush1.bf16.msra.mxu0 %v3138
    %3250 = vmatprep.subr.bf16.mxu0 %v3143
    %3251 = vmatpush1.bf16.msra.mxu0 %v3142
    %3252 = vmatprep.subr.bf16.mxu0 %v3147
    %3253 = vmatpush1.bf16.msra.mxu0 %v3146
    %3254 = vmatprep.subr.bf16.mxu0 %v3151
    %3255 = vmatpush1.bf16.msra.mxu0 %v3150
    %3256 = vmatprep.subr.bf16.mxu0 %v3155
    %3257 = vmatpush1.bf16.msra.mxu0 %v3154
    %3258 = vmatprep.subr.bf16.mxu0 %v3159
    %3259 = vmatpush1.bf16.msra.mxu0 %v3158
    %3260 = vmatprep.subr.bf16.mxu0 %v3163
    %3261 = vmatpush1.bf16.msra.mxu0 %v3162
    %3262 = vmatprep.mubr.bf16.mxu0 %v2907
    %3263 = vmatmul.mubr.bf16.gmra.mrb[0].mxu0 %v2906
    %v3264 = vpop.f32.mrb[0].mxu0
    %v3265 = vadd.f32 %v2851, %v3264
    %v3266 = vpop.f32.mrb[0].mxu0
    %v3267 = vadd.f32 %v2853, %v3266
    %v3268 = vpop.f32.mrb[0].mxu0
    %v3269 = vadd.f32 %v2855, %v3268
    %v3270 = vpop.f32.mrb[0].mxu0
    %v3271 = vadd.f32 %v2857, %v3270
    %3272 = vdwg.mxu0
    %3273 = vmatprep.subr.bf16.mxu0 %v3105
    %3274 = vmatpush1.bf16.msra.mxu0 %v3104
    %3275 = vmatprep.subr.bf16.mxu0 %v3109
    %3276 = vmatpush1.bf16.msra.mxu0 %v3108
    %3277 = vmatprep.subr.bf16.mxu0 %v3113
    %3278 = vmatpush1.bf16.msra.mxu0 %v3112
    %3279 = vmatprep.subr.bf16.mxu0 %v3117
    %3280 = vmatpush1.bf16.msra.mxu0 %v3116
    %3281 = vmatprep.subr.bf16.mxu0 %v3121
    %3282 = vmatpush1.bf16.msra.mxu0 %v3120
    %3283 = vmatprep.subr.bf16.mxu0 %v3125
    %3284 = vmatpush1.bf16.msra.mxu0 %v3124
    %3285 = vmatprep.subr.bf16.mxu0 %v3129
    %3286 = vmatpush1.bf16.msra.mxu0 %v3128
    %3287 = vmatprep.subr.bf16.mxu0 %v3133
    %3288 = vmatpush1.bf16.msra.mxu0 %v3132
    %3289 = vmatprep.subr.bf16.mxu0 %v3137
    %3290 = vmatpush1.bf16.msra.mxu0 %v3136
    %3291 = vmatprep.subr.bf16.mxu0 %v3141
    %3292 = vmatpush1.bf16.msra.mxu0 %v3140
    %3293 = vmatprep.subr.bf16.mxu0 %v3145
    %3294 = vmatpush1.bf16.msra.mxu0 %v3144
    %3295 = vmatprep.subr.bf16.mxu0 %v3149
    %3296 = vmatpush1.bf16.msra.mxu0 %v3148
    %3297 = vmatprep.subr.bf16.mxu0 %v3153
    %3298 = vmatpush1.bf16.msra.mxu0 %v3152
    %3299 = vmatprep.subr.bf16.mxu0 %v3157
    %3300 = vmatpush1.bf16.msra.mxu0 %v3156
    %3301 = vmatprep.subr.bf16.mxu0 %v3161
    %3302 = vmatpush1.bf16.msra.mxu0 %v3160
    %3303 = vmatprep.subr.bf16.mxu0 %v3165
    %3304 = vmatpush1.bf16.msra.mxu0 %v3164
    %3305 = vmatprep.mubr.bf16.mxu0 %v2907
    %3306 = vmatmul.mubr.bf16.gmra.mrb[0].mxu0 %v2906
    %v3307 = vpop.f32.mrb[0].mxu0
    %v3308 = vadd.f32 %v2894, %v3307
    %v3309 = vpop.f32.mrb[0].mxu0
    %v3310 = vadd.f32 %v2896, %v3309
    %v3311 = vpop.f32.mrb[0].mxu0
    %v3312 = vadd.f32 %v2898, %v3311
    %v3313 = vpop.f32.mrb[0].mxu0
    %v3314 = vadd.f32 %v2900, %v3313
    %3315 = vdwg.mxu0
    %v3316 = vld [vmem:[#allocation3 + $0x10] sm:$0xff]
    %v3317 = vld [vmem:[#allocation3 + $0x18] sm:$0x11]
    %v3318 = vld [vmem:[#allocation3 + $0x38] sm:$0xff]
    %v3319 = vld [vmem:[#allocation3 + $0x40] sm:$0x11]
    %vm3320 = vsmask.f32 3328
    %vm3321 = vsmask.f32 7440
    %vm3322 = vmor %vm3320, %vm3321
    %v3324 = vshrl.u32 %v3316, 16
    %v3326 = vrot.slane %v3324, 4
    %v3327 = vshll.u32 %v3316, 16
    %v3329 = vrot.slane %v3327, 5
    %v3330 = vor.u32 %v3326, %v3329
    %v3331 = vrot.slane %v3330, 4
    %v3333 = vshll.u32 %v3317, 16
    %v3335 = vrot.slane %v3333, 5
    %v3336 = vsel %vm3322, %v3331, %v3335
    %v3338 = vshrl.u32 %v3318, 16
    %v3340 = vrot.slane %v3338, 4
    %v3341 = vshll.u32 %v3318, 16
    %v3343 = vrot.slane %v3341, 5
    %v3344 = vor.u32 %v3340, %v3343
    %v3345 = vrot.slane %v3344, 4
    %v3347 = vshll.u32 %v3319, 16
    %v3349 = vrot.slane %v3347, 5
    %v3350 = vsel %vm3322, %v3345, %v3349
    %v3351 = vld [vmem:[#allocation22 + $0x400] sm:$0xff]
    %v3352 = vld [vmem:[#allocation22 + $0x408] sm:$0xff]
    %v3353 = vld [vmem:[#allocation22 + $0x410] sm:$0xff]
    %v3354 = vld [vmem:[#allocation22 + $0x418] sm:$0xff]
    %v3355 = vld [vmem:[#allocation22 + $0x420] sm:$0xff]
    %v3356 = vld [vmem:[#allocation22 + $0x428] sm:$0xff]
    %v3357 = vld [vmem:[#allocation22 + $0x430] sm:$0xff]
    %v3358 = vld [vmem:[#allocation22 + $0x438] sm:$0xff]
    %v3359 = vld [vmem:[#allocation22 + $0x440] sm:$0xff]
    %v3360 = vld [vmem:[#allocation22 + $0x448] sm:$0xff]
    %v3361 = vld [vmem:[#allocation22 + $0x450] sm:$0xff]
    %v3362 = vld [vmem:[#allocation22 + $0x458] sm:$0xff]
    %v3363 = vld [vmem:[#allocation22 + $0x460] sm:$0xff]
    %v3364 = vld [vmem:[#allocation22 + $0x468] sm:$0xff]
    %v3365 = vld [vmem:[#allocation22 + $0x470] sm:$0xff]
    %v3366 = vld [vmem:[#allocation22 + $0x478] sm:$0xff]
    %v3367 = vld [vmem:[#allocation22 + $0x480] sm:$0xff]
    %v3368 = vld [vmem:[#allocation22 + $0x488] sm:$0xff]
    %v3369 = vld [vmem:[#allocation22 + $0x490] sm:$0xff]
    %v3370 = vld [vmem:[#allocation22 + $0x498] sm:$0xff]
    %v3371 = vld [vmem:[#allocation22 + $0x4a0] sm:$0xff]
    %v3372 = vld [vmem:[#allocation22 + $0x4a8] sm:$0xff]
    %v3373 = vld [vmem:[#allocation22 + $0x4b0] sm:$0xff]
    %v3374 = vld [vmem:[#allocation22 + $0x4b8] sm:$0xff]
    %v3375 = vld [vmem:[#allocation22 + $0x4c0] sm:$0xff]
    %v3376 = vld [vmem:[#allocation22 + $0x4c8] sm:$0xff]
    %v3377 = vld [vmem:[#allocation22 + $0x4d0] sm:$0xff]
    %v3378 = vld [vmem:[#allocation22 + $0x4d8] sm:$0xff]
    %v3379 = vld [vmem:[#allocation22 + $0x4e0] sm:$0xff]
    %v3380 = vld [vmem:[#allocation22 + $0x4e8] sm:$0xff]
    %v3381 = vld [vmem:[#allocation22 + $0x4f0] sm:$0xff]
    %v3382 = vld [vmem:[#allocation22 + $0x4f8] sm:$0xff]
    %v3383 = vld [vmem:[#allocation22 + $0x500] sm:$0xff]
    %v3384 = vld [vmem:[#allocation22 + $0x508] sm:$0xff]
    %v3385 = vld [vmem:[#allocation22 + $0x510] sm:$0xff]
    %v3386 = vld [vmem:[#allocation22 + $0x518] sm:$0xff]
    %v3387 = vld [vmem:[#allocation22 + $0x520] sm:$0xff]
    %v3388 = vld [vmem:[#allocation22 + $0x528] sm:$0xff]
    %v3389 = vld [vmem:[#allocation22 + $0x530] sm:$0xff]
    %v3390 = vld [vmem:[#allocation22 + $0x538] sm:$0xff]
    %v3391 = vld [vmem:[#allocation22 + $0x540] sm:$0xff]
    %v3392 = vld [vmem:[#allocation22 + $0x548] sm:$0xff]
    %v3393 = vld [vmem:[#allocation22 + $0x550] sm:$0xff]
    %v3394 = vld [vmem:[#allocation22 + $0x558] sm:$0xff]
    %v3395 = vld [vmem:[#allocation22 + $0x560] sm:$0xff]
    %v3396 = vld [vmem:[#allocation22 + $0x568] sm:$0xff]
    %v3397 = vld [vmem:[#allocation22 + $0x570] sm:$0xff]
    %v3398 = vld [vmem:[#allocation22 + $0x578] sm:$0xff]
    %v3399 = vld [vmem:[#allocation22 + $0x580] sm:$0xff]
    %v3400 = vld [vmem:[#allocation22 + $0x588] sm:$0xff]
    %v3401 = vld [vmem:[#allocation22 + $0x590] sm:$0xff]
    %v3402 = vld [vmem:[#allocation22 + $0x598] sm:$0xff]
    %v3403 = vld [vmem:[#allocation22 + $0x5a0] sm:$0xff]
    %v3404 = vld [vmem:[#allocation22 + $0x5a8] sm:$0xff]
    %v3405 = vld [vmem:[#allocation22 + $0x5b0] sm:$0xff]
    %v3406 = vld [vmem:[#allocation22 + $0x5b8] sm:$0xff]
    %v3407 = vld [vmem:[#allocation22 + $0x5c0] sm:$0xff]
    %v3408 = vld [vmem:[#allocation22 + $0x5c8] sm:$0xff]
    %v3409 = vld [vmem:[#allocation22 + $0x5d0] sm:$0xff]
    %v3410 = vld [vmem:[#allocation22 + $0x5d8] sm:$0xff]
    %v3411 = vld [vmem:[#allocation22 + $0x5e0] sm:$0xff]
    %v3412 = vld [vmem:[#allocation22 + $0x5e8] sm:$0xff]
    %v3413 = vld [vmem:[#allocation22 + $0x5f0] sm:$0xff]
    %v3414 = vld [vmem:[#allocation22 + $0x5f8] sm:$0xff]
    %v3415 = vunpack.c.l.b16 %v3336
    %v3416 = vunpack.c.h.b16 %v3336
    %v3417 = vunpack.c.l.b16 %v3350
    %v3418 = vunpack.c.h.b16 %v3350
    %v3419 = vpack.c.b16 %v3417, %v3415
    %v3420 = vpack.c.b16 %v3418, %v3416
    %v3487 = vunpack.c.l.b16 %v3351
    %v3488 = vunpack.c.h.b16 %v3351
    %v3489 = vunpack.c.l.b16 %v3352
    %v3490 = vunpack.c.h.b16 %v3352
    %v3491 = vunpack.c.l.b16 %v3353
    %v3492 = vunpack.c.h.b16 %v3353
    %v3493 = vunpack.c.l.b16 %v3354
    %v3494 = vunpack.c.h.b16 %v3354
    %v3495 = vunpack.c.l.b16 %v3355
    %v3496 = vunpack.c.h.b16 %v3355
    %v3497 = vunpack.c.l.b16 %v3356
    %v3498 = vunpack.c.h.b16 %v3356
    %v3499 = vunpack.c.l.b16 %v3357
    %v3500 = vunpack.c.h.b16 %v3357
    %v3501 = vunpack.c.l.b16 %v3358
    %v3502 = vunpack.c.h.b16 %v3358
    %v3503 = vunpack.c.l.b16 %v3359
    %v3504 = vunpack.c.h.b16 %v3359
    %v3505 = vunpack.c.l.b16 %v3360
    %v3506 = vunpack.c.h.b16 %v3360
    %v3507 = vunpack.c.l.b16 %v3361
    %v3508 = vunpack.c.h.b16 %v3361
    %v3509 = vunpack.c.l.b16 %v3362
    %v3510 = vunpack.c.h.b16 %v3362
    %v3511 = vunpack.c.l.b16 %v3363
    %v3512 = vunpack.c.h.b16 %v3363
    %v3513 = vunpack.c.l.b16 %v3364
    %v3514 = vunpack.c.h.b16 %v3364
    %v3515 = vunpack.c.l.b16 %v3365
    %v3516 = vunpack.c.h.b16 %v3365
    %v3517 = vunpack.c.l.b16 %v3366
    %v3518 = vunpack.c.h.b16 %v3366
    %v3519 = vunpack.c.l.b16 %v3367
    %v3520 = vunpack.c.h.b16 %v3367
    %v3521 = vunpack.c.l.b16 %v3368
    %v3522 = vunpack.c.h.b16 %v3368
    %v3523 = vunpack.c.l.b16 %v3369
    %v3524 = vunpack.c.h.b16 %v3369
    %v3525 = vunpack.c.l.b16 %v3370
    %v3526 = vunpack.c.h.b16 %v3370
    %v3527 = vunpack.c.l.b16 %v3371
    %v3528 = vunpack.c.h.b16 %v3371
    %v3529 = vunpack.c.l.b16 %v3372
    %v3530 = vunpack.c.h.b16 %v3372
    %v3531 = vunpack.c.l.b16 %v3373
    %v3532 = vunpack.c.h.b16 %v3373
    %v3533 = vunpack.c.l.b16 %v3374
    %v3534 = vunpack.c.h.b16 %v3374
    %v3535 = vunpack.c.l.b16 %v3375
    %v3536 = vunpack.c.h.b16 %v3375
    %v3537 = vunpack.c.l.b16 %v3376
    %v3538 = vunpack.c.h.b16 %v3376
    %v3539 = vunpack.c.l.b16 %v3377
    %v3540 = vunpack.c.h.b16 %v3377
    %v3541 = vunpack.c.l.b16 %v3378
    %v3542 = vunpack.c.h.b16 %v3378
    %v3543 = vunpack.c.l.b16 %v3379
    %v3544 = vunpack.c.h.b16 %v3379
    %v3545 = vunpack.c.l.b16 %v3380
    %v3546 = vunpack.c.h.b16 %v3380
    %v3547 = vunpack.c.l.b16 %v3381
    %v3548 = vunpack.c.h.b16 %v3381
    %v3549 = vunpack.c.l.b16 %v3382
    %v3550 = vunpack.c.h.b16 %v3382
    %v3551 = vunpack.c.l.b16 %v3383
    %v3552 = vunpack.c.h.b16 %v3383
    %v3553 = vunpack.c.l.b16 %v3384
    %v3554 = vunpack.c.h.b16 %v3384
    %v3555 = vunpack.c.l.b16 %v3385
    %v3556 = vunpack.c.h.b16 %v3385
    %v3557 = vunpack.c.l.b16 %v3386
    %v3558 = vunpack.c.h.b16 %v3386
    %v3559 = vunpack.c.l.b16 %v3387
    %v3560 = vunpack.c.h.b16 %v3387
    %v3561 = vunpack.c.l.b16 %v3388
    %v3562 = vunpack.c.h.b16 %v3388
    %v3563 = vunpack.c.l.b16 %v3389
    %v3564 = vunpack.c.h.b16 %v3389
    %v3565 = vunpack.c.l.b16 %v3390
    %v3566 = vunpack.c.h.b16 %v3390
    %v3567 = vunpack.c.l.b16 %v3391
    %v3568 = vunpack.c.h.b16 %v3391
    %v3569 = vunpack.c.l.b16 %v3392
    %v3570 = vunpack.c.h.b16 %v3392
    %v3571 = vunpack.c.l.b16 %v3393
    %v3572 = vunpack.c.h.b16 %v3393
    %v3573 = vunpack.c.l.b16 %v3394
    %v3574 = vunpack.c.h.b16 %v3394
    %v3575 = vunpack.c.l.b16 %v3395
    %v3576 = vunpack.c.h.b16 %v3395
    %v3577 = vunpack.c.l.b16 %v3396
    %v3578 = vunpack.c.h.b16 %v3396
    %v3579 = vunpack.c.l.b16 %v3397
    %v3580 = vunpack.c.h.b16 %v3397
    %v3581 = vunpack.c.l.b16 %v3398
    %v3582 = vunpack.c.h.b16 %v3398
    %v3583 = vunpack.c.l.b16 %v3399
    %v3584 = vunpack.c.h.b16 %v3399
    %v3585 = vunpack.c.l.b16 %v3400
    %v3586 = vunpack.c.h.b16 %v3400
    %v3587 = vunpack.c.l.b16 %v3401
    %v3588 = vunpack.c.h.b16 %v3401
    %v3589 = vunpack.c.l.b16 %v3402
    %v3590 = vunpack.c.h.b16 %v3402
    %v3591 = vunpack.c.l.b16 %v3403
    %v3592 = vunpack.c.h.b16 %v3403
    %v3593 = vunpack.c.l.b16 %v3404
    %v3594 = vunpack.c.h.b16 %v3404
    %v3595 = vunpack.c.l.b16 %v3405
    %v3596 = vunpack.c.h.b16 %v3405
    %v3597 = vunpack.c.l.b16 %v3406
    %v3598 = vunpack.c.h.b16 %v3406
    %v3599 = vunpack.c.l.b16 %v3407
    %v3600 = vunpack.c.h.b16 %v3407
    %v3601 = vunpack.c.l.b16 %v3408
    %v3602 = vunpack.c.h.b16 %v3408
    %v3603 = vunpack.c.l.b16 %v3409
    %v3604 = vunpack.c.h.b16 %v3409
    %v3605 = vunpack.c.l.b16 %v3410
    %v3606 = vunpack.c.h.b16 %v3410
    %v3607 = vunpack.c.l.b16 %v3411
    %v3608 = vunpack.c.h.b16 %v3411
    %v3609 = vunpack.c.l.b16 %v3412
    %v3610 = vunpack.c.h.b16 %v3412
    %v3611 = vunpack.c.l.b16 %v3413
    %v3612 = vunpack.c.h.b16 %v3413
    %v3613 = vunpack.c.l.b16 %v3414
    %v3614 = vunpack.c.h.b16 %v3414
    %v3615 = vpack.c.b16 %v3491, %v3487
    %v3616 = vpack.c.b16 %v3492, %v3488
    %v3617 = vpack.c.b16 %v3493, %v3489
    %v3618 = vpack.c.b16 %v3494, %v3490
    %v3619 = vpack.c.b16 %v3499, %v3495
    %v3620 = vpack.c.b16 %v3500, %v3496
    %v3621 = vpack.c.b16 %v3501, %v3497
    %v3622 = vpack.c.b16 %v3502, %v3498
    %v3623 = vpack.c.b16 %v3507, %v3503
    %v3624 = vpack.c.b16 %v3508, %v3504
    %v3625 = vpack.c.b16 %v3509, %v3505
    %v3626 = vpack.c.b16 %v3510, %v3506
    %v3627 = vpack.c.b16 %v3515, %v3511
    %v3628 = vpack.c.b16 %v3516, %v3512
    %v3629 = vpack.c.b16 %v3517, %v3513
    %v3630 = vpack.c.b16 %v3518, %v3514
    %v3631 = vpack.c.b16 %v3523, %v3519
    %v3632 = vpack.c.b16 %v3524, %v3520
    %v3633 = vpack.c.b16 %v3525, %v3521
    %v3634 = vpack.c.b16 %v3526, %v3522
    %v3635 = vpack.c.b16 %v3531, %v3527
    %v3636 = vpack.c.b16 %v3532, %v3528
    %v3637 = vpack.c.b16 %v3533, %v3529
    %v3638 = vpack.c.b16 %v3534, %v3530
    %v3639 = vpack.c.b16 %v3539, %v3535
    %v3640 = vpack.c.b16 %v3540, %v3536
    %v3641 = vpack.c.b16 %v3541, %v3537
    %v3642 = vpack.c.b16 %v3542, %v3538
    %v3643 = vpack.c.b16 %v3547, %v3543
    %v3644 = vpack.c.b16 %v3548, %v3544
    %v3645 = vpack.c.b16 %v3549, %v3545
    %v3646 = vpack.c.b16 %v3550, %v3546
    %v3647 = vpack.c.b16 %v3555, %v3551
    %v3648 = vpack.c.b16 %v3556, %v3552
    %v3649 = vpack.c.b16 %v3557, %v3553
    %v3650 = vpack.c.b16 %v3558, %v3554
    %v3651 = vpack.c.b16 %v3563, %v3559
    %v3652 = vpack.c.b16 %v3564, %v3560
    %v3653 = vpack.c.b16 %v3565, %v3561
    %v3654 = vpack.c.b16 %v3566, %v3562
    %v3655 = vpack.c.b16 %v3571, %v3567
    %v3656 = vpack.c.b16 %v3572, %v3568
    %v3657 = vpack.c.b16 %v3573, %v3569
    %v3658 = vpack.c.b16 %v3574, %v3570
    %v3659 = vpack.c.b16 %v3579, %v3575
    %v3660 = vpack.c.b16 %v3580, %v3576
    %v3661 = vpack.c.b16 %v3581, %v3577
    %v3662 = vpack.c.b16 %v3582, %v3578
    %v3663 = vpack.c.b16 %v3587, %v3583
    %v3664 = vpack.c.b16 %v3588, %v3584
    %v3665 = vpack.c.b16 %v3589, %v3585
    %v3666 = vpack.c.b16 %v3590, %v3586
    %v3667 = vpack.c.b16 %v3595, %v3591
    %v3668 = vpack.c.b16 %v3596, %v3592
    %v3669 = vpack.c.b16 %v3597, %v3593
    %v3670 = vpack.c.b16 %v3598, %v3594
    %v3671 = vpack.c.b16 %v3603, %v3599
    %v3672 = vpack.c.b16 %v3604, %v3600
    %v3673 = vpack.c.b16 %v3605, %v3601
    %v3674 = vpack.c.b16 %v3606, %v3602
    %v3675 = vpack.c.b16 %v3611, %v3607
    %v3676 = vpack.c.b16 %v3612, %v3608
    %v3677 = vpack.c.b16 %v3613, %v3609
    %v3678 = vpack.c.b16 %v3614, %v3610
    %3743 = vmatprep.subr.bf16.mxu0 %v3616
    %3744 = vmatpush1.bf16.msra.mxu0 %v3615
    %3745 = vmatprep.subr.bf16.mxu0 %v3620
    %3746 = vmatpush1.bf16.msra.mxu0 %v3619
    %3747 = vmatprep.subr.bf16.mxu0 %v3624
    %3748 = vmatpush1.bf16.msra.mxu0 %v3623
    %3749 = vmatprep.subr.bf16.mxu0 %v3628
    %3750 = vmatpush1.bf16.msra.mxu0 %v3627
    %3751 = vmatprep.subr.bf16.mxu0 %v3632
    %3752 = vmatpush1.bf16.msra.mxu0 %v3631
    %3753 = vmatprep.subr.bf16.mxu0 %v3636
    %3754 = vmatpush1.bf16.msra.mxu0 %v3635
    %3755 = vmatprep.subr.bf16.mxu0 %v3640
    %3756 = vmatpush1.bf16.msra.mxu0 %v3639
    %3757 = vmatprep.subr.bf16.mxu0 %v3644
    %3758 = vmatpush1.bf16.msra.mxu0 %v3643
    %3759 = vmatprep.subr.bf16.mxu0 %v3648
    %3760 = vmatpush1.bf16.msra.mxu0 %v3647
    %3761 = vmatprep.subr.bf16.mxu0 %v3652
    %3762 = vmatpush1.bf16.msra.mxu0 %v3651
    %3763 = vmatprep.subr.bf16.mxu0 %v3656
    %3764 = vmatpush1.bf16.msra.mxu0 %v3655
    %3765 = vmatprep.subr.bf16.mxu0 %v3660
    %3766 = vmatpush1.bf16.msra.mxu0 %v3659
    %3767 = vmatprep.subr.bf16.mxu0 %v3664
    %3768 = vmatpush1.bf16.msra.mxu0 %v3663
    %3769 = vmatprep.subr.bf16.mxu0 %v3668
    %3770 = vmatpush1.bf16.msra.mxu0 %v3667
    %3771 = vmatprep.subr.bf16.mxu0 %v3672
    %3772 = vmatpush1.bf16.msra.mxu0 %v3671
    %3773 = vmatprep.subr.bf16.mxu0 %v3676
    %3774 = vmatpush1.bf16.msra.mxu0 %v3675
    %3775 = vmatprep.mubr.bf16.mxu0 %v3420
    %3776 = vmatmul.mubr.bf16.gmra.mrb[0].mxu0 %v3419
    %v3777 = vpop.f32.mrb[0].mxu0
    %v3778 = vadd.f32 0.0, %v3777
    %v3779 = vpop.f32.mrb[0].mxu0
    %v3780 = vadd.f32 0.0, %v3779
    %v3781 = vpop.f32.mrb[0].mxu0
    %v3782 = vadd.f32 0.0, %v3781
    %v3783 = vpop.f32.mrb[0].mxu0
    %v3784 = vadd.f32 0.0, %v3783
    %3785 = vdwg.mxu0
    %3786 = vmatprep.subr.bf16.mxu0 %v3618
    %3787 = vmatpush1.bf16.msra.mxu0 %v3617
    %3788 = vmatprep.subr.bf16.mxu0 %v3622
    %3789 = vmatpush1.bf16.msra.mxu0 %v3621
    %3790 = vmatprep.subr.bf16.mxu0 %v3626
    %3791 = vmatpush1.bf16.msra.mxu0 %v3625
    %3792 = vmatprep.subr.bf16.mxu0 %v3630
    %3793 = vmatpush1.bf16.msra.mxu0 %v3629
    %3794 = vmatprep.subr.bf16.mxu0 %v3634
    %3795 = vmatpush1.bf16.msra.mxu0 %v3633
    %3796 = vmatprep.subr.bf16.mxu0 %v3638
    %3797 = vmatpush1.bf16.msra.mxu0 %v3637
    %3798 = vmatprep.subr.bf16.mxu0 %v3642
    %3799 = vmatpush1.bf16.msra.mxu0 %v3641
    %3800 = vmatprep.subr.bf16.mxu0 %v3646
    %3801 = vmatpush1.bf16.msra.mxu0 %v3645
    %3802 = vmatprep.subr.bf16.mxu0 %v3650
    %3803 = vmatpush1.bf16.msra.mxu0 %v3649
    %3804 = vmatprep.subr.bf16.mxu0 %v3654
    %3805 = vmatpush1.bf16.msra.mxu0 %v3653
    %3806 = vmatprep.subr.bf16.mxu0 %v3658
    %3807 = vmatpush1.bf16.msra.mxu0 %v3657
    %3808 = vmatprep.subr.bf16.mxu0 %v3662
    %3809 = vmatpush1.bf16.msra.mxu0 %v3661
    %3810 = vmatprep.subr.bf16.mxu0 %v3666
    %3811 = vmatpush1.bf16.msra.mxu0 %v3665
    %3812 = vmatprep.subr.bf16.mxu0 %v3670
    %3813 = vmatpush1.bf16.msra.mxu0 %v3669
    %3814 = vmatprep.subr.bf16.mxu0 %v3674
    %3815 = vmatpush1.bf16.msra.mxu0 %v3673
    %3816 = vmatprep.subr.bf16.mxu0 %v3678
    %3817 = vmatpush1.bf16.msra.mxu0 %v3677
    %3818 = vmatprep.mubr.bf16.mxu0 %v3420
    %3819 = vmatmul.mubr.bf16.gmra.mrb[0].mxu0 %v3419
    %v3820 = vpop.f32.mrb[0].mxu0
    %v3821 = vadd.f32 0.0, %v3820
    %v3822 = vpop.f32.mrb[0].mxu0
    %v3823 = vadd.f32 0.0, %v3822
    %v3824 = vpop.f32.mrb[0].mxu0
    %v3825 = vadd.f32 0.0, %v3824
    %v3826 = vpop.f32.mrb[0].mxu0
    %v3827 = vadd.f32 0.0, %v3826
    %3828 = vdwg.mxu0
    %v3829 = vadd.f32 %v3265, %v3778
    %v3830 = vadd.f32 %v3267, %v3780
    %v3831 = vadd.f32 %v3308, %v3821
    %v3832 = vadd.f32 %v3310, %v3823
    %v3833 = vadd.f32 %v3269, %v3782
    %v3834 = vadd.f32 %v3271, %v3784
    %v3835 = vadd.f32 %v3312, %v3825
    %v3836 = vadd.f32 %v3314, %v3827
    %v3837 = vld [vmem:[#allocation23] sm:$0xf]
    %v3838 = vld [vmem:[#allocation25] sm:$0xf]
    %v3839 = vld [vmem:[#allocation26] sm:$0xf]
    %v3841 = vlaneseq
    %v3842 = vshrl.u32 %v3841, 7
    %v3843 = vsub.s32 0, %v3842
    %v3844 = vrot.slane %v3837, %v3843
    %v3845 = vlaneseq
    %v3846 = vshrl.u32 %v3845, 7
    %v3847 = vsub.s32 1, %v3846
    %v3848 = vrot.slane %v3837, %v3847
    %v3849 = vlaneseq
    %v3850 = vshrl.u32 %v3849, 7
    %v3851 = vsub.s32 2, %v3850
    %v3852 = vrot.slane %v3837, %v3851
    %v3853 = vlaneseq
    %v3854 = vshrl.u32 %v3853, 7
    %v3855 = vsub.s32 3, %v3854
    %v3856 = vrot.slane %v3837, %v3855
    %v3861 = vadd.f32 %v3829, %v3844
    %v3862 = vadd.f32 %v3830, %v3848
    %v3863 = vadd.f32 %v3831, %v3852
    %v3864 = vadd.f32 %v3832, %v3856
    %v3865 = vadd.f32 %v3833, %v3844
    %v3866 = vadd.f32 %v3834, %v3848
    %v3867 = vadd.f32 %v3835, %v3852
    %v3868 = vadd.f32 %v3836, %v3856
    %v3869 = vmax.f32 %v3861, 0.0
    %v3870 = vmax.f32 %v3862, 0.0
    %v3871 = vmax.f32 %v3863, 0.0
    %v3872 = vmax.f32 %v3864, 0.0
    %v3873 = vmax.f32 %v3865, 0.0
    %v3874 = vmax.f32 %v3866, 0.0
    %v3875 = vmax.f32 %v3867, 0.0
    %v3876 = vmax.f32 %v3868, 0.0
    %v3878 = vlaneseq
    %v3879 = vshrl.u32 %v3878, 7
    %v3880 = vsub.s32 0, %v3879
    %v3881 = vrot.slane %v3838, %v3880
    %v3882 = vlaneseq
    %v3883 = vshrl.u32 %v3882, 7
    %v3884 = vsub.s32 1, %v3883
    %v3885 = vrot.slane %v3838, %v3884
    %v3886 = vlaneseq
    %v3887 = vshrl.u32 %v3886, 7
    %v3888 = vsub.s32 2, %v3887
    %v3889 = vrot.slane %v3838, %v3888
    %v3890 = vlaneseq
    %v3891 = vshrl.u32 %v3890, 7
    %v3892 = vsub.s32 3, %v3891
    %v3893 = vrot.slane %v3838, %v3892
    %v3898 = vmul.f32 %v3869, %v3881
    %v3899 = vmul.f32 %v3870, %v3885
    %v3900 = vmul.f32 %v3871, %v3889
    %v3901 = vmul.f32 %v3872, %v3893
    %v3902 = vmul.f32 %v3873, %v3881
    %v3903 = vmul.f32 %v3874, %v3885
    %v3904 = vmul.f32 %v3875, %v3889
    %v3905 = vmul.f32 %v3876, %v3893
    %v3907 = vlaneseq
    %v3908 = vshrl.u32 %v3907, 7
    %v3909 = vsub.s32 0, %v3908
    %v3910 = vrot.slane %v3839, %v3909
    %v3911 = vlaneseq
    %v3912 = vshrl.u32 %v3911, 7
    %v3913 = vsub.s32 1, %v3912
    %v3914 = vrot.slane %v3839, %v3913
    %v3915 = vlaneseq
    %v3916 = vshrl.u32 %v3915, 7
    %v3917 = vsub.s32 2, %v3916
    %v3918 = vrot.slane %v3839, %v3917
    %v3919 = vlaneseq
    %v3920 = vshrl.u32 %v3919, 7
    %v3921 = vsub.s32 3, %v3920
    %v3922 = vrot.slane %v3839, %v3921
    %v3927 = vadd.f32 %v3898, %v3910
    %v3928 = vadd.f32 %v3899, %v3914
    %v3929 = vadd.f32 %v3900, %v3918
    %v3930 = vadd.f32 %v3901, %v3922
    %v3931 = vadd.f32 %v3902, %v3910
    %v3932 = vadd.f32 %v3903, %v3914
    %v3933 = vadd.f32 %v3904, %v3918
    %v3934 = vadd.f32 %v3905, %v3922
    %v3943 = vcombine.low %v3927, %v3928
    %v3944 = vcombine.high %v3927, %v3928
    %v3945 = vcombine.low %v3929, %v3930
    %v3946 = vcombine.high %v3929, %v3930
    %v3948 = vunpack.c.l.s4 1983009808
    %v3949 = vunpack.c.0.s8 %v3948
    %v3950 = vlaneseq
    %v3951 = vshrl.u32 %v3950, 7
    %v3952 = vsub.s32 %v3949, %v3951
    %v3953 = vrot.slane %v3943, %v3952
    %v3955 = vunpack.c.l.s4 1983009808
    %v3956 = vunpack.c.0.s8 %v3955
    %v3957 = vlaneseq
    %v3958 = vshrl.u32 %v3957, 7
    %v3959 = vsub.s32 %v3956, %v3958
    %v3960 = vrot.slane %v3944, %v3959
    %v3962 = vunpack.c.l.s4 1983009808
    %v3963 = vunpack.c.0.s8 %v3962
    %v3964 = vlaneseq
    %v3965 = vshrl.u32 %v3964, 7
    %v3966 = vsub.s32 %v3963, %v3965
    %v3967 = vrot.slane %v3945, %v3966
    %v3969 = vunpack.c.l.s4 1983009808
    %v3970 = vunpack.c.0.s8 %v3969
    %v3971 = vlaneseq
    %v3972 = vshrl.u32 %v3971, 7
    %v3973 = vsub.s32 %v3970, %v3972
    %v3974 = vrot.slane %v3946, %v3973
    %v3975 = vcombine.low %v3953, %v3967
    %v3976 = vcombine.high %v3953, %v3967
    %v3977 = vcombine.low %v3960, %v3974
    %v3978 = vcombine.high %v3960, %v3974
    %v3979 = vcombine.low %v3931, %v3932
    %v3980 = vcombine.high %v3931, %v3932
    %v3981 = vcombine.low %v3933, %v3934
    %v3982 = vcombine.high %v3933, %v3934
    %v3984 = vunpack.c.l.s4 1983009808
    %v3985 = vunpack.c.0.s8 %v3984
    %v3986 = vlaneseq
    %v3987 = vshrl.u32 %v3986, 7
    %v3988 = vsub.s32 %v3985, %v3987
    %v3989 = vrot.slane %v3979, %v3988
    %v3991 = vunpack.c.l.s4 1983009808
    %v3992 = vunpack.c.0.s8 %v3991
    %v3993 = vlaneseq
    %v3994 = vshrl.u32 %v3993, 7
    %v3995 = vsub.s32 %v3992, %v3994
    %v3996 = vrot.slane %v3980, %v3995
    %v3998 = vunpack.c.l.s4 1983009808
    %v3999 = vunpack.c.0.s8 %v3998
    %v4000 = vlaneseq
    %v4001 = vshrl.u32 %v4000, 7
    %v4002 = vsub.s32 %v3999, %v4001
    %v4003 = vrot.slane %v3981, %v4002
    %v4005 = vunpack.c.l.s4 1983009808
    %v4006 = vunpack.c.0.s8 %v4005
    %v4007 = vlaneseq
    %v4008 = vshrl.u32 %v4007, 7
    %v4009 = vsub.s32 %v4006, %v4008
    %v4010 = vrot.slane %v3982, %v4009
    %v4011 = vcombine.low %v3989, %v4003
    %v4012 = vcombine.high %v3989, %v4003
    %v4013 = vcombine.low %v3996, %v4010
    %v4014 = vcombine.high %v3996, %v4010
    %v4015 = vcombine.high %v3975, %v3975
    %v4017 = vunpack.c.l.s4 1983009808
    %v4018 = vunpack.c.0.s8 %v4017
    %v4019 = vlaneseq
    %v4020 = vshrl.u32 %v4019, 7
    %v4021 = vsub.s32 %v4018, %v4020
    %v4022 = vrot.slane %v3975, %v4021
    %v4024 = vunpack.c.l.s4 1983009808
    %v4025 = vunpack.c.0.s8 %v4024
    %v4026 = vlaneseq
    %v4027 = vshrl.u32 %v4026, 7
    %v4028 = vsub.s32 %v4025, %v4027
    %v4029 = vrot.slane %v4015, %v4028
    %v4030 = vcombine.high %v4022, %v4022
    %v4031 = vcombine.high %v4029, %v4029
    %v4032 = vcombine.high %v3976, %v3976
    %v4034 = vunpack.c.l.s4 1983009808
    %v4035 = vunpack.c.0.s8 %v4034
    %v4036 = vlaneseq
    %v4037 = vshrl.u32 %v4036, 7
    %v4038 = vsub.s32 %v4035, %v4037
    %v4039 = vrot.slane %v3976, %v4038
    %v4041 = vunpack.c.l.s4 1983009808
    %v4042 = vunpack.c.0.s8 %v4041
    %v4043 = vlaneseq
    %v4044 = vshrl.u32 %v4043, 7
    %v4045 = vsub.s32 %v4042, %v4044
    %v4046 = vrot.slane %v4032, %v4045
    %v4047 = vcombine.high %v4039, %v4039
    %v4048 = vcombine.high %v4046, %v4046
    %v4049 = vcombine.high %v3977, %v3977
    %v4051 = vunpack.c.l.s4 1983009808
    %v4052 = vunpack.c.0.s8 %v4051
    %v4053 = vlaneseq
    %v4054 = vshrl.u32 %v4053, 7
    %v4055 = vsub.s32 %v4052, %v4054
    %v4056 = vrot.slane %v3977, %v4055
    %v4058 = vunpack.c.l.s4 1983009808
    %v4059 = vunpack.c.0.s8 %v4058
    %v4060 = vlaneseq
    %v4061 = vshrl.u32 %v4060, 7
    %v4062 = vsub.s32 %v4059, %v4061
    %v4063 = vrot.slane %v4049, %v4062
    %v4064 = vcombine.high %v4056, %v4056
    %v4065 = vcombine.high %v4063, %v4063
    %v4066 = vcombine.high %v3978, %v3978
    %v4068 = vunpack.c.l.s4 1983009808
    %v4069 = vunpack.c.0.s8 %v4068
    %v4070 = vlaneseq
    %v4071 = vshrl.u32 %v4070, 7
    %v4072 = vsub.s32 %v4069, %v4071
    %v4073 = vrot.slane %v3978, %v4072
    %v4075 = vunpack.c.l.s4 1983009808
    %v4076 = vunpack.c.0.s8 %v4075
    %v4077 = vlaneseq
    %v4078 = vshrl.u32 %v4077, 7
    %v4079 = vsub.s32 %v4076, %v4078
    %v4080 = vrot.slane %v4066, %v4079
    %v4081 = vcombine.high %v4073, %v4073
    %v4082 = vcombine.high %v4080, %v4080
    %v4083 = vcombine.high %v4011, %v4011
    %v4085 = vunpack.c.l.s4 1983009808
    %v4086 = vunpack.c.0.s8 %v4085
    %v4087 = vlaneseq
    %v4088 = vshrl.u32 %v4087, 7
    %v4089 = vsub.s32 %v4086, %v4088
    %v4090 = vrot.slane %v4011, %v4089
    %v4092 = vunpack.c.l.s4 1983009808
    %v4093 = vunpack.c.0.s8 %v4092
    %v4094 = vlaneseq
    %v4095 = vshrl.u32 %v4094, 7
    %v4096 = vsub.s32 %v4093, %v4095
    %v4097 = vrot.slane %v4083, %v4096
    %v4098 = vcombine.high %v4090, %v4090
    %v4099 = vcombine.high %v4097, %v4097
    %v4100 = vcombine.high %v4012, %v4012
    %v4102 = vunpack.c.l.s4 1983009808
    %v4103 = vunpack.c.0.s8 %v4102
    %v4104 = vlaneseq
    %v4105 = vshrl.u32 %v4104, 7
    %v4106 = vsub.s32 %v4103, %v4105
    %v4107 = vrot.slane %v4012, %v4106
    %v4109 = vunpack.c.l.s4 1983009808
    %v4110 = vunpack.c.0.s8 %v4109
    %v4111 = vlaneseq
    %v4112 = vshrl.u32 %v4111, 7
    %v4113 = vsub.s32 %v4110, %v4112
    %v4114 = vrot.slane %v4100, %v4113
    %v4115 = vcombine.high %v4107, %v4107
    %v4116 = vcombine.high %v4114, %v4114
    %v4117 = vcombine.high %v4013, %v4013
    %v4119 = vunpack.c.l.s4 1983009808
    %v4120 = vunpack.c.0.s8 %v4119
    %v4121 = vlaneseq
    %v4122 = vshrl.u32 %v4121, 7
    %v4123 = vsub.s32 %v4120, %v4122
    %v4124 = vrot.slane %v4013, %v4123
    %v4126 = vunpack.c.l.s4 1983009808
    %v4127 = vunpack.c.0.s8 %v4126
    %v4128 = vlaneseq
    %v4129 = vshrl.u32 %v4128, 7
    %v4130 = vsub.s32 %v4127, %v4129
    %v4131 = vrot.slane %v4117, %v4130
    %v4132 = vcombine.high %v4124, %v4124
    %v4133 = vcombine.high %v4131, %v4131
    %v4134 = vcombine.high %v4014, %v4014
    %v4136 = vunpack.c.l.s4 1983009808
    %v4137 = vunpack.c.0.s8 %v4136
    %v4138 = vlaneseq
    %v4139 = vshrl.u32 %v4138, 7
    %v4140 = vsub.s32 %v4137, %v4139
    %v4141 = vrot.slane %v4014, %v4140
    %v4143 = vunpack.c.l.s4 1983009808
    %v4144 = vunpack.c.0.s8 %v4143
    %v4145 = vlaneseq
    %v4146 = vshrl.u32 %v4145, 7
    %v4147 = vsub.s32 %v4144, %v4146
    %v4148 = vrot.slane %v4134, %v4147
    %v4149 = vcombine.high %v4141, %v4141
    %v4150 = vcombine.high %v4148, %v4148
    %v4183 = vsel %vm700, %v4022, -inf
    %v4184 = vrot.slane %v4183, 4
    %v4185 = vmax.f32 %v4183, %v4184
    %v4186 = vrot.slane %v4185, 2
    %v4187 = vmax.f32 %v4185, %v4186
    %v4188 = vrot.slane %v4187, 1
    %v4189 = vmax.f32 %v4187, %v4188
    %v4190 = vsel %vm700, %v4030, -inf
    %v4191 = vrot.slane %v4190, 4
    %v4192 = vmax.f32 %v4190, %v4191
    %v4193 = vrot.slane %v4192, 2
    %v4194 = vmax.f32 %v4192, %v4193
    %v4195 = vrot.slane %v4194, 1
    %v4196 = vmax.f32 %v4194, %v4195
    %v4197 = vsel %vm700, %v4029, -inf
    %v4198 = vrot.slane %v4197, 4
    %v4199 = vmax.f32 %v4197, %v4198
    %v4200 = vrot.slane %v4199, 2
    %v4201 = vmax.f32 %v4199, %v4200
    %v4202 = vrot.slane %v4201, 1
    %v4203 = vmax.f32 %v4201, %v4202
    %v4204 = vsel %vm700, %v4031, -inf
    %v4205 = vrot.slane %v4204, 4
    %v4206 = vmax.f32 %v4204, %v4205
    %v4207 = vrot.slane %v4206, 2
    %v4208 = vmax.f32 %v4206, %v4207
    %v4209 = vrot.slane %v4208, 1
    %v4210 = vmax.f32 %v4208, %v4209
    %v4211 = vsel %vm700, %v4039, -inf
    %v4212 = vrot.slane %v4211, 4
    %v4213 = vmax.f32 %v4211, %v4212
    %v4214 = vrot.slane %v4213, 2
    %v4215 = vmax.f32 %v4213, %v4214
    %v4216 = vrot.slane %v4215, 1
    %v4217 = vmax.f32 %v4215, %v4216
    %v4218 = vsel %vm700, %v4047, -inf
    %v4219 = vrot.slane %v4218, 4
    %v4220 = vmax.f32 %v4218, %v4219
    %v4221 = vrot.slane %v4220, 2
    %v4222 = vmax.f32 %v4220, %v4221
    %v4223 = vrot.slane %v4222, 1
    %v4224 = vmax.f32 %v4222, %v4223
    %v4225 = vsel %vm700, %v4046, -inf
    %v4226 = vrot.slane %v4225, 4
    %v4227 = vmax.f32 %v4225, %v4226
    %v4228 = vrot.slane %v4227, 2
    %v4229 = vmax.f32 %v4227, %v4228
    %v4230 = vrot.slane %v4229, 1
    %v4231 = vmax.f32 %v4229, %v4230
    %v4232 = vsel %vm700, %v4048, -inf
    %v4233 = vrot.slane %v4232, 4
    %v4234 = vmax.f32 %v4232, %v4233
    %v4235 = vrot.slane %v4234, 2
    %v4236 = vmax.f32 %v4234, %v4235
    %v4237 = vrot.slane %v4236, 1
    %v4238 = vmax.f32 %v4236, %v4237
    %v4239 = vsel %vm700, %v4056, -inf
    %v4240 = vrot.slane %v4239, 4
    %v4241 = vmax.f32 %v4239, %v4240
    %v4242 = vrot.slane %v4241, 2
    %v4243 = vmax.f32 %v4241, %v4242
    %v4244 = vrot.slane %v4243, 1
    %v4245 = vmax.f32 %v4243, %v4244
    %v4246 = vsel %vm700, %v4064, -inf
    %v4247 = vrot.slane %v4246, 4
    %v4248 = vmax.f32 %v4246, %v4247
    %v4249 = vrot.slane %v4248, 2
    %v4250 = vmax.f32 %v4248, %v4249
    %v4251 = vrot.slane %v4250, 1
    %v4252 = vmax.f32 %v4250, %v4251
    %v4253 = vsel %vm700, %v4063, -inf
    %v4254 = vrot.slane %v4253, 4
    %v4255 = vmax.f32 %v4253, %v4254
    %v4256 = vrot.slane %v4255, 2
    %v4257 = vmax.f32 %v4255, %v4256
    %v4258 = vrot.slane %v4257, 1
    %v4259 = vmax.f32 %v4257, %v4258
    %v4260 = vsel %vm700, %v4065, -inf
    %v4261 = vrot.slane %v4260, 4
    %v4262 = vmax.f32 %v4260, %v4261
    %v4263 = vrot.slane %v4262, 2
    %v4264 = vmax.f32 %v4262, %v4263
    %v4265 = vrot.slane %v4264, 1
    %v4266 = vmax.f32 %v4264, %v4265
    %v4267 = vsel %vm700, %v4073, -inf
    %v4268 = vrot.slane %v4267, 4
    %v4269 = vmax.f32 %v4267, %v4268
    %v4270 = vrot.slane %v4269, 2
    %v4271 = vmax.f32 %v4269, %v4270
    %v4272 = vrot.slane %v4271, 1
    %v4273 = vmax.f32 %v4271, %v4272
    %v4274 = vsel %vm700, %v4081, -inf
    %v4275 = vrot.slane %v4274, 4
    %v4276 = vmax.f32 %v4274, %v4275
    %v4277 = vrot.slane %v4276, 2
    %v4278 = vmax.f32 %v4276, %v4277
    %v4279 = vrot.slane %v4278, 1
    %v4280 = vmax.f32 %v4278, %v4279
    %v4281 = vsel %vm700, %v4080, -inf
    %v4282 = vrot.slane %v4281, 4
    %v4283 = vmax.f32 %v4281, %v4282
    %v4284 = vrot.slane %v4283, 2
    %v4285 = vmax.f32 %v4283, %v4284
    %v4286 = vrot.slane %v4285, 1
    %v4287 = vmax.f32 %v4285, %v4286
    %v4288 = vsel %vm700, %v4082, -inf
    %v4289 = vrot.slane %v4288, 4
    %v4290 = vmax.f32 %v4288, %v4289
    %v4291 = vrot.slane %v4290, 2
    %v4292 = vmax.f32 %v4290, %v4291
    %v4293 = vrot.slane %v4292, 1
    %v4294 = vmax.f32 %v4292, %v4293
    %v4295 = vsel %vm700, %v4090, -inf
    %v4296 = vrot.slane %v4295, 4
    %v4297 = vmax.f32 %v4295, %v4296
    %v4298 = vrot.slane %v4297, 2
    %v4299 = vmax.f32 %v4297, %v4298
    %v4300 = vrot.slane %v4299, 1
    %v4301 = vmax.f32 %v4299, %v4300
    %v4302 = vsel %vm700, %v4098, -inf
    %v4303 = vrot.slane %v4302, 4
    %v4304 = vmax.f32 %v4302, %v4303
    %v4305 = vrot.slane %v4304, 2
    %v4306 = vmax.f32 %v4304, %v4305
    %v4307 = vrot.slane %v4306, 1
    %v4308 = vmax.f32 %v4306, %v4307
    %v4309 = vsel %vm700, %v4097, -inf
    %v4310 = vrot.slane %v4309, 4
    %v4311 = vmax.f32 %v4309, %v4310
    %v4312 = vrot.slane %v4311, 2
    %v4313 = vmax.f32 %v4311, %v4312
    %v4314 = vrot.slane %v4313, 1
    %v4315 = vmax.f32 %v4313, %v4314
    %v4316 = vsel %vm700, %v4099, -inf
    %v4317 = vrot.slane %v4316, 4
    %v4318 = vmax.f32 %v4316, %v4317
    %v4319 = vrot.slane %v4318, 2
    %v4320 = vmax.f32 %v4318, %v4319
    %v4321 = vrot.slane %v4320, 1
    %v4322 = vmax.f32 %v4320, %v4321
    %v4323 = vsel %vm700, %v4107, -inf
    %v4324 = vrot.slane %v4323, 4
    %v4325 = vmax.f32 %v4323, %v4324
    %v4326 = vrot.slane %v4325, 2
    %v4327 = vmax.f32 %v4325, %v4326
    %v4328 = vrot.slane %v4327, 1
    %v4329 = vmax.f32 %v4327, %v4328
    %v4330 = vsel %vm700, %v4115, -inf
    %v4331 = vrot.slane %v4330, 4
    %v4332 = vmax.f32 %v4330, %v4331
    %v4333 = vrot.slane %v4332, 2
    %v4334 = vmax.f32 %v4332, %v4333
    %v4335 = vrot.slane %v4334, 1
    %v4336 = vmax.f32 %v4334, %v4335
    %v4337 = vsel %vm700, %v4114, -inf
    %v4338 = vrot.slane %v4337, 4
    %v4339 = vmax.f32 %v4337, %v4338
    %v4340 = vrot.slane %v4339, 2
    %v4341 = vmax.f32 %v4339, %v4340
    %v4342 = vrot.slane %v4341, 1
    %v4343 = vmax.f32 %v4341, %v4342
    %v4344 = vsel %vm700, %v4116, -inf
    %v4345 = vrot.slane %v4344, 4
    %v4346 = vmax.f32 %v4344, %v4345
    %v4347 = vrot.slane %v4346, 2
    %v4348 = vmax.f32 %v4346, %v4347
    %v4349 = vrot.slane %v4348, 1
    %v4350 = vmax.f32 %v4348, %v4349
    %v4351 = vsel %vm700, %v4124, -inf
    %v4352 = vrot.slane %v4351, 4
    %v4353 = vmax.f32 %v4351, %v4352
    %v4354 = vrot.slane %v4353, 2
    %v4355 = vmax.f32 %v4353, %v4354
    %v4356 = vrot.slane %v4355, 1
    %v4357 = vmax.f32 %v4355, %v4356
    %v4358 = vsel %vm700, %v4132, -inf
    %v4359 = vrot.slane %v4358, 4
    %v4360 = vmax.f32 %v4358, %v4359
    %v4361 = vrot.slane %v4360, 2
    %v4362 = vmax.f32 %v4360, %v4361
    %v4363 = vrot.slane %v4362, 1
    %v4364 = vmax.f32 %v4362, %v4363
    %v4365 = vsel %vm700, %v4131, -inf
    %v4366 = vrot.slane %v4365, 4
    %v4367 = vmax.f32 %v4365, %v4366
    %v4368 = vrot.slane %v4367, 2
    %v4369 = vmax.f32 %v4367, %v4368
    %v4370 = vrot.slane %v4369, 1
    %v4371 = vmax.f32 %v4369, %v4370
    %v4372 = vsel %vm700, %v4133, -inf
    %v4373 = vrot.slane %v4372, 4
    %v4374 = vmax.f32 %v4372, %v4373
    %v4375 = vrot.slane %v4374, 2
    %v4376 = vmax.f32 %v4374, %v4375
    %v4377 = vrot.slane %v4376, 1
    %v4378 = vmax.f32 %v4376, %v4377
    %v4379 = vsel %vm700, %v4141, -inf
    %v4380 = vrot.slane %v4379, 4
    %v4381 = vmax.f32 %v4379, %v4380
    %v4382 = vrot.slane %v4381, 2
    %v4383 = vmax.f32 %v4381, %v4382
    %v4384 = vrot.slane %v4383, 1
    %v4385 = vmax.f32 %v4383, %v4384
    %v4386 = vsel %vm700, %v4149, -inf
    %v4387 = vrot.slane %v4386, 4
    %v4388 = vmax.f32 %v4386, %v4387
    %v4389 = vrot.slane %v4388, 2
    %v4390 = vmax.f32 %v4388, %v4389
    %v4391 = vrot.slane %v4390, 1
    %v4392 = vmax.f32 %v4390, %v4391
    %v4393 = vsel %vm700, %v4148, -inf
    %v4394 = vrot.slane %v4393, 4
    %v4395 = vmax.f32 %v4393, %v4394
    %v4396 = vrot.slane %v4395, 2
    %v4397 = vmax.f32 %v4395, %v4396
    %v4398 = vrot.slane %v4397, 1
    %v4399 = vmax.f32 %v4397, %v4398
    %v4400 = vsel %vm700, %v4150, -inf
    %v4401 = vrot.slane %v4400, 4
    %v4402 = vmax.f32 %v4400, %v4401
    %v4403 = vrot.slane %v4402, 2
    %v4404 = vmax.f32 %v4402, %v4403
    %v4405 = vrot.slane %v4404, 1
    %v4406 = vmax.f32 %v4404, %v4405
    %v4439 = vcombine.low %v4189, %v4196
    %v4440 = vcombine.low %v4203, %v4210
    %v4442 = vunpack.c.l.s4 1983009808
    %v4443 = vunpack.c.0.s8 %v4442
    %v4444 = vlaneseq
    %v4445 = vshrl.u32 %v4444, 7
    %v4446 = vsub.s32 %v4443, %v4445
    %v4447 = vrot.slane %v4439, %v4446
    %v4449 = vunpack.c.l.s4 1983009808
    %v4450 = vunpack.c.0.s8 %v4449
    %v4451 = vlaneseq
    %v4452 = vshrl.u32 %v4451, 7
    %v4453 = vsub.s32 %v4450, %v4452
    %v4454 = vrot.slane %v4440, %v4453
    %v4455 = vcombine.low %v4447, %v4454
    %v4456 = vcombine.low %v4217, %v4224
    %v4457 = vcombine.low %v4231, %v4238
    %v4459 = vunpack.c.l.s4 1983009808
    %v4460 = vunpack.c.0.s8 %v4459
    %v4461 = vlaneseq
    %v4462 = vshrl.u32 %v4461, 7
    %v4463 = vsub.s32 %v4460, %v4462
    %v4464 = vrot.slane %v4456, %v4463
    %v4466 = vunpack.c.l.s4 1983009808
    %v4467 = vunpack.c.0.s8 %v4466
    %v4468 = vlaneseq
    %v4469 = vshrl.u32 %v4468, 7
    %v4470 = vsub.s32 %v4467, %v4469
    %v4471 = vrot.slane %v4457, %v4470
    %v4472 = vcombine.low %v4464, %v4471
    %v4473 = vcombine.low %v4245, %v4252
    %v4474 = vcombine.low %v4259, %v4266
    %v4476 = vunpack.c.l.s4 1983009808
    %v4477 = vunpack.c.0.s8 %v4476
    %v4478 = vlaneseq
    %v4479 = vshrl.u32 %v4478, 7
    %v4480 = vsub.s32 %v4477, %v4479
    %v4481 = vrot.slane %v4473, %v4480
    %v4483 = vunpack.c.l.s4 1983009808
    %v4484 = vunpack.c.0.s8 %v4483
    %v4485 = vlaneseq
    %v4486 = vshrl.u32 %v4485, 7
    %v4487 = vsub.s32 %v4484, %v4486
    %v4488 = vrot.slane %v4474, %v4487
    %v4489 = vcombine.low %v4481, %v4488
    %v4490 = vcombine.low %v4273, %v4280
    %v4491 = vcombine.low %v4287, %v4294
    %v4493 = vunpack.c.l.s4 1983009808
    %v4494 = vunpack.c.0.s8 %v4493
    %v4495 = vlaneseq
    %v4496 = vshrl.u32 %v4495, 7
    %v4497 = vsub.s32 %v4494, %v4496
    %v4498 = vrot.slane %v4490, %v4497
    %v4500 = vunpack.c.l.s4 1983009808
    %v4501 = vunpack.c.0.s8 %v4500
    %v4502 = vlaneseq
    %v4503 = vshrl.u32 %v4502, 7
    %v4504 = vsub.s32 %v4501, %v4503
    %v4505 = vrot.slane %v4491, %v4504
    %v4506 = vcombine.low %v4498, %v4505
    %v4507 = vcombine.low %v4301, %v4308
    %v4508 = vcombine.low %v4315, %v4322
    %v4510 = vunpack.c.l.s4 1983009808
    %v4511 = vunpack.c.0.s8 %v4510
    %v4512 = vlaneseq
    %v4513 = vshrl.u32 %v4512, 7
    %v4514 = vsub.s32 %v4511, %v4513
    %v4515 = vrot.slane %v4507, %v4514
    %v4517 = vunpack.c.l.s4 1983009808
    %v4518 = vunpack.c.0.s8 %v4517
    %v4519 = vlaneseq
    %v4520 = vshrl.u32 %v4519, 7
    %v4521 = vsub.s32 %v4518, %v4520
    %v4522 = vrot.slane %v4508, %v4521
    %v4523 = vcombine.low %v4515, %v4522
    %v4524 = vcombine.low %v4329, %v4336
    %v4525 = vcombine.low %v4343, %v4350
    %v4527 = vunpack.c.l.s4 1983009808
    %v4528 = vunpack.c.0.s8 %v4527
    %v4529 = vlaneseq
    %v4530 = vshrl.u32 %v4529, 7
    %v4531 = vsub.s32 %v4528, %v4530
    %v4532 = vrot.slane %v4524, %v4531
    %v4534 = vunpack.c.l.s4 1983009808
    %v4535 = vunpack.c.0.s8 %v4534
    %v4536 = vlaneseq
    %v4537 = vshrl.u32 %v4536, 7
    %v4538 = vsub.s32 %v4535, %v4537
    %v4539 = vrot.slane %v4525, %v4538
    %v4540 = vcombine.low %v4532, %v4539
    %v4541 = vcombine.low %v4357, %v4364
    %v4542 = vcombine.low %v4371, %v4378
    %v4544 = vunpack.c.l.s4 1983009808
    %v4545 = vunpack.c.0.s8 %v4544
    %v4546 = vlaneseq
    %v4547 = vshrl.u32 %v4546, 7
    %v4548 = vsub.s32 %v4545, %v4547
    %v4549 = vrot.slane %v4541, %v4548
    %v4551 = vunpack.c.l.s4 1983009808
    %v4552 = vunpack.c.0.s8 %v4551
    %v4553 = vlaneseq
    %v4554 = vshrl.u32 %v4553, 7
    %v4555 = vsub.s32 %v4552, %v4554
    %v4556 = vrot.slane %v4542, %v4555
    %v4557 = vcombine.low %v4549, %v4556
    %v4558 = vcombine.low %v4385, %v4392
    %v4559 = vcombine.low %v4399, %v4406
    %v4561 = vunpack.c.l.s4 1983009808
    %v4562 = vunpack.c.0.s8 %v4561
    %v4563 = vlaneseq
    %v4564 = vshrl.u32 %v4563, 7
    %v4565 = vsub.s32 %v4562, %v4564
    %v4566 = vrot.slane %v4558, %v4565
    %v4568 = vunpack.c.l.s4 1983009808
    %v4569 = vunpack.c.0.s8 %v4568
    %v4570 = vlaneseq
    %v4571 = vshrl.u32 %v4570, 7
    %v4572 = vsub.s32 %v4569, %v4571
    %v4573 = vrot.slane %v4559, %v4572
    %v4574 = vcombine.low %v4566, %v4573
    %v4575 = vsel %vm1045, %v4455, %v4455
    %v4576 = vsel %vm1049, %v4455, %v4575
    %v4577 = vrot.slane %v4472, 7
    %v4578 = vsel %vm1039, %v4577, %v4576
    %v4579 = vsel %vm1043, %v4577, %v4578
    %v4580 = vsel %vm1047, %v4577, %v4579
    %v4581 = vsel %vm1051, %v4577, %v4580
    %v4582 = vsel %vm1045, %v4489, %v4489
    %v4583 = vsel %vm1049, %v4489, %v4582
    %v4584 = vrot.slane %v4506, 7
    %v4585 = vsel %vm1039, %v4584, %v4583
    %v4586 = vsel %vm1043, %v4584, %v4585
    %v4587 = vsel %vm1047, %v4584, %v4586
    %v4588 = vsel %vm1051, %v4584, %v4587
    %v4589 = vsel %vm1045, %v4523, %v4523
    %v4590 = vsel %vm1049, %v4523, %v4589
    %v4591 = vrot.slane %v4540, 7
    %v4592 = vsel %vm1039, %v4591, %v4590
    %v4593 = vsel %vm1043, %v4591, %v4592
    %v4594 = vsel %vm1047, %v4591, %v4593
    %v4595 = vsel %vm1051, %v4591, %v4594
    %v4596 = vsel %vm1045, %v4557, %v4557
    %v4597 = vsel %vm1049, %v4557, %v4596
    %v4598 = vrot.slane %v4574, 7
    %v4599 = vsel %vm1039, %v4598, %v4597
    %v4600 = vsel %vm1043, %v4598, %v4599
    %v4601 = vsel %vm1047, %v4598, %v4600
    %v4602 = vsel %vm1051, %v4598, %v4601
    %v4608 = vunpack.c.l.s4 1966171168
    %v4609 = vunpack.c.0.s8 %v4608
    %v4610 = vlaneseq
    %v4611 = vshrl.u32 %v4610, 7
    %v4612 = vsub.s32 %v4609, %v4611
    %v4613 = vrot.slane %v4581, %v4612
    %v4615 = vunpack.c.l.s4 1966171168
    %v4616 = vunpack.c.0.s8 %v4615
    %v4617 = vlaneseq
    %v4618 = vshrl.u32 %v4617, 7
    %v4619 = vsub.s32 %v4616, %v4618
    %v4620 = vrot.slane %v4588, %v4619
    %v4622 = vunpack.c.l.s4 1966171168
    %v4623 = vunpack.c.0.s8 %v4622
    %v4624 = vlaneseq
    %v4625 = vshrl.u32 %v4624, 7
    %v4626 = vsub.s32 %v4623, %v4625
    %v4627 = vrot.slane %v4595, %v4626
    %v4629 = vunpack.c.l.s4 1966171168
    %v4630 = vunpack.c.0.s8 %v4629
    %v4631 = vlaneseq
    %v4632 = vshrl.u32 %v4631, 7
    %v4633 = vsub.s32 %v4630, %v4632
    %v4634 = vrot.slane %v4602, %v4633
    %v4639 = vcombine.low %v4613, %v4627
    %v4640 = vcombine.high %v4613, %v4627
    %v4642 = vunpack.c.l.s4 1966171168
    %v4643 = vunpack.c.0.s8 %v4642
    %v4644 = vlaneseq
    %v4645 = vshrl.u32 %v4644, 7
    %v4646 = vsub.s32 %v4643, %v4645
    %v4647 = vrot.slane %v4639, %v4646
    %v4649 = vunpack.c.l.s4 1966171168
    %v4650 = vunpack.c.0.s8 %v4649
    %v4651 = vlaneseq
    %v4652 = vshrl.u32 %v4651, 7
    %v4653 = vsub.s32 %v4650, %v4652
    %v4654 = vrot.slane %v4640, %v4653
    %v4655 = vcombine.high %v4647, %v4647
    %v4656 = vcombine.high %v4654, %v4654
    %v4658 = vunpack.c.l.s4 1966171168
    %v4659 = vunpack.c.0.s8 %v4658
    %v4660 = vlaneseq
    %v4661 = vshrl.u32 %v4660, 7
    %v4662 = vsub.s32 %v4659, %v4661
    %v4663 = vrot.slane %v4647, %v4662
    %v4665 = vunpack.c.l.s4 1966171168
    %v4666 = vunpack.c.0.s8 %v4665
    %v4667 = vlaneseq
    %v4668 = vshrl.u32 %v4667, 7
    %v4669 = vsub.s32 %v4666, %v4668
    %v4670 = vrot.slane %v4654, %v4669
    %v4672 = vunpack.c.l.s4 1966171168
    %v4673 = vunpack.c.0.s8 %v4672
    %v4674 = vlaneseq
    %v4675 = vshrl.u32 %v4674, 7
    %v4676 = vsub.s32 %v4673, %v4675
    %v4677 = vrot.slane %v4655, %v4676
    %v4679 = vunpack.c.l.s4 1966171168
    %v4680 = vunpack.c.0.s8 %v4679
    %v4681 = vlaneseq
    %v4682 = vshrl.u32 %v4681, 7
    %v4683 = vsub.s32 %v4680, %v4682
    %v4684 = vrot.slane %v4656, %v4683
    %v4685 = vcombine.high %v4663, %v4663
    %v4686 = vcombine.high %v4670, %v4670
    %v4687 = vcombine.high %v4677, %v4677
    %v4688 = vcombine.high %v4684, %v4684
    %v4689 = vcombine.low %v4620, %v4634
    %v4690 = vcombine.high %v4620, %v4634
    %v4692 = vunpack.c.l.s4 1966171168
    %v4693 = vunpack.c.0.s8 %v4692
    %v4694 = vlaneseq
    %v4695 = vshrl.u32 %v4694, 7
    %v4696 = vsub.s32 %v4693, %v4695
    %v4697 = vrot.slane %v4689, %v4696
    %v4699 = vunpack.c.l.s4 1966171168
    %v4700 = vunpack.c.0.s8 %v4699
    %v4701 = vlaneseq
    %v4702 = vshrl.u32 %v4701, 7
    %v4703 = vsub.s32 %v4700, %v4702
    %v4704 = vrot.slane %v4690, %v4703
    %v4705 = vcombine.high %v4697, %v4697
    %v4706 = vcombine.high %v4704, %v4704
    %v4708 = vunpack.c.l.s4 1966171168
    %v4709 = vunpack.c.0.s8 %v4708
    %v4710 = vlaneseq
    %v4711 = vshrl.u32 %v4710, 7
    %v4712 = vsub.s32 %v4709, %v4711
    %v4713 = vrot.slane %v4697, %v4712
    %v4715 = vunpack.c.l.s4 1966171168
    %v4716 = vunpack.c.0.s8 %v4715
    %v4717 = vlaneseq
    %v4718 = vshrl.u32 %v4717, 7
    %v4719 = vsub.s32 %v4716, %v4718
    %v4720 = vrot.slane %v4704, %v4719
    %v4722 = vunpack.c.l.s4 1966171168
    %v4723 = vunpack.c.0.s8 %v4722
    %v4724 = vlaneseq
    %v4725 = vshrl.u32 %v4724, 7
    %v4726 = vsub.s32 %v4723, %v4725
    %v4727 = vrot.slane %v4705, %v4726
    %v4729 = vunpack.c.l.s4 1966171168
    %v4730 = vunpack.c.0.s8 %v4729
    %v4731 = vlaneseq
    %v4732 = vshrl.u32 %v4731, 7
    %v4733 = vsub.s32 %v4730, %v4732
    %v4734 = vrot.slane %v4706, %v4733
    %v4735 = vcombine.high %v4713, %v4713
    %v4736 = vcombine.high %v4720, %v4720
    %v4737 = vcombine.high %v4727, %v4727
    %v4738 = vcombine.high %v4734, %v4734
    %v4755 = vpack.c.bf16 %v4663, %v4663
    %v4756 = vpack.c.bf16 %v4677, %v4677
    %v4757 = vpack.c.bf16 %v4685, %v4685
    %v4758 = vpack.c.bf16 %v4687, %v4687
    %v4759 = vpack.c.bf16 %v4670, %v4670
    %v4760 = vpack.c.bf16 %v4684, %v4684
    %v4761 = vpack.c.bf16 %v4686, %v4686
    %v4762 = vpack.c.bf16 %v4688, %v4688
    %v4763 = vpack.c.bf16 %v4713, %v4713
    %v4764 = vpack.c.bf16 %v4727, %v4727
    %v4765 = vpack.c.bf16 %v4735, %v4735
    %v4766 = vpack.c.bf16 %v4737, %v4737
    %v4767 = vpack.c.bf16 %v4720, %v4720
    %v4768 = vpack.c.bf16 %v4734, %v4734
    %v4769 = vpack.c.bf16 %v4736, %v4736
    %v4770 = vpack.c.bf16 %v4738, %v4738
    %s4771 = smul.u32 4, 256
    %s4772 = smul.u32 %s4771, 8
    %s4773 = sshll.u32 %s4772, 4
    %4774 = dma.done [#allocation7], %s4773
    %v4775 = vld [vmem:[#allocation4] sm:$0xff]
    %v4776 = vld [vmem:[#allocation4 + $0x8] sm:$0xff]
    %v4777 = vld [vmem:[#allocation4 + $0x10] sm:$0xff]
    %v4778 = vld [vmem:[#allocation4 + $0x18] sm:$0xff]
    %v4779 = vld [vmem:[#allocation4 + $0x20] sm:$0xff]
    %v4780 = vld [vmem:[#allocation4 + $0x28] sm:$0xff]
    %v4781 = vld [vmem:[#allocation4 + $0x30] sm:$0xff]
    %v4782 = vld [vmem:[#allocation4 + $0x38] sm:$0xff]
    %v4783 = vld [vmem:[#allocation4 + $0x40] sm:$0xff]
    %v4784 = vld [vmem:[#allocation4 + $0x48] sm:$0xff]
    %v4785 = vld [vmem:[#allocation4 + $0x50] sm:$0xff]
    %v4786 = vld [vmem:[#allocation4 + $0x58] sm:$0xff]
    %v4787 = vld [vmem:[#allocation4 + $0x60] sm:$0xff]
    %v4788 = vld [vmem:[#allocation4 + $0x68] sm:$0xff]
    %v4789 = vld [vmem:[#allocation4 + $0x70] sm:$0xff]
    %v4790 = vld [vmem:[#allocation4 + $0x78] sm:$0xff]
    %v4791 = vld [vmem:[#allocation4 + $0x80] sm:$0xff]
    %v4792 = vld [vmem:[#allocation4 + $0x88] sm:$0xff]
    %v4793 = vld [vmem:[#allocation4 + $0x90] sm:$0xff]
    %v4794 = vld [vmem:[#allocation4 + $0x98] sm:$0xff]
    %v4795 = vld [vmem:[#allocation4 + $0xa0] sm:$0xff]
    %v4796 = vld [vmem:[#allocation4 + $0xa8] sm:$0xff]
    %v4797 = vld [vmem:[#allocation4 + $0xb0] sm:$0xff]
    %v4798 = vld [vmem:[#allocation4 + $0xb8] sm:$0xff]
    %v4799 = vld [vmem:[#allocation4 + $0xc0] sm:$0xff]
    %v4800 = vld [vmem:[#allocation4 + $0xc8] sm:$0xff]
    %v4801 = vld [vmem:[#allocation4 + $0xd0] sm:$0xff]
    %v4802 = vld [vmem:[#allocation4 + $0xd8] sm:$0xff]
    %v4803 = vld [vmem:[#allocation4 + $0xe0] sm:$0xff]
    %v4804 = vld [vmem:[#allocation4 + $0xe8] sm:$0xff]
    %v4805 = vld [vmem:[#allocation4 + $0xf0] sm:$0xff]
    %v4806 = vld [vmem:[#allocation4 + $0xf8] sm:$0xff]
    %v4807 = vld [vmem:[#allocation4 + $0x100] sm:$0xff]
    %v4808 = vld [vmem:[#allocation4 + $0x108] sm:$0xff]
    %v4809 = vld [vmem:[#allocation4 + $0x110] sm:$0xff]
    %v4810 = vld [vmem:[#allocation4 + $0x118] sm:$0xff]
    %v4811 = vld [vmem:[#allocation4 + $0x120] sm:$0xff]
    %v4812 = vld [vmem:[#allocation4 + $0x128] sm:$0xff]
    %v4813 = vld [vmem:[#allocation4 + $0x130] sm:$0xff]
    %v4814 = vld [vmem:[#allocation4 + $0x138] sm:$0xff]
    %v4815 = vld [vmem:[#allocation4 + $0x140] sm:$0xff]
    %v4816 = vld [vmem:[#allocation4 + $0x148] sm:$0xff]
    %v4817 = vld [vmem:[#allocation4 + $0x150] sm:$0xff]
    %v4818 = vld [vmem:[#allocation4 + $0x158] sm:$0xff]
    %v4819 = vld [vmem:[#allocation4 + $0x160] sm:$0xff]
    %v4820 = vld [vmem:[#allocation4 + $0x168] sm:$0xff]
    %v4821 = vld [vmem:[#allocation4 + $0x170] sm:$0xff]
    %v4822 = vld [vmem:[#allocation4 + $0x178] sm:$0xff]
    %v4823 = vld [vmem:[#allocation4 + $0x180] sm:$0xff]
    %v4824 = vld [vmem:[#allocation4 + $0x188] sm:$0xff]
    %v4825 = vld [vmem:[#allocation4 + $0x190] sm:$0xff]
    %v4826 = vld [vmem:[#allocation4 + $0x198] sm:$0xff]
    %v4827 = vld [vmem:[#allocation4 + $0x1a0] sm:$0xff]
    %v4828 = vld [vmem:[#allocation4 + $0x1a8] sm:$0xff]
    %v4829 = vld [vmem:[#allocation4 + $0x1b0] sm:$0xff]
    %v4830 = vld [vmem:[#allocation4 + $0x1b8] sm:$0xff]
    %v4831 = vld [vmem:[#allocation4 + $0x1c0] sm:$0xff]
    %v4832 = vld [vmem:[#allocation4 + $0x1c8] sm:$0xff]
    %v4833 = vld [vmem:[#allocation4 + $0x1d0] sm:$0xff]
    %v4834 = vld [vmem:[#allocation4 + $0x1d8] sm:$0xff]
    %v4835 = vld [vmem:[#allocation4 + $0x1e0] sm:$0xff]
    %v4836 = vld [vmem:[#allocation4 + $0x1e8] sm:$0xff]
    %v4837 = vld [vmem:[#allocation4 + $0x1f0] sm:$0xff]
    %v4838 = vld [vmem:[#allocation4 + $0x1f8] sm:$0xff]
    %v4839 = vld [vmem:[#allocation4 + $0x200] sm:$0xff]
    %v4840 = vld [vmem:[#allocation4 + $0x208] sm:$0xff]
    %v4841 = vld [vmem:[#allocation4 + $0x210] sm:$0xff]
    %v4842 = vld [vmem:[#allocation4 + $0x218] sm:$0xff]
    %v4843 = vld [vmem:[#allocation4 + $0x220] sm:$0xff]
    %v4844 = vld [vmem:[#allocation4 + $0x228] sm:$0xff]
    %v4845 = vld [vmem:[#allocation4 + $0x230] sm:$0xff]
    %v4846 = vld [vmem:[#allocation4 + $0x238] sm:$0xff]
    %v4847 = vld [vmem:[#allocation4 + $0x240] sm:$0xff]
    %v4848 = vld [vmem:[#allocation4 + $0x248] sm:$0xff]
    %v4849 = vld [vmem:[#allocation4 + $0x250] sm:$0xff]
    %v4850 = vld [vmem:[#allocation4 + $0x258] sm:$0xff]
    %v4851 = vld [vmem:[#allocation4 + $0x260] sm:$0xff]
    %v4852 = vld [vmem:[#allocation4 + $0x268] sm:$0xff]
    %v4853 = vld [vmem:[#allocation4 + $0x270] sm:$0xff]
    %v4854 = vld [vmem:[#allocation4 + $0x278] sm:$0xff]
    %v4855 = vld [vmem:[#allocation4 + $0x280] sm:$0xff]
    %v4856 = vld [vmem:[#allocation4 + $0x288] sm:$0xff]
    %v4857 = vld [vmem:[#allocation4 + $0x290] sm:$0xff]
    %v4858 = vld [vmem:[#allocation4 + $0x298] sm:$0xff]
    %v4859 = vld [vmem:[#allocation4 + $0x2a0] sm:$0xff]
    %v4860 = vld [vmem:[#allocation4 + $0x2a8] sm:$0xff]
    %v4861 = vld [vmem:[#allocation4 + $0x2b0] sm:$0xff]
    %v4862 = vld [vmem:[#allocation4 + $0x2b8] sm:$0xff]
    %v4863 = vld [vmem:[#allocation4 + $0x2c0] sm:$0xff]
    %v4864 = vld [vmem:[#allocation4 + $0x2c8] sm:$0xff]
    %v4865 = vld [vmem:[#allocation4 + $0x2d0] sm:$0xff]
    %v4866 = vld [vmem:[#allocation4 + $0x2d8] sm:$0xff]
    %v4867 = vld [vmem:[#allocation4 + $0x2e0] sm:$0xff]
    %v4868 = vld [vmem:[#allocation4 + $0x2e8] sm:$0xff]
    %v4869 = vld [vmem:[#allocation4 + $0x2f0] sm:$0xff]
    %v4870 = vld [vmem:[#allocation4 + $0x2f8] sm:$0xff]
    %v4871 = vld [vmem:[#allocation4 + $0x300] sm:$0xff]
    %v4872 = vld [vmem:[#allocation4 + $0x308] sm:$0xff]
    %v4873 = vld [vmem:[#allocation4 + $0x310] sm:$0xff]
    %v4874 = vld [vmem:[#allocation4 + $0x318] sm:$0xff]
    %v4875 = vld [vmem:[#allocation4 + $0x320] sm:$0xff]
    %v4876 = vld [vmem:[#allocation4 + $0x328] sm:$0xff]
    %v4877 = vld [vmem:[#allocation4 + $0x330] sm:$0xff]
    %v4878 = vld [vmem:[#allocation4 + $0x338] sm:$0xff]
    %v4879 = vld [vmem:[#allocation4 + $0x340] sm:$0xff]
    %v4880 = vld [vmem:[#allocation4 + $0x348] sm:$0xff]
    %v4881 = vld [vmem:[#allocation4 + $0x350] sm:$0xff]
    %v4882 = vld [vmem:[#allocation4 + $0x358] sm:$0xff]
    %v4883 = vld [vmem:[#allocation4 + $0x360] sm:$0xff]
    %v4884 = vld [vmem:[#allocation4 + $0x368] sm:$0xff]
    %v4885 = vld [vmem:[#allocation4 + $0x370] sm:$0xff]
    %v4886 = vld [vmem:[#allocation4 + $0x378] sm:$0xff]
    %v4887 = vld [vmem:[#allocation4 + $0x380] sm:$0xff]
    %v4888 = vld [vmem:[#allocation4 + $0x388] sm:$0xff]
    %v4889 = vld [vmem:[#allocation4 + $0x390] sm:$0xff]
    %v4890 = vld [vmem:[#allocation4 + $0x398] sm:$0xff]
    %v4891 = vld [vmem:[#allocation4 + $0x3a0] sm:$0xff]
    %v4892 = vld [vmem:[#allocation4 + $0x3a8] sm:$0xff]
    %v4893 = vld [vmem:[#allocation4 + $0x3b0] sm:$0xff]
    %v4894 = vld [vmem:[#allocation4 + $0x3b8] sm:$0xff]
    %v4895 = vld [vmem:[#allocation4 + $0x3c0] sm:$0xff]
    %v4896 = vld [vmem:[#allocation4 + $0x3c8] sm:$0xff]
    %v4897 = vld [vmem:[#allocation4 + $0x3d0] sm:$0xff]
    %v4898 = vld [vmem:[#allocation4 + $0x3d8] sm:$0xff]
    %v4899 = vld [vmem:[#allocation4 + $0x3e0] sm:$0xff]
    %v4900 = vld [vmem:[#allocation4 + $0x3e8] sm:$0xff]
    %v4901 = vld [vmem:[#allocation4 + $0x3f0] sm:$0xff]
    %v4902 = vld [vmem:[#allocation4 + $0x3f8] sm:$0xff]
    %v4903 = vld [vmem:[#allocation4 + $0x400] sm:$0xff]
    %v4904 = vld [vmem:[#allocation4 + $0x408] sm:$0xff]
    %v4905 = vld [vmem:[#allocation4 + $0x410] sm:$0xff]
    %v4906 = vld [vmem:[#allocation4 + $0x418] sm:$0xff]
    %v4907 = vld [vmem:[#allocation4 + $0x420] sm:$0xff]
    %v4908 = vld [vmem:[#allocation4 + $0x428] sm:$0xff]
    %v4909 = vld [vmem:[#allocation4 + $0x430] sm:$0xff]
    %v4910 = vld [vmem:[#allocation4 + $0x438] sm:$0xff]
    %v4911 = vld [vmem:[#allocation4 + $0x440] sm:$0xff]
    %v4912 = vld [vmem:[#allocation4 + $0x448] sm:$0xff]
    %v4913 = vld [vmem:[#allocation4 + $0x450] sm:$0xff]
    %v4914 = vld [vmem:[#allocation4 + $0x458] sm:$0xff]
    %v4915 = vld [vmem:[#allocation4 + $0x460] sm:$0xff]
    %v4916 = vld [vmem:[#allocation4 + $0x468] sm:$0xff]
    %v4917 = vld [vmem:[#allocation4 + $0x470] sm:$0xff]
    %v4918 = vld [vmem:[#allocation4 + $0x478] sm:$0xff]
    %v4919 = vld [vmem:[#allocation4 + $0x480] sm:$0xff]
    %v4920 = vld [vmem:[#allocation4 + $0x488] sm:$0xff]
    %v4921 = vld [vmem:[#allocation4 + $0x490] sm:$0xff]
    %v4922 = vld [vmem:[#allocation4 + $0x498] sm:$0xff]
    %v4923 = vld [vmem:[#allocation4 + $0x4a0] sm:$0xff]
    %v4924 = vld [vmem:[#allocation4 + $0x4a8] sm:$0xff]
    %v4925 = vld [vmem:[#allocation4 + $0x4b0] sm:$0xff]
    %v4926 = vld [vmem:[#allocation4 + $0x4b8] sm:$0xff]
    %v4927 = vld [vmem:[#allocation4 + $0x4c0] sm:$0xff]
    %v4928 = vld [vmem:[#allocation4 + $0x4c8] sm:$0xff]
    %v4929 = vld [vmem:[#allocation4 + $0x4d0] sm:$0xff]
    %v4930 = vld [vmem:[#allocation4 + $0x4d8] sm:$0xff]
    %v4931 = vld [vmem:[#allocation4 + $0x4e0] sm:$0xff]
    %v4932 = vld [vmem:[#allocation4 + $0x4e8] sm:$0xff]
    %v4933 = vld [vmem:[#allocation4 + $0x4f0] sm:$0xff]
    %v4934 = vld [vmem:[#allocation4 + $0x4f8] sm:$0xff]
    %v4935 = vld [vmem:[#allocation4 + $0x500] sm:$0xff]
    %v4936 = vld [vmem:[#allocation4 + $0x508] sm:$0xff]
    %v4937 = vld [vmem:[#allocation4 + $0x510] sm:$0xff]
    %v4938 = vld [vmem:[#allocation4 + $0x518] sm:$0xff]
    %v4939 = vld [vmem:[#allocation4 + $0x520] sm:$0xff]
    %v4940 = vld [vmem:[#allocation4 + $0x528] sm:$0xff]
    %v4941 = vld [vmem:[#allocation4 + $0x530] sm:$0xff]
    %v4942 = vld [vmem:[#allocation4 + $0x538] sm:$0xff]
    %v4943 = vld [vmem:[#allocation4 + $0x540] sm:$0xff]
    %v4944 = vld [vmem:[#allocation4 + $0x548] sm:$0xff]
    %v4945 = vld [vmem:[#allocation4 + $0x550] sm:$0xff]
    %v4946 = vld [vmem:[#allocation4 + $0x558] sm:$0xff]
    %v4947 = vld [vmem:[#allocation4 + $0x560] sm:$0xff]
    %v4948 = vld [vmem:[#allocation4 + $0x568] sm:$0xff]
    %v4949 = vld [vmem:[#allocation4 + $0x570] sm:$0xff]
    %v4950 = vld [vmem:[#allocation4 + $0x578] sm:$0xff]
    %v4951 = vld [vmem:[#allocation4 + $0x580] sm:$0xff]
    %v4952 = vld [vmem:[#allocation4 + $0x588] sm:$0xff]
    %v4953 = vld [vmem:[#allocation4 + $0x590] sm:$0xff]
    %v4954 = vld [vmem:[#allocation4 + $0x598] sm:$0xff]
    %v4955 = vld [vmem:[#allocation4 + $0x5a0] sm:$0xff]
    %v4956 = vld [vmem:[#allocation4 + $0x5a8] sm:$0xff]
    %v4957 = vld [vmem:[#allocation4 + $0x5b0] sm:$0xff]
    %v4958 = vld [vmem:[#allocation4 + $0x5b8] sm:$0xff]
    %v4959 = vld [vmem:[#allocation4 + $0x5c0] sm:$0xff]
    %v4960 = vld [vmem:[#allocation4 + $0x5c8] sm:$0xff]
    %v4961 = vld [vmem:[#allocation4 + $0x5d0] sm:$0xff]
    %v4962 = vld [vmem:[#allocation4 + $0x5d8] sm:$0xff]
    %v4963 = vld [vmem:[#allocation4 + $0x5e0] sm:$0xff]
    %v4964 = vld [vmem:[#allocation4 + $0x5e8] sm:$0xff]
    %v4965 = vld [vmem:[#allocation4 + $0x5f0] sm:$0xff]
    %v4966 = vld [vmem:[#allocation4 + $0x5f8] sm:$0xff]
    %v4967 = vld [vmem:[#allocation4 + $0x600] sm:$0xff]
    %v4968 = vld [vmem:[#allocation4 + $0x608] sm:$0xff]
    %v4969 = vld [vmem:[#allocation4 + $0x610] sm:$0xff]
    %v4970 = vld [vmem:[#allocation4 + $0x618] sm:$0xff]
    %v4971 = vld [vmem:[#allocation4 + $0x620] sm:$0xff]
    %v4972 = vld [vmem:[#allocation4 + $0x628] sm:$0xff]
    %v4973 = vld [vmem:[#allocation4 + $0x630] sm:$0xff]
    %v4974 = vld [vmem:[#allocation4 + $0x638] sm:$0xff]
    %v4975 = vld [vmem:[#allocation4 + $0x640] sm:$0xff]
    %v4976 = vld [vmem:[#allocation4 + $0x648] sm:$0xff]
    %v4977 = vld [vmem:[#allocation4 + $0x650] sm:$0xff]
    %v4978 = vld [vmem:[#allocation4 + $0x658] sm:$0xff]
    %v4979 = vld [vmem:[#allocation4 + $0x660] sm:$0xff]
    %v4980 = vld [vmem:[#allocation4 + $0x668] sm:$0xff]
    %v4981 = vld [vmem:[#allocation4 + $0x670] sm:$0xff]
    %v4982 = vld [vmem:[#allocation4 + $0x678] sm:$0xff]
    %v4983 = vld [vmem:[#allocation4 + $0x680] sm:$0xff]
    %v4984 = vld [vmem:[#allocation4 + $0x688] sm:$0xff]
    %v4985 = vld [vmem:[#allocation4 + $0x690] sm:$0xff]
    %v4986 = vld [vmem:[#allocation4 + $0x698] sm:$0xff]
    %v4987 = vld [vmem:[#allocation4 + $0x6a0] sm:$0xff]
    %v4988 = vld [vmem:[#allocation4 + $0x6a8] sm:$0xff]
    %v4989 = vld [vmem:[#allocation4 + $0x6b0] sm:$0xff]
    %v4990 = vld [vmem:[#allocation4 + $0x6b8] sm:$0xff]
    %v4991 = vld [vmem:[#allocation4 + $0x6c0] sm:$0xff]
    %v4992 = vld [vmem:[#allocation4 + $0x6c8] sm:$0xff]
    %v4993 = vld [vmem:[#allocation4 + $0x6d0] sm:$0xff]
    %v4994 = vld [vmem:[#allocation4 + $0x6d8] sm:$0xff]
    %v4995 = vld [vmem:[#allocation4 + $0x6e0] sm:$0xff]
    %v4996 = vld [vmem:[#allocation4 + $0x6e8] sm:$0xff]
    %v4997 = vld [vmem:[#allocation4 + $0x6f0] sm:$0xff]
    %v4998 = vld [vmem:[#allocation4 + $0x6f8] sm:$0xff]
    %v4999 = vld [vmem:[#allocation4 + $0x700] sm:$0xff]
    %v5000 = vld [vmem:[#allocation4 + $0x708] sm:$0xff]
    %v5001 = vld [vmem:[#allocation4 + $0x710] sm:$0xff]
    %v5002 = vld [vmem:[#allocation4 + $0x718] sm:$0xff]
    %v5003 = vld [vmem:[#allocation4 + $0x720] sm:$0xff]
    %v5004 = vld [vmem:[#allocation4 + $0x728] sm:$0xff]
    %v5005 = vld [vmem:[#allocation4 + $0x730] sm:$0xff]
    %v5006 = vld [vmem:[#allocation4 + $0x738] sm:$0xff]
    %v5007 = vld [vmem:[#allocation4 + $0x740] sm:$0xff]
    %v5008 = vld [vmem:[#allocation4 + $0x748] sm:$0xff]
    %v5009 = vld [vmem:[#allocation4 + $0x750] sm:$0xff]
    %v5010 = vld [vmem:[#allocation4 + $0x758] sm:$0xff]
    %v5011 = vld [vmem:[#allocation4 + $0x760] sm:$0xff]
    %v5012 = vld [vmem:[#allocation4 + $0x768] sm:$0xff]
    %v5013 = vld [vmem:[#allocation4 + $0x770] sm:$0xff]
    %v5014 = vld [vmem:[#allocation4 + $0x778] sm:$0xff]
    %v5015 = vld [vmem:[#allocation4 + $0x780] sm:$0xff]
    %v5016 = vld [vmem:[#allocation4 + $0x788] sm:$0xff]
    %v5017 = vld [vmem:[#allocation4 + $0x790] sm:$0xff]
    %v5018 = vld [vmem:[#allocation4 + $0x798] sm:$0xff]
    %v5019 = vld [vmem:[#allocation4 + $0x7a0] sm:$0xff]
    %v5020 = vld [vmem:[#allocation4 + $0x7a8] sm:$0xff]
    %v5021 = vld [vmem:[#allocation4 + $0x7b0] sm:$0xff]
    %v5022 = vld [vmem:[#allocation4 + $0x7b8] sm:$0xff]
    %v5023 = vld [vmem:[#allocation4 + $0x7c0] sm:$0xff]
    %v5024 = vld [vmem:[#allocation4 + $0x7c8] sm:$0xff]
    %v5025 = vld [vmem:[#allocation4 + $0x7d0] sm:$0xff]
    %v5026 = vld [vmem:[#allocation4 + $0x7d8] sm:$0xff]
    %v5027 = vld [vmem:[#allocation4 + $0x7e0] sm:$0xff]
    %v5028 = vld [vmem:[#allocation4 + $0x7e8] sm:$0xff]
    %v5029 = vld [vmem:[#allocation4 + $0x7f0] sm:$0xff]
    %v5030 = vld [vmem:[#allocation4 + $0x7f8] sm:$0xff]
    %v5031 = vld [vmem:[#allocation4 + $0x800] sm:$0xff]
    %v5032 = vld [vmem:[#allocation4 + $0x808] sm:$0xff]
    %v5033 = vld [vmem:[#allocation4 + $0x810] sm:$0xff]
    %v5034 = vld [vmem:[#allocation4 + $0x818] sm:$0xff]
    %v5035 = vld [vmem:[#allocation4 + $0x820] sm:$0xff]
    %v5036 = vld [vmem:[#allocation4 + $0x828] sm:$0xff]
    %v5037 = vld [vmem:[#allocation4 + $0x830] sm:$0xff]
    %v5038 = vld [vmem:[#allocation4 + $0x838] sm:$0xff]
    %v5039 = vld [vmem:[#allocation4 + $0x840] sm:$0xff]
    %v5040 = vld [vmem:[#allocation4 + $0x848] sm:$0xff]
    %v5041 = vld [vmem:[#allocation4 + $0x850] sm:$0xff]
    %v5042 = vld [vmem:[#allocation4 + $0x858] sm:$0xff]
    %v5043 = vld [vmem:[#allocation4 + $0x860] sm:$0xff]
    %v5044 = vld [vmem:[#allocation4 + $0x868] sm:$0xff]
    %v5045 = vld [vmem:[#allocation4 + $0x870] sm:$0xff]
    %v5046 = vld [vmem:[#allocation4 + $0x878] sm:$0xff]
    %v5047 = vld [vmem:[#allocation4 + $0x880] sm:$0xff]
    %v5048 = vld [vmem:[#allocation4 + $0x888] sm:$0xff]
    %v5049 = vld [vmem:[#allocation4 + $0x890] sm:$0xff]
    %v5050 = vld [vmem:[#allocation4 + $0x898] sm:$0xff]
    %v5051 = vld [vmem:[#allocation4 + $0x8a0] sm:$0xff]
    %v5052 = vld [vmem:[#allocation4 + $0x8a8] sm:$0xff]
    %v5053 = vld [vmem:[#allocation4 + $0x8b0] sm:$0xff]
    %v5054 = vld [vmem:[#allocation4 + $0x8b8] sm:$0xff]
    %v5055 = vld [vmem:[#allocation4 + $0x8c0] sm:$0xff]
    %v5056 = vld [vmem:[#allocation4 + $0x8c8] sm:$0xff]
    %v5057 = vld [vmem:[#allocation4 + $0x8d0] sm:$0xff]
    %v5058 = vld [vmem:[#allocation4 + $0x8d8] sm:$0xff]
    %v5059 = vld [vmem:[#allocation4 + $0x8e0] sm:$0xff]
    %v5060 = vld [vmem:[#allocation4 + $0x8e8] sm:$0xff]
    %v5061 = vld [vmem:[#allocation4 + $0x8f0] sm:$0xff]
    %v5062 = vld [vmem:[#allocation4 + $0x8f8] sm:$0xff]
    %v5063 = vld [vmem:[#allocation4 + $0x900] sm:$0xff]
    %v5064 = vld [vmem:[#allocation4 + $0x908] sm:$0xff]
    %v5065 = vld [vmem:[#allocation4 + $0x910] sm:$0xff]
    %v5066 = vld [vmem:[#allocation4 + $0x918] sm:$0xff]
    %v5067 = vld [vmem:[#allocation4 + $0x920] sm:$0xff]
    %v5068 = vld [vmem:[#allocation4 + $0x928] sm:$0xff]
    %v5069 = vld [vmem:[#allocation4 + $0x930] sm:$0xff]
    %v5070 = vld [vmem:[#allocation4 + $0x938] sm:$0xff]
    %v5071 = vld [vmem:[#allocation4 + $0x940] sm:$0xff]
    %v5072 = vld [vmem:[#allocation4 + $0x948] sm:$0xff]
    %v5073 = vld [vmem:[#allocation4 + $0x950] sm:$0xff]
    %v5074 = vld [vmem:[#allocation4 + $0x958] sm:$0xff]
    %v5075 = vld [vmem:[#allocation4 + $0x960] sm:$0xff]
    %v5076 = vld [vmem:[#allocation4 + $0x968] sm:$0xff]
    %v5077 = vld [vmem:[#allocation4 + $0x970] sm:$0xff]
    %v5078 = vld [vmem:[#allocation4 + $0x978] sm:$0xff]
    %v5079 = vld [vmem:[#allocation4 + $0x980] sm:$0xff]
    %v5080 = vld [vmem:[#allocation4 + $0x988] sm:$0xff]
    %v5081 = vld [vmem:[#allocation4 + $0x990] sm:$0xff]
    %v5082 = vld [vmem:[#allocation4 + $0x998] sm:$0xff]
    %v5083 = vld [vmem:[#allocation4 + $0x9a0] sm:$0xff]
    %v5084 = vld [vmem:[#allocation4 + $0x9a8] sm:$0xff]
    %v5085 = vld [vmem:[#allocation4 + $0x9b0] sm:$0xff]
    %v5086 = vld [vmem:[#allocation4 + $0x9b8] sm:$0xff]
    %v5087 = vld [vmem:[#allocation4 + $0x9c0] sm:$0xff]
    %v5088 = vld [vmem:[#allocation4 + $0x9c8] sm:$0xff]
    %v5089 = vld [vmem:[#allocation4 + $0x9d0] sm:$0xff]
    %v5090 = vld [vmem:[#allocation4 + $0x9d8] sm:$0xff]
    %v5091 = vld [vmem:[#allocation4 + $0x9e0] sm:$0xff]
    %v5092 = vld [vmem:[#allocation4 + $0x9e8] sm:$0xff]
    %v5093 = vld [vmem:[#allocation4 + $0x9f0] sm:$0xff]
    %v5094 = vld [vmem:[#allocation4 + $0x9f8] sm:$0xff]
    %v5095 = vld [vmem:[#allocation4 + $0xa00] sm:$0xff]
    %v5096 = vld [vmem:[#allocation4 + $0xa08] sm:$0xff]
    %v5097 = vld [vmem:[#allocation4 + $0xa10] sm:$0xff]
    %v5098 = vld [vmem:[#allocation4 + $0xa18] sm:$0xff]
    %v5099 = vld [vmem:[#allocation4 + $0xa20] sm:$0xff]
    %v5100 = vld [vmem:[#allocation4 + $0xa28] sm:$0xff]
    %v5101 = vld [vmem:[#allocation4 + $0xa30] sm:$0xff]
    %v5102 = vld [vmem:[#allocation4 + $0xa38] sm:$0xff]
    %v5103 = vld [vmem:[#allocation4 + $0xa40] sm:$0xff]
    %v5104 = vld [vmem:[#allocation4 + $0xa48] sm:$0xff]
    %v5105 = vld [vmem:[#allocation4 + $0xa50] sm:$0xff]
    %v5106 = vld [vmem:[#allocation4 + $0xa58] sm:$0xff]
    %v5107 = vld [vmem:[#allocation4 + $0xa60] sm:$0xff]
    %v5108 = vld [vmem:[#allocation4 + $0xa68] sm:$0xff]
    %v5109 = vld [vmem:[#allocation4 + $0xa70] sm:$0xff]
    %v5110 = vld [vmem:[#allocation4 + $0xa78] sm:$0xff]
    %v5111 = vld [vmem:[#allocation4 + $0xa80] sm:$0xff]
    %v5112 = vld [vmem:[#allocation4 + $0xa88] sm:$0xff]
    %v5113 = vld [vmem:[#allocation4 + $0xa90] sm:$0xff]
    %v5114 = vld [vmem:[#allocation4 + $0xa98] sm:$0xff]
    %v5115 = vld [vmem:[#allocation4 + $0xaa0] sm:$0xff]
    %v5116 = vld [vmem:[#allocation4 + $0xaa8] sm:$0xff]
    %v5117 = vld [vmem:[#allocation4 + $0xab0] sm:$0xff]
    %v5118 = vld [vmem:[#allocation4 + $0xab8] sm:$0xff]
    %v5119 = vld [vmem:[#allocation4 + $0xac0] sm:$0xff]
    %v5120 = vld [vmem:[#allocation4 + $0xac8] sm:$0xff]
    %v5121 = vld [vmem:[#allocation4 + $0xad0] sm:$0xff]
    %v5122 = vld [vmem:[#allocation4 + $0xad8] sm:$0xff]
    %v5123 = vld [vmem:[#allocation4 + $0xae0] sm:$0xff]
    %v5124 = vld [vmem:[#allocation4 + $0xae8] sm:$0xff]
    %v5125 = vld [vmem:[#allocation4 + $0xaf0] sm:$0xff]
    %v5126 = vld [vmem:[#allocation4 + $0xaf8] sm:$0xff]
    %v5127 = vld [vmem:[#allocation4 + $0xb00] sm:$0xff]
    %v5128 = vld [vmem:[#allocation4 + $0xb08] sm:$0xff]
    %v5129 = vld [vmem:[#allocation4 + $0xb10] sm:$0xff]
    %v5130 = vld [vmem:[#allocation4 + $0xb18] sm:$0xff]
    %v5131 = vld [vmem:[#allocation4 + $0xb20] sm:$0xff]
    %v5132 = vld [vmem:[#allocation4 + $0xb28] sm:$0xff]
    %v5133 = vld [vmem:[#allocation4 + $0xb30] sm:$0xff]
    %v5134 = vld [vmem:[#allocation4 + $0xb38] sm:$0xff]
    %v5135 = vld [vmem:[#allocation4 + $0xb40] sm:$0xff]
    %v5136 = vld [vmem:[#allocation4 + $0xb48] sm:$0xff]
    %v5137 = vld [vmem:[#allocation4 + $0xb50] sm:$0xff]
    %v5138 = vld [vmem:[#allocation4 + $0xb58] sm:$0xff]
    %v5139 = vld [vmem:[#allocation4 + $0xb60] sm:$0xff]
    %v5140 = vld [vmem:[#allocation4 + $0xb68] sm:$0xff]
    %v5141 = vld [vmem:[#allocation4 + $0xb70] sm:$0xff]
    %v5142 = vld [vmem:[#allocation4 + $0xb78] sm:$0xff]
    %v5143 = vld [vmem:[#allocation4 + $0xb80] sm:$0xff]
    %v5144 = vld [vmem:[#allocation4 + $0xb88] sm:$0xff]
    %v5145 = vld [vmem:[#allocation4 + $0xb90] sm:$0xff]
    %v5146 = vld [vmem:[#allocation4 + $0xb98] sm:$0xff]
    %v5147 = vld [vmem:[#allocation4 + $0xba0] sm:$0xff]
    %v5148 = vld [vmem:[#allocation4 + $0xba8] sm:$0xff]
    %v5149 = vld [vmem:[#allocation4 + $0xbb0] sm:$0xff]
    %v5150 = vld [vmem:[#allocation4 + $0xbb8] sm:$0xff]
    %v5151 = vld [vmem:[#allocation4 + $0xbc0] sm:$0xff]
    %v5152 = vld [vmem:[#allocation4 + $0xbc8] sm:$0xff]
    %v5153 = vld [vmem:[#allocation4 + $0xbd0] sm:$0xff]
    %v5154 = vld [vmem:[#allocation4 + $0xbd8] sm:$0xff]
    %v5155 = vld [vmem:[#allocation4 + $0xbe0] sm:$0xff]
    %v5156 = vld [vmem:[#allocation4 + $0xbe8] sm:$0xff]
    %v5157 = vld [vmem:[#allocation4 + $0xbf0] sm:$0xff]
    %v5158 = vld [vmem:[#allocation4 + $0xbf8] sm:$0xff]
    %v5159 = vld [vmem:[#allocation4 + $0xc00] sm:$0xff]
    %v5160 = vld [vmem:[#allocation4 + $0xc08] sm:$0xff]
    %v5161 = vld [vmem:[#allocation4 + $0xc10] sm:$0xff]
    %v5162 = vld [vmem:[#allocation4 + $0xc18] sm:$0xff]
    %v5163 = vld [vmem:[#allocation4 + $0xc20] sm:$0xff]
    %v5164 = vld [vmem:[#allocation4 + $0xc28] sm:$0xff]
    %v5165 = vld [vmem:[#allocation4 + $0xc30] sm:$0xff]
    %v5166 = vld [vmem:[#allocation4 + $0xc38] sm:$0xff]
    %v5167 = vld [vmem:[#allocation4 + $0xc40] sm:$0xff]
    %v5168 = vld [vmem:[#allocation4 + $0xc48] sm:$0xff]
    %v5169 = vld [vmem:[#allocation4 + $0xc50] sm:$0xff]
    %v5170 = vld [vmem:[#allocation4 + $0xc58] sm:$0xff]
    %v5171 = vld [vmem:[#allocation4 + $0xc60] sm:$0xff]
    %v5172 = vld [vmem:[#allocation4 + $0xc68] sm:$0xff]
    %v5173 = vld [vmem:[#allocation4 + $0xc70] sm:$0xff]
    %v5174 = vld [vmem:[#allocation4 + $0xc78] sm:$0xff]
    %v5175 = vld [vmem:[#allocation4 + $0xc80] sm:$0xff]
    %v5176 = vld [vmem:[#allocation4 + $0xc88] sm:$0xff]
    %v5177 = vld [vmem:[#allocation4 + $0xc90] sm:$0xff]
    %v5178 = vld [vmem:[#allocation4 + $0xc98] sm:$0xff]
    %v5179 = vld [vmem:[#allocation4 + $0xca0] sm:$0xff]
    %v5180 = vld [vmem:[#allocation4 + $0xca8] sm:$0xff]
    %v5181 = vld [vmem:[#allocation4 + $0xcb0] sm:$0xff]
    %v5182 = vld [vmem:[#allocation4 + $0xcb8] sm:$0xff]
    %v5183 = vld [vmem:[#allocation4 + $0xcc0] sm:$0xff]
    %v5184 = vld [vmem:[#allocation4 + $0xcc8] sm:$0xff]
    %v5185 = vld [vmem:[#allocation4 + $0xcd0] sm:$0xff]
    %v5186 = vld [vmem:[#allocation4 + $0xcd8] sm:$0xff]
    %v5187 = vld [vmem:[#allocation4 + $0xce0] sm:$0xff]
    %v5188 = vld [vmem:[#allocation4 + $0xce8] sm:$0xff]
    %v5189 = vld [vmem:[#allocation4 + $0xcf0] sm:$0xff]
    %v5190 = vld [vmem:[#allocation4 + $0xcf8] sm:$0xff]
    %v5191 = vld [vmem:[#allocation4 + $0xd00] sm:$0xff]
    %v5192 = vld [vmem:[#allocation4 + $0xd08] sm:$0xff]
    %v5193 = vld [vmem:[#allocation4 + $0xd10] sm:$0xff]
    %v5194 = vld [vmem:[#allocation4 + $0xd18] sm:$0xff]
    %v5195 = vld [vmem:[#allocation4 + $0xd20] sm:$0xff]
    %v5196 = vld [vmem:[#allocation4 + $0xd28] sm:$0xff]
    %v5197 = vld [vmem:[#allocation4 + $0xd30] sm:$0xff]
    %v5198 = vld [vmem:[#allocation4 + $0xd38] sm:$0xff]
    %v5199 = vld [vmem:[#allocation4 + $0xd40] sm:$0xff]
    %v5200 = vld [vmem:[#allocation4 + $0xd48] sm:$0xff]
    %v5201 = vld [vmem:[#allocation4 + $0xd50] sm:$0xff]
    %v5202 = vld [vmem:[#allocation4 + $0xd58] sm:$0xff]
    %v5203 = vld [vmem:[#allocation4 + $0xd60] sm:$0xff]
    %v5204 = vld [vmem:[#allocation4 + $0xd68] sm:$0xff]
    %v5205 = vld [vmem:[#allocation4 + $0xd70] sm:$0xff]
    %v5206 = vld [vmem:[#allocation4 + $0xd78] sm:$0xff]
    %v5207 = vld [vmem:[#allocation4 + $0xd80] sm:$0xff]
    %v5208 = vld [vmem:[#allocation4 + $0xd88] sm:$0xff]
    %v5209 = vld [vmem:[#allocation4 + $0xd90] sm:$0xff]
    %v5210 = vld [vmem:[#allocation4 + $0xd98] sm:$0xff]
    %v5211 = vld [vmem:[#allocation4 + $0xda0] sm:$0xff]
    %v5212 = vld [vmem:[#allocation4 + $0xda8] sm:$0xff]
    %v5213 = vld [vmem:[#allocation4 + $0xdb0] sm:$0xff]
    %v5214 = vld [vmem:[#allocation4 + $0xdb8] sm:$0xff]
    %v5215 = vld [vmem:[#allocation4 + $0xdc0] sm:$0xff]
    %v5216 = vld [vmem:[#allocation4 + $0xdc8] sm:$0xff]
    %v5217 = vld [vmem:[#allocation4 + $0xdd0] sm:$0xff]
    %v5218 = vld [vmem:[#allocation4 + $0xdd8] sm:$0xff]
    %v5219 = vld [vmem:[#allocation4 + $0xde0] sm:$0xff]
    %v5220 = vld [vmem:[#allocation4 + $0xde8] sm:$0xff]
    %v5221 = vld [vmem:[#allocation4 + $0xdf0] sm:$0xff]
    %v5222 = vld [vmem:[#allocation4 + $0xdf8] sm:$0xff]
    %v5223 = vld [vmem:[#allocation4 + $0xe00] sm:$0xff]
    %v5224 = vld [vmem:[#allocation4 + $0xe08] sm:$0xff]
    %v5225 = vld [vmem:[#allocation4 + $0xe10] sm:$0xff]
    %v5226 = vld [vmem:[#allocation4 + $0xe18] sm:$0xff]
    %v5227 = vld [vmem:[#allocation4 + $0xe20] sm:$0xff]
    %v5228 = vld [vmem:[#allocation4 + $0xe28] sm:$0xff]
    %v5229 = vld [vmem:[#allocation4 + $0xe30] sm:$0xff]
    %v5230 = vld [vmem:[#allocation4 + $0xe38] sm:$0xff]
    %v5231 = vld [vmem:[#allocation4 + $0xe40] sm:$0xff]
    %v5232 = vld [vmem:[#allocation4 + $0xe48] sm:$0xff]
    %v5233 = vld [vmem:[#allocation4 + $0xe50] sm:$0xff]
    %v5234 = vld [vmem:[#allocation4 + $0xe58] sm:$0xff]
    %v5235 = vld [vmem:[#allocation4 + $0xe60] sm:$0xff]
    %v5236 = vld [vmem:[#allocation4 + $0xe68] sm:$0xff]
    %v5237 = vld [vmem:[#allocation4 + $0xe70] sm:$0xff]
    %v5238 = vld [vmem:[#allocation4 + $0xe78] sm:$0xff]
    %v5239 = vld [vmem:[#allocation4 + $0xe80] sm:$0xff]
    %v5240 = vld [vmem:[#allocation4 + $0xe88] sm:$0xff]
    %v5241 = vld [vmem:[#allocation4 + $0xe90] sm:$0xff]
    %v5242 = vld [vmem:[#allocation4 + $0xe98] sm:$0xff]
    %v5243 = vld [vmem:[#allocation4 + $0xea0] sm:$0xff]
    %v5244 = vld [vmem:[#allocation4 + $0xea8] sm:$0xff]
    %v5245 = vld [vmem:[#allocation4 + $0xeb0] sm:$0xff]
    %v5246 = vld [vmem:[#allocation4 + $0xeb8] sm:$0xff]
    %v5247 = vld [vmem:[#allocation4 + $0xec0] sm:$0xff]
    %v5248 = vld [vmem:[#allocation4 + $0xec8] sm:$0xff]
    %v5249 = vld [vmem:[#allocation4 + $0xed0] sm:$0xff]
    %v5250 = vld [vmem:[#allocation4 + $0xed8] sm:$0xff]
    %v5251 = vld [vmem:[#allocation4 + $0xee0] sm:$0xff]
    %v5252 = vld [vmem:[#allocation4 + $0xee8] sm:$0xff]
    %v5253 = vld [vmem:[#allocation4 + $0xef0] sm:$0xff]
    %v5254 = vld [vmem:[#allocation4 + $0xef8] sm:$0xff]
    %v5255 = vld [vmem:[#allocation4 + $0xf00] sm:$0xff]
    %v5256 = vld [vmem:[#allocation4 + $0xf08] sm:$0xff]
    %v5257 = vld [vmem:[#allocation4 + $0xf10] sm:$0xff]
    %v5258 = vld [vmem:[#allocation4 + $0xf18] sm:$0xff]
    %v5259 = vld [vmem:[#allocation4 + $0xf20] sm:$0xff]
    %v5260 = vld [vmem:[#allocation4 + $0xf28] sm:$0xff]
    %v5261 = vld [vmem:[#allocation4 + $0xf30] sm:$0xff]
    %v5262 = vld [vmem:[#allocation4 + $0xf38] sm:$0xff]
    %v5263 = vld [vmem:[#allocation4 + $0xf40] sm:$0xff]
    %v5264 = vld [vmem:[#allocation4 + $0xf48] sm:$0xff]
    %v5265 = vld [vmem:[#allocation4 + $0xf50] sm:$0xff]
    %v5266 = vld [vmem:[#allocation4 + $0xf58] sm:$0xff]
    %v5267 = vld [vmem:[#allocation4 + $0xf60] sm:$0xff]
    %v5268 = vld [vmem:[#allocation4 + $0xf68] sm:$0xff]
    %v5269 = vld [vmem:[#allocation4 + $0xf70] sm:$0xff]
    %v5270 = vld [vmem:[#allocation4 + $0xf78] sm:$0xff]
    %v5271 = vld [vmem:[#allocation4 + $0xf80] sm:$0xff]
    %v5272 = vld [vmem:[#allocation4 + $0xf88] sm:$0xff]
    %v5273 = vld [vmem:[#allocation4 + $0xf90] sm:$0xff]
    %v5274 = vld [vmem:[#allocation4 + $0xf98] sm:$0xff]
    %v5275 = vld [vmem:[#allocation4 + $0xfa0] sm:$0xff]
    %v5276 = vld [vmem:[#allocation4 + $0xfa8] sm:$0xff]
    %v5277 = vld [vmem:[#allocation4 + $0xfb0] sm:$0xff]
    %v5278 = vld [vmem:[#allocation4 + $0xfb8] sm:$0xff]
    %v5279 = vld [vmem:[#allocation4 + $0xfc0] sm:$0xff]
    %v5280 = vld [vmem:[#allocation4 + $0xfc8] sm:$0xff]
    %v5281 = vld [vmem:[#allocation4 + $0xfd0] sm:$0xff]
    %v5282 = vld [vmem:[#allocation4 + $0xfd8] sm:$0xff]
    %v5283 = vld [vmem:[#allocation4 + $0xfe0] sm:$0xff]
    %v5284 = vld [vmem:[#allocation4 + $0xfe8] sm:$0xff]
    %v5285 = vld [vmem:[#allocation4 + $0xff0] sm:$0xff]
    %v5286 = vld [vmem:[#allocation4 + $0xff8] sm:$0xff]
    %v5287 = vld [vmem:[#allocation4 + $0x1000] sm:$0xff]
    %v5288 = vld [vmem:[#allocation4 + $0x1008] sm:$0xff]
    %v5289 = vld [vmem:[#allocation4 + $0x1010] sm:$0xff]
    %v5290 = vld [vmem:[#allocation4 + $0x1018] sm:$0xff]
    %v5291 = vld [vmem:[#allocation4 + $0x1020] sm:$0xff]
    %v5292 = vld [vmem:[#allocation4 + $0x1028] sm:$0xff]
    %v5293 = vld [vmem:[#allocation4 + $0x1030] sm:$0xff]
    %v5294 = vld [vmem:[#allocation4 + $0x1038] sm:$0xff]
    %v5295 = vld [vmem:[#allocation4 + $0x1040] sm:$0xff]
    %v5296 = vld [vmem:[#allocation4 + $0x1048] sm:$0xff]
    %v5297 = vld [vmem:[#allocation4 + $0x1050] sm:$0xff]
    %v5298 = vld [vmem:[#allocation4 + $0x1058] sm:$0xff]
    %v5299 = vld [vmem:[#allocation4 + $0x1060] sm:$0xff]
    %v5300 = vld [vmem:[#allocation4 + $0x1068] sm:$0xff]
    %v5301 = vld [vmem:[#allocation4 + $0x1070] sm:$0xff]
    %v5302 = vld [vmem:[#allocation4 + $0x1078] sm:$0xff]
    %v5303 = vld [vmem:[#allocation4 + $0x1080] sm:$0xff]
    %v5304 = vld [vmem:[#allocation4 + $0x1088] sm:$0xff]
    %v5305 = vld [vmem:[#allocation4 + $0x1090] sm:$0xff]
    %v5306 = vld [vmem:[#allocation4 + $0x1098] sm:$0xff]
    %v5307 = vld [vmem:[#allocation4 + $0x10a0] sm:$0xff]
    %v5308 = vld [vmem:[#allocation4 + $0x10a8] sm:$0xff]
    %v5309 = vld [vmem:[#allocation4 + $0x10b0] sm:$0xff]
    %v5310 = vld [vmem:[#allocation4 + $0x10b8] sm:$0xff]
    %v5311 = vld [vmem:[#allocation4 + $0x10c0] sm:$0xff]
    %v5312 = vld [vmem:[#allocation4 + $0x10c8] sm:$0xff]
    %v5313 = vld [vmem:[#allocation4 + $0x10d0] sm:$0xff]
    %v5314 = vld [vmem:[#allocation4 + $0x10d8] sm:$0xff]
    %v5315 = vld [vmem:[#allocation4 + $0x10e0] sm:$0xff]
    %v5316 = vld [vmem:[#allocation4 + $0x10e8] sm:$0xff]
    %v5317 = vld [vmem:[#allocation4 + $0x10f0] sm:$0xff]
    %v5318 = vld [vmem:[#allocation4 + $0x10f8] sm:$0xff]
    %v5319 = vld [vmem:[#allocation4 + $0x1100] sm:$0xff]
    %v5320 = vld [vmem:[#allocation4 + $0x1108] sm:$0xff]
    %v5321 = vld [vmem:[#allocation4 + $0x1110] sm:$0xff]
    %v5322 = vld [vmem:[#allocation4 + $0x1118] sm:$0xff]
    %v5323 = vld [vmem:[#allocation4 + $0x1120] sm:$0xff]
    %v5324 = vld [vmem:[#allocation4 + $0x1128] sm:$0xff]
    %v5325 = vld [vmem:[#allocation4 + $0x1130] sm:$0xff]
    %v5326 = vld [vmem:[#allocation4 + $0x1138] sm:$0xff]
    %v5327 = vld [vmem:[#allocation4 + $0x1140] sm:$0xff]
    %v5328 = vld [vmem:[#allocation4 + $0x1148] sm:$0xff]
    %v5329 = vld [vmem:[#allocation4 + $0x1150] sm:$0xff]
    %v5330 = vld [vmem:[#allocation4 + $0x1158] sm:$0xff]
    %v5331 = vld [vmem:[#allocation4 + $0x1160] sm:$0xff]
    %v5332 = vld [vmem:[#allocation4 + $0x1168] sm:$0xff]
    %v5333 = vld [vmem:[#allocation4 + $0x1170] sm:$0xff]
    %v5334 = vld [vmem:[#allocation4 + $0x1178] sm:$0xff]
    %v5335 = vld [vmem:[#allocation4 + $0x1180] sm:$0xff]
    %v5336 = vld [vmem:[#allocation4 + $0x1188] sm:$0xff]
    %v5337 = vld [vmem:[#allocation4 + $0x1190] sm:$0xff]
    %v5338 = vld [vmem:[#allocation4 + $0x1198] sm:$0xff]
    %v5339 = vld [vmem:[#allocation4 + $0x11a0] sm:$0xff]
    %v5340 = vld [vmem:[#allocation4 + $0x11a8] sm:$0xff]
    %v5341 = vld [vmem:[#allocation4 + $0x11b0] sm:$0xff]
    %v5342 = vld [vmem:[#allocation4 + $0x11b8] sm:$0xff]
    %v5343 = vld [vmem:[#allocation4 + $0x11c0] sm:$0xff]
    %v5344 = vld [vmem:[#allocation4 + $0x11c8] sm:$0xff]
    %v5345 = vld [vmem:[#allocation4 + $0x11d0] sm:$0xff]
    %v5346 = vld [vmem:[#allocation4 + $0x11d8] sm:$0xff]
    %v5347 = vld [vmem:[#allocation4 + $0x11e0] sm:$0xff]
    %v5348 = vld [vmem:[#allocation4 + $0x11e8] sm:$0xff]
    %v5349 = vld [vmem:[#allocation4 + $0x11f0] sm:$0xff]
    %v5350 = vld [vmem:[#allocation4 + $0x11f8] sm:$0xff]
    %v5351 = vld [vmem:[#allocation4 + $0x1200] sm:$0xff]
    %v5352 = vld [vmem:[#allocation4 + $0x1208] sm:$0xff]
    %v5353 = vld [vmem:[#allocation4 + $0x1210] sm:$0xff]
    %v5354 = vld [vmem:[#allocation4 + $0x1218] sm:$0xff]
    %v5355 = vld [vmem:[#allocation4 + $0x1220] sm:$0xff]
    %v5356 = vld [vmem:[#allocation4 + $0x1228] sm:$0xff]
    %v5357 = vld [vmem:[#allocation4 + $0x1230] sm:$0xff]
    %v5358 = vld [vmem:[#allocation4 + $0x1238] sm:$0xff]
    %v5359 = vld [vmem:[#allocation4 + $0x1240] sm:$0xff]
    %v5360 = vld [vmem:[#allocation4 + $0x1248] sm:$0xff]
    %v5361 = vld [vmem:[#allocation4 + $0x1250] sm:$0xff]
    %v5362 = vld [vmem:[#allocation4 + $0x1258] sm:$0xff]
    %v5363 = vld [vmem:[#allocation4 + $0x1260] sm:$0xff]
    %v5364 = vld [vmem:[#allocation4 + $0x1268] sm:$0xff]
    %v5365 = vld [vmem:[#allocation4 + $0x1270] sm:$0xff]
    %v5366 = vld [vmem:[#allocation4 + $0x1278] sm:$0xff]
    %v5367 = vld [vmem:[#allocation4 + $0x1280] sm:$0xff]
    %v5368 = vld [vmem:[#allocation4 + $0x1288] sm:$0xff]
    %v5369 = vld [vmem:[#allocation4 + $0x1290] sm:$0xff]
    %v5370 = vld [vmem:[#allocation4 + $0x1298] sm:$0xff]
    %v5371 = vld [vmem:[#allocation4 + $0x12a0] sm:$0xff]
    %v5372 = vld [vmem:[#allocation4 + $0x12a8] sm:$0xff]
    %v5373 = vld [vmem:[#allocation4 + $0x12b0] sm:$0xff]
    %v5374 = vld [vmem:[#allocation4 + $0x12b8] sm:$0xff]
    %v5375 = vld [vmem:[#allocation4 + $0x12c0] sm:$0xff]
    %v5376 = vld [vmem:[#allocation4 + $0x12c8] sm:$0xff]
    %v5377 = vld [vmem:[#allocation4 + $0x12d0] sm:$0xff]
    %v5378 = vld [vmem:[#allocation4 + $0x12d8] sm:$0xff]
    %v5379 = vld [vmem:[#allocation4 + $0x12e0] sm:$0xff]
    %v5380 = vld [vmem:[#allocation4 + $0x12e8] sm:$0xff]
    %v5381 = vld [vmem:[#allocation4 + $0x12f0] sm:$0xff]
    %v5382 = vld [vmem:[#allocation4 + $0x12f8] sm:$0xff]
    %v5383 = vld [vmem:[#allocation4 + $0x1300] sm:$0xff]
    %v5384 = vld [vmem:[#allocation4 + $0x1308] sm:$0xff]
    %v5385 = vld [vmem:[#allocation4 + $0x1310] sm:$0xff]
    %v5386 = vld [vmem:[#allocation4 + $0x1318] sm:$0xff]
    %v5387 = vld [vmem:[#allocation4 + $0x1320] sm:$0xff]
    %v5388 = vld [vmem:[#allocation4 + $0x1328] sm:$0xff]
    %v5389 = vld [vmem:[#allocation4 + $0x1330] sm:$0xff]
    %v5390 = vld [vmem:[#allocation4 + $0x1338] sm:$0xff]
    %v5391 = vld [vmem:[#allocation4 + $0x1340] sm:$0xff]
    %v5392 = vld [vmem:[#allocation4 + $0x1348] sm:$0xff]
    %v5393 = vld [vmem:[#allocation4 + $0x1350] sm:$0xff]
    %v5394 = vld [vmem:[#allocation4 + $0x1358] sm:$0xff]
    %v5395 = vld [vmem:[#allocation4 + $0x1360] sm:$0xff]
    %v5396 = vld [vmem:[#allocation4 + $0x1368] sm:$0xff]
    %v5397 = vld [vmem:[#allocation4 + $0x1370] sm:$0xff]
    %v5398 = vld [vmem:[#allocation4 + $0x1378] sm:$0xff]
    %v5399 = vld [vmem:[#allocation4 + $0x1380] sm:$0xff]
    %v5400 = vld [vmem:[#allocation4 + $0x1388] sm:$0xff]
    %v5401 = vld [vmem:[#allocation4 + $0x1390] sm:$0xff]
    %v5402 = vld [vmem:[#allocation4 + $0x1398] sm:$0xff]
    %v5403 = vld [vmem:[#allocation4 + $0x13a0] sm:$0xff]
    %v5404 = vld [vmem:[#allocation4 + $0x13a8] sm:$0xff]
    %v5405 = vld [vmem:[#allocation4 + $0x13b0] sm:$0xff]
    %v5406 = vld [vmem:[#allocation4 + $0x13b8] sm:$0xff]
    %v5407 = vld [vmem:[#allocation4 + $0x13c0] sm:$0xff]
    %v5408 = vld [vmem:[#allocation4 + $0x13c8] sm:$0xff]
    %v5409 = vld [vmem:[#allocation4 + $0x13d0] sm:$0xff]
    %v5410 = vld [vmem:[#allocation4 + $0x13d8] sm:$0xff]
    %v5411 = vld [vmem:[#allocation4 + $0x13e0] sm:$0xff]
    %v5412 = vld [vmem:[#allocation4 + $0x13e8] sm:$0xff]
    %v5413 = vld [vmem:[#allocation4 + $0x13f0] sm:$0xff]
    %v5414 = vld [vmem:[#allocation4 + $0x13f8] sm:$0xff]
    %v5415 = vld [vmem:[#allocation4 + $0x1400] sm:$0xff]
    %v5416 = vld [vmem:[#allocation4 + $0x1408] sm:$0xff]
    %v5417 = vld [vmem:[#allocation4 + $0x1410] sm:$0xff]
    %v5418 = vld [vmem:[#allocation4 + $0x1418] sm:$0xff]
    %v5419 = vld [vmem:[#allocation4 + $0x1420] sm:$0xff]
    %v5420 = vld [vmem:[#allocation4 + $0x1428] sm:$0xff]
    %v5421 = vld [vmem:[#allocation4 + $0x1430] sm:$0xff]
    %v5422 = vld [vmem:[#allocation4 + $0x1438] sm:$0xff]
    %v5423 = vld [vmem:[#allocation4 + $0x1440] sm:$0xff]
    %v5424 = vld [vmem:[#allocation4 + $0x1448] sm:$0xff]
    %v5425 = vld [vmem:[#allocation4 + $0x1450] sm:$0xff]
    %v5426 = vld [vmem:[#allocation4 + $0x1458] sm:$0xff]
    %v5427 = vld [vmem:[#allocation4 + $0x1460] sm:$0xff]
    %v5428 = vld [vmem:[#allocation4 + $0x1468] sm:$0xff]
    %v5429 = vld [vmem:[#allocation4 + $0x1470] sm:$0xff]
    %v5430 = vld [vmem:[#allocation4 + $0x1478] sm:$0xff]
    %v5431 = vld [vmem:[#allocation4 + $0x1480] sm:$0xff]
    %v5432 = vld [vmem:[#allocation4 + $0x1488] sm:$0xff]
    %v5433 = vld [vmem:[#allocation4 + $0x1490] sm:$0xff]
    %v5434 = vld [vmem:[#allocation4 + $0x1498] sm:$0xff]
    %v5435 = vld [vmem:[#allocation4 + $0x14a0] sm:$0xff]
    %v5436 = vld [vmem:[#allocation4 + $0x14a8] sm:$0xff]
    %v5437 = vld [vmem:[#allocation4 + $0x14b0] sm:$0xff]
    %v5438 = vld [vmem:[#allocation4 + $0x14b8] sm:$0xff]
    %v5439 = vld [vmem:[#allocation4 + $0x14c0] sm:$0xff]
    %v5440 = vld [vmem:[#allocation4 + $0x14c8] sm:$0xff]
    %v5441 = vld [vmem:[#allocation4 + $0x14d0] sm:$0xff]
    %v5442 = vld [vmem:[#allocation4 + $0x14d8] sm:$0xff]
    %v5443 = vld [vmem:[#allocation4 + $0x14e0] sm:$0xff]
    %v5444 = vld [vmem:[#allocation4 + $0x14e8] sm:$0xff]
    %v5445 = vld [vmem:[#allocation4 + $0x14f0] sm:$0xff]
    %v5446 = vld [vmem:[#allocation4 + $0x14f8] sm:$0xff]
    %v5447 = vld [vmem:[#allocation4 + $0x1500] sm:$0xff]
    %v5448 = vld [vmem:[#allocation4 + $0x1508] sm:$0xff]
    %v5449 = vld [vmem:[#allocation4 + $0x1510] sm:$0xff]
    %v5450 = vld [vmem:[#allocation4 + $0x1518] sm:$0xff]
    %v5451 = vld [vmem:[#allocation4 + $0x1520] sm:$0xff]
    %v5452 = vld [vmem:[#allocation4 + $0x1528] sm:$0xff]
    %v5453 = vld [vmem:[#allocation4 + $0x1530] sm:$0xff]
    %v5454 = vld [vmem:[#allocation4 + $0x1538] sm:$0xff]
    %v5455 = vld [vmem:[#allocation4 + $0x1540] sm:$0xff]
    %v5456 = vld [vmem:[#allocation4 + $0x1548] sm:$0xff]
    %v5457 = vld [vmem:[#allocation4 + $0x1550] sm:$0xff]
    %v5458 = vld [vmem:[#allocation4 + $0x1558] sm:$0xff]
    %v5459 = vld [vmem:[#allocation4 + $0x1560] sm:$0xff]
    %v5460 = vld [vmem:[#allocation4 + $0x1568] sm:$0xff]
    %v5461 = vld [vmem:[#allocation4 + $0x1570] sm:$0xff]
    %v5462 = vld [vmem:[#allocation4 + $0x1578] sm:$0xff]
    %v5463 = vld [vmem:[#allocation4 + $0x1580] sm:$0xff]
    %v5464 = vld [vmem:[#allocation4 + $0x1588] sm:$0xff]
    %v5465 = vld [vmem:[#allocation4 + $0x1590] sm:$0xff]
    %v5466 = vld [vmem:[#allocation4 + $0x1598] sm:$0xff]
    %v5467 = vld [vmem:[#allocation4 + $0x15a0] sm:$0xff]
    %v5468 = vld [vmem:[#allocation4 + $0x15a8] sm:$0xff]
    %v5469 = vld [vmem:[#allocation4 + $0x15b0] sm:$0xff]
    %v5470 = vld [vmem:[#allocation4 + $0x15b8] sm:$0xff]
    %v5471 = vld [vmem:[#allocation4 + $0x15c0] sm:$0xff]
    %v5472 = vld [vmem:[#allocation4 + $0x15c8] sm:$0xff]
    %v5473 = vld [vmem:[#allocation4 + $0x15d0] sm:$0xff]
    %v5474 = vld [vmem:[#allocation4 + $0x15d8] sm:$0xff]
    %v5475 = vld [vmem:[#allocation4 + $0x15e0] sm:$0xff]
    %v5476 = vld [vmem:[#allocation4 + $0x15e8] sm:$0xff]
    %v5477 = vld [vmem:[#allocation4 + $0x15f0] sm:$0xff]
    %v5478 = vld [vmem:[#allocation4 + $0x15f8] sm:$0xff]
    %v5479 = vld [vmem:[#allocation4 + $0x1600] sm:$0xff]
    %v5480 = vld [vmem:[#allocation4 + $0x1608] sm:$0xff]
    %v5481 = vld [vmem:[#allocation4 + $0x1610] sm:$0xff]
    %v5482 = vld [vmem:[#allocation4 + $0x1618] sm:$0xff]
    %v5483 = vld [vmem:[#allocation4 + $0x1620] sm:$0xff]
    %v5484 = vld [vmem:[#allocation4 + $0x1628] sm:$0xff]
    %v5485 = vld [vmem:[#allocation4 + $0x1630] sm:$0xff]
    %v5486 = vld [vmem:[#allocation4 + $0x1638] sm:$0xff]
    %v5487 = vld [vmem:[#allocation4 + $0x1640] sm:$0xff]
    %v5488 = vld [vmem:[#allocation4 + $0x1648] sm:$0xff]
    %v5489 = vld [vmem:[#allocation4 + $0x1650] sm:$0xff]
    %v5490 = vld [vmem:[#allocation4 + $0x1658] sm:$0xff]
    %v5491 = vld [vmem:[#allocation4 + $0x1660] sm:$0xff]
    %v5492 = vld [vmem:[#allocation4 + $0x1668] sm:$0xff]
    %v5493 = vld [vmem:[#allocation4 + $0x1670] sm:$0xff]
    %v5494 = vld [vmem:[#allocation4 + $0x1678] sm:$0xff]
    %v5495 = vld [vmem:[#allocation4 + $0x1680] sm:$0xff]
    %v5496 = vld [vmem:[#allocation4 + $0x1688] sm:$0xff]
    %v5497 = vld [vmem:[#allocation4 + $0x1690] sm:$0xff]
    %v5498 = vld [vmem:[#allocation4 + $0x1698] sm:$0xff]
    %v5499 = vld [vmem:[#allocation4 + $0x16a0] sm:$0xff]
    %v5500 = vld [vmem:[#allocation4 + $0x16a8] sm:$0xff]
    %v5501 = vld [vmem:[#allocation4 + $0x16b0] sm:$0xff]
    %v5502 = vld [vmem:[#allocation4 + $0x16b8] sm:$0xff]
    %v5503 = vld [vmem:[#allocation4 + $0x16c0] sm:$0xff]
    %v5504 = vld [vmem:[#allocation4 + $0x16c8] sm:$0xff]
    %v5505 = vld [vmem:[#allocation4 + $0x16d0] sm:$0xff]
    %v5506 = vld [vmem:[#allocation4 + $0x16d8] sm:$0xff]
    %v5507 = vld [vmem:[#allocation4 + $0x16e0] sm:$0xff]
    %v5508 = vld [vmem:[#allocation4 + $0x16e8] sm:$0xff]
    %v5509 = vld [vmem:[#allocation4 + $0x16f0] sm:$0xff]
    %v5510 = vld [vmem:[#allocation4 + $0x16f8] sm:$0xff]
    %v5511 = vld [vmem:[#allocation4 + $0x1700] sm:$0xff]
    %v5512 = vld [vmem:[#allocation4 + $0x1708] sm:$0xff]
    %v5513 = vld [vmem:[#allocation4 + $0x1710] sm:$0xff]
    %v5514 = vld [vmem:[#allocation4 + $0x1718] sm:$0xff]
    %v5515 = vld [vmem:[#allocation4 + $0x1720] sm:$0xff]
    %v5516 = vld [vmem:[#allocation4 + $0x1728] sm:$0xff]
    %v5517 = vld [vmem:[#allocation4 + $0x1730] sm:$0xff]
    %v5518 = vld [vmem:[#allocation4 + $0x1738] sm:$0xff]
    %v5519 = vld [vmem:[#allocation4 + $0x1740] sm:$0xff]
    %v5520 = vld [vmem:[#allocation4 + $0x1748] sm:$0xff]
    %v5521 = vld [vmem:[#allocation4 + $0x1750] sm:$0xff]
    %v5522 = vld [vmem:[#allocation4 + $0x1758] sm:$0xff]
    %v5523 = vld [vmem:[#allocation4 + $0x1760] sm:$0xff]
    %v5524 = vld [vmem:[#allocation4 + $0x1768] sm:$0xff]
    %v5525 = vld [vmem:[#allocation4 + $0x1770] sm:$0xff]
    %v5526 = vld [vmem:[#allocation4 + $0x1778] sm:$0xff]
    %v5527 = vld [vmem:[#allocation4 + $0x1780] sm:$0xff]
    %v5528 = vld [vmem:[#allocation4 + $0x1788] sm:$0xff]
    %v5529 = vld [vmem:[#allocation4 + $0x1790] sm:$0xff]
    %v5530 = vld [vmem:[#allocation4 + $0x1798] sm:$0xff]
    %v5531 = vld [vmem:[#allocation4 + $0x17a0] sm:$0xff]
    %v5532 = vld [vmem:[#allocation4 + $0x17a8] sm:$0xff]
    %v5533 = vld [vmem:[#allocation4 + $0x17b0] sm:$0xff]
    %v5534 = vld [vmem:[#allocation4 + $0x17b8] sm:$0xff]
    %v5535 = vld [vmem:[#allocation4 + $0x17c0] sm:$0xff]
    %v5536 = vld [vmem:[#allocation4 + $0x17c8] sm:$0xff]
    %v5537 = vld [vmem:[#allocation4 + $0x17d0] sm:$0xff]
    %v5538 = vld [vmem:[#allocation4 + $0x17d8] sm:$0xff]
    %v5539 = vld [vmem:[#allocation4 + $0x17e0] sm:$0xff]
    %v5540 = vld [vmem:[#allocation4 + $0x17e8] sm:$0xff]
    %v5541 = vld [vmem:[#allocation4 + $0x17f0] sm:$0xff]
    %v5542 = vld [vmem:[#allocation4 + $0x17f8] sm:$0xff]
    %v5543 = vld [vmem:[#allocation4 + $0x1800] sm:$0xff]
    %v5544 = vld [vmem:[#allocation4 + $0x1808] sm:$0xff]
    %v5545 = vld [vmem:[#allocation4 + $0x1810] sm:$0xff]
    %v5546 = vld [vmem:[#allocation4 + $0x1818] sm:$0xff]
    %v5547 = vld [vmem:[#allocation4 + $0x1820] sm:$0xff]
    %v5548 = vld [vmem:[#allocation4 + $0x1828] sm:$0xff]
    %v5549 = vld [vmem:[#allocation4 + $0x1830] sm:$0xff]
    %v5550 = vld [vmem:[#allocation4 + $0x1838] sm:$0xff]
    %v5551 = vld [vmem:[#allocation4 + $0x1840] sm:$0xff]
    %v5552 = vld [vmem:[#allocation4 + $0x1848] sm:$0xff]
    %v5553 = vld [vmem:[#allocation4 + $0x1850] sm:$0xff]
    %v5554 = vld [vmem:[#allocation4 + $0x1858] sm:$0xff]
    %v5555 = vld [vmem:[#allocation4 + $0x1860] sm:$0xff]
    %v5556 = vld [vmem:[#allocation4 + $0x1868] sm:$0xff]
    %v5557 = vld [vmem:[#allocation4 + $0x1870] sm:$0xff]
    %v5558 = vld [vmem:[#allocation4 + $0x1878] sm:$0xff]
    %v5559 = vld [vmem:[#allocation4 + $0x1880] sm:$0xff]
    %v5560 = vld [vmem:[#allocation4 + $0x1888] sm:$0xff]
    %v5561 = vld [vmem:[#allocation4 + $0x1890] sm:$0xff]
    %v5562 = vld [vmem:[#allocation4 + $0x1898] sm:$0xff]
    %v5563 = vld [vmem:[#allocation4 + $0x18a0] sm:$0xff]
    %v5564 = vld [vmem:[#allocation4 + $0x18a8] sm:$0xff]
    %v5565 = vld [vmem:[#allocation4 + $0x18b0] sm:$0xff]
    %v5566 = vld [vmem:[#allocation4 + $0x18b8] sm:$0xff]
    %v5567 = vld [vmem:[#allocation4 + $0x18c0] sm:$0xff]
    %v5568 = vld [vmem:[#allocation4 + $0x18c8] sm:$0xff]
    %v5569 = vld [vmem:[#allocation4 + $0x18d0] sm:$0xff]
    %v5570 = vld [vmem:[#allocation4 + $0x18d8] sm:$0xff]
    %v5571 = vld [vmem:[#allocation4 + $0x18e0] sm:$0xff]
    %v5572 = vld [vmem:[#allocation4 + $0x18e8] sm:$0xff]
    %v5573 = vld [vmem:[#allocation4 + $0x18f0] sm:$0xff]
    %v5574 = vld [vmem:[#allocation4 + $0x18f8] sm:$0xff]
    %v5575 = vld [vmem:[#allocation4 + $0x1900] sm:$0xff]
    %v5576 = vld [vmem:[#allocation4 + $0x1908] sm:$0xff]
    %v5577 = vld [vmem:[#allocation4 + $0x1910] sm:$0xff]
    %v5578 = vld [vmem:[#allocation4 + $0x1918] sm:$0xff]
    %v5579 = vld [vmem:[#allocation4 + $0x1920] sm:$0xff]
    %v5580 = vld [vmem:[#allocation4 + $0x1928] sm:$0xff]
    %v5581 = vld [vmem:[#allocation4 + $0x1930] sm:$0xff]
    %v5582 = vld [vmem:[#allocation4 + $0x1938] sm:$0xff]
    %v5583 = vld [vmem:[#allocation4 + $0x1940] sm:$0xff]
    %v5584 = vld [vmem:[#allocation4 + $0x1948] sm:$0xff]
    %v5585 = vld [vmem:[#allocation4 + $0x1950] sm:$0xff]
    %v5586 = vld [vmem:[#allocation4 + $0x1958] sm:$0xff]
    %v5587 = vld [vmem:[#allocation4 + $0x1960] sm:$0xff]
    %v5588 = vld [vmem:[#allocation4 + $0x1968] sm:$0xff]
    %v5589 = vld [vmem:[#allocation4 + $0x1970] sm:$0xff]
    %v5590 = vld [vmem:[#allocation4 + $0x1978] sm:$0xff]
    %v5591 = vld [vmem:[#allocation4 + $0x1980] sm:$0xff]
    %v5592 = vld [vmem:[#allocation4 + $0x1988] sm:$0xff]
    %v5593 = vld [vmem:[#allocation4 + $0x1990] sm:$0xff]
    %v5594 = vld [vmem:[#allocation4 + $0x1998] sm:$0xff]
    %v5595 = vld [vmem:[#allocation4 + $0x19a0] sm:$0xff]
    %v5596 = vld [vmem:[#allocation4 + $0x19a8] sm:$0xff]
    %v5597 = vld [vmem:[#allocation4 + $0x19b0] sm:$0xff]
    %v5598 = vld [vmem:[#allocation4 + $0x19b8] sm:$0xff]
    %v5599 = vld [vmem:[#allocation4 + $0x19c0] sm:$0xff]
    %v5600 = vld [vmem:[#allocation4 + $0x19c8] sm:$0xff]
    %v5601 = vld [vmem:[#allocation4 + $0x19d0] sm:$0xff]
    %v5602 = vld [vmem:[#allocation4 + $0x19d8] sm:$0xff]
    %v5603 = vld [vmem:[#allocation4 + $0x19e0] sm:$0xff]
    %v5604 = vld [vmem:[#allocation4 + $0x19e8] sm:$0xff]
    %v5605 = vld [vmem:[#allocation4 + $0x19f0] sm:$0xff]
    %v5606 = vld [vmem:[#allocation4 + $0x19f8] sm:$0xff]
    %v5607 = vld [vmem:[#allocation4 + $0x1a00] sm:$0xff]
    %v5608 = vld [vmem:[#allocation4 + $0x1a08] sm:$0xff]
    %v5609 = vld [vmem:[#allocation4 + $0x1a10] sm:$0xff]
    %v5610 = vld [vmem:[#allocation4 + $0x1a18] sm:$0xff]
    %v5611 = vld [vmem:[#allocation4 + $0x1a20] sm:$0xff]
    %v5612 = vld [vmem:[#allocation4 + $0x1a28] sm:$0xff]
    %v5613 = vld [vmem:[#allocation4 + $0x1a30] sm:$0xff]
    %v5614 = vld [vmem:[#allocation4 + $0x1a38] sm:$0xff]
    %v5615 = vld [vmem:[#allocation4 + $0x1a40] sm:$0xff]
    %v5616 = vld [vmem:[#allocation4 + $0x1a48] sm:$0xff]
    %v5617 = vld [vmem:[#allocation4 + $0x1a50] sm:$0xff]
    %v5618 = vld [vmem:[#allocation4 + $0x1a58] sm:$0xff]
    %v5619 = vld [vmem:[#allocation4 + $0x1a60] sm:$0xff]
    %v5620 = vld [vmem:[#allocation4 + $0x1a68] sm:$0xff]
    %v5621 = vld [vmem:[#allocation4 + $0x1a70] sm:$0xff]
    %v5622 = vld [vmem:[#allocation4 + $0x1a78] sm:$0xff]
    %v5623 = vld [vmem:[#allocation4 + $0x1a80] sm:$0xff]
    %v5624 = vld [vmem:[#allocation4 + $0x1a88] sm:$0xff]
    %v5625 = vld [vmem:[#allocation4 + $0x1a90] sm:$0xff]
    %v5626 = vld [vmem:[#allocation4 + $0x1a98] sm:$0xff]
    %v5627 = vld [vmem:[#allocation4 + $0x1aa0] sm:$0xff]
    %v5628 = vld [vmem:[#allocation4 + $0x1aa8] sm:$0xff]
    %v5629 = vld [vmem:[#allocation4 + $0x1ab0] sm:$0xff]
    %v5630 = vld [vmem:[#allocation4 + $0x1ab8] sm:$0xff]
    %v5631 = vld [vmem:[#allocation4 + $0x1ac0] sm:$0xff]
    %v5632 = vld [vmem:[#allocation4 + $0x1ac8] sm:$0xff]
    %v5633 = vld [vmem:[#allocation4 + $0x1ad0] sm:$0xff]
    %v5634 = vld [vmem:[#allocation4 + $0x1ad8] sm:$0xff]
    %v5635 = vld [vmem:[#allocation4 + $0x1ae0] sm:$0xff]
    %v5636 = vld [vmem:[#allocation4 + $0x1ae8] sm:$0xff]
    %v5637 = vld [vmem:[#allocation4 + $0x1af0] sm:$0xff]
    %v5638 = vld [vmem:[#allocation4 + $0x1af8] sm:$0xff]
    %v5639 = vld [vmem:[#allocation4 + $0x1b00] sm:$0xff]
    %v5640 = vld [vmem:[#allocation4 + $0x1b08] sm:$0xff]
    %v5641 = vld [vmem:[#allocation4 + $0x1b10] sm:$0xff]
    %v5642 = vld [vmem:[#allocation4 + $0x1b18] sm:$0xff]
    %v5643 = vld [vmem:[#allocation4 + $0x1b20] sm:$0xff]
    %v5644 = vld [vmem:[#allocation4 + $0x1b28] sm:$0xff]
    %v5645 = vld [vmem:[#allocation4 + $0x1b30] sm:$0xff]
    %v5646 = vld [vmem:[#allocation4 + $0x1b38] sm:$0xff]
    %v5647 = vld [vmem:[#allocation4 + $0x1b40] sm:$0xff]
    %v5648 = vld [vmem:[#allocation4 + $0x1b48] sm:$0xff]
    %v5649 = vld [vmem:[#allocation4 + $0x1b50] sm:$0xff]
    %v5650 = vld [vmem:[#allocation4 + $0x1b58] sm:$0xff]
    %v5651 = vld [vmem:[#allocation4 + $0x1b60] sm:$0xff]
    %v5652 = vld [vmem:[#allocation4 + $0x1b68] sm:$0xff]
    %v5653 = vld [vmem:[#allocation4 + $0x1b70] sm:$0xff]
    %v5654 = vld [vmem:[#allocation4 + $0x1b78] sm:$0xff]
    %v5655 = vld [vmem:[#allocation4 + $0x1b80] sm:$0xff]
    %v5656 = vld [vmem:[#allocation4 + $0x1b88] sm:$0xff]
    %v5657 = vld [vmem:[#allocation4 + $0x1b90] sm:$0xff]
    %v5658 = vld [vmem:[#allocation4 + $0x1b98] sm:$0xff]
    %v5659 = vld [vmem:[#allocation4 + $0x1ba0] sm:$0xff]
    %v5660 = vld [vmem:[#allocation4 + $0x1ba8] sm:$0xff]
    %v5661 = vld [vmem:[#allocation4 + $0x1bb0] sm:$0xff]
    %v5662 = vld [vmem:[#allocation4 + $0x1bb8] sm:$0xff]
    %v5663 = vld [vmem:[#allocation4 + $0x1bc0] sm:$0xff]
    %v5664 = vld [vmem:[#allocation4 + $0x1bc8] sm:$0xff]
    %v5665 = vld [vmem:[#allocation4 + $0x1bd0] sm:$0xff]
    %v5666 = vld [vmem:[#allocation4 + $0x1bd8] sm:$0xff]
    %v5667 = vld [vmem:[#allocation4 + $0x1be0] sm:$0xff]
    %v5668 = vld [vmem:[#allocation4 + $0x1be8] sm:$0xff]
    %v5669 = vld [vmem:[#allocation4 + $0x1bf0] sm:$0xff]
    %v5670 = vld [vmem:[#allocation4 + $0x1bf8] sm:$0xff]
    %v5671 = vld [vmem:[#allocation4 + $0x1c00] sm:$0xff]
    %v5672 = vld [vmem:[#allocation4 + $0x1c08] sm:$0xff]
    %v5673 = vld [vmem:[#allocation4 + $0x1c10] sm:$0xff]
    %v5674 = vld [vmem:[#allocation4 + $0x1c18] sm:$0xff]
    %v5675 = vld [vmem:[#allocation4 + $0x1c20] sm:$0xff]
    %v5676 = vld [vmem:[#allocation4 + $0x1c28] sm:$0xff]
    %v5677 = vld [vmem:[#allocation4 + $0x1c30] sm:$0xff]
    %v5678 = vld [vmem:[#allocation4 + $0x1c38] sm:$0xff]
    %v5679 = vld [vmem:[#allocation4 + $0x1c40] sm:$0xff]
    %v5680 = vld [vmem:[#allocation4 + $0x1c48] sm:$0xff]
    %v5681 = vld [vmem:[#allocation4 + $0x1c50] sm:$0xff]
    %v5682 = vld [vmem:[#allocation4 + $0x1c58] sm:$0xff]
    %v5683 = vld [vmem:[#allocation4 + $0x1c60] sm:$0xff]
    %v5684 = vld [vmem:[#allocation4 + $0x1c68] sm:$0xff]
    %v5685 = vld [vmem:[#allocation4 + $0x1c70] sm:$0xff]
    %v5686 = vld [vmem:[#allocation4 + $0x1c78] sm:$0xff]
    %v5687 = vld [vmem:[#allocation4 + $0x1c80] sm:$0xff]
    %v5688 = vld [vmem:[#allocation4 + $0x1c88] sm:$0xff]
    %v5689 = vld [vmem:[#allocation4 + $0x1c90] sm:$0xff]
    %v5690 = vld [vmem:[#allocation4 + $0x1c98] sm:$0xff]
    %v5691 = vld [vmem:[#allocation4 + $0x1ca0] sm:$0xff]
    %v5692 = vld [vmem:[#allocation4 + $0x1ca8] sm:$0xff]
    %v5693 = vld [vmem:[#allocation4 + $0x1cb0] sm:$0xff]
    %v5694 = vld [vmem:[#allocation4 + $0x1cb8] sm:$0xff]
    %v5695 = vld [vmem:[#allocation4 + $0x1cc0] sm:$0xff]
    %v5696 = vld [vmem:[#allocation4 + $0x1cc8] sm:$0xff]
    %v5697 = vld [vmem:[#allocation4 + $0x1cd0] sm:$0xff]
    %v5698 = vld [vmem:[#allocation4 + $0x1cd8] sm:$0xff]
    %v5699 = vld [vmem:[#allocation4 + $0x1ce0] sm:$0xff]
    %v5700 = vld [vmem:[#allocation4 + $0x1ce8] sm:$0xff]
    %v5701 = vld [vmem:[#allocation4 + $0x1cf0] sm:$0xff]
    %v5702 = vld [vmem:[#allocation4 + $0x1cf8] sm:$0xff]
    %v5703 = vld [vmem:[#allocation4 + $0x1d00] sm:$0xff]
    %v5704 = vld [vmem:[#allocation4 + $0x1d08] sm:$0xff]
    %v5705 = vld [vmem:[#allocation4 + $0x1d10] sm:$0xff]
    %v5706 = vld [vmem:[#allocation4 + $0x1d18] sm:$0xff]
    %v5707 = vld [vmem:[#allocation4 + $0x1d20] sm:$0xff]
    %v5708 = vld [vmem:[#allocation4 + $0x1d28] sm:$0xff]
    %v5709 = vld [vmem:[#allocation4 + $0x1d30] sm:$0xff]
    %v5710 = vld [vmem:[#allocation4 + $0x1d38] sm:$0xff]
    %v5711 = vld [vmem:[#allocation4 + $0x1d40] sm:$0xff]
    %v5712 = vld [vmem:[#allocation4 + $0x1d48] sm:$0xff]
    %v5713 = vld [vmem:[#allocation4 + $0x1d50] sm:$0xff]
    %v5714 = vld [vmem:[#allocation4 + $0x1d58] sm:$0xff]
    %v5715 = vld [vmem:[#allocation4 + $0x1d60] sm:$0xff]
    %v5716 = vld [vmem:[#allocation4 + $0x1d68] sm:$0xff]
    %v5717 = vld [vmem:[#allocation4 + $0x1d70] sm:$0xff]
    %v5718 = vld [vmem:[#allocation4 + $0x1d78] sm:$0xff]
    %v5719 = vld [vmem:[#allocation4 + $0x1d80] sm:$0xff]
    %v5720 = vld [vmem:[#allocation4 + $0x1d88] sm:$0xff]
    %v5721 = vld [vmem:[#allocation4 + $0x1d90] sm:$0xff]
    %v5722 = vld [vmem:[#allocation4 + $0x1d98] sm:$0xff]
    %v5723 = vld [vmem:[#allocation4 + $0x1da0] sm:$0xff]
    %v5724 = vld [vmem:[#allocation4 + $0x1da8] sm:$0xff]
    %v5725 = vld [vmem:[#allocation4 + $0x1db0] sm:$0xff]
    %v5726 = vld [vmem:[#allocation4 + $0x1db8] sm:$0xff]
    %v5727 = vld [vmem:[#allocation4 + $0x1dc0] sm:$0xff]
    %v5728 = vld [vmem:[#allocation4 + $0x1dc8] sm:$0xff]
    %v5729 = vld [vmem:[#allocation4 + $0x1dd0] sm:$0xff]
    %v5730 = vld [vmem:[#allocation4 + $0x1dd8] sm:$0xff]
    %v5731 = vld [vmem:[#allocation4 + $0x1de0] sm:$0xff]
    %v5732 = vld [vmem:[#allocation4 + $0x1de8] sm:$0xff]
    %v5733 = vld [vmem:[#allocation4 + $0x1df0] sm:$0xff]
    %v5734 = vld [vmem:[#allocation4 + $0x1df8] sm:$0xff]
    %v5735 = vld [vmem:[#allocation4 + $0x1e00] sm:$0xff]
    %v5736 = vld [vmem:[#allocation4 + $0x1e08] sm:$0xff]
    %v5737 = vld [vmem:[#allocation4 + $0x1e10] sm:$0xff]
    %v5738 = vld [vmem:[#allocation4 + $0x1e18] sm:$0xff]
    %v5739 = vld [vmem:[#allocation4 + $0x1e20] sm:$0xff]
    %v5740 = vld [vmem:[#allocation4 + $0x1e28] sm:$0xff]
    %v5741 = vld [vmem:[#allocation4 + $0x1e30] sm:$0xff]
    %v5742 = vld [vmem:[#allocation4 + $0x1e38] sm:$0xff]
    %v5743 = vld [vmem:[#allocation4 + $0x1e40] sm:$0xff]
    %v5744 = vld [vmem:[#allocation4 + $0x1e48] sm:$0xff]
    %v5745 = vld [vmem:[#allocation4 + $0x1e50] sm:$0xff]
    %v5746 = vld [vmem:[#allocation4 + $0x1e58] sm:$0xff]
    %v5747 = vld [vmem:[#allocation4 + $0x1e60] sm:$0xff]
    %v5748 = vld [vmem:[#allocation4 + $0x1e68] sm:$0xff]
    %v5749 = vld [vmem:[#allocation4 + $0x1e70] sm:$0xff]
    %v5750 = vld [vmem:[#allocation4 + $0x1e78] sm:$0xff]
    %v5751 = vld [vmem:[#allocation4 + $0x1e80] sm:$0xff]
    %v5752 = vld [vmem:[#allocation4 + $0x1e88] sm:$0xff]
    %v5753 = vld [vmem:[#allocation4 + $0x1e90] sm:$0xff]
    %v5754 = vld [vmem:[#allocation4 + $0x1e98] sm:$0xff]
    %v5755 = vld [vmem:[#allocation4 + $0x1ea0] sm:$0xff]
    %v5756 = vld [vmem:[#allocation4 + $0x1ea8] sm:$0xff]
    %v5757 = vld [vmem:[#allocation4 + $0x1eb0] sm:$0xff]
    %v5758 = vld [vmem:[#allocation4 + $0x1eb8] sm:$0xff]
    %v5759 = vld [vmem:[#allocation4 + $0x1ec0] sm:$0xff]
    %v5760 = vld [vmem:[#allocation4 + $0x1ec8] sm:$0xff]
    %v5761 = vld [vmem:[#allocation4 + $0x1ed0] sm:$0xff]
    %v5762 = vld [vmem:[#allocation4 + $0x1ed8] sm:$0xff]
    %v5763 = vld [vmem:[#allocation4 + $0x1ee0] sm:$0xff]
    %v5764 = vld [vmem:[#allocation4 + $0x1ee8] sm:$0xff]
    %v5765 = vld [vmem:[#allocation4 + $0x1ef0] sm:$0xff]
    %v5766 = vld [vmem:[#allocation4 + $0x1ef8] sm:$0xff]
    %v5767 = vld [vmem:[#allocation4 + $0x1f00] sm:$0xff]
    %v5768 = vld [vmem:[#allocation4 + $0x1f08] sm:$0xff]
    %v5769 = vld [vmem:[#allocation4 + $0x1f10] sm:$0xff]
    %v5770 = vld [vmem:[#allocation4 + $0x1f18] sm:$0xff]
    %v5771 = vld [vmem:[#allocation4 + $0x1f20] sm:$0xff]
    %v5772 = vld [vmem:[#allocation4 + $0x1f28] sm:$0xff]
    %v5773 = vld [vmem:[#allocation4 + $0x1f30] sm:$0xff]
    %v5774 = vld [vmem:[#allocation4 + $0x1f38] sm:$0xff]
    %v5775 = vld [vmem:[#allocation4 + $0x1f40] sm:$0xff]
    %v5776 = vld [vmem:[#allocation4 + $0x1f48] sm:$0xff]
    %v5777 = vld [vmem:[#allocation4 + $0x1f50] sm:$0xff]
    %v5778 = vld [vmem:[#allocation4 + $0x1f58] sm:$0xff]
    %v5779 = vld [vmem:[#allocation4 + $0x1f60] sm:$0xff]
    %v5780 = vld [vmem:[#allocation4 + $0x1f68] sm:$0xff]
    %v5781 = vld [vmem:[#allocation4 + $0x1f70] sm:$0xff]
    %v5782 = vld [vmem:[#allocation4 + $0x1f78] sm:$0xff]
    %v5783 = vld [vmem:[#allocation4 + $0x1f80] sm:$0xff]
    %v5784 = vld [vmem:[#allocation4 + $0x1f88] sm:$0xff]
    %v5785 = vld [vmem:[#allocation4 + $0x1f90] sm:$0xff]
    %v5786 = vld [vmem:[#allocation4 + $0x1f98] sm:$0xff]
    %v5787 = vld [vmem:[#allocation4 + $0x1fa0] sm:$0xff]
    %v5788 = vld [vmem:[#allocation4 + $0x1fa8] sm:$0xff]
    %v5789 = vld [vmem:[#allocation4 + $0x1fb0] sm:$0xff]
    %v5790 = vld [vmem:[#allocation4 + $0x1fb8] sm:$0xff]
    %v5791 = vld [vmem:[#allocation4 + $0x1fc0] sm:$0xff]
    %v5792 = vld [vmem:[#allocation4 + $0x1fc8] sm:$0xff]
    %v5793 = vld [vmem:[#allocation4 + $0x1fd0] sm:$0xff]
    %v5794 = vld [vmem:[#allocation4 + $0x1fd8] sm:$0xff]
    %v5795 = vld [vmem:[#allocation4 + $0x1fe0] sm:$0xff]
    %v5796 = vld [vmem:[#allocation4 + $0x1fe8] sm:$0xff]
    %v5797 = vld [vmem:[#allocation4 + $0x1ff0] sm:$0xff]
    %v5798 = vld [vmem:[#allocation4 + $0x1ff8] sm:$0xff]
    %v5799 = vld [vmem:[#allocation28] sm:$0xff]
    %v5801 = vlaneseq
    %v5802 = vshrl.u32 %v5801, 7
    %v5803 = vsub.s32 0, %v5802
    %v5804 = vrot.slane %v5799, %v5803
    %v5805 = vlaneseq
    %v5806 = vshrl.u32 %v5805, 7
    %v5807 = vsub.s32 1, %v5806
    %v5808 = vrot.slane %v5799, %v5807
    %v5809 = vlaneseq
    %v5810 = vshrl.u32 %v5809, 7
    %v5811 = vsub.s32 2, %v5810
    %v5812 = vrot.slane %v5799, %v5811
    %v5813 = vlaneseq
    %v5814 = vshrl.u32 %v5813, 7
    %v5815 = vsub.s32 3, %v5814
    %v5816 = vrot.slane %v5799, %v5815
    %v5817 = vlaneseq
    %v5818 = vshrl.u32 %v5817, 7
    %v5819 = vsub.s32 4, %v5818
    %v5820 = vrot.slane %v5799, %v5819
    %v5821 = vlaneseq
    %v5822 = vshrl.u32 %v5821, 7
    %v5823 = vsub.s32 5, %v5822
    %v5824 = vrot.slane %v5799, %v5823
    %v5825 = vlaneseq
    %v5826 = vshrl.u32 %v5825, 7
    %v5827 = vsub.s32 6, %v5826
    %v5828 = vrot.slane %v5799, %v5827
    %v5829 = vlaneseq
    %v5830 = vshrl.u32 %v5829, 7
    %v5831 = vsub.s32 7, %v5830
    %v5832 = vrot.slane %v5799, %v5831
    %5841 = vmatprep.subr.bf16.mxu0 %v4776
    %5842 = vmatpush1.bf16.msra.mxu0 %v4775
    %5843 = vmatprep.subr.bf16.mxu0 %v4784
    %5844 = vmatpush1.bf16.msra.mxu0 %v4783
    %5845 = vmatprep.subr.bf16.mxu0 %v4792
    %5846 = vmatpush1.bf16.msra.mxu0 %v4791
    %5847 = vmatprep.subr.bf16.mxu0 %v4800
    %5848 = vmatpush1.bf16.msra.mxu0 %v4799
    %5849 = vmatprep.subr.bf16.mxu0 %v4808
    %5850 = vmatpush1.bf16.msra.mxu0 %v4807
    %5851 = vmatprep.subr.bf16.mxu0 %v4816
    %5852 = vmatpush1.bf16.msra.mxu0 %v4815
    %5853 = vmatprep.subr.bf16.mxu0 %v4824
    %5854 = vmatpush1.bf16.msra.mxu0 %v4823
    %5855 = vmatprep.subr.bf16.mxu0 %v4832
    %5856 = vmatpush1.bf16.msra.mxu0 %v4831
    %5857 = vmatprep.subr.bf16.mxu0 %v4840
    %5858 = vmatpush1.bf16.msra.mxu0 %v4839
    %5859 = vmatprep.subr.bf16.mxu0 %v4848
    %5860 = vmatpush1.bf16.msra.mxu0 %v4847
    %5861 = vmatprep.subr.bf16.mxu0 %v4856
    %5862 = vmatpush1.bf16.msra.mxu0 %v4855
    %5863 = vmatprep.subr.bf16.mxu0 %v4864
    %5864 = vmatpush1.bf16.msra.mxu0 %v4863
    %5865 = vmatprep.subr.bf16.mxu0 %v4872
    %5866 = vmatpush1.bf16.msra.mxu0 %v4871
    %5867 = vmatprep.subr.bf16.mxu0 %v4880
    %5868 = vmatpush1.bf16.msra.mxu0 %v4879
    %5869 = vmatprep.subr.bf16.mxu0 %v4888
    %5870 = vmatpush1.bf16.msra.mxu0 %v4887
    %5871 = vmatprep.subr.bf16.mxu0 %v4896
    %5872 = vmatpush1.bf16.msra.mxu0 %v4895
    %5873 = vmatprep.mubr.bf16.mxu0 %v4756
    %5874 = vmatmul.mubr.bf16.gmra.mrb[0].mxu0 %v4755
    %v5875 = vpop.f32.mrb[0].mxu0
    %v5876 = vadd.f32 %v5804, %v5875
    %v5877 = vpop.f32.mrb[0].mxu0
    %v5878 = vadd.f32 %v5808, %v5877
    %v5879 = vpop.f32.mrb[0].mxu0
    %v5880 = vpop.f32.mrb[0].mxu0
    %5881 = vdwg.mxu0
    %5882 = vmatprep.subr.bf16.mxu0 %v4904
    %5883 = vmatpush1.bf16.msra.mxu0 %v4903
    %5884 = vmatprep.subr.bf16.mxu0 %v4912
    %5885 = vmatpush1.bf16.msra.mxu0 %v4911
    %5886 = vmatprep.subr.bf16.mxu0 %v4920
    %5887 = vmatpush1.bf16.msra.mxu0 %v4919
    %5888 = vmatprep.subr.bf16.mxu0 %v4928
    %5889 = vmatpush1.bf16.msra.mxu0 %v4927
    %5890 = vmatprep.subr.bf16.mxu0 %v4936
    %5891 = vmatpush1.bf16.msra.mxu0 %v4935
    %5892 = vmatprep.subr.bf16.mxu0 %v4944
    %5893 = vmatpush1.bf16.msra.mxu0 %v4943
    %5894 = vmatprep.subr.bf16.mxu0 %v4952
    %5895 = vmatpush1.bf16.msra.mxu0 %v4951
    %5896 = vmatprep.subr.bf16.mxu0 %v4960
    %5897 = vmatpush1.bf16.msra.mxu0 %v4959
    %5898 = vmatprep.subr.bf16.mxu0 %v4968
    %5899 = vmatpush1.bf16.msra.mxu0 %v4967
    %5900 = vmatprep.subr.bf16.mxu0 %v4976
    %5901 = vmatpush1.bf16.msra.mxu0 %v4975
    %5902 = vmatprep.subr.bf16.mxu0 %v4984
    %5903 = vmatpush1.bf16.msra.mxu0 %v4983
    %5904 = vmatprep.subr.bf16.mxu0 %v4992
    %5905 = vmatpush1.bf16.msra.mxu0 %v4991
    %5906 = vmatprep.subr.bf16.mxu0 %v5000
    %5907 = vmatpush1.bf16.msra.mxu0 %v4999
    %5908 = vmatprep.subr.bf16.mxu0 %v5008
    %5909 = vmatpush1.bf16.msra.mxu0 %v5007
    %5910 = vmatprep.subr.bf16.mxu0 %v5016
    %5911 = vmatpush1.bf16.msra.mxu0 %v5015
    %5912 = vmatprep.subr.bf16.mxu0 %v5024
    %5913 = vmatpush1.bf16.msra.mxu0 %v5023
    %5914 = vmatprep.mubr.bf16.mxu0 %v4758
    %5915 = vmatmul.mubr.bf16.gmra.mrb[0].mxu0 %v4757
    %v5916 = vpop.f32.mrb[0].mxu0
    %v5917 = vadd.f32 %v5876, %v5916
    %v5918 = vpop.f32.mrb[0].mxu0
    %v5919 = vadd.f32 %v5878, %v5918
    %v5920 = vpop.f32.mrb[0].mxu0
    %v5921 = vpop.f32.mrb[0].mxu0
    %5922 = vdwg.mxu0
    %5923 = vmatprep.subr.bf16.mxu0 %v5032
    %5924 = vmatpush1.bf16.msra.mxu0 %v5031
    %5925 = vmatprep.subr.bf16.mxu0 %v5040
    %5926 = vmatpush1.bf16.msra.mxu0 %v5039
    %5927 = vmatprep.subr.bf16.mxu0 %v5048
    %5928 = vmatpush1.bf16.msra.mxu0 %v5047
    %5929 = vmatprep.subr.bf16.mxu0 %v5056
    %5930 = vmatpush1.bf16.msra.mxu0 %v5055
    %5931 = vmatprep.subr.bf16.mxu0 %v5064
    %5932 = vmatpush1.bf16.msra.mxu0 %v5063
    %5933 = vmatprep.subr.bf16.mxu0 %v5072
    %5934 = vmatpush1.bf16.msra.mxu0 %v5071
    %5935 = vmatprep.subr.bf16.mxu0 %v5080
    %5936 = vmatpush1.bf16.msra.mxu0 %v5079
    %5937 = vmatprep.subr.bf16.mxu0 %v5088
    %5938 = vmatpush1.bf16.msra.mxu0 %v5087
    %5939 = vmatprep.subr.bf16.mxu0 %v5096
    %5940 = vmatpush1.bf16.msra.mxu0 %v5095
    %5941 = vmatprep.subr.bf16.mxu0 %v5104
    %5942 = vmatpush1.bf16.msra.mxu0 %v5103
    %5943 = vmatprep.subr.bf16.mxu0 %v5112
    %5944 = vmatpush1.bf16.msra.mxu0 %v5111
    %5945 = vmatprep.subr.bf16.mxu0 %v5120
    %5946 = vmatpush1.bf16.msra.mxu0 %v5119
    %5947 = vmatprep.subr.bf16.mxu0 %v5128
    %5948 = vmatpush1.bf16.msra.mxu0 %v5127
    %5949 = vmatprep.subr.bf16.mxu0 %v5136
    %5950 = vmatpush1.bf16.msra.mxu0 %v5135
    %5951 = vmatprep.subr.bf16.mxu0 %v5144
    %5952 = vmatpush1.bf16.msra.mxu0 %v5143
    %5953 = vmatprep.subr.bf16.mxu0 %v5152
    %5954 = vmatpush1.bf16.msra.mxu0 %v5151
    %5955 = vmatprep.mubr.bf16.mxu0 %v4760
    %5956 = vmatmul.mubr.bf16.gmra.mrb[0].mxu0 %v4759
    %v5957 = vpop.f32.mrb[0].mxu0
    %v5958 = vadd.f32 %v5917, %v5957
    %v5959 = vpop.f32.mrb[0].mxu0
    %v5960 = vadd.f32 %v5919, %v5959
    %v5961 = vpop.f32.mrb[0].mxu0
    %v5962 = vpop.f32.mrb[0].mxu0
    %5963 = vdwg.mxu0
    %5964 = vmatprep.subr.bf16.mxu0 %v5160
    %5965 = vmatpush1.bf16.msra.mxu0 %v5159
    %5966 = vmatprep.subr.bf16.mxu0 %v5168
    %5967 = vmatpush1.bf16.msra.mxu0 %v5167
    %5968 = vmatprep.subr.bf16.mxu0 %v5176
    %5969 = vmatpush1.bf16.msra.mxu0 %v5175
    %5970 = vmatprep.subr.bf16.mxu0 %v5184
    %5971 = vmatpush1.bf16.msra.mxu0 %v5183
    %5972 = vmatprep.subr.bf16.mxu0 %v5192
    %5973 = vmatpush1.bf16.msra.mxu0 %v5191
    %5974 = vmatprep.subr.bf16.mxu0 %v5200
    %5975 = vmatpush1.bf16.msra.mxu0 %v5199
    %5976 = vmatprep.subr.bf16.mxu0 %v5208
    %5977 = vmatpush1.bf16.msra.mxu0 %v5207
    %5978 = vmatprep.subr.bf16.mxu0 %v5216
    %5979 = vmatpush1.bf16.msra.mxu0 %v5215
    %5980 = vmatprep.subr.bf16.mxu0 %v5224
    %5981 = vmatpush1.bf16.msra.mxu0 %v5223
    %5982 = vmatprep.subr.bf16.mxu0 %v5232
    %5983 = vmatpush1.bf16.msra.mxu0 %v5231
    %5984 = vmatprep.subr.bf16.mxu0 %v5240
    %5985 = vmatpush1.bf16.msra.mxu0 %v5239
    %5986 = vmatprep.subr.bf16.mxu0 %v5248
    %5987 = vmatpush1.bf16.msra.mxu0 %v5247
    %5988 = vmatprep.subr.bf16.mxu0 %v5256
    %5989 = vmatpush1.bf16.msra.mxu0 %v5255
    %5990 = vmatprep.subr.bf16.mxu0 %v5264
    %5991 = vmatpush1.bf16.msra.mxu0 %v5263
    %5992 = vmatprep.subr.bf16.mxu0 %v5272
    %5993 = vmatpush1.bf16.msra.mxu0 %v5271
    %5994 = vmatprep.subr.bf16.mxu0 %v5280
    %5995 = vmatpush1.bf16.msra.mxu0 %v5279
    %5996 = vmatprep.mubr.bf16.mxu0 %v4762
    %5997 = vmatmul.mubr.bf16.gmra.mrb[0].mxu0 %v4761
    %v5998 = vpop.f32.mrb[0].mxu0
    %v5999 = vadd.f32 %v5958, %v5998
    %v6000 = vpop.f32.mrb[0].mxu0
    %v6001 = vadd.f32 %v5960, %v6000
    %v6002 = vpop.f32.mrb[0].mxu0
    %v6003 = vpop.f32.mrb[0].mxu0
    %6004 = vdwg.mxu0
    %6005 = vmatprep.subr.bf16.mxu0 %v5288
    %6006 = vmatpush1.bf16.msra.mxu0 %v5287
    %6007 = vmatprep.subr.bf16.mxu0 %v5296
    %6008 = vmatpush1.bf16.msra.mxu0 %v5295
    %6009 = vmatprep.subr.bf16.mxu0 %v5304
    %6010 = vmatpush1.bf16.msra.mxu0 %v5303
    %6011 = vmatprep.subr.bf16.mxu0 %v5312
    %6012 = vmatpush1.bf16.msra.mxu0 %v5311
    %6013 = vmatprep.subr.bf16.mxu0 %v5320
    %6014 = vmatpush1.bf16.msra.mxu0 %v5319
    %6015 = vmatprep.subr.bf16.mxu0 %v5328
    %6016 = vmatpush1.bf16.msra.mxu0 %v5327
    %6017 = vmatprep.subr.bf16.mxu0 %v5336
    %6018 = vmatpush1.bf16.msra.mxu0 %v5335
    %6019 = vmatprep.subr.bf16.mxu0 %v5344
    %6020 = vmatpush1.bf16.msra.mxu0 %v5343
    %6021 = vmatprep.subr.bf16.mxu0 %v5352
    %6022 = vmatpush1.bf16.msra.mxu0 %v5351
    %6023 = vmatprep.subr.bf16.mxu0 %v5360
    %6024 = vmatpush1.bf16.msra.mxu0 %v5359
    %6025 = vmatprep.subr.bf16.mxu0 %v5368
    %6026 = vmatpush1.bf16.msra.mxu0 %v5367
    %6027 = vmatprep.subr.bf16.mxu0 %v5376
    %6028 = vmatpush1.bf16.msra.mxu0 %v5375
    %6029 = vmatprep.subr.bf16.mxu0 %v5384
    %6030 = vmatpush1.bf16.msra.mxu0 %v5383
    %6031 = vmatprep.subr.bf16.mxu0 %v5392
    %6032 = vmatpush1.bf16.msra.mxu0 %v5391
    %6033 = vmatprep.subr.bf16.mxu0 %v5400
    %6034 = vmatpush1.bf16.msra.mxu0 %v5399
    %6035 = vmatprep.subr.bf16.mxu0 %v5408
    %6036 = vmatpush1.bf16.msra.mxu0 %v5407
    %6037 = vmatprep.mubr.bf16.mxu0 %v4764
    %6038 = vmatmul.mubr.bf16.gmra.mrb[0].mxu0 %v4763
    %v6039 = vpop.f32.mrb[0].mxu0
    %v6040 = vadd.f32 %v5999, %v6039
    %v6041 = vpop.f32.mrb[0].mxu0
    %v6042 = vadd.f32 %v6001, %v6041
    %v6043 = vpop.f32.mrb[0].mxu0
    %v6044 = vpop.f32.mrb[0].mxu0
    %6045 = vdwg.mxu0
    %6046 = vmatprep.subr.bf16.mxu0 %v5416
    %6047 = vmatpush1.bf16.msra.mxu0 %v5415
    %6048 = vmatprep.subr.bf16.mxu0 %v5424
    %6049 = vmatpush1.bf16.msra.mxu0 %v5423
    %6050 = vmatprep.subr.bf16.mxu0 %v5432
    %6051 = vmatpush1.bf16.msra.mxu0 %v5431
    %6052 = vmatprep.subr.bf16.mxu0 %v5440
    %6053 = vmatpush1.bf16.msra.mxu0 %v5439
    %6054 = vmatprep.subr.bf16.mxu0 %v5448
    %6055 = vmatpush1.bf16.msra.mxu0 %v5447
    %6056 = vmatprep.subr.bf16.mxu0 %v5456
    %6057 = vmatpush1.bf16.msra.mxu0 %v5455
    %6058 = vmatprep.subr.bf16.mxu0 %v5464
    %6059 = vmatpush1.bf16.msra.mxu0 %v5463
    %6060 = vmatprep.subr.bf16.mxu0 %v5472
    %6061 = vmatpush1.bf16.msra.mxu0 %v5471
    %6062 = vmatprep.subr.bf16.mxu0 %v5480
    %6063 = vmatpush1.bf16.msra.mxu0 %v5479
    %6064 = vmatprep.subr.bf16.mxu0 %v5488
    %6065 = vmatpush1.bf16.msra.mxu0 %v5487
    %6066 = vmatprep.subr.bf16.mxu0 %v5496
    %6067 = vmatpush1.bf16.msra.mxu0 %v5495
    %6068 = vmatprep.subr.bf16.mxu0 %v5504
    %6069 = vmatpush1.bf16.msra.mxu0 %v5503
    %6070 = vmatprep.subr.bf16.mxu0 %v5512
    %6071 = vmatpush1.bf16.msra.mxu0 %v5511
    %6072 = vmatprep.subr.bf16.mxu0 %v5520
    %6073 = vmatpush1.bf16.msra.mxu0 %v5519
    %6074 = vmatprep.subr.bf16.mxu0 %v5528
    %6075 = vmatpush1.bf16.msra.mxu0 %v5527
    %6076 = vmatprep.subr.bf16.mxu0 %v5536
    %6077 = vmatpush1.bf16.msra.mxu0 %v5535
    %6078 = vmatprep.mubr.bf16.mxu0 %v4766
    %6079 = vmatmul.mubr.bf16.gmra.mrb[0].mxu0 %v4765
    %v6080 = vpop.f32.mrb[0].mxu0
    %v6081 = vadd.f32 %v6040, %v6080
    %v6082 = vpop.f32.mrb[0].mxu0
    %v6083 = vadd.f32 %v6042, %v6082
    %v6084 = vpop.f32.mrb[0].mxu0
    %v6085 = vpop.f32.mrb[0].mxu0
    %6086 = vdwg.mxu0
    %6087 = vmatprep.subr.bf16.mxu0 %v5544
    %6088 = vmatpush1.bf16.msra.mxu0 %v5543
    %6089 = vmatprep.subr.bf16.mxu0 %v5552
    %6090 = vmatpush1.bf16.msra.mxu0 %v5551
    %6091 = vmatprep.subr.bf16.mxu0 %v5560
    %6092 = vmatpush1.bf16.msra.mxu0 %v5559
    %6093 = vmatprep.subr.bf16.mxu0 %v5568
    %6094 = vmatpush1.bf16.msra.mxu0 %v5567
    %6095 = vmatprep.subr.bf16.mxu0 %v5576
    %6096 = vmatpush1.bf16.msra.mxu0 %v5575
    %6097 = vmatprep.subr.bf16.mxu0 %v5584
    %6098 = vmatpush1.bf16.msra.mxu0 %v5583
    %6099 = vmatprep.subr.bf16.mxu0 %v5592
    %6100 = vmatpush1.bf16.msra.mxu0 %v5591
    %6101 = vmatprep.subr.bf16.mxu0 %v5600
    %6102 = vmatpush1.bf16.msra.mxu0 %v5599
    %6103 = vmatprep.subr.bf16.mxu0 %v5608
    %6104 = vmatpush1.bf16.msra.mxu0 %v5607
    %6105 = vmatprep.subr.bf16.mxu0 %v5616
    %6106 = vmatpush1.bf16.msra.mxu0 %v5615
    %6107 = vmatprep.subr.bf16.mxu0 %v5624
    %6108 = vmatpush1.bf16.msra.mxu0 %v5623
    %6109 = vmatprep.subr.bf16.mxu0 %v5632
    %6110 = vmatpush1.bf16.msra.mxu0 %v5631
    %6111 = vmatprep.subr.bf16.mxu0 %v5640
    %6112 = vmatpush1.bf16.msra.mxu0 %v5639
    %6113 = vmatprep.subr.bf16.mxu0 %v5648
    %6114 = vmatpush1.bf16.msra.mxu0 %v5647
    %6115 = vmatprep.subr.bf16.mxu0 %v5656
    %6116 = vmatpush1.bf16.msra.mxu0 %v5655
    %6117 = vmatprep.subr.bf16.mxu0 %v5664
    %6118 = vmatpush1.bf16.msra.mxu0 %v5663
    %6119 = vmatprep.mubr.bf16.mxu0 %v4768
    %6120 = vmatmul.mubr.bf16.gmra.mrb[0].mxu0 %v4767
    %v6121 = vpop.f32.mrb[0].mxu0
    %v6122 = vadd.f32 %v6081, %v6121
    %v6123 = vpop.f32.mrb[0].mxu0
    %v6124 = vadd.f32 %v6083, %v6123
    %v6125 = vpop.f32.mrb[0].mxu0
    %v6126 = vpop.f32.mrb[0].mxu0
    %6127 = vdwg.mxu0
    %6128 = vmatprep.subr.bf16.mxu0 %v5672
    %6129 = vmatpush1.bf16.msra.mxu0 %v5671
    %6130 = vmatprep.subr.bf16.mxu0 %v5680
    %6131 = vmatpush1.bf16.msra.mxu0 %v5679
    %6132 = vmatprep.subr.bf16.mxu0 %v5688
    %6133 = vmatpush1.bf16.msra.mxu0 %v5687
    %6134 = vmatprep.subr.bf16.mxu0 %v5696
    %6135 = vmatpush1.bf16.msra.mxu0 %v5695
    %6136 = vmatprep.subr.bf16.mxu0 %v5704
    %6137 = vmatpush1.bf16.msra.mxu0 %v5703
    %6138 = vmatprep.subr.bf16.mxu0 %v5712
    %6139 = vmatpush1.bf16.msra.mxu0 %v5711
    %6140 = vmatprep.subr.bf16.mxu0 %v5720
    %6141 = vmatpush1.bf16.msra.mxu0 %v5719
    %6142 = vmatprep.subr.bf16.mxu0 %v5728
    %6143 = vmatpush1.bf16.msra.mxu0 %v5727
    %6144 = vmatprep.subr.bf16.mxu0 %v5736
    %6145 = vmatpush1.bf16.msra.mxu0 %v5735
    %6146 = vmatprep.subr.bf16.mxu0 %v5744
    %6147 = vmatpush1.bf16.msra.mxu0 %v5743
    %6148 = vmatprep.subr.bf16.mxu0 %v5752
    %6149 = vmatpush1.bf16.msra.mxu0 %v5751
    %6150 = vmatprep.subr.bf16.mxu0 %v5760
    %6151 = vmatpush1.bf16.msra.mxu0 %v5759
    %6152 = vmatprep.subr.bf16.mxu0 %v5768
    %6153 = vmatpush1.bf16.msra.mxu0 %v5767
    %6154 = vmatprep.subr.bf16.mxu0 %v5776
    %6155 = vmatpush1.bf16.msra.mxu0 %v5775
    %6156 = vmatprep.subr.bf16.mxu0 %v5784
    %6157 = vmatpush1.bf16.msra.mxu0 %v5783
    %6158 = vmatprep.subr.bf16.mxu0 %v5792
    %6159 = vmatpush1.bf16.msra.mxu0 %v5791
    %6160 = vmatprep.mubr.bf16.mxu0 %v4770
    %6161 = vmatmul.mubr.bf16.gmra.mrb[0].mxu0 %v4769
    %v6162 = vpop.f32.mrb[0].mxu0
    %v6163 = vadd.f32 %v6122, %v6162
    %v6164 = vpop.f32.mrb[0].mxu0
    %v6165 = vadd.f32 %v6124, %v6164
    %v6166 = vpop.f32.mrb[0].mxu0
    %v6167 = vpop.f32.mrb[0].mxu0
    %6168 = vdwg.mxu0
    %6169 = vmatprep.subr.bf16.mxu0 %v4778
    %6170 = vmatpush1.bf16.msra.mxu0 %v4777
    %6171 = vmatprep.subr.bf16.mxu0 %v4786
    %6172 = vmatpush1.bf16.msra.mxu0 %v4785
    %6173 = vmatprep.subr.bf16.mxu0 %v4794
    %6174 = vmatpush1.bf16.msra.mxu0 %v4793
    %6175 = vmatprep.subr.bf16.mxu0 %v4802
    %6176 = vmatpush1.bf16.msra.mxu0 %v4801
    %6177 = vmatprep.subr.bf16.mxu0 %v4810
    %6178 = vmatpush1.bf16.msra.mxu0 %v4809
    %6179 = vmatprep.subr.bf16.mxu0 %v4818
    %6180 = vmatpush1.bf16.msra.mxu0 %v4817
    %6181 = vmatprep.subr.bf16.mxu0 %v4826
    %6182 = vmatpush1.bf16.msra.mxu0 %v4825
    %6183 = vmatprep.subr.bf16.mxu0 %v4834
    %6184 = vmatpush1.bf16.msra.mxu0 %v4833
    %6185 = vmatprep.subr.bf16.mxu0 %v4842
    %6186 = vmatpush1.bf16.msra.mxu0 %v4841
    %6187 = vmatprep.subr.bf16.mxu0 %v4850
    %6188 = vmatpush1.bf16.msra.mxu0 %v4849
    %6189 = vmatprep.subr.bf16.mxu0 %v4858
    %6190 = vmatpush1.bf16.msra.mxu0 %v4857
    %6191 = vmatprep.subr.bf16.mxu0 %v4866
    %6192 = vmatpush1.bf16.msra.mxu0 %v4865
    %6193 = vmatprep.subr.bf16.mxu0 %v4874
    %6194 = vmatpush1.bf16.msra.mxu0 %v4873
    %6195 = vmatprep.subr.bf16.mxu0 %v4882
    %6196 = vmatpush1.bf16.msra.mxu0 %v4881
    %6197 = vmatprep.subr.bf16.mxu0 %v4890
    %6198 = vmatpush1.bf16.msra.mxu0 %v4889
    %6199 = vmatprep.subr.bf16.mxu0 %v4898
    %6200 = vmatpush1.bf16.msra.mxu0 %v4897
    %6201 = vmatprep.mubr.bf16.mxu0 %v4756
    %6202 = vmatmul.mubr.bf16.gmra.mrb[0].mxu0 %v4755
    %v6203 = vpop.f32.mrb[0].mxu0
    %v6204 = vadd.f32 %v5812, %v6203
    %v6205 = vpop.f32.mrb[0].mxu0
    %v6206 = vadd.f32 %v5816, %v6205
    %v6207 = vpop.f32.mrb[0].mxu0
    %v6208 = vpop.f32.mrb[0].mxu0
    %6209 = vdwg.mxu0
    %6210 = vmatprep.subr.bf16.mxu0 %v4906
    %6211 = vmatpush1.bf16.msra.mxu0 %v4905
    %6212 = vmatprep.subr.bf16.mxu0 %v4914
    %6213 = vmatpush1.bf16.msra.mxu0 %v4913
    %6214 = vmatprep.subr.bf16.mxu0 %v4922
    %6215 = vmatpush1.bf16.msra.mxu0 %v4921
    %6216 = vmatprep.subr.bf16.mxu0 %v4930
    %6217 = vmatpush1.bf16.msra.mxu0 %v4929
    %6218 = vmatprep.subr.bf16.mxu0 %v4938
    %6219 = vmatpush1.bf16.msra.mxu0 %v4937
    %6220 = vmatprep.subr.bf16.mxu0 %v4946
    %6221 = vmatpush1.bf16.msra.mxu0 %v4945
    %6222 = vmatprep.subr.bf16.mxu0 %v4954
    %6223 = vmatpush1.bf16.msra.mxu0 %v4953
    %6224 = vmatprep.subr.bf16.mxu0 %v4962
    %6225 = vmatpush1.bf16.msra.mxu0 %v4961
    %6226 = vmatprep.subr.bf16.mxu0 %v4970
    %6227 = vmatpush1.bf16.msra.mxu0 %v4969
    %6228 = vmatprep.subr.bf16.mxu0 %v4978
    %6229 = vmatpush1.bf16.msra.mxu0 %v4977
    %6230 = vmatprep.subr.bf16.mxu0 %v4986
    %6231 = vmatpush1.bf16.msra.mxu0 %v4985
    %6232 = vmatprep.subr.bf16.mxu0 %v4994
    %6233 = vmatpush1.bf16.msra.mxu0 %v4993
    %6234 = vmatprep.subr.bf16.mxu0 %v5002
    %6235 = vmatpush1.bf16.msra.mxu0 %v5001
    %6236 = vmatprep.subr.bf16.mxu0 %v5010
    %6237 = vmatpush1.bf16.msra.mxu0 %v5009
    %6238 = vmatprep.subr.bf16.mxu0 %v5018
    %6239 = vmatpush1.bf16.msra.mxu0 %v5017
    %6240 = vmatprep.subr.bf16.mxu0 %v5026
    %6241 = vmatpush1.bf16.msra.mxu0 %v5025
    %6242 = vmatprep.mubr.bf16.mxu0 %v4758
    %6243 = vmatmul.mubr.bf16.gmra.mrb[0].mxu0 %v4757
    %v6244 = vpop.f32.mrb[0].mxu0
    %v6245 = vadd.f32 %v6204, %v6244
    %v6246 = vpop.f32.mrb[0].mxu0
    %v6247 = vadd.f32 %v6206, %v6246
    %v6248 = vpop.f32.mrb[0].mxu0
    %v6249 = vpop.f32.mrb[0].mxu0
    %6250 = vdwg.mxu0
    %6251 = vmatprep.subr.bf16.mxu0 %v5034
    %6252 = vmatpush1.bf16.msra.mxu0 %v5033
    %6253 = vmatprep.subr.bf16.mxu0 %v5042
    %6254 = vmatpush1.bf16.msra.mxu0 %v5041
    %6255 = vmatprep.subr.bf16.mxu0 %v5050
    %6256 = vmatpush1.bf16.msra.mxu0 %v5049
    %6257 = vmatprep.subr.bf16.mxu0 %v5058
    %6258 = vmatpush1.bf16.msra.mxu0 %v5057
    %6259 = vmatprep.subr.bf16.mxu0 %v5066
    %6260 = vmatpush1.bf16.msra.mxu0 %v5065
    %6261 = vmatprep.subr.bf16.mxu0 %v5074
    %6262 = vmatpush1.bf16.msra.mxu0 %v5073
    %6263 = vmatprep.subr.bf16.mxu0 %v5082
    %6264 = vmatpush1.bf16.msra.mxu0 %v5081
    %6265 = vmatprep.subr.bf16.mxu0 %v5090
    %6266 = vmatpush1.bf16.msra.mxu0 %v5089
    %6267 = vmatprep.subr.bf16.mxu0 %v5098
    %6268 = vmatpush1.bf16.msra.mxu0 %v5097
    %6269 = vmatprep.subr.bf16.mxu0 %v5106
    %6270 = vmatpush1.bf16.msra.mxu0 %v5105
    %6271 = vmatprep.subr.bf16.mxu0 %v5114
    %6272 = vmatpush1.bf16.msra.mxu0 %v5113
    %6273 = vmatprep.subr.bf16.mxu0 %v5122
    %6274 = vmatpush1.bf16.msra.mxu0 %v5121
    %6275 = vmatprep.subr.bf16.mxu0 %v5130
    %6276 = vmatpush1.bf16.msra.mxu0 %v5129
    %6277 = vmatprep.subr.bf16.mxu0 %v5138
    %6278 = vmatpush1.bf16.msra.mxu0 %v5137
    %6279 = vmatprep.subr.bf16.mxu0 %v5146
    %6280 = vmatpush1.bf16.msra.mxu0 %v5145
    %6281 = vmatprep.subr.bf16.mxu0 %v5154
    %6282 = vmatpush1.bf16.msra.mxu0 %v5153
    %6283 = vmatprep.mubr.bf16.mxu0 %v4760
    %6284 = vmatmul.mubr.bf16.gmra.mrb[0].mxu0 %v4759
    %v6285 = vpop.f32.mrb[0].mxu0
    %v6286 = vadd.f32 %v6245, %v6285
    %v6287 = vpop.f32.mrb[0].mxu0
    %v6288 = vadd.f32 %v6247, %v6287
    %v6289 = vpop.f32.mrb[0].mxu0
    %v6290 = vpop.f32.mrb[0].mxu0
    %6291 = vdwg.mxu0
    %6292 = vmatprep.subr.bf16.mxu0 %v5162
    %6293 = vmatpush1.bf16.msra.mxu0 %v5161
    %6294 = vmatprep.subr.bf16.mxu0 %v5170
    %6295 = vmatpush1.bf16.msra.mxu0 %v5169
    %6296 = vmatprep.subr.bf16.mxu0 %v5178
    %6297 = vmatpush1.bf16.msra.mxu0 %v5177
    %6298 = vmatprep.subr.bf16.mxu0 %v5186
    %6299 = vmatpush1.bf16.msra.mxu0 %v5185
    %6300 = vmatprep.subr.bf16.mxu0 %v5194
    %6301 = vmatpush1.bf16.msra.mxu0 %v5193
    %6302 = vmatprep.subr.bf16.mxu0 %v5202
    %6303 = vmatpush1.bf16.msra.mxu0 %v5201
    %6304 = vmatprep.subr.bf16.mxu0 %v5210
    %6305 = vmatpush1.bf16.msra.mxu0 %v5209
    %6306 = vmatprep.subr.bf16.mxu0 %v5218
    %6307 = vmatpush1.bf16.msra.mxu0 %v5217
    %6308 = vmatprep.subr.bf16.mxu0 %v5226
    %6309 = vmatpush1.bf16.msra.mxu0 %v5225
    %6310 = vmatprep.subr.bf16.mxu0 %v5234
    %6311 = vmatpush1.bf16.msra.mxu0 %v5233
    %6312 = vmatprep.subr.bf16.mxu0 %v5242
    %6313 = vmatpush1.bf16.msra.mxu0 %v5241
    %6314 = vmatprep.subr.bf16.mxu0 %v5250
    %6315 = vmatpush1.bf16.msra.mxu0 %v5249
    %6316 = vmatprep.subr.bf16.mxu0 %v5258
    %6317 = vmatpush1.bf16.msra.mxu0 %v5257
    %6318 = vmatprep.subr.bf16.mxu0 %v5266
    %6319 = vmatpush1.bf16.msra.mxu0 %v5265
    %6320 = vmatprep.subr.bf16.mxu0 %v5274
    %6321 = vmatpush1.bf16.msra.mxu0 %v5273
    %6322 = vmatprep.subr.bf16.mxu0 %v5282
    %6323 = vmatpush1.bf16.msra.mxu0 %v5281
    %6324 = vmatprep.mubr.bf16.mxu0 %v4762
    %6325 = vmatmul.mubr.bf16.gmra.mrb[0].mxu0 %v4761
    %v6326 = vpop.f32.mrb[0].mxu0
    %v6327 = vadd.f32 %v6286, %v6326
    %v6328 = vpop.f32.mrb[0].mxu0
    %v6329 = vadd.f32 %v6288, %v6328
    %v6330 = vpop.f32.mrb[0].mxu0
    %v6331 = vpop.f32.mrb[0].mxu0
    %6332 = vdwg.mxu0
    %6333 = vmatprep.subr.bf16.mxu0 %v5290
    %6334 = vmatpush1.bf16.msra.mxu0 %v5289
    %6335 = vmatprep.subr.bf16.mxu0 %v5298
    %6336 = vmatpush1.bf16.msra.mxu0 %v5297
    %6337 = vmatprep.subr.bf16.mxu0 %v5306
    %6338 = vmatpush1.bf16.msra.mxu0 %v5305
    %6339 = vmatprep.subr.bf16.mxu0 %v5314
    %6340 = vmatpush1.bf16.msra.mxu0 %v5313
    %6341 = vmatprep.subr.bf16.mxu0 %v5322
    %6342 = vmatpush1.bf16.msra.mxu0 %v5321
    %6343 = vmatprep.subr.bf16.mxu0 %v5330
    %6344 = vmatpush1.bf16.msra.mxu0 %v5329
    %6345 = vmatprep.subr.bf16.mxu0 %v5338
    %6346 = vmatpush1.bf16.msra.mxu0 %v5337
    %6347 = vmatprep.subr.bf16.mxu0 %v5346
    %6348 = vmatpush1.bf16.msra.mxu0 %v5345
    %6349 = vmatprep.subr.bf16.mxu0 %v5354
    %6350 = vmatpush1.bf16.msra.mxu0 %v5353
    %6351 = vmatprep.subr.bf16.mxu0 %v5362
    %6352 = vmatpush1.bf16.msra.mxu0 %v5361
    %6353 = vmatprep.subr.bf16.mxu0 %v5370
    %6354 = vmatpush1.bf16.msra.mxu0 %v5369
    %6355 = vmatprep.subr.bf16.mxu0 %v5378
    %6356 = vmatpush1.bf16.msra.mxu0 %v5377
    %6357 = vmatprep.subr.bf16.mxu0 %v5386
    %6358 = vmatpush1.bf16.msra.mxu0 %v5385
    %6359 = vmatprep.subr.bf16.mxu0 %v5394
    %6360 = vmatpush1.bf16.msra.mxu0 %v5393
    %6361 = vmatprep.subr.bf16.mxu0 %v5402
    %6362 = vmatpush1.bf16.msra.mxu0 %v5401
    %6363 = vmatprep.subr.bf16.mxu0 %v5410
    %6364 = vmatpush1.bf16.msra.mxu0 %v5409
    %6365 = vmatprep.mubr.bf16.mxu0 %v4764
    %6366 = vmatmul.mubr.bf16.gmra.mrb[0].mxu0 %v4763
    %v6367 = vpop.f32.mrb[0].mxu0
    %v6368 = vadd.f32 %v6327, %v6367
    %v6369 = vpop.f32.mrb[0].mxu0
    %v6370 = vadd.f32 %v6329, %v6369
    %v6371 = vpop.f32.mrb[0].mxu0
    %v6372 = vpop.f32.mrb[0].mxu0
    %6373 = vdwg.mxu0
    %6374 = vmatprep.subr.bf16.mxu0 %v5418
    %6375 = vmatpush1.bf16.msra.mxu0 %v5417
    %6376 = vmatprep.subr.bf16.mxu0 %v5426
    %6377 = vmatpush1.bf16.msra.mxu0 %v5425
    %6378 = vmatprep.subr.bf16.mxu0 %v5434
    %6379 = vmatpush1.bf16.msra.mxu0 %v5433
    %6380 = vmatprep.subr.bf16.mxu0 %v5442
    %6381 = vmatpush1.bf16.msra.mxu0 %v5441
    %6382 = vmatprep.subr.bf16.mxu0 %v5450
    %6383 = vmatpush1.bf16.msra.mxu0 %v5449
    %6384 = vmatprep.subr.bf16.mxu0 %v5458
    %6385 = vmatpush1.bf16.msra.mxu0 %v5457
    %6386 = vmatprep.subr.bf16.mxu0 %v5466
    %6387 = vmatpush1.bf16.msra.mxu0 %v5465
    %6388 = vmatprep.subr.bf16.mxu0 %v5474
    %6389 = vmatpush1.bf16.msra.mxu0 %v5473
    %6390 = vmatprep.subr.bf16.mxu0 %v5482
    %6391 = vmatpush1.bf16.msra.mxu0 %v5481
    %6392 = vmatprep.subr.bf16.mxu0 %v5490
    %6393 = vmatpush1.bf16.msra.mxu0 %v5489
    %6394 = vmatprep.subr.bf16.mxu0 %v5498
    %6395 = vmatpush1.bf16.msra.mxu0 %v5497
    %6396 = vmatprep.subr.bf16.mxu0 %v5506
    %6397 = vmatpush1.bf16.msra.mxu0 %v5505
    %6398 = vmatprep.subr.bf16.mxu0 %v5514
    %6399 = vmatpush1.bf16.msra.mxu0 %v5513
    %6400 = vmatprep.subr.bf16.mxu0 %v5522
    %6401 = vmatpush1.bf16.msra.mxu0 %v5521
    %6402 = vmatprep.subr.bf16.mxu0 %v5530
    %6403 = vmatpush1.bf16.msra.mxu0 %v5529
    %6404 = vmatprep.subr.bf16.mxu0 %v5538
    %6405 = vmatpush1.bf16.msra.mxu0 %v5537
    %6406 = vmatprep.mubr.bf16.mxu0 %v4766
    %6407 = vmatmul.mubr.bf16.gmra.mrb[0].mxu0 %v4765
    %v6408 = vpop.f32.mrb[0].mxu0
    %v6409 = vadd.f32 %v6368, %v6408
    %v6410 = vpop.f32.mrb[0].mxu0
    %v6411 = vadd.f32 %v6370, %v6410
    %v6412 = vpop.f32.mrb[0].mxu0
    %v6413 = vpop.f32.mrb[0].mxu0
    %6414 = vdwg.mxu0
    %6415 = vmatprep.subr.bf16.mxu0 %v5546
    %6416 = vmatpush1.bf16.msra.mxu0 %v5545
    %6417 = vmatprep.subr.bf16.mxu0 %v5554
    %6418 = vmatpush1.bf16.msra.mxu0 %v5553
    %6419 = vmatprep.subr.bf16.mxu0 %v5562
    %6420 = vmatpush1.bf16.msra.mxu0 %v5561
    %6421 = vmatprep.subr.bf16.mxu0 %v5570
    %6422 = vmatpush1.bf16.msra.mxu0 %v5569
    %6423 = vmatprep.subr.bf16.mxu0 %v5578
    %6424 = vmatpush1.bf16.msra.mxu0 %v5577
    %6425 = vmatprep.subr.bf16.mxu0 %v5586
    %6426 = vmatpush1.bf16.msra.mxu0 %v5585
    %6427 = vmatprep.subr.bf16.mxu0 %v5594
    %6428 = vmatpush1.bf16.msra.mxu0 %v5593
    %6429 = vmatprep.subr.bf16.mxu0 %v5602
    %6430 = vmatpush1.bf16.msra.mxu0 %v5601
    %6431 = vmatprep.subr.bf16.mxu0 %v5610
    %6432 = vmatpush1.bf16.msra.mxu0 %v5609
    %6433 = vmatprep.subr.bf16.mxu0 %v5618
    %6434 = vmatpush1.bf16.msra.mxu0 %v5617
    %6435 = vmatprep.subr.bf16.mxu0 %v5626
    %6436 = vmatpush1.bf16.msra.mxu0 %v5625
    %6437 = vmatprep.subr.bf16.mxu0 %v5634
    %6438 = vmatpush1.bf16.msra.mxu0 %v5633
    %6439 = vmatprep.subr.bf16.mxu0 %v5642
    %6440 = vmatpush1.bf16.msra.mxu0 %v5641
    %6441 = vmatprep.subr.bf16.mxu0 %v5650
    %6442 = vmatpush1.bf16.msra.mxu0 %v5649
    %6443 = vmatprep.subr.bf16.mxu0 %v5658
    %6444 = vmatpush1.bf16.msra.mxu0 %v5657
    %6445 = vmatprep.subr.bf16.mxu0 %v5666
    %6446 = vmatpush1.bf16.msra.mxu0 %v5665
    %6447 = vmatprep.mubr.bf16.mxu0 %v4768
    %6448 = vmatmul.mubr.bf16.gmra.mrb[0].mxu0 %v4767
    %v6449 = vpop.f32.mrb[0].mxu0
    %v6450 = vadd.f32 %v6409, %v6449
    %v6451 = vpop.f32.mrb[0].mxu0
    %v6452 = vadd.f32 %v6411, %v6451
    %v6453 = vpop.f32.mrb[0].mxu0
    %v6454 = vpop.f32.mrb[0].mxu0
    %6455 = vdwg.mxu0
    %6456 = vmatprep.subr.bf16.mxu0 %v5674
    %6457 = vmatpush1.bf16.msra.mxu0 %v5673
    %6458 = vmatprep.subr.bf16.mxu0 %v5682
    %6459 = vmatpush1.bf16.msra.mxu0 %v5681
    %6460 = vmatprep.subr.bf16.mxu0 %v5690
    %6461 = vmatpush1.bf16.msra.mxu0 %v5689
    %6462 = vmatprep.subr.bf16.mxu0 %v5698
    %6463 = vmatpush1.bf16.msra.mxu0 %v5697
    %6464 = vmatprep.subr.bf16.mxu0 %v5706
    %6465 = vmatpush1.bf16.msra.mxu0 %v5705
    %6466 = vmatprep.subr.bf16.mxu0 %v5714
    %6467 = vmatpush1.bf16.msra.mxu0 %v5713
    %6468 = vmatprep.subr.bf16.mxu0 %v5722
    %6469 = vmatpush1.bf16.msra.mxu0 %v5721
    %6470 = vmatprep.subr.bf16.mxu0 %v5730
    %6471 = vmatpush1.bf16.msra.mxu0 %v5729
    %6472 = vmatprep.subr.bf16.mxu0 %v5738
    %6473 = vmatpush1.bf16.msra.mxu0 %v5737
    %6474 = vmatprep.subr.bf16.mxu0 %v5746
    %6475 = vmatpush1.bf16.msra.mxu0 %v5745
    %6476 = vmatprep.subr.bf16.mxu0 %v5754
    %6477 = vmatpush1.bf16.msra.mxu0 %v5753
    %6478 = vmatprep.subr.bf16.mxu0 %v5762
    %6479 = vmatpush1.bf16.msra.mxu0 %v5761
    %6480 = vmatprep.subr.bf16.mxu0 %v5770
    %6481 = vmatpush1.bf16.msra.mxu0 %v5769
    %6482 = vmatprep.subr.bf16.mxu0 %v5778
    %6483 = vmatpush1.bf16.msra.mxu0 %v5777
    %6484 = vmatprep.subr.bf16.mxu0 %v5786
    %6485 = vmatpush1.bf16.msra.mxu0 %v5785
    %6486 = vmatprep.subr.bf16.mxu0 %v5794
    %6487 = vmatpush1.bf16.msra.mxu0 %v5793
    %6488 = vmatprep.mubr.bf16.mxu0 %v4770
    %6489 = vmatmul.mubr.bf16.gmra.mrb[0].mxu0 %v4769
    %v6490 = vpop.f32.mrb[0].mxu0
    %v6491 = vadd.f32 %v6450, %v6490
    %v6492 = vpop.f32.mrb[0].mxu0
    %v6493 = vadd.f32 %v6452, %v6492
    %v6494 = vpop.f32.mrb[0].mxu0
    %v6495 = vpop.f32.mrb[0].mxu0
    %6496 = vdwg.mxu0
    %6497 = vmatprep.subr.bf16.mxu0 %v4780
    %6498 = vmatpush1.bf16.msra.mxu0 %v4779
    %6499 = vmatprep.subr.bf16.mxu0 %v4788
    %6500 = vmatpush1.bf16.msra.mxu0 %v4787
    %6501 = vmatprep.subr.bf16.mxu0 %v4796
    %6502 = vmatpush1.bf16.msra.mxu0 %v4795
    %6503 = vmatprep.subr.bf16.mxu0 %v4804
    %6504 = vmatpush1.bf16.msra.mxu0 %v4803
    %6505 = vmatprep.subr.bf16.mxu0 %v4812
    %6506 = vmatpush1.bf16.msra.mxu0 %v4811
    %6507 = vmatprep.subr.bf16.mxu0 %v4820
    %6508 = vmatpush1.bf16.msra.mxu0 %v4819
    %6509 = vmatprep.subr.bf16.mxu0 %v4828
    %6510 = vmatpush1.bf16.msra.mxu0 %v4827
    %6511 = vmatprep.subr.bf16.mxu0 %v4836
    %6512 = vmatpush1.bf16.msra.mxu0 %v4835
    %6513 = vmatprep.subr.bf16.mxu0 %v4844
    %6514 = vmatpush1.bf16.msra.mxu0 %v4843
    %6515 = vmatprep.subr.bf16.mxu0 %v4852
    %6516 = vmatpush1.bf16.msra.mxu0 %v4851
    %6517 = vmatprep.subr.bf16.mxu0 %v4860
    %6518 = vmatpush1.bf16.msra.mxu0 %v4859
    %6519 = vmatprep.subr.bf16.mxu0 %v4868
    %6520 = vmatpush1.bf16.msra.mxu0 %v4867
    %6521 = vmatprep.subr.bf16.mxu0 %v4876
    %6522 = vmatpush1.bf16.msra.mxu0 %v4875
    %6523 = vmatprep.subr.bf16.mxu0 %v4884
    %6524 = vmatpush1.bf16.msra.mxu0 %v4883
    %6525 = vmatprep.subr.bf16.mxu0 %v4892
    %6526 = vmatpush1.bf16.msra.mxu0 %v4891
    %6527 = vmatprep.subr.bf16.mxu0 %v4900
    %6528 = vmatpush1.bf16.msra.mxu0 %v4899
    %6529 = vmatprep.mubr.bf16.mxu0 %v4756
    %6530 = vmatmul.mubr.bf16.gmra.mrb[0].mxu0 %v4755
    %v6531 = vpop.f32.mrb[0].mxu0
    %v6532 = vadd.f32 %v5820, %v6531
    %v6533 = vpop.f32.mrb[0].mxu0
    %v6534 = vadd.f32 %v5824, %v6533
    %v6535 = vpop.f32.mrb[0].mxu0
    %v6536 = vpop.f32.mrb[0].mxu0
    %6537 = vdwg.mxu0
    %6538 = vmatprep.subr.bf16.mxu0 %v4908
    %6539 = vmatpush1.bf16.msra.mxu0 %v4907
    %6540 = vmatprep.subr.bf16.mxu0 %v4916
    %6541 = vmatpush1.bf16.msra.mxu0 %v4915
    %6542 = vmatprep.subr.bf16.mxu0 %v4924
    %6543 = vmatpush1.bf16.msra.mxu0 %v4923
    %6544 = vmatprep.subr.bf16.mxu0 %v4932
    %6545 = vmatpush1.bf16.msra.mxu0 %v4931
    %6546 = vmatprep.subr.bf16.mxu0 %v4940
    %6547 = vmatpush1.bf16.msra.mxu0 %v4939
    %6548 = vmatprep.subr.bf16.mxu0 %v4948
    %6549 = vmatpush1.bf16.msra.mxu0 %v4947
    %6550 = vmatprep.subr.bf16.mxu0 %v4956
    %6551 = vmatpush1.bf16.msra.mxu0 %v4955
    %6552 = vmatprep.subr.bf16.mxu0 %v4964
    %6553 = vmatpush1.bf16.msra.mxu0 %v4963
    %6554 = vmatprep.subr.bf16.mxu0 %v4972
    %6555 = vmatpush1.bf16.msra.mxu0 %v4971
    %6556 = vmatprep.subr.bf16.mxu0 %v4980
    %6557 = vmatpush1.bf16.msra.mxu0 %v4979
    %6558 = vmatprep.subr.bf16.mxu0 %v4988
    %6559 = vmatpush1.bf16.msra.mxu0 %v4987
    %6560 = vmatprep.subr.bf16.mxu0 %v4996
    %6561 = vmatpush1.bf16.msra.mxu0 %v4995
    %6562 = vmatprep.subr.bf16.mxu0 %v5004
    %6563 = vmatpush1.bf16.msra.mxu0 %v5003
    %6564 = vmatprep.subr.bf16.mxu0 %v5012
    %6565 = vmatpush1.bf16.msra.mxu0 %v5011
    %6566 = vmatprep.subr.bf16.mxu0 %v5020
    %6567 = vmatpush1.bf16.msra.mxu0 %v5019
    %6568 = vmatprep.subr.bf16.mxu0 %v5028
    %6569 = vmatpush1.bf16.msra.mxu0 %v5027
    %6570 = vmatprep.mubr.bf16.mxu0 %v4758
    %6571 = vmatmul.mubr.bf16.gmra.mrb[0].mxu0 %v4757
    %v6572 = vpop.f32.mrb[0].mxu0
    %v6573 = vadd.f32 %v6532, %v6572
    %v6574 = vpop.f32.mrb[0].mxu0
    %v6575 = vadd.f32 %v6534, %v6574
    %v6576 = vpop.f32.mrb[0].mxu0
    %v6577 = vpop.f32.mrb[0].mxu0
    %6578 = vdwg.mxu0
    %6579 = vmatprep.subr.bf16.mxu0 %v5036
    %6580 = vmatpush1.bf16.msra.mxu0 %v5035
    %6581 = vmatprep.subr.bf16.mxu0 %v5044
    %6582 = vmatpush1.bf16.msra.mxu0 %v5043
    %6583 = vmatprep.subr.bf16.mxu0 %v5052
    %6584 = vmatpush1.bf16.msra.mxu0 %v5051
    %6585 = vmatprep.subr.bf16.mxu0 %v5060
    %6586 = vmatpush1.bf16.msra.mxu0 %v5059
    %6587 = vmatprep.subr.bf16.mxu0 %v5068
    %6588 = vmatpush1.bf16.msra.mxu0 %v5067
    %6589 = vmatprep.subr.bf16.mxu0 %v5076
    %6590 = vmatpush1.bf16.msra.mxu0 %v5075
    %6591 = vmatprep.subr.bf16.mxu0 %v5084
    %6592 = vmatpush1.bf16.msra.mxu0 %v5083
    %6593 = vmatprep.subr.bf16.mxu0 %v5092
    %6594 = vmatpush1.bf16.msra.mxu0 %v5091
    %6595 = vmatprep.subr.bf16.mxu0 %v5100
    %6596 = vmatpush1.bf16.msra.mxu0 %v5099
    %6597 = vmatprep.subr.bf16.mxu0 %v5108
    %6598 = vmatpush1.bf16.msra.mxu0 %v5107
    %6599 = vmatprep.subr.bf16.mxu0 %v5116
    %6600 = vmatpush1.bf16.msra.mxu0 %v5115
    %6601 = vmatprep.subr.bf16.mxu0 %v5124
    %6602 = vmatpush1.bf16.msra.mxu0 %v5123
    %6603 = vmatprep.subr.bf16.mxu0 %v5132
    %6604 = vmatpush1.bf16.msra.mxu0 %v5131
    %6605 = vmatprep.subr.bf16.mxu0 %v5140
    %6606 = vmatpush1.bf16.msra.mxu0 %v5139
    %6607 = vmatprep.subr.bf16.mxu0 %v5148
    %6608 = vmatpush1.bf16.msra.mxu0 %v5147
    %6609 = vmatprep.subr.bf16.mxu0 %v5156
    %6610 = vmatpush1.bf16.msra.mxu0 %v5155
    %6611 = vmatprep.mubr.bf16.mxu0 %v4760
    %6612 = vmatmul.mubr.bf16.gmra.mrb[0].mxu0 %v4759
    %v6613 = vpop.f32.mrb[0].mxu0
    %v6614 = vadd.f32 %v6573, %v6613
    %v6615 = vpop.f32.mrb[0].mxu0
    %v6616 = vadd.f32 %v6575, %v6615
    %v6617 = vpop.f32.mrb[0].mxu0
    %v6618 = vpop.f32.mrb[0].mxu0
    %6619 = vdwg.mxu0
    %6620 = vmatprep.subr.bf16.mxu0 %v5164
    %6621 = vmatpush1.bf16.msra.mxu0 %v5163
    %6622 = vmatprep.subr.bf16.mxu0 %v5172
    %6623 = vmatpush1.bf16.msra.mxu0 %v5171
    %6624 = vmatprep.subr.bf16.mxu0 %v5180
    %6625 = vmatpush1.bf16.msra.mxu0 %v5179
    %6626 = vmatprep.subr.bf16.mxu0 %v5188
    %6627 = vmatpush1.bf16.msra.mxu0 %v5187
    %6628 = vmatprep.subr.bf16.mxu0 %v5196
    %6629 = vmatpush1.bf16.msra.mxu0 %v5195
    %6630 = vmatprep.subr.bf16.mxu0 %v5204
    %6631 = vmatpush1.bf16.msra.mxu0 %v5203
    %6632 = vmatprep.subr.bf16.mxu0 %v5212
    %6633 = vmatpush1.bf16.msra.mxu0 %v5211
    %6634 = vmatprep.subr.bf16.mxu0 %v5220
    %6635 = vmatpush1.bf16.msra.mxu0 %v5219
    %6636 = vmatprep.subr.bf16.mxu0 %v5228
    %6637 = vmatpush1.bf16.msra.mxu0 %v5227
    %6638 = vmatprep.subr.bf16.mxu0 %v5236
    %6639 = vmatpush1.bf16.msra.mxu0 %v5235
    %6640 = vmatprep.subr.bf16.mxu0 %v5244
    %6641 = vmatpush1.bf16.msra.mxu0 %v5243
    %6642 = vmatprep.subr.bf16.mxu0 %v5252
    %6643 = vmatpush1.bf16.msra.mxu0 %v5251
    %6644 = vmatprep.subr.bf16.mxu0 %v5260
    %6645 = vmatpush1.bf16.msra.mxu0 %v5259
    %6646 = vmatprep.subr.bf16.mxu0 %v5268
    %6647 = vmatpush1.bf16.msra.mxu0 %v5267
    %6648 = vmatprep.subr.bf16.mxu0 %v5276
    %6649 = vmatpush1.bf16.msra.mxu0 %v5275
    %6650 = vmatprep.subr.bf16.mxu0 %v5284
    %6651 = vmatpush1.bf16.msra.mxu0 %v5283
    %6652 = vmatprep.mubr.bf16.mxu0 %v4762
    %6653 = vmatmul.mubr.bf16.gmra.mrb[0].mxu0 %v4761
    %v6654 = vpop.f32.mrb[0].mxu0
    %v6655 = vadd.f32 %v6614, %v6654
    %v6656 = vpop.f32.mrb[0].mxu0
    %v6657 = vadd.f32 %v6616, %v6656
    %v6658 = vpop.f32.mrb[0].mxu0
    %v6659 = vpop.f32.mrb[0].mxu0
    %6660 = vdwg.mxu0
    %6661 = vmatprep.subr.bf16.mxu0 %v5292
    %6662 = vmatpush1.bf16.msra.mxu0 %v5291
    %6663 = vmatprep.subr.bf16.mxu0 %v5300
    %6664 = vmatpush1.bf16.msra.mxu0 %v5299
    %6665 = vmatprep.subr.bf16.mxu0 %v5308
    %6666 = vmatpush1.bf16.msra.mxu0 %v5307
    %6667 = vmatprep.subr.bf16.mxu0 %v5316
    %6668 = vmatpush1.bf16.msra.mxu0 %v5315
    %6669 = vmatprep.subr.bf16.mxu0 %v5324
    %6670 = vmatpush1.bf16.msra.mxu0 %v5323
    %6671 = vmatprep.subr.bf16.mxu0 %v5332
    %6672 = vmatpush1.bf16.msra.mxu0 %v5331
    %6673 = vmatprep.subr.bf16.mxu0 %v5340
    %6674 = vmatpush1.bf16.msra.mxu0 %v5339
    %6675 = vmatprep.subr.bf16.mxu0 %v5348
    %6676 = vmatpush1.bf16.msra.mxu0 %v5347
    %6677 = vmatprep.subr.bf16.mxu0 %v5356
    %6678 = vmatpush1.bf16.msra.mxu0 %v5355
    %6679 = vmatprep.subr.bf16.mxu0 %v5364
    %6680 = vmatpush1.bf16.msra.mxu0 %v5363
    %6681 = vmatprep.subr.bf16.mxu0 %v5372
    %6682 = vmatpush1.bf16.msra.mxu0 %v5371
    %6683 = vmatprep.subr.bf16.mxu0 %v5380
    %6684 = vmatpush1.bf16.msra.mxu0 %v5379
    %6685 = vmatprep.subr.bf16.mxu0 %v5388
    %6686 = vmatpush1.bf16.msra.mxu0 %v5387
    %6687 = vmatprep.subr.bf16.mxu0 %v5396
    %6688 = vmatpush1.bf16.msra.mxu0 %v5395
    %6689 = vmatprep.subr.bf16.mxu0 %v5404
    %6690 = vmatpush1.bf16.msra.mxu0 %v5403
    %6691 = vmatprep.subr.bf16.mxu0 %v5412
    %6692 = vmatpush1.bf16.msra.mxu0 %v5411
    %6693 = vmatprep.mubr.bf16.mxu0 %v4764
    %6694 = vmatmul.mubr.bf16.gmra.mrb[0].mxu0 %v4763
    %v6695 = vpop.f32.mrb[0].mxu0
    %v6696 = vadd.f32 %v6655, %v6695
    %v6697 = vpop.f32.mrb[0].mxu0
    %v6698 = vadd.f32 %v6657, %v6697
    %v6699 = vpop.f32.mrb[0].mxu0
    %v6700 = vpop.f32.mrb[0].mxu0
    %6701 = vdwg.mxu0
    %6702 = vmatprep.subr.bf16.mxu0 %v5420
    %6703 = vmatpush1.bf16.msra.mxu0 %v5419
    %6704 = vmatprep.subr.bf16.mxu0 %v5428
    %6705 = vmatpush1.bf16.msra.mxu0 %v5427
    %6706 = vmatprep.subr.bf16.mxu0 %v5436
    %6707 = vmatpush1.bf16.msra.mxu0 %v5435
    %6708 = vmatprep.subr.bf16.mxu0 %v5444
    %6709 = vmatpush1.bf16.msra.mxu0 %v5443
    %6710 = vmatprep.subr.bf16.mxu0 %v5452
    %6711 = vmatpush1.bf16.msra.mxu0 %v5451
    %6712 = vmatprep.subr.bf16.mxu0 %v5460
    %6713 = vmatpush1.bf16.msra.mxu0 %v5459
    %6714 = vmatprep.subr.bf16.mxu0 %v5468
    %6715 = vmatpush1.bf16.msra.mxu0 %v5467
    %6716 = vmatprep.subr.bf16.mxu0 %v5476
    %6717 = vmatpush1.bf16.msra.mxu0 %v5475
    %6718 = vmatprep.subr.bf16.mxu0 %v5484
    %6719 = vmatpush1.bf16.msra.mxu0 %v5483
    %6720 = vmatprep.subr.bf16.mxu0 %v5492
    %6721 = vmatpush1.bf16.msra.mxu0 %v5491
    %6722 = vmatprep.subr.bf16.mxu0 %v5500
    %6723 = vmatpush1.bf16.msra.mxu0 %v5499
    %6724 = vmatprep.subr.bf16.mxu0 %v5508
    %6725 = vmatpush1.bf16.msra.mxu0 %v5507
    %6726 = vmatprep.subr.bf16.mxu0 %v5516
    %6727 = vmatpush1.bf16.msra.mxu0 %v5515
    %6728 = vmatprep.subr.bf16.mxu0 %v5524
    %6729 = vmatpush1.bf16.msra.mxu0 %v5523
    %6730 = vmatprep.subr.bf16.mxu0 %v5532
    %6731 = vmatpush1.bf16.msra.mxu0 %v5531
    %6732 = vmatprep.subr.bf16.mxu0 %v5540
    %6733 = vmatpush1.bf16.msra.mxu0 %v5539
    %6734 = vmatprep.mubr.bf16.mxu0 %v4766
    %6735 = vmatmul.mubr.bf16.gmra.mrb[0].mxu0 %v4765
    %v6736 = vpop.f32.mrb[0].mxu0
    %v6737 = vadd.f32 %v6696, %v6736
    %v6738 = vpop.f32.mrb[0].mxu0
    %v6739 = vadd.f32 %v6698, %v6738
    %v6740 = vpop.f32.mrb[0].mxu0
    %v6741 = vpop.f32.mrb[0].mxu0
    %6742 = vdwg.mxu0
    %6743 = vmatprep.subr.bf16.mxu0 %v5548
    %6744 = vmatpush1.bf16.msra.mxu0 %v5547
    %6745 = vmatprep.subr.bf16.mxu0 %v5556
    %6746 = vmatpush1.bf16.msra.mxu0 %v5555
    %6747 = vmatprep.subr.bf16.mxu0 %v5564
    %6748 = vmatpush1.bf16.msra.mxu0 %v5563
    %6749 = vmatprep.subr.bf16.mxu0 %v5572
    %6750 = vmatpush1.bf16.msra.mxu0 %v5571
    %6751 = vmatprep.subr.bf16.mxu0 %v5580
    %6752 = vmatpush1.bf16.msra.mxu0 %v5579
    %6753 = vmatprep.subr.bf16.mxu0 %v5588
    %6754 = vmatpush1.bf16.msra.mxu0 %v5587
    %6755 = vmatprep.subr.bf16.mxu0 %v5596
    %6756 = vmatpush1.bf16.msra.mxu0 %v5595
    %6757 = vmatprep.subr.bf16.mxu0 %v5604
    %6758 = vmatpush1.bf16.msra.mxu0 %v5603
    %6759 = vmatprep.subr.bf16.mxu0 %v5612
    %6760 = vmatpush1.bf16.msra.mxu0 %v5611
    %6761 = vmatprep.subr.bf16.mxu0 %v5620
    %6762 = vmatpush1.bf16.msra.mxu0 %v5619
    %6763 = vmatprep.subr.bf16.mxu0 %v5628
    %6764 = vmatpush1.bf16.msra.mxu0 %v5627
    %6765 = vmatprep.subr.bf16.mxu0 %v5636
    %6766 = vmatpush1.bf16.msra.mxu0 %v5635
    %6767 = vmatprep.subr.bf16.mxu0 %v5644
    %6768 = vmatpush1.bf16.msra.mxu0 %v5643
    %6769 = vmatprep.subr.bf16.mxu0 %v5652
    %6770 = vmatpush1.bf16.msra.mxu0 %v5651
    %6771 = vmatprep.subr.bf16.mxu0 %v5660
    %6772 = vmatpush1.bf16.msra.mxu0 %v5659
    %6773 = vmatprep.subr.bf16.mxu0 %v5668
    %6774 = vmatpush1.bf16.msra.mxu0 %v5667
    %6775 = vmatprep.mubr.bf16.mxu0 %v4768
    %6776 = vmatmul.mubr.bf16.gmra.mrb[0].mxu0 %v4767
    %v6777 = vpop.f32.mrb[0].mxu0
    %v6778 = vadd.f32 %v6737, %v6777
    %v6779 = vpop.f32.mrb[0].mxu0
    %v6780 = vadd.f32 %v6739, %v6779
    %v6781 = vpop.f32.mrb[0].mxu0
    %v6782 = vpop.f32.mrb[0].mxu0
    %6783 = vdwg.mxu0
    %6784 = vmatprep.subr.bf16.mxu0 %v5676
    %6785 = vmatpush1.bf16.msra.mxu0 %v5675
    %6786 = vmatprep.subr.bf16.mxu0 %v5684
    %6787 = vmatpush1.bf16.msra.mxu0 %v5683
    %6788 = vmatprep.subr.bf16.mxu0 %v5692
    %6789 = vmatpush1.bf16.msra.mxu0 %v5691
    %6790 = vmatprep.subr.bf16.mxu0 %v5700
    %6791 = vmatpush1.bf16.msra.mxu0 %v5699
    %6792 = vmatprep.subr.bf16.mxu0 %v5708
    %6793 = vmatpush1.bf16.msra.mxu0 %v5707
    %6794 = vmatprep.subr.bf16.mxu0 %v5716
    %6795 = vmatpush1.bf16.msra.mxu0 %v5715
    %6796 = vmatprep.subr.bf16.mxu0 %v5724
    %6797 = vmatpush1.bf16.msra.mxu0 %v5723
    %6798 = vmatprep.subr.bf16.mxu0 %v5732
    %6799 = vmatpush1.bf16.msra.mxu0 %v5731
    %6800 = vmatprep.subr.bf16.mxu0 %v5740
    %6801 = vmatpush1.bf16.msra.mxu0 %v5739
    %6802 = vmatprep.subr.bf16.mxu0 %v5748
    %6803 = vmatpush1.bf16.msra.mxu0 %v5747
    %6804 = vmatprep.subr.bf16.mxu0 %v5756
    %6805 = vmatpush1.bf16.msra.mxu0 %v5755
    %6806 = vmatprep.subr.bf16.mxu0 %v5764
    %6807 = vmatpush1.bf16.msra.mxu0 %v5763
    %6808 = vmatprep.subr.bf16.mxu0 %v5772
    %6809 = vmatpush1.bf16.msra.mxu0 %v5771
    %6810 = vmatprep.subr.bf16.mxu0 %v5780
    %6811 = vmatpush1.bf16.msra.mxu0 %v5779
    %6812 = vmatprep.subr.bf16.mxu0 %v5788
    %6813 = vmatpush1.bf16.msra.mxu0 %v5787
    %6814 = vmatprep.subr.bf16.mxu0 %v5796
    %6815 = vmatpush1.bf16.msra.mxu0 %v5795
    %6816 = vmatprep.mubr.bf16.mxu0 %v4770
    %6817 = vmatmul.mubr.bf16.gmra.mrb[0].mxu0 %v4769
    %v6818 = vpop.f32.mrb[0].mxu0
    %v6819 = vadd.f32 %v6778, %v6818
    %v6820 = vpop.f32.mrb[0].mxu0
    %v6821 = vadd.f32 %v6780, %v6820
    %v6822 = vpop.f32.mrb[0].mxu0
    %v6823 = vpop.f32.mrb[0].mxu0
    %6824 = vdwg.mxu0
    %6825 = vmatprep.subr.bf16.mxu0 %v4782
    %6826 = vmatpush1.bf16.msra.mxu0 %v4781
    %6827 = vmatprep.subr.bf16.mxu0 %v4790
    %6828 = vmatpush1.bf16.msra.mxu0 %v4789
    %6829 = vmatprep.subr.bf16.mxu0 %v4798
    %6830 = vmatpush1.bf16.msra.mxu0 %v4797
    %6831 = vmatprep.subr.bf16.mxu0 %v4806
    %6832 = vmatpush1.bf16.msra.mxu0 %v4805
    %6833 = vmatprep.subr.bf16.mxu0 %v4814
    %6834 = vmatpush1.bf16.msra.mxu0 %v4813
    %6835 = vmatprep.subr.bf16.mxu0 %v4822
    %6836 = vmatpush1.bf16.msra.mxu0 %v4821
    %6837 = vmatprep.subr.bf16.mxu0 %v4830
    %6838 = vmatpush1.bf16.msra.mxu0 %v4829
    %6839 = vmatprep.subr.bf16.mxu0 %v4838
    %6840 = vmatpush1.bf16.msra.mxu0 %v4837
    %6841 = vmatprep.subr.bf16.mxu0 %v4846
    %6842 = vmatpush1.bf16.msra.mxu0 %v4845
    %6843 = vmatprep.subr.bf16.mxu0 %v4854
    %6844 = vmatpush1.bf16.msra.mxu0 %v4853
    %6845 = vmatprep.subr.bf16.mxu0 %v4862
    %6846 = vmatpush1.bf16.msra.mxu0 %v4861
    %6847 = vmatprep.subr.bf16.mxu0 %v4870
    %6848 = vmatpush1.bf16.msra.mxu0 %v4869
    %6849 = vmatprep.subr.bf16.mxu0 %v4878
    %6850 = vmatpush1.bf16.msra.mxu0 %v4877
    %6851 = vmatprep.subr.bf16.mxu0 %v4886
    %6852 = vmatpush1.bf16.msra.mxu0 %v4885
    %6853 = vmatprep.subr.bf16.mxu0 %v4894
    %6854 = vmatpush1.bf16.msra.mxu0 %v4893
    %6855 = vmatprep.subr.bf16.mxu0 %v4902
    %6856 = vmatpush1.bf16.msra.mxu0 %v4901
    %6857 = vmatprep.mubr.bf16.mxu0 %v4756
    %6858 = vmatmul.mubr.bf16.gmra.mrb[0].mxu0 %v4755
    %v6859 = vpop.f32.mrb[0].mxu0
    %v6860 = vadd.f32 %v5828, %v6859
    %v6861 = vpop.f32.mrb[0].mxu0
    %v6862 = vadd.f32 %v5832, %v6861
    %v6863 = vpop.f32.mrb[0].mxu0
    %v6864 = vpop.f32.mrb[0].mxu0
    %6865 = vdwg.mxu0
    %6866 = vmatprep.subr.bf16.mxu0 %v4910
    %6867 = vmatpush1.bf16.msra.mxu0 %v4909
    %6868 = vmatprep.subr.bf16.mxu0 %v4918
    %6869 = vmatpush1.bf16.msra.mxu0 %v4917
    %6870 = vmatprep.subr.bf16.mxu0 %v4926
    %6871 = vmatpush1.bf16.msra.mxu0 %v4925
    %6872 = vmatprep.subr.bf16.mxu0 %v4934
    %6873 = vmatpush1.bf16.msra.mxu0 %v4933
    %6874 = vmatprep.subr.bf16.mxu0 %v4942
    %6875 = vmatpush1.bf16.msra.mxu0 %v4941
    %6876 = vmatprep.subr.bf16.mxu0 %v4950
    %6877 = vmatpush1.bf16.msra.mxu0 %v4949
    %6878 = vmatprep.subr.bf16.mxu0 %v4958
    %6879 = vmatpush1.bf16.msra.mxu0 %v4957
    %6880 = vmatprep.subr.bf16.mxu0 %v4966
    %6881 = vmatpush1.bf16.msra.mxu0 %v4965
    %6882 = vmatprep.subr.bf16.mxu0 %v4974
    %6883 = vmatpush1.bf16.msra.mxu0 %v4973
    %6884 = vmatprep.subr.bf16.mxu0 %v4982
    %6885 = vmatpush1.bf16.msra.mxu0 %v4981
    %6886 = vmatprep.subr.bf16.mxu0 %v4990
    %6887 = vmatpush1.bf16.msra.mxu0 %v4989
    %6888 = vmatprep.subr.bf16.mxu0 %v4998
    %6889 = vmatpush1.bf16.msra.mxu0 %v4997
    %6890 = vmatprep.subr.bf16.mxu0 %v5006
    %6891 = vmatpush1.bf16.msra.mxu0 %v5005
    %6892 = vmatprep.subr.bf16.mxu0 %v5014
    %6893 = vmatpush1.bf16.msra.mxu0 %v5013
    %6894 = vmatprep.subr.bf16.mxu0 %v5022
    %6895 = vmatpush1.bf16.msra.mxu0 %v5021
    %6896 = vmatprep.subr.bf16.mxu0 %v5030
    %6897 = vmatpush1.bf16.msra.mxu0 %v5029
    %6898 = vmatprep.mubr.bf16.mxu0 %v4758
    %6899 = vmatmul.mubr.bf16.gmra.mrb[0].mxu0 %v4757
    %v6900 = vpop.f32.mrb[0].mxu0
    %v6901 = vadd.f32 %v6860, %v6900
    %v6902 = vpop.f32.mrb[0].mxu0
    %v6903 = vadd.f32 %v6862, %v6902
    %v6904 = vpop.f32.mrb[0].mxu0
    %v6905 = vpop.f32.mrb[0].mxu0
    %6906 = vdwg.mxu0
    %6907 = vmatprep.subr.bf16.mxu0 %v5038
    %6908 = vmatpush1.bf16.msra.mxu0 %v5037
    %6909 = vmatprep.subr.bf16.mxu0 %v5046
    %6910 = vmatpush1.bf16.msra.mxu0 %v5045
    %6911 = vmatprep.subr.bf16.mxu0 %v5054
    %6912 = vmatpush1.bf16.msra.mxu0 %v5053
    %6913 = vmatprep.subr.bf16.mxu0 %v5062
    %6914 = vmatpush1.bf16.msra.mxu0 %v5061
    %6915 = vmatprep.subr.bf16.mxu0 %v5070
    %6916 = vmatpush1.bf16.msra.mxu0 %v5069
    %6917 = vmatprep.subr.bf16.mxu0 %v5078
    %6918 = vmatpush1.bf16.msra.mxu0 %v5077
    %6919 = vmatprep.subr.bf16.mxu0 %v5086
    %6920 = vmatpush1.bf16.msra.mxu0 %v5085
    %6921 = vmatprep.subr.bf16.mxu0 %v5094
    %6922 = vmatpush1.bf16.msra.mxu0 %v5093
    %6923 = vmatprep.subr.bf16.mxu0 %v5102
    %6924 = vmatpush1.bf16.msra.mxu0 %v5101
    %6925 = vmatprep.subr.bf16.mxu0 %v5110
    %6926 = vmatpush1.bf16.msra.mxu0 %v5109
    %6927 = vmatprep.subr.bf16.mxu0 %v5118
    %6928 = vmatpush1.bf16.msra.mxu0 %v5117
    %6929 = vmatprep.subr.bf16.mxu0 %v5126
    %6930 = vmatpush1.bf16.msra.mxu0 %v5125
    %6931 = vmatprep.subr.bf16.mxu0 %v5134
    %6932 = vmatpush1.bf16.msra.mxu0 %v5133
    %6933 = vmatprep.subr.bf16.mxu0 %v5142
    %6934 = vmatpush1.bf16.msra.mxu0 %v5141
    %6935 = vmatprep.subr.bf16.mxu0 %v5150
    %6936 = vmatpush1.bf16.msra.mxu0 %v5149
    %6937 = vmatprep.subr.bf16.mxu0 %v5158
    %6938 = vmatpush1.bf16.msra.mxu0 %v5157
    %6939 = vmatprep.mubr.bf16.mxu0 %v4760
    %6940 = vmatmul.mubr.bf16.gmra.mrb[0].mxu0 %v4759
    %v6941 = vpop.f32.mrb[0].mxu0
    %v6942 = vadd.f32 %v6901, %v6941
    %v6943 = vpop.f32.mrb[0].mxu0
    %v6944 = vadd.f32 %v6903, %v6943
    %v6945 = vpop.f32.mrb[0].mxu0
    %v6946 = vpop.f32.mrb[0].mxu0
    %6947 = vdwg.mxu0
    %6948 = vmatprep.subr.bf16.mxu0 %v5166
    %6949 = vmatpush1.bf16.msra.mxu0 %v5165
    %6950 = vmatprep.subr.bf16.mxu0 %v5174
    %6951 = vmatpush1.bf16.msra.mxu0 %v5173
    %6952 = vmatprep.subr.bf16.mxu0 %v5182
    %6953 = vmatpush1.bf16.msra.mxu0 %v5181
    %6954 = vmatprep.subr.bf16.mxu0 %v5190
    %6955 = vmatpush1.bf16.msra.mxu0 %v5189
    %6956 = vmatprep.subr.bf16.mxu0 %v5198
    %6957 = vmatpush1.bf16.msra.mxu0 %v5197
    %6958 = vmatprep.subr.bf16.mxu0 %v5206
    %6959 = vmatpush1.bf16.msra.mxu0 %v5205
    %6960 = vmatprep.subr.bf16.mxu0 %v5214
    %6961 = vmatpush1.bf16.msra.mxu0 %v5213
    %6962 = vmatprep.subr.bf16.mxu0 %v5222
    %6963 = vmatpush1.bf16.msra.mxu0 %v5221
    %6964 = vmatprep.subr.bf16.mxu0 %v5230
    %6965 = vmatpush1.bf16.msra.mxu0 %v5229
    %6966 = vmatprep.subr.bf16.mxu0 %v5238
    %6967 = vmatpush1.bf16.msra.mxu0 %v5237
    %6968 = vmatprep.subr.bf16.mxu0 %v5246
    %6969 = vmatpush1.bf16.msra.mxu0 %v5245
    %6970 = vmatprep.subr.bf16.mxu0 %v5254
    %6971 = vmatpush1.bf16.msra.mxu0 %v5253
    %6972 = vmatprep.subr.bf16.mxu0 %v5262
    %6973 = vmatpush1.bf16.msra.mxu0 %v5261
    %6974 = vmatprep.subr.bf16.mxu0 %v5270
    %6975 = vmatpush1.bf16.msra.mxu0 %v5269
    %6976 = vmatprep.subr.bf16.mxu0 %v5278
    %6977 = vmatpush1.bf16.msra.mxu0 %v5277
    %6978 = vmatprep.subr.bf16.mxu0 %v5286
    %6979 = vmatpush1.bf16.msra.mxu0 %v5285
    %6980 = vmatprep.mubr.bf16.mxu0 %v4762
    %6981 = vmatmul.mubr.bf16.gmra.mrb[0].mxu0 %v4761
    %v6982 = vpop.f32.mrb[0].mxu0
    %v6983 = vadd.f32 %v6942, %v6982
    %v6984 = vpop.f32.mrb[0].mxu0
    %v6985 = vadd.f32 %v6944, %v6984
    %v6986 = vpop.f32.mrb[0].mxu0
    %v6987 = vpop.f32.mrb[0].mxu0
    %6988 = vdwg.mxu0
    %6989 = vmatprep.subr.bf16.mxu0 %v5294
    %6990 = vmatpush1.bf16.msra.mxu0 %v5293
    %6991 = vmatprep.subr.bf16.mxu0 %v5302
    %6992 = vmatpush1.bf16.msra.mxu0 %v5301
    %6993 = vmatprep.subr.bf16.mxu0 %v5310
    %6994 = vmatpush1.bf16.msra.mxu0 %v5309
    %6995 = vmatprep.subr.bf16.mxu0 %v5318
    %6996 = vmatpush1.bf16.msra.mxu0 %v5317
    %6997 = vmatprep.subr.bf16.mxu0 %v5326
    %6998 = vmatpush1.bf16.msra.mxu0 %v5325
    %6999 = vmatprep.subr.bf16.mxu0 %v5334
    %7000 = vmatpush1.bf16.msra.mxu0 %v5333
    %7001 = vmatprep.subr.bf16.mxu0 %v5342
    %7002 = vmatpush1.bf16.msra.mxu0 %v5341
    %7003 = vmatprep.subr.bf16.mxu0 %v5350
    %7004 = vmatpush1.bf16.msra.mxu0 %v5349
    %7005 = vmatprep.subr.bf16.mxu0 %v5358
    %7006 = vmatpush1.bf16.msra.mxu0 %v5357
    %7007 = vmatprep.subr.bf16.mxu0 %v5366
    %7008 = vmatpush1.bf16.msra.mxu0 %v5365
    %7009 = vmatprep.subr.bf16.mxu0 %v5374
    %7010 = vmatpush1.bf16.msra.mxu0 %v5373
    %7011 = vmatprep.subr.bf16.mxu0 %v5382
    %7012 = vmatpush1.bf16.msra.mxu0 %v5381
    %7013 = vmatprep.subr.bf16.mxu0 %v5390
    %7014 = vmatpush1.bf16.msra.mxu0 %v5389
    %7015 = vmatprep.subr.bf16.mxu0 %v5398
    %7016 = vmatpush1.bf16.msra.mxu0 %v5397
    %7017 = vmatprep.subr.bf16.mxu0 %v5406
    %7018 = vmatpush1.bf16.msra.mxu0 %v5405
    %7019 = vmatprep.subr.bf16.mxu0 %v5414
    %7020 = vmatpush1.bf16.msra.mxu0 %v5413
    %7021 = vmatprep.mubr.bf16.mxu0 %v4764
    %7022 = vmatmul.mubr.bf16.gmra.mrb[0].mxu0 %v4763
    %v7023 = vpop.f32.mrb[0].mxu0
    %v7024 = vadd.f32 %v6983, %v7023
    %v7025 = vpop.f32.mrb[0].mxu0
    %v7026 = vadd.f32 %v6985, %v7025
    %v7027 = vpop.f32.mrb[0].mxu0
    %v7028 = vpop.f32.mrb[0].mxu0
    %7029 = vdwg.mxu0
    %7030 = vmatprep.subr.bf16.mxu0 %v5422
    %7031 = vmatpush1.bf16.msra.mxu0 %v5421
    %7032 = vmatprep.subr.bf16.mxu0 %v5430
    %7033 = vmatpush1.bf16.msra.mxu0 %v5429
    %7034 = vmatprep.subr.bf16.mxu0 %v5438
    %7035 = vmatpush1.bf16.msra.mxu0 %v5437
    %7036 = vmatprep.subr.bf16.mxu0 %v5446
    %7037 = vmatpush1.bf16.msra.mxu0 %v5445
    %7038 = vmatprep.subr.bf16.mxu0 %v5454
    %7039 = vmatpush1.bf16.msra.mxu0 %v5453
    %7040 = vmatprep.subr.bf16.mxu0 %v5462
    %7041 = vmatpush1.bf16.msra.mxu0 %v5461
    %7042 = vmatprep.subr.bf16.mxu0 %v5470
    %7043 = vmatpush1.bf16.msra.mxu0 %v5469
    %7044 = vmatprep.subr.bf16.mxu0 %v5478
    %7045 = vmatpush1.bf16.msra.mxu0 %v5477
    %7046 = vmatprep.subr.bf16.mxu0 %v5486
    %7047 = vmatpush1.bf16.msra.mxu0 %v5485
    %7048 = vmatprep.subr.bf16.mxu0 %v5494
    %7049 = vmatpush1.bf16.msra.mxu0 %v5493
    %7050 = vmatprep.subr.bf16.mxu0 %v5502
    %7051 = vmatpush1.bf16.msra.mxu0 %v5501
    %7052 = vmatprep.subr.bf16.mxu0 %v5510
    %7053 = vmatpush1.bf16.msra.mxu0 %v5509
    %7054 = vmatprep.subr.bf16.mxu0 %v5518
    %7055 = vmatpush1.bf16.msra.mxu0 %v5517
    %7056 = vmatprep.subr.bf16.mxu0 %v5526
    %7057 = vmatpush1.bf16.msra.mxu0 %v5525
    %7058 = vmatprep.subr.bf16.mxu0 %v5534
    %7059 = vmatpush1.bf16.msra.mxu0 %v5533
    %7060 = vmatprep.subr.bf16.mxu0 %v5542
    %7061 = vmatpush1.bf16.msra.mxu0 %v5541
    %7062 = vmatprep.mubr.bf16.mxu0 %v4766
    %7063 = vmatmul.mubr.bf16.gmra.mrb[0].mxu0 %v4765
    %v7064 = vpop.f32.mrb[0].mxu0
    %v7065 = vadd.f32 %v7024, %v7064
    %v7066 = vpop.f32.mrb[0].mxu0
    %v7067 = vadd.f32 %v7026, %v7066
    %v7068 = vpop.f32.mrb[0].mxu0
    %v7069 = vpop.f32.mrb[0].mxu0
    %7070 = vdwg.mxu0
    %7071 = vmatprep.subr.bf16.mxu0 %v5550
    %7072 = vmatpush1.bf16.msra.mxu0 %v5549
    %7073 = vmatprep.subr.bf16.mxu0 %v5558
    %7074 = vmatpush1.bf16.msra.mxu0 %v5557
    %7075 = vmatprep.subr.bf16.mxu0 %v5566
    %7076 = vmatpush1.bf16.msra.mxu0 %v5565
    %7077 = vmatprep.subr.bf16.mxu0 %v5574
    %7078 = vmatpush1.bf16.msra.mxu0 %v5573
    %7079 = vmatprep.subr.bf16.mxu0 %v5582
    %7080 = vmatpush1.bf16.msra.mxu0 %v5581
    %7081 = vmatprep.subr.bf16.mxu0 %v5590
    %7082 = vmatpush1.bf16.msra.mxu0 %v5589
    %7083 = vmatprep.subr.bf16.mxu0 %v5598
    %7084 = vmatpush1.bf16.msra.mxu0 %v5597
    %7085 = vmatprep.subr.bf16.mxu0 %v5606
    %7086 = vmatpush1.bf16.msra.mxu0 %v5605
    %7087 = vmatprep.subr.bf16.mxu0 %v5614
    %7088 = vmatpush1.bf16.msra.mxu0 %v5613
    %7089 = vmatprep.subr.bf16.mxu0 %v5622
    %7090 = vmatpush1.bf16.msra.mxu0 %v5621
    %7091 = vmatprep.subr.bf16.mxu0 %v5630
    %7092 = vmatpush1.bf16.msra.mxu0 %v5629
    %7093 = vmatprep.subr.bf16.mxu0 %v5638
    %7094 = vmatpush1.bf16.msra.mxu0 %v5637
    %7095 = vmatprep.subr.bf16.mxu0 %v5646
    %7096 = vmatpush1.bf16.msra.mxu0 %v5645
    %7097 = vmatprep.subr.bf16.mxu0 %v5654
    %7098 = vmatpush1.bf16.msra.mxu0 %v5653
    %7099 = vmatprep.subr.bf16.mxu0 %v5662
    %7100 = vmatpush1.bf16.msra.mxu0 %v5661
    %7101 = vmatprep.subr.bf16.mxu0 %v5670
    %7102 = vmatpush1.bf16.msra.mxu0 %v5669
    %7103 = vmatprep.mubr.bf16.mxu0 %v4768
    %7104 = vmatmul.mubr.bf16.gmra.mrb[0].mxu0 %v4767
    %v7105 = vpop.f32.mrb[0].mxu0
    %v7106 = vadd.f32 %v7065, %v7105
    %v7107 = vpop.f32.mrb[0].mxu0
    %v7108 = vadd.f32 %v7067, %v7107
    %v7109 = vpop.f32.mrb[0].mxu0
    %v7110 = vpop.f32.mrb[0].mxu0
    %7111 = vdwg.mxu0
    %7112 = vmatprep.subr.bf16.mxu0 %v5678
    %7113 = vmatpush1.bf16.msra.mxu0 %v5677
    %7114 = vmatprep.subr.bf16.mxu0 %v5686
    %7115 = vmatpush1.bf16.msra.mxu0 %v5685
    %7116 = vmatprep.subr.bf16.mxu0 %v5694
    %7117 = vmatpush1.bf16.msra.mxu0 %v5693
    %7118 = vmatprep.subr.bf16.mxu0 %v5702
    %7119 = vmatpush1.bf16.msra.mxu0 %v5701
    %7120 = vmatprep.subr.bf16.mxu0 %v5710
    %7121 = vmatpush1.bf16.msra.mxu0 %v5709
    %7122 = vmatprep.subr.bf16.mxu0 %v5718
    %7123 = vmatpush1.bf16.msra.mxu0 %v5717
    %7124 = vmatprep.subr.bf16.mxu0 %v5726
    %7125 = vmatpush1.bf16.msra.mxu0 %v5725
    %7126 = vmatprep.subr.bf16.mxu0 %v5734
    %7127 = vmatpush1.bf16.msra.mxu0 %v5733
    %7128 = vmatprep.subr.bf16.mxu0 %v5742
    %7129 = vmatpush1.bf16.msra.mxu0 %v5741
    %7130 = vmatprep.subr.bf16.mxu0 %v5750
    %7131 = vmatpush1.bf16.msra.mxu0 %v5749
    %7132 = vmatprep.subr.bf16.mxu0 %v5758
    %7133 = vmatpush1.bf16.msra.mxu0 %v5757
    %7134 = vmatprep.subr.bf16.mxu0 %v5766
    %7135 = vmatpush1.bf16.msra.mxu0 %v5765
    %7136 = vmatprep.subr.bf16.mxu0 %v5774
    %7137 = vmatpush1.bf16.msra.mxu0 %v5773
    %7138 = vmatprep.subr.bf16.mxu0 %v5782
    %7139 = vmatpush1.bf16.msra.mxu0 %v5781
    %7140 = vmatprep.subr.bf16.mxu0 %v5790
    %7141 = vmatpush1.bf16.msra.mxu0 %v5789
    %7142 = vmatprep.subr.bf16.mxu0 %v5798
    %7143 = vmatpush1.bf16.msra.mxu0 %v5797
    %7144 = vmatprep.mubr.bf16.mxu0 %v4770
    %7145 = vmatmul.mubr.bf16.gmra.mrb[0].mxu0 %v4769
    %v7146 = vpop.f32.mrb[0].mxu0
    %v7147 = vadd.f32 %v7106, %v7146
    %v7148 = vpop.f32.mrb[0].mxu0
    %v7149 = vadd.f32 %v7108, %v7148
    %v7150 = vpop.f32.mrb[0].mxu0
    %v7151 = vpop.f32.mrb[0].mxu0
    %7152 = vdwg.mxu0
    %v7153 = vmax.f32 %v6163, 0.0
    %v7154 = vmax.f32 %v6165, 0.0
    %v7155 = vmax.f32 %v6491, 0.0
    %v7156 = vmax.f32 %v6493, 0.0
    %v7157 = vmax.f32 %v6819, 0.0
    %v7158 = vmax.f32 %v6821, 0.0
    %v7159 = vmax.f32 %v7147, 0.0
    %v7160 = vmax.f32 %v7149, 0.0
    %s7161 = smul.u32 4, 128
    %s7162 = smul.u32 %s7161, 4
    %s7163 = sshll.u32 %s7162, 4
    %7164 = dma.done %s259, %s7163
    %v7165 = vpack.c.bf16 %v7153, %v7153
    %v7166 = vpack.c.bf16 %v7154, %v7154
    %v7167 = vpack.c.bf16 %v7155, %v7155
    %v7168 = vpack.c.bf16 %v7156, %v7156
    %v7169 = vpack.c.bf16 %v7157, %v7157
    %v7170 = vpack.c.bf16 %v7158, %v7158
    %v7171 = vpack.c.bf16 %v7159, %v7159
    %v7172 = vpack.c.bf16 %v7160, %v7160
    %v7173 = vld [vmem:[#allocation5] sm:$0xff]
    %v7174 = vld [vmem:[#allocation5 + $0x8] sm:$0xff]
    %v7175 = vld [vmem:[#allocation5 + $0x10] sm:$0xff]
    %v7176 = vld [vmem:[#allocation5 + $0x18] sm:$0xff]
    %v7177 = vld [vmem:[#allocation5 + $0x20] sm:$0xff]
    %v7178 = vld [vmem:[#allocation5 + $0x28] sm:$0xff]
    %v7179 = vld [vmem:[#allocation5 + $0x30] sm:$0xff]
    %v7180 = vld [vmem:[#allocation5 + $0x38] sm:$0xff]
    %v7181 = vld [vmem:[#allocation5 + $0x40] sm:$0xff]
    %v7182 = vld [vmem:[#allocation5 + $0x48] sm:$0xff]
    %v7183 = vld [vmem:[#allocation5 + $0x50] sm:$0xff]
    %v7184 = vld [vmem:[#allocation5 + $0x58] sm:$0xff]
    %v7185 = vld [vmem:[#allocation5 + $0x60] sm:$0xff]
    %v7186 = vld [vmem:[#allocation5 + $0x68] sm:$0xff]
    %v7187 = vld [vmem:[#allocation5 + $0x70] sm:$0xff]
    %v7188 = vld [vmem:[#allocation5 + $0x78] sm:$0xff]
    %v7189 = vld [vmem:[#allocation5 + $0x80] sm:$0xff]
    %v7190 = vld [vmem:[#allocation5 + $0x88] sm:$0xff]
    %v7191 = vld [vmem:[#allocation5 + $0x90] sm:$0xff]
    %v7192 = vld [vmem:[#allocation5 + $0x98] sm:$0xff]
    %v7193 = vld [vmem:[#allocation5 + $0xa0] sm:$0xff]
    %v7194 = vld [vmem:[#allocation5 + $0xa8] sm:$0xff]
    %v7195 = vld [vmem:[#allocation5 + $0xb0] sm:$0xff]
    %v7196 = vld [vmem:[#allocation5 + $0xb8] sm:$0xff]
    %v7197 = vld [vmem:[#allocation5 + $0xc0] sm:$0xff]
    %v7198 = vld [vmem:[#allocation5 + $0xc8] sm:$0xff]
    %v7199 = vld [vmem:[#allocation5 + $0xd0] sm:$0xff]
    %v7200 = vld [vmem:[#allocation5 + $0xd8] sm:$0xff]
    %v7201 = vld [vmem:[#allocation5 + $0xe0] sm:$0xff]
    %v7202 = vld [vmem:[#allocation5 + $0xe8] sm:$0xff]
    %v7203 = vld [vmem:[#allocation5 + $0xf0] sm:$0xff]
    %v7204 = vld [vmem:[#allocation5 + $0xf8] sm:$0xff]
    %v7205 = vld [vmem:[#allocation5 + $0x100] sm:$0xff]
    %v7206 = vld [vmem:[#allocation5 + $0x108] sm:$0xff]
    %v7207 = vld [vmem:[#allocation5 + $0x110] sm:$0xff]
    %v7208 = vld [vmem:[#allocation5 + $0x118] sm:$0xff]
    %v7209 = vld [vmem:[#allocation5 + $0x120] sm:$0xff]
    %v7210 = vld [vmem:[#allocation5 + $0x128] sm:$0xff]
    %v7211 = vld [vmem:[#allocation5 + $0x130] sm:$0xff]
    %v7212 = vld [vmem:[#allocation5 + $0x138] sm:$0xff]
    %v7213 = vld [vmem:[#allocation5 + $0x140] sm:$0xff]
    %v7214 = vld [vmem:[#allocation5 + $0x148] sm:$0xff]
    %v7215 = vld [vmem:[#allocation5 + $0x150] sm:$0xff]
    %v7216 = vld [vmem:[#allocation5 + $0x158] sm:$0xff]
    %v7217 = vld [vmem:[#allocation5 + $0x160] sm:$0xff]
    %v7218 = vld [vmem:[#allocation5 + $0x168] sm:$0xff]
    %v7219 = vld [vmem:[#allocation5 + $0x170] sm:$0xff]
    %v7220 = vld [vmem:[#allocation5 + $0x178] sm:$0xff]
    %v7221 = vld [vmem:[#allocation5 + $0x180] sm:$0xff]
    %v7222 = vld [vmem:[#allocation5 + $0x188] sm:$0xff]
    %v7223 = vld [vmem:[#allocation5 + $0x190] sm:$0xff]
    %v7224 = vld [vmem:[#allocation5 + $0x198] sm:$0xff]
    %v7225 = vld [vmem:[#allocation5 + $0x1a0] sm:$0xff]
    %v7226 = vld [vmem:[#allocation5 + $0x1a8] sm:$0xff]
    %v7227 = vld [vmem:[#allocation5 + $0x1b0] sm:$0xff]
    %v7228 = vld [vmem:[#allocation5 + $0x1b8] sm:$0xff]
    %v7229 = vld [vmem:[#allocation5 + $0x1c0] sm:$0xff]
    %v7230 = vld [vmem:[#allocation5 + $0x1c8] sm:$0xff]
    %v7231 = vld [vmem:[#allocation5 + $0x1d0] sm:$0xff]
    %v7232 = vld [vmem:[#allocation5 + $0x1d8] sm:$0xff]
    %v7233 = vld [vmem:[#allocation5 + $0x1e0] sm:$0xff]
    %v7234 = vld [vmem:[#allocation5 + $0x1e8] sm:$0xff]
    %v7235 = vld [vmem:[#allocation5 + $0x1f0] sm:$0xff]
    %v7236 = vld [vmem:[#allocation5 + $0x1f8] sm:$0xff]
    %v7237 = vld [vmem:[#allocation5 + $0x200] sm:$0xff]
    %v7238 = vld [vmem:[#allocation5 + $0x208] sm:$0xff]
    %v7239 = vld [vmem:[#allocation5 + $0x210] sm:$0xff]
    %v7240 = vld [vmem:[#allocation5 + $0x218] sm:$0xff]
    %v7241 = vld [vmem:[#allocation5 + $0x220] sm:$0xff]
    %v7242 = vld [vmem:[#allocation5 + $0x228] sm:$0xff]
    %v7243 = vld [vmem:[#allocation5 + $0x230] sm:$0xff]
    %v7244 = vld [vmem:[#allocation5 + $0x238] sm:$0xff]
    %v7245 = vld [vmem:[#allocation5 + $0x240] sm:$0xff]
    %v7246 = vld [vmem:[#allocation5 + $0x248] sm:$0xff]
    %v7247 = vld [vmem:[#allocation5 + $0x250] sm:$0xff]
    %v7248 = vld [vmem:[#allocation5 + $0x258] sm:$0xff]
    %v7249 = vld [vmem:[#allocation5 + $0x260] sm:$0xff]
    %v7250 = vld [vmem:[#allocation5 + $0x268] sm:$0xff]
    %v7251 = vld [vmem:[#allocation5 + $0x270] sm:$0xff]
    %v7252 = vld [vmem:[#allocation5 + $0x278] sm:$0xff]
    %v7253 = vld [vmem:[#allocation5 + $0x280] sm:$0xff]
    %v7254 = vld [vmem:[#allocation5 + $0x288] sm:$0xff]
    %v7255 = vld [vmem:[#allocation5 + $0x290] sm:$0xff]
    %v7256 = vld [vmem:[#allocation5 + $0x298] sm:$0xff]
    %v7257 = vld [vmem:[#allocation5 + $0x2a0] sm:$0xff]
    %v7258 = vld [vmem:[#allocation5 + $0x2a8] sm:$0xff]
    %v7259 = vld [vmem:[#allocation5 + $0x2b0] sm:$0xff]
    %v7260 = vld [vmem:[#allocation5 + $0x2b8] sm:$0xff]
    %v7261 = vld [vmem:[#allocation5 + $0x2c0] sm:$0xff]
    %v7262 = vld [vmem:[#allocation5 + $0x2c8] sm:$0xff]
    %v7263 = vld [vmem:[#allocation5 + $0x2d0] sm:$0xff]
    %v7264 = vld [vmem:[#allocation5 + $0x2d8] sm:$0xff]
    %v7265 = vld [vmem:[#allocation5 + $0x2e0] sm:$0xff]
    %v7266 = vld [vmem:[#allocation5 + $0x2e8] sm:$0xff]
    %v7267 = vld [vmem:[#allocation5 + $0x2f0] sm:$0xff]
    %v7268 = vld [vmem:[#allocation5 + $0x2f8] sm:$0xff]
    %v7269 = vld [vmem:[#allocation5 + $0x300] sm:$0xff]
    %v7270 = vld [vmem:[#allocation5 + $0x308] sm:$0xff]
    %v7271 = vld [vmem:[#allocation5 + $0x310] sm:$0xff]
    %v7272 = vld [vmem:[#allocation5 + $0x318] sm:$0xff]
    %v7273 = vld [vmem:[#allocation5 + $0x320] sm:$0xff]
    %v7274 = vld [vmem:[#allocation5 + $0x328] sm:$0xff]
    %v7275 = vld [vmem:[#allocation5 + $0x330] sm:$0xff]
    %v7276 = vld [vmem:[#allocation5 + $0x338] sm:$0xff]
    %v7277 = vld [vmem:[#allocation5 + $0x340] sm:$0xff]
    %v7278 = vld [vmem:[#allocation5 + $0x348] sm:$0xff]
    %v7279 = vld [vmem:[#allocation5 + $0x350] sm:$0xff]
    %v7280 = vld [vmem:[#allocation5 + $0x358] sm:$0xff]
    %v7281 = vld [vmem:[#allocation5 + $0x360] sm:$0xff]
    %v7282 = vld [vmem:[#allocation5 + $0x368] sm:$0xff]
    %v7283 = vld [vmem:[#allocation5 + $0x370] sm:$0xff]
    %v7284 = vld [vmem:[#allocation5 + $0x378] sm:$0xff]
    %v7285 = vld [vmem:[#allocation5 + $0x380] sm:$0xff]
    %v7286 = vld [vmem:[#allocation5 + $0x388] sm:$0xff]
    %v7287 = vld [vmem:[#allocation5 + $0x390] sm:$0xff]
    %v7288 = vld [vmem:[#allocation5 + $0x398] sm:$0xff]
    %v7289 = vld [vmem:[#allocation5 + $0x3a0] sm:$0xff]
    %v7290 = vld [vmem:[#allocation5 + $0x3a8] sm:$0xff]
    %v7291 = vld [vmem:[#allocation5 + $0x3b0] sm:$0xff]
    %v7292 = vld [vmem:[#allocation5 + $0x3b8] sm:$0xff]
    %v7293 = vld [vmem:[#allocation5 + $0x3c0] sm:$0xff]
    %v7294 = vld [vmem:[#allocation5 + $0x3c8] sm:$0xff]
    %v7295 = vld [vmem:[#allocation5 + $0x3d0] sm:$0xff]
    %v7296 = vld [vmem:[#allocation5 + $0x3d8] sm:$0xff]
    %v7297 = vld [vmem:[#allocation5 + $0x3e0] sm:$0xff]
    %v7298 = vld [vmem:[#allocation5 + $0x3e8] sm:$0xff]
    %v7299 = vld [vmem:[#allocation5 + $0x3f0] sm:$0xff]
    %v7300 = vld [vmem:[#allocation5 + $0x3f8] sm:$0xff]
    %v7301 = vld [vmem:[#allocation5 + $0x400] sm:$0xff]
    %v7302 = vld [vmem:[#allocation5 + $0x408] sm:$0xff]
    %v7303 = vld [vmem:[#allocation5 + $0x410] sm:$0xff]
    %v7304 = vld [vmem:[#allocation5 + $0x418] sm:$0xff]
    %v7305 = vld [vmem:[#allocation5 + $0x420] sm:$0xff]
    %v7306 = vld [vmem:[#allocation5 + $0x428] sm:$0xff]
    %v7307 = vld [vmem:[#allocation5 + $0x430] sm:$0xff]
    %v7308 = vld [vmem:[#allocation5 + $0x438] sm:$0xff]
    %v7309 = vld [vmem:[#allocation5 + $0x440] sm:$0xff]
    %v7310 = vld [vmem:[#allocation5 + $0x448] sm:$0xff]
    %v7311 = vld [vmem:[#allocation5 + $0x450] sm:$0xff]
    %v7312 = vld [vmem:[#allocation5 + $0x458] sm:$0xff]
    %v7313 = vld [vmem:[#allocation5 + $0x460] sm:$0xff]
    %v7314 = vld [vmem:[#allocation5 + $0x468] sm:$0xff]
    %v7315 = vld [vmem:[#allocation5 + $0x470] sm:$0xff]
    %v7316 = vld [vmem:[#allocation5 + $0x478] sm:$0xff]
    %v7317 = vld [vmem:[#allocation5 + $0x480] sm:$0xff]
    %v7318 = vld [vmem:[#allocation5 + $0x488] sm:$0xff]
    %v7319 = vld [vmem:[#allocation5 + $0x490] sm:$0xff]
    %v7320 = vld [vmem:[#allocation5 + $0x498] sm:$0xff]
    %v7321 = vld [vmem:[#allocation5 + $0x4a0] sm:$0xff]
    %v7322 = vld [vmem:[#allocation5 + $0x4a8] sm:$0xff]
    %v7323 = vld [vmem:[#allocation5 + $0x4b0] sm:$0xff]
    %v7324 = vld [vmem:[#allocation5 + $0x4b8] sm:$0xff]
    %v7325 = vld [vmem:[#allocation5 + $0x4c0] sm:$0xff]
    %v7326 = vld [vmem:[#allocation5 + $0x4c8] sm:$0xff]
    %v7327 = vld [vmem:[#allocation5 + $0x4d0] sm:$0xff]
    %v7328 = vld [vmem:[#allocation5 + $0x4d8] sm:$0xff]
    %v7329 = vld [vmem:[#allocation5 + $0x4e0] sm:$0xff]
    %v7330 = vld [vmem:[#allocation5 + $0x4e8] sm:$0xff]
    %v7331 = vld [vmem:[#allocation5 + $0x4f0] sm:$0xff]
    %v7332 = vld [vmem:[#allocation5 + $0x4f8] sm:$0xff]
    %v7333 = vld [vmem:[#allocation5 + $0x500] sm:$0xff]
    %v7334 = vld [vmem:[#allocation5 + $0x508] sm:$0xff]
    %v7335 = vld [vmem:[#allocation5 + $0x510] sm:$0xff]
    %v7336 = vld [vmem:[#allocation5 + $0x518] sm:$0xff]
    %v7337 = vld [vmem:[#allocation5 + $0x520] sm:$0xff]
    %v7338 = vld [vmem:[#allocation5 + $0x528] sm:$0xff]
    %v7339 = vld [vmem:[#allocation5 + $0x530] sm:$0xff]
    %v7340 = vld [vmem:[#allocation5 + $0x538] sm:$0xff]
    %v7341 = vld [vmem:[#allocation5 + $0x540] sm:$0xff]
    %v7342 = vld [vmem:[#allocation5 + $0x548] sm:$0xff]
    %v7343 = vld [vmem:[#allocation5 + $0x550] sm:$0xff]
    %v7344 = vld [vmem:[#allocation5 + $0x558] sm:$0xff]
    %v7345 = vld [vmem:[#allocation5 + $0x560] sm:$0xff]
    %v7346 = vld [vmem:[#allocation5 + $0x568] sm:$0xff]
    %v7347 = vld [vmem:[#allocation5 + $0x570] sm:$0xff]
    %v7348 = vld [vmem:[#allocation5 + $0x578] sm:$0xff]
    %v7349 = vld [vmem:[#allocation5 + $0x580] sm:$0xff]
    %v7350 = vld [vmem:[#allocation5 + $0x588] sm:$0xff]
    %v7351 = vld [vmem:[#allocation5 + $0x590] sm:$0xff]
    %v7352 = vld [vmem:[#allocation5 + $0x598] sm:$0xff]
    %v7353 = vld [vmem:[#allocation5 + $0x5a0] sm:$0xff]
    %v7354 = vld [vmem:[#allocation5 + $0x5a8] sm:$0xff]
    %v7355 = vld [vmem:[#allocation5 + $0x5b0] sm:$0xff]
    %v7356 = vld [vmem:[#allocation5 + $0x5b8] sm:$0xff]
    %v7357 = vld [vmem:[#allocation5 + $0x5c0] sm:$0xff]
    %v7358 = vld [vmem:[#allocation5 + $0x5c8] sm:$0xff]
    %v7359 = vld [vmem:[#allocation5 + $0x5d0] sm:$0xff]
    %v7360 = vld [vmem:[#allocation5 + $0x5d8] sm:$0xff]
    %v7361 = vld [vmem:[#allocation5 + $0x5e0] sm:$0xff]
    %v7362 = vld [vmem:[#allocation5 + $0x5e8] sm:$0xff]
    %v7363 = vld [vmem:[#allocation5 + $0x5f0] sm:$0xff]
    %v7364 = vld [vmem:[#allocation5 + $0x5f8] sm:$0xff]
    %v7365 = vld [vmem:[#allocation5 + $0x600] sm:$0xff]
    %v7366 = vld [vmem:[#allocation5 + $0x608] sm:$0xff]
    %v7367 = vld [vmem:[#allocation5 + $0x610] sm:$0xff]
    %v7368 = vld [vmem:[#allocation5 + $0x618] sm:$0xff]
    %v7369 = vld [vmem:[#allocation5 + $0x620] sm:$0xff]
    %v7370 = vld [vmem:[#allocation5 + $0x628] sm:$0xff]
    %v7371 = vld [vmem:[#allocation5 + $0x630] sm:$0xff]
    %v7372 = vld [vmem:[#allocation5 + $0x638] sm:$0xff]
    %v7373 = vld [vmem:[#allocation5 + $0x640] sm:$0xff]
    %v7374 = vld [vmem:[#allocation5 + $0x648] sm:$0xff]
    %v7375 = vld [vmem:[#allocation5 + $0x650] sm:$0xff]
    %v7376 = vld [vmem:[#allocation5 + $0x658] sm:$0xff]
    %v7377 = vld [vmem:[#allocation5 + $0x660] sm:$0xff]
    %v7378 = vld [vmem:[#allocation5 + $0x668] sm:$0xff]
    %v7379 = vld [vmem:[#allocation5 + $0x670] sm:$0xff]
    %v7380 = vld [vmem:[#allocation5 + $0x678] sm:$0xff]
    %v7381 = vld [vmem:[#allocation5 + $0x680] sm:$0xff]
    %v7382 = vld [vmem:[#allocation5 + $0x688] sm:$0xff]
    %v7383 = vld [vmem:[#allocation5 + $0x690] sm:$0xff]
    %v7384 = vld [vmem:[#allocation5 + $0x698] sm:$0xff]
    %v7385 = vld [vmem:[#allocation5 + $0x6a0] sm:$0xff]
    %v7386 = vld [vmem:[#allocation5 + $0x6a8] sm:$0xff]
    %v7387 = vld [vmem:[#allocation5 + $0x6b0] sm:$0xff]
    %v7388 = vld [vmem:[#allocation5 + $0x6b8] sm:$0xff]
    %v7389 = vld [vmem:[#allocation5 + $0x6c0] sm:$0xff]
    %v7390 = vld [vmem:[#allocation5 + $0x6c8] sm:$0xff]
    %v7391 = vld [vmem:[#allocation5 + $0x6d0] sm:$0xff]
    %v7392 = vld [vmem:[#allocation5 + $0x6d8] sm:$0xff]
    %v7393 = vld [vmem:[#allocation5 + $0x6e0] sm:$0xff]
    %v7394 = vld [vmem:[#allocation5 + $0x6e8] sm:$0xff]
    %v7395 = vld [vmem:[#allocation5 + $0x6f0] sm:$0xff]
    %v7396 = vld [vmem:[#allocation5 + $0x6f8] sm:$0xff]
    %v7397 = vld [vmem:[#allocation5 + $0x700] sm:$0xff]
    %v7398 = vld [vmem:[#allocation5 + $0x708] sm:$0xff]
    %v7399 = vld [vmem:[#allocation5 + $0x710] sm:$0xff]
    %v7400 = vld [vmem:[#allocation5 + $0x718] sm:$0xff]
    %v7401 = vld [vmem:[#allocation5 + $0x720] sm:$0xff]
    %v7402 = vld [vmem:[#allocation5 + $0x728] sm:$0xff]
    %v7403 = vld [vmem:[#allocation5 + $0x730] sm:$0xff]
    %v7404 = vld [vmem:[#allocation5 + $0x738] sm:$0xff]
    %v7405 = vld [vmem:[#allocation5 + $0x740] sm:$0xff]
    %v7406 = vld [vmem:[#allocation5 + $0x748] sm:$0xff]
    %v7407 = vld [vmem:[#allocation5 + $0x750] sm:$0xff]
    %v7408 = vld [vmem:[#allocation5 + $0x758] sm:$0xff]
    %v7409 = vld [vmem:[#allocation5 + $0x760] sm:$0xff]
    %v7410 = vld [vmem:[#allocation5 + $0x768] sm:$0xff]
    %v7411 = vld [vmem:[#allocation5 + $0x770] sm:$0xff]
    %v7412 = vld [vmem:[#allocation5 + $0x778] sm:$0xff]
    %v7413 = vld [vmem:[#allocation5 + $0x780] sm:$0xff]
    %v7414 = vld [vmem:[#allocation5 + $0x788] sm:$0xff]
    %v7415 = vld [vmem:[#allocation5 + $0x790] sm:$0xff]
    %v7416 = vld [vmem:[#allocation5 + $0x798] sm:$0xff]
    %v7417 = vld [vmem:[#allocation5 + $0x7a0] sm:$0xff]
    %v7418 = vld [vmem:[#allocation5 + $0x7a8] sm:$0xff]
    %v7419 = vld [vmem:[#allocation5 + $0x7b0] sm:$0xff]
    %v7420 = vld [vmem:[#allocation5 + $0x7b8] sm:$0xff]
    %v7421 = vld [vmem:[#allocation5 + $0x7c0] sm:$0xff]
    %v7422 = vld [vmem:[#allocation5 + $0x7c8] sm:$0xff]
    %v7423 = vld [vmem:[#allocation5 + $0x7d0] sm:$0xff]
    %v7424 = vld [vmem:[#allocation5 + $0x7d8] sm:$0xff]
    %v7425 = vld [vmem:[#allocation5 + $0x7e0] sm:$0xff]
    %v7426 = vld [vmem:[#allocation5 + $0x7e8] sm:$0xff]
    %v7427 = vld [vmem:[#allocation5 + $0x7f0] sm:$0xff]
    %v7428 = vld [vmem:[#allocation5 + $0x7f8] sm:$0xff]
    %v7429 = vld [vmem:[#allocation29] sm:$0xf]
    %v7431 = vlaneseq
    %v7432 = vshrl.u32 %v7431, 7
    %v7433 = vsub.s32 0, %v7432
    %v7434 = vrot.slane %v7429, %v7433
    %v7435 = vlaneseq
    %v7436 = vshrl.u32 %v7435, 7
    %v7437 = vsub.s32 1, %v7436
    %v7438 = vrot.slane %v7429, %v7437
    %v7439 = vlaneseq
    %v7440 = vshrl.u32 %v7439, 7
    %v7441 = vsub.s32 2, %v7440
    %v7442 = vrot.slane %v7429, %v7441
    %v7443 = vlaneseq
    %v7444 = vshrl.u32 %v7443, 7
    %v7445 = vsub.s32 3, %v7444
    %v7446 = vrot.slane %v7429, %v7445
    %7451 = vmatprep.subr.bf16.mxu0 %v7174
    %7452 = vmatpush1.bf16.msra.mxu0 %v7173
    %7453 = vmatprep.subr.bf16.mxu0 %v7178
    %7454 = vmatpush1.bf16.msra.mxu0 %v7177
    %7455 = vmatprep.subr.bf16.mxu0 %v7182
    %7456 = vmatpush1.bf16.msra.mxu0 %v7181
    %7457 = vmatprep.subr.bf16.mxu0 %v7186
    %7458 = vmatpush1.bf16.msra.mxu0 %v7185
    %7459 = vmatprep.subr.bf16.mxu0 %v7190
    %7460 = vmatpush1.bf16.msra.mxu0 %v7189
    %7461 = vmatprep.subr.bf16.mxu0 %v7194
    %7462 = vmatpush1.bf16.msra.mxu0 %v7193
    %7463 = vmatprep.subr.bf16.mxu0 %v7198
    %7464 = vmatpush1.bf16.msra.mxu0 %v7197
    %7465 = vmatprep.subr.bf16.mxu0 %v7202
    %7466 = vmatpush1.bf16.msra.mxu0 %v7201
    %7467 = vmatprep.subr.bf16.mxu0 %v7206
    %7468 = vmatpush1.bf16.msra.mxu0 %v7205
    %7469 = vmatprep.subr.bf16.mxu0 %v7210
    %7470 = vmatpush1.bf16.msra.mxu0 %v7209
    %7471 = vmatprep.subr.bf16.mxu0 %v7214
    %7472 = vmatpush1.bf16.msra.mxu0 %v7213
    %7473 = vmatprep.subr.bf16.mxu0 %v7218
    %7474 = vmatpush1.bf16.msra.mxu0 %v7217
    %7475 = vmatprep.subr.bf16.mxu0 %v7222
    %7476 = vmatpush1.bf16.msra.mxu0 %v7221
    %7477 = vmatprep.subr.bf16.mxu0 %v7226
    %7478 = vmatpush1.bf16.msra.mxu0 %v7225
    %7479 = vmatprep.subr.bf16.mxu0 %v7230
    %7480 = vmatpush1.bf16.msra.mxu0 %v7229
    %7481 = vmatprep.subr.bf16.mxu0 %v7234
    %7482 = vmatpush1.bf16.msra.mxu0 %v7233
    %7483 = vmatprep.mubr.bf16.mxu0 %v7166
    %7484 = vmatmul.mubr.bf16.gmra.mrb[0].mxu0 %v7165
    %v7485 = vpop.f32.mrb[0].mxu0
    %v7486 = vadd.f32 %v7434, %v7485
    %v7487 = vpop.f32.mrb[0].mxu0
    %v7488 = vadd.f32 %v7438, %v7487
    %v7489 = vpop.f32.mrb[0].mxu0
    %v7490 = vpop.f32.mrb[0].mxu0
    %7491 = vdwg.mxu0
    %7492 = vmatprep.subr.bf16.mxu0 %v7238
    %7493 = vmatpush1.bf16.msra.mxu0 %v7237
    %7494 = vmatprep.subr.bf16.mxu0 %v7242
    %7495 = vmatpush1.bf16.msra.mxu0 %v7241
    %7496 = vmatprep.subr.bf16.mxu0 %v7246
    %7497 = vmatpush1.bf16.msra.mxu0 %v7245
    %7498 = vmatprep.subr.bf16.mxu0 %v7250
    %7499 = vmatpush1.bf16.msra.mxu0 %v7249
    %7500 = vmatprep.subr.bf16.mxu0 %v7254
    %7501 = vmatpush1.bf16.msra.mxu0 %v7253
    %7502 = vmatprep.subr.bf16.mxu0 %v7258
    %7503 = vmatpush1.bf16.msra.mxu0 %v7257
    %7504 = vmatprep.subr.bf16.mxu0 %v7262
    %7505 = vmatpush1.bf16.msra.mxu0 %v7261
    %7506 = vmatprep.subr.bf16.mxu0 %v7266
    %7507 = vmatpush1.bf16.msra.mxu0 %v7265
    %7508 = vmatprep.subr.bf16.mxu0 %v7270
    %7509 = vmatpush1.bf16.msra.mxu0 %v7269
    %7510 = vmatprep.subr.bf16.mxu0 %v7274
    %7511 = vmatpush1.bf16.msra.mxu0 %v7273
    %7512 = vmatprep.subr.bf16.mxu0 %v7278
    %7513 = vmatpush1.bf16.msra.mxu0 %v7277
    %7514 = vmatprep.subr.bf16.mxu0 %v7282
    %7515 = vmatpush1.bf16.msra.mxu0 %v7281
    %7516 = vmatprep.subr.bf16.mxu0 %v7286
    %7517 = vmatpush1.bf16.msra.mxu0 %v7285
    %7518 = vmatprep.subr.bf16.mxu0 %v7290
    %7519 = vmatpush1.bf16.msra.mxu0 %v7289
    %7520 = vmatprep.subr.bf16.mxu0 %v7294
    %7521 = vmatpush1.bf16.msra.mxu0 %v7293
    %7522 = vmatprep.subr.bf16.mxu0 %v7298
    %7523 = vmatpush1.bf16.msra.mxu0 %v7297
    %7524 = vmatprep.mubr.bf16.mxu0 %v7168
    %7525 = vmatmul.mubr.bf16.gmra.mrb[0].mxu0 %v7167
    %v7526 = vpop.f32.mrb[0].mxu0
    %v7527 = vadd.f32 %v7486, %v7526
    %v7528 = vpop.f32.mrb[0].mxu0
    %v7529 = vadd.f32 %v7488, %v7528
    %v7530 = vpop.f32.mrb[0].mxu0
    %v7531 = vpop.f32.mrb[0].mxu0
    %7532 = vdwg.mxu0
    %7533 = vmatprep.subr.bf16.mxu0 %v7302
    %7534 = vmatpush1.bf16.msra.mxu0 %v7301
    %7535 = vmatprep.subr.bf16.mxu0 %v7306
    %7536 = vmatpush1.bf16.msra.mxu0 %v7305
    %7537 = vmatprep.subr.bf16.mxu0 %v7310
    %7538 = vmatpush1.bf16.msra.mxu0 %v7309
    %7539 = vmatprep.subr.bf16.mxu0 %v7314
    %7540 = vmatpush1.bf16.msra.mxu0 %v7313
    %7541 = vmatprep.subr.bf16.mxu0 %v7318
    %7542 = vmatpush1.bf16.msra.mxu0 %v7317
    %7543 = vmatprep.subr.bf16.mxu0 %v7322
    %7544 = vmatpush1.bf16.msra.mxu0 %v7321
    %7545 = vmatprep.subr.bf16.mxu0 %v7326
    %7546 = vmatpush1.bf16.msra.mxu0 %v7325
    %7547 = vmatprep.subr.bf16.mxu0 %v7330
    %7548 = vmatpush1.bf16.msra.mxu0 %v7329
    %7549 = vmatprep.subr.bf16.mxu0 %v7334
    %7550 = vmatpush1.bf16.msra.mxu0 %v7333
    %7551 = vmatprep.subr.bf16.mxu0 %v7338
    %7552 = vmatpush1.bf16.msra.mxu0 %v7337
    %7553 = vmatprep.subr.bf16.mxu0 %v7342
    %7554 = vmatpush1.bf16.msra.mxu0 %v7341
    %7555 = vmatprep.subr.bf16.mxu0 %v7346
    %7556 = vmatpush1.bf16.msra.mxu0 %v7345
    %7557 = vmatprep.subr.bf16.mxu0 %v7350
    %7558 = vmatpush1.bf16.msra.mxu0 %v7349
    %7559 = vmatprep.subr.bf16.mxu0 %v7354
    %7560 = vmatpush1.bf16.msra.mxu0 %v7353
    %7561 = vmatprep.subr.bf16.mxu0 %v7358
    %7562 = vmatpush1.bf16.msra.mxu0 %v7357
    %7563 = vmatprep.subr.bf16.mxu0 %v7362
    %7564 = vmatpush1.bf16.msra.mxu0 %v7361
    %7565 = vmatprep.mubr.bf16.mxu0 %v7170
    %7566 = vmatmul.mubr.bf16.gmra.mrb[0].mxu0 %v7169
    %v7567 = vpop.f32.mrb[0].mxu0
    %v7568 = vadd.f32 %v7527, %v7567
    %v7569 = vpop.f32.mrb[0].mxu0
    %v7570 = vadd.f32 %v7529, %v7569
    %v7571 = vpop.f32.mrb[0].mxu0
    %v7572 = vpop.f32.mrb[0].mxu0
    %7573 = vdwg.mxu0
    %7574 = vmatprep.subr.bf16.mxu0 %v7366
    %7575 = vmatpush1.bf16.msra.mxu0 %v7365
    %7576 = vmatprep.subr.bf16.mxu0 %v7370
    %7577 = vmatpush1.bf16.msra.mxu0 %v7369
    %7578 = vmatprep.subr.bf16.mxu0 %v7374
    %7579 = vmatpush1.bf16.msra.mxu0 %v7373
    %7580 = vmatprep.subr.bf16.mxu0 %v7378
    %7581 = vmatpush1.bf16.msra.mxu0 %v7377
    %7582 = vmatprep.subr.bf16.mxu0 %v7382
    %7583 = vmatpush1.bf16.msra.mxu0 %v7381
    %7584 = vmatprep.subr.bf16.mxu0 %v7386
    %7585 = vmatpush1.bf16.msra.mxu0 %v7385
    %7586 = vmatprep.subr.bf16.mxu0 %v7390
    %7587 = vmatpush1.bf16.msra.mxu0 %v7389
    %7588 = vmatprep.subr.bf16.mxu0 %v7394
    %7589 = vmatpush1.bf16.msra.mxu0 %v7393
    %7590 = vmatprep.subr.bf16.mxu0 %v7398
    %7591 = vmatpush1.bf16.msra.mxu0 %v7397
    %7592 = vmatprep.subr.bf16.mxu0 %v7402
    %7593 = vmatpush1.bf16.msra.mxu0 %v7401
    %7594 = vmatprep.subr.bf16.mxu0 %v7406
    %7595 = vmatpush1.bf16.msra.mxu0 %v7405
    %7596 = vmatprep.subr.bf16.mxu0 %v7410
    %7597 = vmatpush1.bf16.msra.mxu0 %v7409
    %7598 = vmatprep.subr.bf16.mxu0 %v7414
    %7599 = vmatpush1.bf16.msra.mxu0 %v7413
    %7600 = vmatprep.subr.bf16.mxu0 %v7418
    %7601 = vmatpush1.bf16.msra.mxu0 %v7417
    %7602 = vmatprep.subr.bf16.mxu0 %v7422
    %7603 = vmatpush1.bf16.msra.mxu0 %v7421
    %7604 = vmatprep.subr.bf16.mxu0 %v7426
    %7605 = vmatpush1.bf16.msra.mxu0 %v7425
    %7606 = vmatprep.mubr.bf16.mxu0 %v7172
    %7607 = vmatmul.mubr.bf16.gmra.mrb[0].mxu0 %v7171
    %v7608 = vpop.f32.mrb[0].mxu0
    %v7609 = vadd.f32 %v7568, %v7608
    %v7610 = vpop.f32.mrb[0].mxu0
    %v7611 = vadd.f32 %v7570, %v7610
    %v7612 = vpop.f32.mrb[0].mxu0
    %v7613 = vpop.f32.mrb[0].mxu0
    %7614 = vdwg.mxu0
    %7615 = vmatprep.subr.bf16.mxu0 %v7176
    %7616 = vmatpush1.bf16.msra.mxu0 %v7175
    %7617 = vmatprep.subr.bf16.mxu0 %v7180
    %7618 = vmatpush1.bf16.msra.mxu0 %v7179
    %7619 = vmatprep.subr.bf16.mxu0 %v7184
    %7620 = vmatpush1.bf16.msra.mxu0 %v7183
    %7621 = vmatprep.subr.bf16.mxu0 %v7188
    %7622 = vmatpush1.bf16.msra.mxu0 %v7187
    %7623 = vmatprep.subr.bf16.mxu0 %v7192
    %7624 = vmatpush1.bf16.msra.mxu0 %v7191
    %7625 = vmatprep.subr.bf16.mxu0 %v7196
    %7626 = vmatpush1.bf16.msra.mxu0 %v7195
    %7627 = vmatprep.subr.bf16.mxu0 %v7200
    %7628 = vmatpush1.bf16.msra.mxu0 %v7199
    %7629 = vmatprep.subr.bf16.mxu0 %v7204
    %7630 = vmatpush1.bf16.msra.mxu0 %v7203
    %7631 = vmatprep.subr.bf16.mxu0 %v7208
    %7632 = vmatpush1.bf16.msra.mxu0 %v7207
    %7633 = vmatprep.subr.bf16.mxu0 %v7212
    %7634 = vmatpush1.bf16.msra.mxu0 %v7211
    %7635 = vmatprep.subr.bf16.mxu0 %v7216
    %7636 = vmatpush1.bf16.msra.mxu0 %v7215
    %7637 = vmatprep.subr.bf16.mxu0 %v7220
    %7638 = vmatpush1.bf16.msra.mxu0 %v7219
    %7639 = vmatprep.subr.bf16.mxu0 %v7224
    %7640 = vmatpush1.bf16.msra.mxu0 %v7223
    %7641 = vmatprep.subr.bf16.mxu0 %v7228
    %7642 = vmatpush1.bf16.msra.mxu0 %v7227
    %7643 = vmatprep.subr.bf16.mxu0 %v7232
    %7644 = vmatpush1.bf16.msra.mxu0 %v7231
    %7645 = vmatprep.subr.bf16.mxu0 %v7236
    %7646 = vmatpush1.bf16.msra.mxu0 %v7235
    %7647 = vmatprep.mubr.bf16.mxu0 %v7166
    %7648 = vmatmul.mubr.bf16.gmra.mrb[0].mxu0 %v7165
    %v7649 = vpop.f32.mrb[0].mxu0
    %v7650 = vadd.f32 %v7442, %v7649
    %v7651 = vpop.f32.mrb[0].mxu0
    %v7652 = vadd.f32 %v7446, %v7651
    %v7653 = vpop.f32.mrb[0].mxu0
    %v7654 = vpop.f32.mrb[0].mxu0
    %7655 = vdwg.mxu0
    %7656 = vmatprep.subr.bf16.mxu0 %v7240
    %7657 = vmatpush1.bf16.msra.mxu0 %v7239
    %7658 = vmatprep.subr.bf16.mxu0 %v7244
    %7659 = vmatpush1.bf16.msra.mxu0 %v7243
    %7660 = vmatprep.subr.bf16.mxu0 %v7248
    %7661 = vmatpush1.bf16.msra.mxu0 %v7247
    %7662 = vmatprep.subr.bf16.mxu0 %v7252
    %7663 = vmatpush1.bf16.msra.mxu0 %v7251
    %7664 = vmatprep.subr.bf16.mxu0 %v7256
    %7665 = vmatpush1.bf16.msra.mxu0 %v7255
    %7666 = vmatprep.subr.bf16.mxu0 %v7260
    %7667 = vmatpush1.bf16.msra.mxu0 %v7259
    %7668 = vmatprep.subr.bf16.mxu0 %v7264
    %7669 = vmatpush1.bf16.msra.mxu0 %v7263
    %7670 = vmatprep.subr.bf16.mxu0 %v7268
    %7671 = vmatpush1.bf16.msra.mxu0 %v7267
    %7672 = vmatprep.subr.bf16.mxu0 %v7272
    %7673 = vmatpush1.bf16.msra.mxu0 %v7271
    %7674 = vmatprep.subr.bf16.mxu0 %v7276
    %7675 = vmatpush1.bf16.msra.mxu0 %v7275
    %7676 = vmatprep.subr.bf16.mxu0 %v7280
    %7677 = vmatpush1.bf16.msra.mxu0 %v7279
    %7678 = vmatprep.subr.bf16.mxu0 %v7284
    %7679 = vmatpush1.bf16.msra.mxu0 %v7283
    %7680 = vmatprep.subr.bf16.mxu0 %v7288
    %7681 = vmatpush1.bf16.msra.mxu0 %v7287
    %7682 = vmatprep.subr.bf16.mxu0 %v7292
    %7683 = vmatpush1.bf16.msra.mxu0 %v7291
    %7684 = vmatprep.subr.bf16.mxu0 %v7296
    %7685 = vmatpush1.bf16.msra.mxu0 %v7295
    %7686 = vmatprep.subr.bf16.mxu0 %v7300
    %7687 = vmatpush1.bf16.msra.mxu0 %v7299
    %7688 = vmatprep.mubr.bf16.mxu0 %v7168
    %7689 = vmatmul.mubr.bf16.gmra.mrb[0].mxu0 %v7167
    %v7690 = vpop.f32.mrb[0].mxu0
    %v7691 = vadd.f32 %v7650, %v7690
    %v7692 = vpop.f32.mrb[0].mxu0
    %v7693 = vadd.f32 %v7652, %v7692
    %v7694 = vpop.f32.mrb[0].mxu0
    %v7695 = vpop.f32.mrb[0].mxu0
    %7696 = vdwg.mxu0
    %7697 = vmatprep.subr.bf16.mxu0 %v7304
    %7698 = vmatpush1.bf16.msra.mxu0 %v7303
    %7699 = vmatprep.subr.bf16.mxu0 %v7308
    %7700 = vmatpush1.bf16.msra.mxu0 %v7307
    %7701 = vmatprep.subr.bf16.mxu0 %v7312
    %7702 = vmatpush1.bf16.msra.mxu0 %v7311
    %7703 = vmatprep.subr.bf16.mxu0 %v7316
    %7704 = vmatpush1.bf16.msra.mxu0 %v7315
    %7705 = vmatprep.subr.bf16.mxu0 %v7320
    %7706 = vmatpush1.bf16.msra.mxu0 %v7319
    %7707 = vmatprep.subr.bf16.mxu0 %v7324
    %7708 = vmatpush1.bf16.msra.mxu0 %v7323
    %7709 = vmatprep.subr.bf16.mxu0 %v7328
    %7710 = vmatpush1.bf16.msra.mxu0 %v7327
    %7711 = vmatprep.subr.bf16.mxu0 %v7332
    %7712 = vmatpush1.bf16.msra.mxu0 %v7331
    %7713 = vmatprep.subr.bf16.mxu0 %v7336
    %7714 = vmatpush1.bf16.msra.mxu0 %v7335
    %7715 = vmatprep.subr.bf16.mxu0 %v7340
    %7716 = vmatpush1.bf16.msra.mxu0 %v7339
    %7717 = vmatprep.subr.bf16.mxu0 %v7344
    %7718 = vmatpush1.bf16.msra.mxu0 %v7343
    %7719 = vmatprep.subr.bf16.mxu0 %v7348
    %7720 = vmatpush1.bf16.msra.mxu0 %v7347
    %7721 = vmatprep.subr.bf16.mxu0 %v7352
    %7722 = vmatpush1.bf16.msra.mxu0 %v7351
    %7723 = vmatprep.subr.bf16.mxu0 %v7356
    %7724 = vmatpush1.bf16.msra.mxu0 %v7355
    %7725 = vmatprep.subr.bf16.mxu0 %v7360
    %7726 = vmatpush1.bf16.msra.mxu0 %v7359
    %7727 = vmatprep.subr.bf16.mxu0 %v7364
    %7728 = vmatpush1.bf16.msra.mxu0 %v7363
    %7729 = vmatprep.mubr.bf16.mxu0 %v7170
    %7730 = vmatmul.mubr.bf16.gmra.mrb[0].mxu0 %v7169
    %v7731 = vpop.f32.mrb[0].mxu0
    %v7732 = vadd.f32 %v7691, %v7731
    %v7733 = vpop.f32.mrb[0].mxu0
    %v7734 = vadd.f32 %v7693, %v7733
    %v7735 = vpop.f32.mrb[0].mxu0
    %v7736 = vpop.f32.mrb[0].mxu0
    %7737 = vdwg.mxu0
    %7738 = vmatprep.subr.bf16.mxu0 %v7368
    %7739 = vmatpush1.bf16.msra.mxu0 %v7367
    %7740 = vmatprep.subr.bf16.mxu0 %v7372
    %7741 = vmatpush1.bf16.msra.mxu0 %v7371
    %7742 = vmatprep.subr.bf16.mxu0 %v7376
    %7743 = vmatpush1.bf16.msra.mxu0 %v7375
    %7744 = vmatprep.subr.bf16.mxu0 %v7380
    %7745 = vmatpush1.bf16.msra.mxu0 %v7379
    %7746 = vmatprep.subr.bf16.mxu0 %v7384
    %7747 = vmatpush1.bf16.msra.mxu0 %v7383
    %7748 = vmatprep.subr.bf16.mxu0 %v7388
    %7749 = vmatpush1.bf16.msra.mxu0 %v7387
    %7750 = vmatprep.subr.bf16.mxu0 %v7392
    %7751 = vmatpush1.bf16.msra.mxu0 %v7391
    %7752 = vmatprep.subr.bf16.mxu0 %v7396
    %7753 = vmatpush1.bf16.msra.mxu0 %v7395
    %7754 = vmatprep.subr.bf16.mxu0 %v7400
    %7755 = vmatpush1.bf16.msra.mxu0 %v7399
    %7756 = vmatprep.subr.bf16.mxu0 %v7404
    %7757 = vmatpush1.bf16.msra.mxu0 %v7403
    %7758 = vmatprep.subr.bf16.mxu0 %v7408
    %7759 = vmatpush1.bf16.msra.mxu0 %v7407
    %7760 = vmatprep.subr.bf16.mxu0 %v7412
    %7761 = vmatpush1.bf16.msra.mxu0 %v7411
    %7762 = vmatprep.subr.bf16.mxu0 %v7416
    %7763 = vmatpush1.bf16.msra.mxu0 %v7415
    %7764 = vmatprep.subr.bf16.mxu0 %v7420
    %7765 = vmatpush1.bf16.msra.mxu0 %v7419
    %7766 = vmatprep.subr.bf16.mxu0 %v7424
    %7767 = vmatpush1.bf16.msra.mxu0 %v7423
    %7768 = vmatprep.subr.bf16.mxu0 %v7428
    %7769 = vmatpush1.bf16.msra.mxu0 %v7427
    %7770 = vmatprep.mubr.bf16.mxu0 %v7172
    %7771 = vmatmul.mubr.bf16.gmra.mrb[0].mxu0 %v7171
    %v7772 = vpop.f32.mrb[0].mxu0
    %v7773 = vadd.f32 %v7732, %v7772
    %v7774 = vpop.f32.mrb[0].mxu0
    %v7775 = vadd.f32 %v7734, %v7774
    %v7776 = vpop.f32.mrb[0].mxu0
    %v7777 = vpop.f32.mrb[0].mxu0
    %7778 = vdwg.mxu0
    %v7779 = vmax.f32 %v7609, 0.0
    %v7780 = vmax.f32 %v7611, 0.0
    %v7781 = vmax.f32 %v7773, 0.0
    %v7782 = vmax.f32 %v7775, 0.0
    %s7783 = smul.u32 4, 64
    %s7784 = smul.u32 %s7783, 1
    %s7785 = sshll.u32 %s7784, 4
    %7786 = dma.done %s294, %s7785
    %v7787 = vpack.c.bf16 %v7779, %v7779
    %v7788 = vpack.c.bf16 %v7780, %v7780
    %v7789 = vpack.c.bf16 %v7781, %v7781
    %v7790 = vpack.c.bf16 %v7782, %v7782
    %v7791 = vld [vmem:[#allocation6] sm:$0xff]
    %v7792 = vld [vmem:[#allocation6 + $0x8] sm:$0xff]
    %v7793 = vld [vmem:[#allocation6 + $0x10] sm:$0xff]
    %v7794 = vld [vmem:[#allocation6 + $0x18] sm:$0xff]
    %v7795 = vld [vmem:[#allocation6 + $0x20] sm:$0xff]
    %v7796 = vld [vmem:[#allocation6 + $0x28] sm:$0xff]
    %v7797 = vld [vmem:[#allocation6 + $0x30] sm:$0xff]
    %v7798 = vld [vmem:[#allocation6 + $0x38] sm:$0xff]
    %v7799 = vld [vmem:[#allocation6 + $0x40] sm:$0xff]
    %v7800 = vld [vmem:[#allocation6 + $0x48] sm:$0xff]
    %v7801 = vld [vmem:[#allocation6 + $0x50] sm:$0xff]
    %v7802 = vld [vmem:[#allocation6 + $0x58] sm:$0xff]
    %v7803 = vld [vmem:[#allocation6 + $0x60] sm:$0xff]
    %v7804 = vld [vmem:[#allocation6 + $0x68] sm:$0xff]
    %v7805 = vld [vmem:[#allocation6 + $0x70] sm:$0xff]
    %v7806 = vld [vmem:[#allocation6 + $0x78] sm:$0xff]
    %v7807 = vld [vmem:[#allocation6 + $0x80] sm:$0xff]
    %v7808 = vld [vmem:[#allocation6 + $0x88] sm:$0xff]
    %v7809 = vld [vmem:[#allocation6 + $0x90] sm:$0xff]
    %v7810 = vld [vmem:[#allocation6 + $0x98] sm:$0xff]
    %v7811 = vld [vmem:[#allocation6 + $0xa0] sm:$0xff]
    %v7812 = vld [vmem:[#allocation6 + $0xa8] sm:$0xff]
    %v7813 = vld [vmem:[#allocation6 + $0xb0] sm:$0xff]
    %v7814 = vld [vmem:[#allocation6 + $0xb8] sm:$0xff]
    %v7815 = vld [vmem:[#allocation6 + $0xc0] sm:$0xff]
    %v7816 = vld [vmem:[#allocation6 + $0xc8] sm:$0xff]
    %v7817 = vld [vmem:[#allocation6 + $0xd0] sm:$0xff]
    %v7818 = vld [vmem:[#allocation6 + $0xd8] sm:$0xff]
    %v7819 = vld [vmem:[#allocation6 + $0xe0] sm:$0xff]
    %v7820 = vld [vmem:[#allocation6 + $0xe8] sm:$0xff]
    %v7821 = vld [vmem:[#allocation6 + $0xf0] sm:$0xff]
    %v7822 = vld [vmem:[#allocation6 + $0xf8] sm:$0xff]
    %v7823 = vld [vmem:[%s18] sm:$0x1]
    %v7825 = vlaneseq
    %v7826 = vshrl.u32 %v7825, 7
    %v7827 = vsub.s32 0, %v7826
    %v7828 = vrot.slane %v7823, %v7827
    %7830 = vmatprep.subr.bf16.mxu0 0
    %7831 = vmatpush1.bf16.msra.mxu0 %v7791
    %7832 = vmatprep.subr.bf16.mxu0 0
    %7833 = vmatpush1.bf16.msra.mxu0 %v7792
    %7834 = vmatprep.subr.bf16.mxu0 0
    %7835 = vmatpush1.bf16.msra.mxu0 %v7793
    %7836 = vmatprep.subr.bf16.mxu0 0
    %7837 = vmatpush1.bf16.msra.mxu0 %v7794
    %7838 = vmatprep.subr.bf16.mxu0 0
    %7839 = vmatpush1.bf16.msra.mxu0 %v7795
    %7840 = vmatprep.subr.bf16.mxu0 0
    %7841 = vmatpush1.bf16.msra.mxu0 %v7796
    %7842 = vmatprep.subr.bf16.mxu0 0
    %7843 = vmatpush1.bf16.msra.mxu0 %v7797
    %7844 = vmatprep.subr.bf16.mxu0 0
    %7845 = vmatpush1.bf16.msra.mxu0 %v7798
    %7846 = vmatprep.subr.bf16.mxu0 0
    %7847 = vmatpush1.bf16.msra.mxu0 %v7799
    %7848 = vmatprep.subr.bf16.mxu0 0
    %7849 = vmatpush1.bf16.msra.mxu0 %v7800
    %7850 = vmatprep.subr.bf16.mxu0 0
    %7851 = vmatpush1.bf16.msra.mxu0 %v7801
    %7852 = vmatprep.subr.bf16.mxu0 0
    %7853 = vmatpush1.bf16.msra.mxu0 %v7802
    %7854 = vmatprep.subr.bf16.mxu0 0
    %7855 = vmatpush1.bf16.msra.mxu0 %v7803
    %7856 = vmatprep.subr.bf16.mxu0 0
    %7857 = vmatpush1.bf16.msra.mxu0 %v7804
    %7858 = vmatprep.subr.bf16.mxu0 0
    %7859 = vmatpush1.bf16.msra.mxu0 %v7805
    %7860 = vmatprep.subr.bf16.mxu0 0
    %7861 = vmatpush1.bf16.msra.mxu0 %v7806
    %7862 = vmatprep.mubr.bf16.mxu0 %v7788
    %7863 = vmatmul.mubr.bf16.gmra.mrb[0].mxu0 %v7787
    %v7864 = vpop.f32.mrb[0].mxu0
    %v7865 = vadd.f32 %v7828, %v7864
    %v7866 = vpop.f32.mrb[0].mxu0
    %v7867 = vpop.f32.mrb[0].mxu0
    %v7868 = vpop.f32.mrb[0].mxu0
    %7869 = vdwg.mxu0
    %7870 = vmatprep.subr.bf16.mxu0 0
    %7871 = vmatpush1.bf16.msra.mxu0 %v7807
    %7872 = vmatprep.subr.bf16.mxu0 0
    %7873 = vmatpush1.bf16.msra.mxu0 %v7808
    %7874 = vmatprep.subr.bf16.mxu0 0
    %7875 = vmatpush1.bf16.msra.mxu0 %v7809
    %7876 = vmatprep.subr.bf16.mxu0 0
    %7877 = vmatpush1.bf16.msra.mxu0 %v7810
    %7878 = vmatprep.subr.bf16.mxu0 0
    %7879 = vmatpush1.bf16.msra.mxu0 %v7811
    %7880 = vmatprep.subr.bf16.mxu0 0
    %7881 = vmatpush1.bf16.msra.mxu0 %v7812
    %7882 = vmatprep.subr.bf16.mxu0 0
    %7883 = vmatpush1.bf16.msra.mxu0 %v7813
    %7884 = vmatprep.subr.bf16.mxu0 0
    %7885 = vmatpush1.bf16.msra.mxu0 %v7814
    %7886 = vmatprep.subr.bf16.mxu0 0
    %7887 = vmatpush1.bf16.msra.mxu0 %v7815
    %7888 = vmatprep.subr.bf16.mxu0 0
    %7889 = vmatpush1.bf16.msra.mxu0 %v7816
    %7890 = vmatprep.subr.bf16.mxu0 0
    %7891 = vmatpush1.bf16.msra.mxu0 %v7817
    %7892 = vmatprep.subr.bf16.mxu0 0
    %7893 = vmatpush1.bf16.msra.mxu0 %v7818
    %7894 = vmatprep.subr.bf16.mxu0 0
    %7895 = vmatpush1.bf16.msra.mxu0 %v7819
    %7896 = vmatprep.subr.bf16.mxu0 0
    %7897 = vmatpush1.bf16.msra.mxu0 %v7820
    %7898 = vmatprep.subr.bf16.mxu0 0
    %7899 = vmatpush1.bf16.msra.mxu0 %v7821
    %7900 = vmatprep.subr.bf16.mxu0 0
    %7901 = vmatpush1.bf16.msra.mxu0 %v7822
    %7902 = vmatprep.mubr.bf16.mxu0 %v7790
    %7903 = vmatmul.mubr.bf16.gmra.mrb[0].mxu0 %v7789
    %v7904 = vpop.f32.mrb[0].mxu0
    %v7905 = vadd.f32 %v7865, %v7904
    %v7906 = vpop.f32.mrb[0].mxu0
    %v7907 = vpop.f32.mrb[0].mxu0
    %v7908 = vpop.f32.mrb[0].mxu0
    %7909 = vdwg.mxu0
    %7910 = vst [vmem:[#allocation31] sm:$0x3] %v7905
    // Predicated region
    $region126: #{combined_cyber_threat_cnn_forward.1} parent=1 // pred_check
      _
    $region127: #{combined_cyber_threat_cnn_forward.1} parent=1 // pred_check_branch
      %7912 = sbr.rel (0) target = $region129
    $region128: #{combined_cyber_threat_cnn_forward.1} parent=1 // pred_region
      %s7914 = ssub.s32 32, 32
      %7915 = vsyncadd [#allocation10], %s7914
      %s7917 = sshll.u32 [#allocation31], 4
      %s7918 = int_to_ptr.vmem [resolvable:$true] %s7917
      %7920 = dma.vmem_to_hbm [thread:$0]  %s7918, 32, %s19, [#allocation10]
    $region129: #{combined_cyber_threat_cnn_forward.1} parent=1 // pred_fallthru
      _
    // Predicated region
    $region130: #{combined_cyber_threat_cnn_forward.1} parent=1 // pred_check
      _
    $region131: #{combined_cyber_threat_cnn_forward.1} parent=1 // pred_check_branch
      %7922 = sbr.rel (0) target = $region133
    $region132: #{combined_cyber_threat_cnn_forward.1} parent=1 // pred_region
      %7923 = dma.done [#allocation10], 32
    $region133: #{combined_cyber_threat_cnn_forward.1} parent=1 // pred_fallthru
      _
    %7924 = vsyncpa [#allocation9], 1
    %7925 = vsyncpa [#allocation12], 1
    %7926 = vsyncpa [#allocation15], 1
    %7927 = vsyncpa [#allocation18], 1
    %7928 = vsyncpa [#allocation21], 1
    %7929 = vsyncpa [#allocation24], 1
    %7930 = vsyncpa [#allocation27], 1
    %7931 = vsyncpa [#allocation30], 1
    %7932 = vsyncpa [#allocation10], 1
  %7933 = vsyncmov [#allocation7]
  %s7934 = vpop.sfrf %7933
  %p7935 = scmp.eq.s32.totalorder %s7934, 0
  %p7936 = pneg %p7935
  %7938 = shalt.err (%p7936)
  %s7939 = scalar_lea.sflag [#allocation7], 1
  %7940 = vsyncmov %s7939
  %s7941 = vpop.sfrf %7940
  %p7942 = scmp.eq.s32.totalorder %s7941, 0
  %p7943 = pneg %p7942
  %7945 = shalt.err (%p7943)
  %s7946 = scalar_lea.sflag [#allocation7], 2
  %7947 = vsyncmov %s7946
  %s7948 = vpop.sfrf %7947
  %p7949 = scmp.eq.s32.totalorder %s7948, 0
  %p7950 = pneg %p7949
  %7952 = shalt.err (%p7950)

</llo_original>
